<compile_context>
chip_gen: v7x
topology: tpu7x:2x2x1
jax: 0.10.0
libtpu: 0.0.40
codegen_flags: <defaults>
</compile_context>

<pallas_src>
import functools

import numpy as np
import jax
import jax.numpy as jnp
from jax.experimental import pallas as pl
from jax.experimental.pallas import tpu as pltpu

KER = 3
PAD = 1
BN_EPS = 1e-5
LRELU_SLOPE = 0.2
GUARD = 128  # lane-aligned guard band around the flattened activation


def _wdisc_kernel(*refs, num_bn, W):
    """Fully fused WDiscriminator forward in channels-on-sublanes layout.

    refs layout:
      [0]                     masks   (9, 1, M) f32 {0,1} per-tap validity masks
      [1]                     x       (C, M)    f32 (channel-padded input)
      [2 .. 1+3*num_bn]       per BN block: w (9, C, C) bf16, gamma (C, 1) f32, beta (C, 1) f32
      [2+3*num_bn, 3+3*num_bn] tail w (9, CTP, C) bf16, tail bias (CTP, 1) f32
      [4+3*num_bn]            out     (CT, M) f32
      [5+3*num_bn]            scratch buf (C, GUARD + M + GUARD) f32
    """
    mask_ref = refs[0]
    x_ref = refs[1]
    blk = refs[2:2 + 3 * num_bn]
    wt_ref = refs[2 + 3 * num_bn]
    bt_ref = refs[3 + 3 * num_bn]
    o_ref = refs[4 + 3 * num_bn]
    buf = refs[5 + 3 * num_bn]

    C, M = x_ref.shape
    inv_m = 1.0 / M

    # Zero ONLY the guard bands (lane-aligned dense stores); the interior is fully
    # rewritten every layer, so nothing else is ever memset.
    buf[:, :GUARD] = jnp.zeros((C, GUARD), jnp.float32)
    buf[:, GUARD + M:] = jnp.zeros((C, GUARD), jnp.float32)
    buf[:, GUARD:GUARD + M] = x_ref[...]

    def conv3x3(w_ref):
        """'same' 3x3 conv as 9 accumulated MXU matmuls; returns (Cout, M) f32."""
        y = None
        t = 0
        for ry in (-1, 0, 1):
            for rx in (-1, 0, 1):
                off = ry * W + rx
                start = GUARD + off
                raw = buf[:, start:start + M]              # (C, M) f32 shifted tap
                if off == 0:
                    tap = raw.astype(jnp.bfloat16)          # centre tap: mask is all-ones
                else:
                    # Mask off positions whose neighbour falls in the zero padding
                    # (also kills any cross-image leakage of the flat shift).
                    tap = (raw * mask_ref[t]).astype(jnp.bfloat16)
                d = jnp.dot(w_ref[t], tap, preferred_element_type=jnp.float32)
                y = d if y is None else y + d
                t += 1
        return y

    for l in range(num_bn):
        w_ref, g_ref, b_ref = blk[3 * l], blk[3 * l + 1], blk[3 * l + 2]
        # Conv bias intentionally skipped: BatchNorm(y + b) == BatchNorm(y) exactly.
        yl = conv3x3(w_ref)                                   # (C, M) f32

        # Training-mode BatchNorm2d, two-pass centered biased variance, all f32.
        # TODO(synk): running_mean / running_var momentum updates are not modeled.
        mean = jnp.sum(yl, axis=1, keepdims=True) * inv_m     # lane reduction (XLU)
        cen = yl - mean
        var = jnp.sum(cen * cen, axis=1, keepdims=True) * inv_m
        # Zero-padded output channels have var==0; their gamma is zero-padded, so
        # scale == 0 masks the rsqrt(eps) blow-up and they stay exactly 0.
        scale = g_ref[...] * jax.lax.rsqrt(var + BN_EPS)       # (C, 1)
        z = cen * scale + b_ref[...]
        z = jnp.maximum(z, LRELU_SLOPE * z)                    # LeakyReLU(0.2)

        buf[:, GUARD:GUARD + M] = z                            # lane-aligned dense write-back

    # Tail: plain conv with bias, no BN / activation.  Lane-dense (CT, M) store.
    yt = conv3x3(wt_ref) + bt_ref[...]                         # (CTP, M) f32
    o_ref[...] = yt[:o_ref.shape[0], :]


def wdiscriminator_forward(x_nchw, params):
    """Wrapper: pure layout glue (transpose/pad/reshape) + one pallas_call."""
    N, Cin, H, W = x_nchw.shape
    blocks = params["blocks"]
    tail = params["tail"]
    num_bn = len(blocks)
    M = N * H * W

    # Common channel width so every layer shares the same (C, M) activation buffer.
    chans = [Cin, tail["w"].shape[1]]
    for b in blocks:
        chans += [b["w"].shape[0], b["w"].shape[1]]
    C = ((max(chans) + 7) // 8) * 8

    cout_t = tail["w"].shape[0]                       # 1
    cout_t_pad = ((max(cout_t, 8) + 7) // 8) * 8      # 8

    def prep_w(w_oihw, cout_pad):
        co, ci, kh, kw = w_oihw.shape
        # OIHW -> (tap, Cout, Cin); tap order (dy, dx) matches the kernel loop.
        w9 = jnp.transpose(w_oihw, (2, 3, 0, 1)).reshape(kh * kw, co, ci)
        w9 = jnp.pad(w9, ((0, 0), (0, cout_pad - co), (0, C - ci)))
        return w9.astype(jnp.bfloat16)

    def prep_vec(v, n_pad):
        # NOTE: MUST zero-pad (not ones) -- padded gamma==0 keeps padded channels 0.
        return jnp.pad(v, (0, n_pad - v.shape[0])).reshape(n_pad, 1).astype(jnp.float32)

    # Precomputed per-tap validity masks ("same" zero padding), constants.
    m_idx = np.arange(M)
    yy = (m_idx // W) % H
    xx = m_idx % W
    masks = np.zeros((KER * KER, 1, M), np.float32)
    t = 0
    for ry in (-1, 0, 1):
        for rx in (-1, 0, 1):
            valid = (yy + ry >= 0) & (yy + ry < H) & (xx + rx >= 0) & (xx + rx < W)
            masks[t, 0, :] = valid.astype(np.float32)
            t += 1

    # NCHW -> (C, M) with M flattened as (n, y, x); pad channels to C.
    x_cm = jnp.transpose(x_nchw, (1, 0, 2, 3)).reshape(Cin, M)
    x_cm = jnp.pad(x_cm, ((0, C - Cin), (0, 0))).astype(jnp.float32)

    inputs = [jnp.asarray(masks), x_cm]
    for b in blocks:
        inputs.append(prep_w(b["w"], C))
        inputs.append(prep_vec(b["gamma"], C))
        inputs.append(prep_vec(b["beta"], C))
    inputs.append(prep_w(tail["w"], cout_t_pad))
    inputs.append(prep_vec(tail["b"], cout_t_pad))

    kernel = functools.partial(_wdisc_kernel, num_bn=num_bn, W=W)
    vmem = pl.BlockSpec(memory_space=pltpu.MemorySpace.VMEM)

    out_cm = pl.pallas_call(
        kernel,
        out_shape=jax.ShapeDtypeStruct((cout_t, M), jnp.float32),
        in_specs=[vmem] * len(inputs),
        out_specs=vmem,
        scratch_shapes=[
            pltpu.VMEM((C, GUARD + M + GUARD), jnp.float32),   # guarded activation buffer
        ],
        compiler_params=pltpu.CompilerParams(
            # Right-sized: true resident footprint is < 1 MiB after tile padding.
            vmem_limit_bytes=4 * 1024 * 1024,
        ),
    )(*inputs)

    # (Cout_t, N*H*W) -> NCHW
    return out_cm.reshape(cout_t, N, H, W).transpose(1, 0, 2, 3)


def init_params(key, *, nc_im=3, nfc=32, min_nfc=32, num_layer=5):
    """Deterministic synthetic parameters matching WDiscriminator.__init__ shapes (OIHW)."""
    params = {"blocks": []}

    def conv_params(k, cin, cout):
        kw_, kb_ = jax.random.split(k)
        w = jax.random.normal(kw_, (cout, cin, KER, KER), jnp.float32) * 0.05
        b = jax.random.normal(kb_, (cout,), jnp.float32) * 0.05
        return w, b

    # head: nc_im -> nfc
    key, k = jax.random.split(key)
    w, b = conv_params(k, nc_im, nfc)
    params["blocks"].append(
        {"w": w, "b": b, "gamma": jnp.ones((nfc,), jnp.float32),
         "beta": jnp.zeros((nfc,), jnp.float32)})

    # body: num_layer - 2 blocks
    N = nfc
    for i in range(num_layer - 2):
        N = int(nfc / (2 ** (i + 1)))
        cin = max(2 * N, min_nfc)
        cout = max(N, min_nfc)
        key, k = jax.random.split(key)
        w, b = conv_params(k, cin, cout)
        params["blocks"].append(
            {"w": w, "b": b, "gamma": jnp.ones((cout,), jnp.float32),
             "beta": jnp.zeros((cout,), jnp.float32)})

    # tail: max(N, min_nfc) -> 1
    key, k = jax.random.split(key)
    w, b = conv_params(k, max(N, min_nfc), 1)
    params["tail"] = {"w": w, "b": b}
    return params


def _ref_forward(x, params):
    """Plain-JAX f32 NCHW reference (includes the conv bias the kernel provably skips)."""
    def conv(x, w, b):
        y = jax.lax.conv_general_dilated(
            x, w, window_strides=(1, 1),
            padding=((PAD, PAD), (PAD, PAD)),
            dimension_numbers=("NCHW", "OIHW", "NCHW"))
        return y + b.reshape(1, -1, 1, 1)

    for p in params["blocks"]:
        y = conv(x, p["w"], p["b"])
        mean = jnp.mean(y, axis=(0, 2, 3), keepdims=True)
        var = jnp.mean((y - mean) ** 2, axis=(0, 2, 3), keepdims=True)
        y = ((y - mean) * jax.lax.rsqrt(var + BN_EPS)
             * p["gamma"].reshape(1, -1, 1, 1) + p["beta"].reshape(1, -1, 1, 1))
        x = jnp.where(y >= 0, y, LRELU_SLOPE * y)
    t = params["tail"]
    return conv(x, t["w"], t["b"])


if __name__ == "__main__":
    key = jax.random.PRNGKey(0)
    kx, kp = jax.random.split(key)

    # NCHW input, matching the PyTorch module: (N=2, C=3, H=16, W=16)
    x = jax.random.normal(kx, (2, 3, 16, 16), jnp.float32)
    params = init_params(kp, nc_im=3, nfc=32, min_nfc=32, num_layer=5)

    fwd = jax.jit(wdiscriminator_forward)
    out = jax.block_until_ready(fwd(x, params))
    assert out.shape == (2, 1, 16, 16), out.shape

    ref = jax.block_until_ready(_ref_forward(x, params))
    # Tolerance accounts for bf16 MXU operands; BN renormalizes each layer, so the
    # deviation stays ~1% of the unit-scale activations.
    if not jnp.allclose(out, ref, rtol=5e-2, atol=5e-2):
        raise AssertionError("Pallas output mismatch vs JAX reference")

    print("KERNEL_OK")
</pallas_src>

<mosaic_0001>
module attributes {stable_mosaic.version = 11 : i64} {
  func.func @_wdisc_kernel(%arg0: memref<9x1x512xf32, #tpu.memory_space<vmem>>, %arg1: memref<32x512xf32, #tpu.memory_space<vmem>>, %arg2: memref<9x32x32xbf16, #tpu.memory_space<vmem>>, %arg3: memref<32x1xf32, #tpu.memory_space<vmem>>, %arg4: memref<32x1xf32, #tpu.memory_space<vmem>>, %arg5: memref<9x32x32xbf16, #tpu.memory_space<vmem>>, %arg6: memref<32x1xf32, #tpu.memory_space<vmem>>, %arg7: memref<32x1xf32, #tpu.memory_space<vmem>>, %arg8: memref<9x32x32xbf16, #tpu.memory_space<vmem>>, %arg9: memref<32x1xf32, #tpu.memory_space<vmem>>, %arg10: memref<32x1xf32, #tpu.memory_space<vmem>>, %arg11: memref<9x32x32xbf16, #tpu.memory_space<vmem>>, %arg12: memref<32x1xf32, #tpu.memory_space<vmem>>, %arg13: memref<32x1xf32, #tpu.memory_space<vmem>>, %arg14: memref<9x8x32xbf16, #tpu.memory_space<vmem>>, %arg15: memref<8x1xf32, #tpu.memory_space<vmem>>, %arg16: memref<1x512xf32, #tpu.memory_space<vmem>>, %arg17: memref<32x768xf32, #tpu.memory_space<vmem>>) attributes {dimension_semantics = [], scalar_prefetch = 0 : i64, scratch_operands = 1 : i64, tpu.core_type = #tpu.core_type<tc>} {
    %cst = arith.constant 0.000000e+00 : f32
    %0 = vector.broadcast %cst : f32 to vector<32x128xf32>
    %c0 = arith.constant 0 : index
    %c0_0 = arith.constant 0 : index
    %1 = vector.load %arg17[%c0, %c0_0] : memref<32x768xf32, #tpu.memory_space<vmem>>, vector<32x128xf32>
    tpu.vector_store %arg17[%c0, %c0_0], %0 {strides = array<i32>} : memref<32x768xf32, #tpu.memory_space<vmem>>, vector<32x128xf32>,
    %cst_1 = arith.constant 0.000000e+00 : f32
    %2 = vector.broadcast %cst_1 : f32 to vector<32x128xf32>
    %c0_2 = arith.constant 0 : index
    %c640 = arith.constant 640 : index
    %3 = vector.load %arg17[%c0_2, %c640] : memref<32x768xf32, #tpu.memory_space<vmem>>, vector<32x128xf32>
    tpu.vector_store %arg17[%c0_2, %c640], %2 {strides = array<i32>} : memref<32x768xf32, #tpu.memory_space<vmem>>, vector<32x128xf32>,
    %c0_3 = arith.constant 0 : index
    %c0_4 = arith.constant 0 : index
    %4 = vector.load %arg1[%c0_3, %c0_4] : memref<32x512xf32, #tpu.memory_space<vmem>>, vector<32x512xf32>
    %c0_5 = arith.constant 0 : index
    %c128 = arith.constant 128 : index
    %5 = vector.load %arg17[%c0_5, %c128] : memref<32x768xf32, #tpu.memory_space<vmem>>, vector<32x512xf32>
    tpu.vector_store %arg17[%c0_5, %c128], %4 {strides = array<i32>} : memref<32x768xf32, #tpu.memory_space<vmem>>, vector<32x512xf32>,
    %c0_6 = arith.constant 0 : index
    %c111 = arith.constant 111 : index
    %6 = vector.load %arg17[%c0_6, %c111] : memref<32x768xf32, #tpu.memory_space<vmem>>, vector<32x512xf32>
    %c0_7 = arith.constant 0 : index
    %c0_8 = arith.constant 0 : index
    %c0_9 = arith.constant 0 : index
    %7 = vector.load %arg0[%c0_7, %c0_8, %c0_9] : memref<9x1x512xf32, #tpu.memory_space<vmem>>, vector<1x1x512xf32>
    %8 = vector.shape_cast %7 : vector<1x1x512xf32> to vector<1x512xf32>
    %9 = vector.broadcast %8 : vector<1x512xf32> to vector<32x512xf32>
    %10 = arith.mulf %6, %9 : vector<32x512xf32>
    %11 = arith.truncf %10 : vector<32x512xf32> to vector<32x512xbf16>
    %c0_10 = arith.constant 0 : index
    %c0_11 = arith.constant 0 : index
    %c0_12 = arith.constant 0 : index
    %12 = vector.load %arg2[%c0_10, %c0_11, %c0_12] : memref<9x32x32xbf16, #tpu.memory_space<vmem>>, vector<1x32x32xbf16>
    %13 = vector.shape_cast %12 : vector<1x32x32xbf16> to vector<32x32xbf16>
    %cst_13 = arith.constant dense<0.000000e+00> : vector<32x512xf32>
    %14 = tpu.matmul %13, %11, %cst_13 {dimension_numbers = #tpu.dot_dimension_numbers<[1], [0], [0], [1], [0, 0, 1, 1], [], []>} : vector<32x32xbf16>, vector<32x512xbf16>, vector<32x512xf32> -> vector<32x512xf32>
    %c0_14 = arith.constant 0 : index
    %c112 = arith.constant 112 : index
    %15 = vector.load %arg17[%c0_14, %c112] : memref<32x768xf32, #tpu.memory_space<vmem>>, vector<32x512xf32>
    %c1 = arith.constant 1 : index
    %c0_15 = arith.constant 0 : index
    %c0_16 = arith.constant 0 : index
    %16 = vector.load %arg0[%c1, %c0_15, %c0_16] : memref<9x1x512xf32, #tpu.memory_space<vmem>>, vector<1x1x512xf32>
    %17 = vector.shape_cast %16 : vector<1x1x512xf32> to vector<1x512xf32>
    %18 = vector.broadcast %17 : vector<1x512xf32> to vector<32x512xf32>
    %19 = arith.mulf %15, %18 : vector<32x512xf32>
    %20 = arith.truncf %19 : vector<32x512xf32> to vector<32x512xbf16>
    %c1_17 = arith.constant 1 : index
    %c0_18 = arith.constant 0 : index
    %c0_19 = arith.constant 0 : index
    %21 = vector.load %arg2[%c1_17, %c0_18, %c0_19] : memref<9x32x32xbf16, #tpu.memory_space<vmem>>, vector<1x32x32xbf16>
    %22 = vector.shape_cast %21 : vector<1x32x32xbf16> to vector<32x32xbf16>
    %cst_20 = arith.constant dense<0.000000e+00> : vector<32x512xf32>
    %23 = tpu.matmul %22, %20, %cst_20 {dimension_numbers = #tpu.dot_dimension_numbers<[1], [0], [0], [1], [0, 0, 1, 1], [], []>} : vector<32x32xbf16>, vector<32x512xbf16>, vector<32x512xf32> -> vector<32x512xf32>
    %24 = arith.addf %14, %23 : vector<32x512xf32>
    %c0_21 = arith.constant 0 : index
    %c113 = arith.constant 113 : index
    %25 = vector.load %arg17[%c0_21, %c113] : memref<32x768xf32, #tpu.memory_space<vmem>>, vector<32x512xf32>
    %c2 = arith.constant 2 : index
    %c0_22 = arith.constant 0 : index
    %c0_23 = arith.constant 0 : index
    %26 = vector.load %arg0[%c2, %c0_22, %c0_23] : memref<9x1x512xf32, #tpu.memory_space<vmem>>, vector<1x1x512xf32>
    %27 = vector.shape_cast %26 : vector<1x1x512xf32> to vector<1x512xf32>
    %28 = vector.broadcast %27 : vector<1x512xf32> to vector<32x512xf32>
    %29 = arith.mulf %25, %28 : vector<32x512xf32>
    %30 = arith.truncf %29 : vector<32x512xf32> to vector<32x512xbf16>
    %c2_24 = arith.constant 2 : index
    %c0_25 = arith.constant 0 : index
    %c0_26 = arith.constant 0 : index
    %31 = vector.load %arg2[%c2_24, %c0_25, %c0_26] : memref<9x32x32xbf16, #tpu.memory_space<vmem>>, vector<1x32x32xbf16>
    %32 = vector.shape_cast %31 : vector<1x32x32xbf16> to vector<32x32xbf16>
    %cst_27 = arith.constant dense<0.000000e+00> : vector<32x512xf32>
    %33 = tpu.matmul %32, %30, %cst_27 {dimension_numbers = #tpu.dot_dimension_numbers<[1], [0], [0], [1], [0, 0, 1, 1], [], []>} : vector<32x32xbf16>, vector<32x512xbf16>, vector<32x512xf32> -> vector<32x512xf32>
    %34 = arith.addf %24, %33 : vector<32x512xf32>
    %c0_28 = arith.constant 0 : index
    %c127 = arith.constant 127 : index
    %35 = vector.load %arg17[%c0_28, %c127] : memref<32x768xf32, #tpu.memory_space<vmem>>, vector<32x512xf32>
    %c3 = arith.constant 3 : index
    %c0_29 = arith.constant 0 : index
    %c0_30 = arith.constant 0 : index
    %36 = vector.load %arg0[%c3, %c0_29, %c0_30] : memref<9x1x512xf32, #tpu.memory_space<vmem>>, vector<1x1x512xf32>
    %37 = vector.shape_cast %36 : vector<1x1x512xf32> to vector<1x512xf32>
    %38 = vector.broadcast %37 : vector<1x512xf32> to vector<32x512xf32>
    %39 = arith.mulf %35, %38 : vector<32x512xf32>
    %40 = arith.truncf %39 : vector<32x512xf32> to vector<32x512xbf16>
    %c3_31 = arith.constant 3 : index
    %c0_32 = arith.constant 0 : index
    %c0_33 = arith.constant 0 : index
    %41 = vector.load %arg2[%c3_31, %c0_32, %c0_33] : memref<9x32x32xbf16, #tpu.memory_space<vmem>>, vector<1x32x32xbf16>
    %42 = vector.shape_cast %41 : vector<1x32x32xbf16> to vector<32x32xbf16>
    %cst_34 = arith.constant dense<0.000000e+00> : vector<32x512xf32>
    %43 = tpu.matmul %42, %40, %cst_34 {dimension_numbers = #tpu.dot_dimension_numbers<[1], [0], [0], [1], [0, 0, 1, 1], [], []>} : vector<32x32xbf16>, vector<32x512xbf16>, vector<32x512xf32> -> vector<32x512xf32>
    %44 = arith.addf %34, %43 : vector<32x512xf32>
    %c0_35 = arith.constant 0 : index
    %c128_36 = arith.constant 128 : index
    %45 = vector.load %arg17[%c0_35, %c128_36] : memref<32x768xf32, #tpu.memory_space<vmem>>, vector<32x512xf32>
    %46 = arith.truncf %45 : vector<32x512xf32> to vector<32x512xbf16>
    %c4 = arith.constant 4 : index
    %c0_37 = arith.constant 0 : index
    %c0_38 = arith.constant 0 : index
    %47 = vector.load %arg2[%c4, %c0_37, %c0_38] : memref<9x32x32xbf16, #tpu.memory_space<vmem>>, vector<1x32x32xbf16>
    %48 = vector.shape_cast %47 : vector<1x32x32xbf16> to vector<32x32xbf16>
    %cst_39 = arith.constant dense<0.000000e+00> : vector<32x512xf32>
    %49 = tpu.matmul %48, %46, %cst_39 {dimension_numbers = #tpu.dot_dimension_numbers<[1], [0], [0], [1], [0, 0, 1, 1], [], []>} : vector<32x32xbf16>, vector<32x512xbf16>, vector<32x512xf32> -> vector<32x512xf32>
    %50 = arith.addf %44, %49 : vector<32x512xf32>
    %c0_40 = arith.constant 0 : index
    %c129 = arith.constant 129 : index
    %51 = vector.load %arg17[%c0_40, %c129] : memref<32x768xf32, #tpu.memory_space<vmem>>, vector<32x512xf32>
    %c5 = arith.constant 5 : index
    %c0_41 = arith.constant 0 : index
    %c0_42 = arith.constant 0 : index
    %52 = vector.load %arg0[%c5, %c0_41, %c0_42] : memref<9x1x512xf32, #tpu.memory_space<vmem>>, vector<1x1x512xf32>
    %53 = vector.shape_cast %52 : vector<1x1x512xf32> to vector<1x512xf32>
    %54 = vector.broadcast %53 : vector<1x512xf32> to vector<32x512xf32>
    %55 = arith.mulf %51, %54 : vector<32x512xf32>
    %56 = arith.truncf %55 : vector<32x512xf32> to vector<32x512xbf16>
    %c5_43 = arith.constant 5 : index
    %c0_44 = arith.constant 0 : index
    %c0_45 = arith.constant 0 : index
    %57 = vector.load %arg2[%c5_43, %c0_44, %c0_45] : memref<9x32x32xbf16, #tpu.memory_space<vmem>>, vector<1x32x32xbf16>
    %58 = vector.shape_cast %57 : vector<1x32x32xbf16> to vector<32x32xbf16>
    %cst_46 = arith.constant dense<0.000000e+00> : vector<32x512xf32>
    %59 = tpu.matmul %58, %56, %cst_46 {dimension_numbers = #tpu.dot_dimension_numbers<[1], [0], [0], [1], [0, 0, 1, 1], [], []>} : vector<32x32xbf16>, vector<32x512xbf16>, vector<32x512xf32> -> vector<32x512xf32>
    %60 = arith.addf %50, %59 : vector<32x512xf32>
    %c0_47 = arith.constant 0 : index
    %c143 = arith.constant 143 : index
    %61 = vector.load %arg17[%c0_47, %c143] : memref<32x768xf32, #tpu.memory_space<vmem>>, vector<32x512xf32>
    %c6 = arith.constant 6 : index
    %c0_48 = arith.constant 0 : index
    %c0_49 = arith.constant 0 : index
    %62 = vector.load %arg0[%c6, %c0_48, %c0_49] : memref<9x1x512xf32, #tpu.memory_space<vmem>>, vector<1x1x512xf32>
    %63 = vector.shape_cast %62 : vector<1x1x512xf32> to vector<1x512xf32>
    %64 = vector.broadcast %63 : vector<1x512xf32> to vector<32x512xf32>
    %65 = arith.mulf %61, %64 : vector<32x512xf32>
    %66 = arith.truncf %65 : vector<32x512xf32> to vector<32x512xbf16>
    %c6_50 = arith.constant 6 : index
    %c0_51 = arith.constant 0 : index
    %c0_52 = arith.constant 0 : index
    %67 = vector.load %arg2[%c6_50, %c0_51, %c0_52] : memref<9x32x32xbf16, #tpu.memory_space<vmem>>, vector<1x32x32xbf16>
    %68 = vector.shape_cast %67 : vector<1x32x32xbf16> to vector<32x32xbf16>
    %cst_53 = arith.constant dense<0.000000e+00> : vector<32x512xf32>
    %69 = tpu.matmul %68, %66, %cst_53 {dimension_numbers = #tpu.dot_dimension_numbers<[1], [0], [0], [1], [0, 0, 1, 1], [], []>} : vector<32x32xbf16>, vector<32x512xbf16>, vector<32x512xf32> -> vector<32x512xf32>
    %70 = arith.addf %60, %69 : vector<32x512xf32>
    %c0_54 = arith.constant 0 : index
    %c144 = arith.constant 144 : index
    %71 = vector.load %arg17[%c0_54, %c144] : memref<32x768xf32, #tpu.memory_space<vmem>>, vector<32x512xf32>
    %c7 = arith.constant 7 : index
    %c0_55 = arith.constant 0 : index
    %c0_56 = arith.constant 0 : index
    %72 = vector.load %arg0[%c7, %c0_55, %c0_56] : memref<9x1x512xf32, #tpu.memory_space<vmem>>, vector<1x1x512xf32>
    %73 = vector.shape_cast %72 : vector<1x1x512xf32> to vector<1x512xf32>
    %74 = vector.broadcast %73 : vector<1x512xf32> to vector<32x512xf32>
    %75 = arith.mulf %71, %74 : vector<32x512xf32>
    %76 = arith.truncf %75 : vector<32x512xf32> to vector<32x512xbf16>
    %c7_57 = arith.constant 7 : index
    %c0_58 = arith.constant 0 : index
    %c0_59 = arith.constant 0 : index
    %77 = vector.load %arg2[%c7_57, %c0_58, %c0_59] : memref<9x32x32xbf16, #tpu.memory_space<vmem>>, vector<1x32x32xbf16>
    %78 = vector.shape_cast %77 : vector<1x32x32xbf16> to vector<32x32xbf16>
    %cst_60 = arith.constant dense<0.000000e+00> : vector<32x512xf32>
    %79 = tpu.matmul %78, %76, %cst_60 {dimension_numbers = #tpu.dot_dimension_numbers<[1], [0], [0], [1], [0, 0, 1, 1], [], []>} : vector<32x32xbf16>, vector<32x512xbf16>, vector<32x512xf32> -> vector<32x512xf32>
    %80 = arith.addf %70, %79 : vector<32x512xf32>
    %c0_61 = arith.constant 0 : index
    %c145 = arith.constant 145 : index
    %81 = vector.load %arg17[%c0_61, %c145] : memref<32x768xf32, #tpu.memory_space<vmem>>, vector<32x512xf32>
    %c8 = arith.constant 8 : index
    %c0_62 = arith.constant 0 : index
    %c0_63 = arith.constant 0 : index
    %82 = vector.load %arg0[%c8, %c0_62, %c0_63] : memref<9x1x512xf32, #tpu.memory_space<vmem>>, vector<1x1x512xf32>
    %83 = vector.shape_cast %82 : vector<1x1x512xf32> to vector<1x512xf32>
    %84 = vector.broadcast %83 : vector<1x512xf32> to vector<32x512xf32>
    %85 = arith.mulf %81, %84 : vector<32x512xf32>
    %86 = arith.truncf %85 : vector<32x512xf32> to vector<32x512xbf16>
    %c8_64 = arith.constant 8 : index
    %c0_65 = arith.constant 0 : index
    %c0_66 = arith.constant 0 : index
    %87 = vector.load %arg2[%c8_64, %c0_65, %c0_66] : memref<9x32x32xbf16, #tpu.memory_space<vmem>>, vector<1x32x32xbf16>
    %88 = vector.shape_cast %87 : vector<1x32x32xbf16> to vector<32x32xbf16>
    %cst_67 = arith.constant dense<0.000000e+00> : vector<32x512xf32>
    %89 = tpu.matmul %88, %86, %cst_67 {dimension_numbers = #tpu.dot_dimension_numbers<[1], [0], [0], [1], [0, 0, 1, 1], [], []>} : vector<32x32xbf16>, vector<32x512xbf16>, vector<32x512xf32> -> vector<32x512xf32>
    %90 = arith.addf %80, %89 : vector<32x512xf32>
    %cst_68 = arith.constant dense<0.000000e+00> : vector<32xf32>
    %91 = vector.multi_reduction <add>, %90, %cst_68 [1] : vector<32x512xf32> to vector<32xf32>
    %92 = vector.shape_cast %91 : vector<32xf32> to vector<32x1xf32>
    %cst_69 = arith.constant 0.001953125 : f32
    %93 = vector.broadcast %cst_69 : f32 to vector<32x1xf32>
    %94 = arith.mulf %92, %93 : vector<32x1xf32>
    %95 = vector.broadcast %94 : vector<32x1xf32> to vector<32x512xf32>
    %96 = arith.subf %90, %95 : vector<32x512xf32>
    %97 = arith.mulf %96, %96 : vector<32x512xf32>
    %cst_70 = arith.constant dense<0.000000e+00> : vector<32xf32>
    %98 = vector.multi_reduction <add>, %97, %cst_70 [1] : vector<32x512xf32> to vector<32xf32>
    %99 = vector.shape_cast %98 : vector<32xf32> to vector<32x1xf32>
    %cst_71 = arith.constant 0.001953125 : f32
    %100 = vector.broadcast %cst_71 : f32 to vector<32x1xf32>
    %101 = arith.mulf %99, %100 : vector<32x1xf32>
    %c0_72 = arith.constant 0 : index
    %c0_73 = arith.constant 0 : index
    %102 = vector.load %arg3[%c0_72, %c0_73] : memref<32x1xf32, #tpu.memory_space<vmem>>, vector<32x1xf32>
    %cst_74 = arith.constant 9.99999974E-6 : f32
    %103 = vector.broadcast %cst_74 : f32 to vector<32x1xf32>
    %104 = arith.addf %101, %103 : vector<32x1xf32>
    %105 = math.rsqrt %104 : vector<32x1xf32>
    %106 = arith.mulf %102, %105 : vector<32x1xf32>
    %107 = vector.broadcast %106 : vector<32x1xf32> to vector<32x512xf32>
    %108 = arith.mulf %96, %107 : vector<32x512xf32>
    %c0_75 = arith.constant 0 : index
    %c0_76 = arith.constant 0 : index
    %109 = vector.load %arg4[%c0_75, %c0_76] : memref<32x1xf32, #tpu.memory_space<vmem>>, vector<32x1xf32>
    %110 = vector.broadcast %109 : vector<32x1xf32> to vector<32x512xf32>
    %111 = arith.addf %108, %110 : vector<32x512xf32>
    %cst_77 = arith.constant 2.000000e-01 : f32
    %112 = vector.broadcast %cst_77 : f32 to vector<32x512xf32>
    %113 = arith.mulf %112, %111 : vector<32x512xf32>
    %114 = arith.maximumf %111, %113 : vector<32x512xf32>
    %c0_78 = arith.constant 0 : index
    %c128_79 = arith.constant 128 : index
    %115 = vector.load %arg17[%c0_78, %c128_79] : memref<32x768xf32, #tpu.memory_space<vmem>>, vector<32x512xf32>
    tpu.vector_store %arg17[%c0_78, %c128_79], %114 {strides = array<i32>} : memref<32x768xf32, #tpu.memory_space<vmem>>, vector<32x512xf32>,
    %c0_80 = arith.constant 0 : index
    %c111_81 = arith.constant 111 : index
    %116 = vector.load %arg17[%c0_80, %c111_81] : memref<32x768xf32, #tpu.memory_space<vmem>>, vector<32x512xf32>
    %c0_82 = arith.constant 0 : index
    %c0_83 = arith.constant 0 : index
    %c0_84 = arith.constant 0 : index
    %117 = vector.load %arg0[%c0_82, %c0_83, %c0_84] : memref<9x1x512xf32, #tpu.memory_space<vmem>>, vector<1x1x512xf32>
    %118 = vector.shape_cast %117 : vector<1x1x512xf32> to vector<1x512xf32>
    %119 = vector.broadcast %118 : vector<1x512xf32> to vector<32x512xf32>
    %120 = arith.mulf %116, %119 : vector<32x512xf32>
    %121 = arith.truncf %120 : vector<32x512xf32> to vector<32x512xbf16>
    %c0_85 = arith.constant 0 : index
    %c0_86 = arith.constant 0 : index
    %c0_87 = arith.constant 0 : index
    %122 = vector.load %arg5[%c0_85, %c0_86, %c0_87] : memref<9x32x32xbf16, #tpu.memory_space<vmem>>, vector<1x32x32xbf16>
    %123 = vector.shape_cast %122 : vector<1x32x32xbf16> to vector<32x32xbf16>
    %cst_88 = arith.constant dense<0.000000e+00> : vector<32x512xf32>
    %124 = tpu.matmul %123, %121, %cst_88 {dimension_numbers = #tpu.dot_dimension_numbers<[1], [0], [0], [1], [0, 0, 1, 1], [], []>} : vector<32x32xbf16>, vector<32x512xbf16>, vector<32x512xf32> -> vector<32x512xf32>
    %c0_89 = arith.constant 0 : index
    %c112_90 = arith.constant 112 : index
    %125 = vector.load %arg17[%c0_89, %c112_90] : memref<32x768xf32, #tpu.memory_space<vmem>>, vector<32x512xf32>
    %c1_91 = arith.constant 1 : index
    %c0_92 = arith.constant 0 : index
    %c0_93 = arith.constant 0 : index
    %126 = vector.load %arg0[%c1_91, %c0_92, %c0_93] : memref<9x1x512xf32, #tpu.memory_space<vmem>>, vector<1x1x512xf32>
    %127 = vector.shape_cast %126 : vector<1x1x512xf32> to vector<1x512xf32>
    %128 = vector.broadcast %127 : vector<1x512xf32> to vector<32x512xf32>
    %129 = arith.mulf %125, %128 : vector<32x512xf32>
    %130 = arith.truncf %129 : vector<32x512xf32> to vector<32x512xbf16>
    %c1_94 = arith.constant 1 : index
    %c0_95 = arith.constant 0 : index
    %c0_96 = arith.constant 0 : index
    %131 = vector.load %arg5[%c1_94, %c0_95, %c0_96] : memref<9x32x32xbf16, #tpu.memory_space<vmem>>, vector<1x32x32xbf16>
    %132 = vector.shape_cast %131 : vector<1x32x32xbf16> to vector<32x32xbf16>
    %cst_97 = arith.constant dense<0.000000e+00> : vector<32x512xf32>
    %133 = tpu.matmul %132, %130, %cst_97 {dimension_numbers = #tpu.dot_dimension_numbers<[1], [0], [0], [1], [0, 0, 1, 1], [], []>} : vector<32x32xbf16>, vector<32x512xbf16>, vector<32x512xf32> -> vector<32x512xf32>
    %134 = arith.addf %124, %133 : vector<32x512xf32>
    %c0_98 = arith.constant 0 : index
    %c113_99 = arith.constant 113 : index
    %135 = vector.load %arg17[%c0_98, %c113_99] : memref<32x768xf32, #tpu.memory_space<vmem>>, vector<32x512xf32>
    %c2_100 = arith.constant 2 : index
    %c0_101 = arith.constant 0 : index
    %c0_102 = arith.constant 0 : index
    %136 = vector.load %arg0[%c2_100, %c0_101, %c0_102] : memref<9x1x512xf32, #tpu.memory_space<vmem>>, vector<1x1x512xf32>
    %137 = vector.shape_cast %136 : vector<1x1x512xf32> to vector<1x512xf32>
    %138 = vector.broadcast %137 : vector<1x512xf32> to vector<32x512xf32>
    %139 = arith.mulf %135, %138 : vector<32x512xf32>
    %140 = arith.truncf %139 : vector<32x512xf32> to vector<32x512xbf16>
    %c2_103 = arith.constant 2 : index
    %c0_104 = arith.constant 0 : index
    %c0_105 = arith.constant 0 : index
    %141 = vector.load %arg5[%c2_103, %c0_104, %c0_105] : memref<9x32x32xbf16, #tpu.memory_space<vmem>>, vector<1x32x32xbf16>
    %142 = vector.shape_cast %141 : vector<1x32x32xbf16> to vector<32x32xbf16>
    %cst_106 = arith.constant dense<0.000000e+00> : vector<32x512xf32>
    %143 = tpu.matmul %142, %140, %cst_106 {dimension_numbers = #tpu.dot_dimension_numbers<[1], [0], [0], [1], [0, 0, 1, 1], [], []>} : vector<32x32xbf16>, vector<32x512xbf16>, vector<32x512xf32> -> vector<32x512xf32>
    %144 = arith.addf %134, %143 : vector<32x512xf32>
    %c0_107 = arith.constant 0 : index
    %c127_108 = arith.constant 127 : index
    %145 = vector.load %arg17[%c0_107, %c127_108] : memref<32x768xf32, #tpu.memory_space<vmem>>, vector<32x512xf32>
    %c3_109 = arith.constant 3 : index
    %c0_110 = arith.constant 0 : index
    %c0_111 = arith.constant 0 : index
    %146 = vector.load %arg0[%c3_109, %c0_110, %c0_111] : memref<9x1x512xf32, #tpu.memory_space<vmem>>, vector<1x1x512xf32>
    %147 = vector.shape_cast %146 : vector<1x1x512xf32> to vector<1x512xf32>
    %148 = vector.broadcast %147 : vector<1x512xf32> to vector<32x512xf32>
    %149 = arith.mulf %145, %148 : vector<32x512xf32>
    %150 = arith.truncf %149 : vector<32x512xf32> to vector<32x512xbf16>
    %c3_112 = arith.constant 3 : index
    %c0_113 = arith.constant 0 : index
    %c0_114 = arith.constant 0 : index
    %151 = vector.load %arg5[%c3_112, %c0_113, %c0_114] : memref<9x32x32xbf16, #tpu.memory_space<vmem>>, vector<1x32x32xbf16>
    %152 = vector.shape_cast %151 : vector<1x32x32xbf16> to vector<32x32xbf16>
    %cst_115 = arith.constant dense<0.000000e+00> : vector<32x512xf32>
    %153 = tpu.matmul %152, %150, %cst_115 {dimension_numbers = #tpu.dot_dimension_numbers<[1], [0], [0], [1], [0, 0, 1, 1], [], []>} : vector<32x32xbf16>, vector<32x512xbf16>, vector<32x512xf32> -> vector<32x512xf32>
    %154 = arith.addf %144, %153 : vector<32x512xf32>
    %c0_116 = arith.constant 0 : index
    %c128_117 = arith.constant 128 : index
    %155 = vector.load %arg17[%c0_116, %c128_117] : memref<32x768xf32, #tpu.memory_space<vmem>>, vector<32x512xf32>
    %156 = arith.truncf %155 : vector<32x512xf32> to vector<32x512xbf16>
    %c4_118 = arith.constant 4 : index
    %c0_119 = arith.constant 0 : index
    %c0_120 = arith.constant 0 : index
    %157 = vector.load %arg5[%c4_118, %c0_119, %c0_120] : memref<9x32x32xbf16, #tpu.memory_space<vmem>>, vector<1x32x32xbf16>
    %158 = vector.shape_cast %157 : vector<1x32x32xbf16> to vector<32x32xbf16>
    %cst_121 = arith.constant dense<0.000000e+00> : vector<32x512xf32>
    %159 = tpu.matmul %158, %156, %cst_121 {dimension_numbers = #tpu.dot_dimension_numbers<[1], [0], [0], [1], [0, 0, 1, 1], [], []>} : vector<32x32xbf16>, vector<32x512xbf16>, vector<32x512xf32> -> vector<32x512xf32>
    %160 = arith.addf %154, %159 : vector<32x512xf32>
    %c0_122 = arith.constant 0 : index
    %c129_123 = arith.constant 129 : index
    %161 = vector.load %arg17[%c0_122, %c129_123] : memref<32x768xf32, #tpu.memory_space<vmem>>, vector<32x512xf32>
    %c5_124 = arith.constant 5 : index
    %c0_125 = arith.constant 0 : index
    %c0_126 = arith.constant 0 : index
    %162 = vector.load %arg0[%c5_124, %c0_125, %c0_126] : memref<9x1x512xf32, #tpu.memory_space<vmem>>, vector<1x1x512xf32>
    %163 = vector.shape_cast %162 : vector<1x1x512xf32> to vector<1x512xf32>
    %164 = vector.broadcast %163 : vector<1x512xf32> to vector<32x512xf32>
    %165 = arith.mulf %161, %164 : vector<32x512xf32>
    %166 = arith.truncf %165 : vector<32x512xf32> to vector<32x512xbf16>
    %c5_127 = arith.constant 5 : index
    %c0_128 = arith.constant 0 : index
    %c0_129 = arith.constant 0 : index
    %167 = vector.load %arg5[%c5_127, %c0_128, %c0_129] : memref<9x32x32xbf16, #tpu.memory_space<vmem>>, vector<1x32x32xbf16>
    %168 = vector.shape_cast %167 : vector<1x32x32xbf16> to vector<32x32xbf16>
    %cst_130 = arith.constant dense<0.000000e+00> : vector<32x512xf32>
    %169 = tpu.matmul %168, %166, %cst_130 {dimension_numbers = #tpu.dot_dimension_numbers<[1], [0], [0], [1], [0, 0, 1, 1], [], []>} : vector<32x32xbf16>, vector<32x512xbf16>, vector<32x512xf32> -> vector<32x512xf32>
    %170 = arith.addf %160, %169 : vector<32x512xf32>
    %c0_131 = arith.constant 0 : index
    %c143_132 = arith.constant 143 : index
    %171 = vector.load %arg17[%c0_131, %c143_132] : memref<32x768xf32, #tpu.memory_space<vmem>>, vector<32x512xf32>
    %c6_133 = arith.constant 6 : index
    %c0_134 = arith.constant 0 : index
    %c0_135 = arith.constant 0 : index
    %172 = vector.load %arg0[%c6_133, %c0_134, %c0_135] : memref<9x1x512xf32, #tpu.memory_space<vmem>>, vector<1x1x512xf32>
    %173 = vector.shape_cast %172 : vector<1x1x512xf32> to vector<1x512xf32>
    %174 = vector.broadcast %173 : vector<1x512xf32> to vector<32x512xf32>
    %175 = arith.mulf %171, %174 : vector<32x512xf32>
    %176 = arith.truncf %175 : vector<32x512xf32> to vector<32x512xbf16>
    %c6_136 = arith.constant 6 : index
    %c0_137 = arith.constant 0 : index
    %c0_138 = arith.constant 0 : index
    %177 = vector.load %arg5[%c6_136, %c0_137, %c0_138] : memref<9x32x32xbf16, #tpu.memory_space<vmem>>, vector<1x32x32xbf16>
    %178 = vector.shape_cast %177 : vector<1x32x32xbf16> to vector<32x32xbf16>
    %cst_139 = arith.constant dense<0.000000e+00> : vector<32x512xf32>
    %179 = tpu.matmul %178, %176, %cst_139 {dimension_numbers = #tpu.dot_dimension_numbers<[1], [0], [0], [1], [0, 0, 1, 1], [], []>} : vector<32x32xbf16>, vector<32x512xbf16>, vector<32x512xf32> -> vector<32x512xf32>
    %180 = arith.addf %170, %179 : vector<32x512xf32>
    %c0_140 = arith.constant 0 : index
    %c144_141 = arith.constant 144 : index
    %181 = vector.load %arg17[%c0_140, %c144_141] : memref<32x768xf32, #tpu.memory_space<vmem>>, vector<32x512xf32>
    %c7_142 = arith.constant 7 : index
    %c0_143 = arith.constant 0 : index
    %c0_144 = arith.constant 0 : index
    %182 = vector.load %arg0[%c7_142, %c0_143, %c0_144] : memref<9x1x512xf32, #tpu.memory_space<vmem>>, vector<1x1x512xf32>
    %183 = vector.shape_cast %182 : vector<1x1x512xf32> to vector<1x512xf32>
    %184 = vector.broadcast %183 : vector<1x512xf32> to vector<32x512xf32>
    %185 = arith.mulf %181, %184 : vector<32x512xf32>
    %186 = arith.truncf %185 : vector<32x512xf32> to vector<32x512xbf16>
    %c7_145 = arith.constant 7 : index
    %c0_146 = arith.constant 0 : index
    %c0_147 = arith.constant 0 : index
    %187 = vector.load %arg5[%c7_145, %c0_146, %c0_147] : memref<9x32x32xbf16, #tpu.memory_space<vmem>>, vector<1x32x32xbf16>
    %188 = vector.shape_cast %187 : vector<1x32x32xbf16> to vector<32x32xbf16>
    %cst_148 = arith.constant dense<0.000000e+00> : vector<32x512xf32>
    %189 = tpu.matmul %188, %186, %cst_148 {dimension_numbers = #tpu.dot_dimension_numbers<[1], [0], [0], [1], [0, 0, 1, 1], [], []>} : vector<32x32xbf16>, vector<32x512xbf16>, vector<32x512xf32> -> vector<32x512xf32>
    %190 = arith.addf %180, %189 : vector<32x512xf32>
    %c0_149 = arith.constant 0 : index
    %c145_150 = arith.constant 145 : index
    %191 = vector.load %arg17[%c0_149, %c145_150] : memref<32x768xf32, #tpu.memory_space<vmem>>, vector<32x512xf32>
    %c8_151 = arith.constant 8 : index
    %c0_152 = arith.constant 0 : index
    %c0_153 = arith.constant 0 : index
    %192 = vector.load %arg0[%c8_151, %c0_152, %c0_153] : memref<9x1x512xf32, #tpu.memory_space<vmem>>, vector<1x1x512xf32>
    %193 = vector.shape_cast %192 : vector<1x1x512xf32> to vector<1x512xf32>
    %194 = vector.broadcast %193 : vector<1x512xf32> to vector<32x512xf32>
    %195 = arith.mulf %191, %194 : vector<32x512xf32>
    %196 = arith.truncf %195 : vector<32x512xf32> to vector<32x512xbf16>
    %c8_154 = arith.constant 8 : index
    %c0_155 = arith.constant 0 : index
    %c0_156 = arith.constant 0 : index
    %197 = vector.load %arg5[%c8_154, %c0_155, %c0_156] : memref<9x32x32xbf16, #tpu.memory_space<vmem>>, vector<1x32x32xbf16>
    %198 = vector.shape_cast %197 : vector<1x32x32xbf16> to vector<32x32xbf16>
    %cst_157 = arith.constant dense<0.000000e+00> : vector<32x512xf32>
    %199 = tpu.matmul %198, %196, %cst_157 {dimension_numbers = #tpu.dot_dimension_numbers<[1], [0], [0], [1], [0, 0, 1, 1], [], []>} : vector<32x32xbf16>, vector<32x512xbf16>, vector<32x512xf32> -> vector<32x512xf32>
    %200 = arith.addf %190, %199 : vector<32x512xf32>
    %cst_158 = arith.constant dense<0.000000e+00> : vector<32xf32>
    %201 = vector.multi_reduction <add>, %200, %cst_158 [1] : vector<32x512xf32> to vector<32xf32>
    %202 = vector.shape_cast %201 : vector<32xf32> to vector<32x1xf32>
    %cst_159 = arith.constant 0.001953125 : f32
    %203 = vector.broadcast %cst_159 : f32 to vector<32x1xf32>
    %204 = arith.mulf %202, %203 : vector<32x1xf32>
    %205 = vector.broadcast %204 : vector<32x1xf32> to vector<32x512xf32>
    %206 = arith.subf %200, %205 : vector<32x512xf32>
    %207 = arith.mulf %206, %206 : vector<32x512xf32>
    %cst_160 = arith.constant dense<0.000000e+00> : vector<32xf32>
    %208 = vector.multi_reduction <add>, %207, %cst_160 [1] : vector<32x512xf32> to vector<32xf32>
    %209 = vector.shape_cast %208 : vector<32xf32> to vector<32x1xf32>
    %cst_161 = arith.constant 0.001953125 : f32
    %210 = vector.broadcast %cst_161 : f32 to vector<32x1xf32>
    %211 = arith.mulf %209, %210 : vector<32x1xf32>
    %c0_162 = arith.constant 0 : index
    %c0_163 = arith.constant 0 : index
    %212 = vector.load %arg6[%c0_162, %c0_163] : memref<32x1xf32, #tpu.memory_space<vmem>>, vector<32x1xf32>
    %cst_164 = arith.constant 9.99999974E-6 : f32
    %213 = vector.broadcast %cst_164 : f32 to vector<32x1xf32>
    %214 = arith.addf %211, %213 : vector<32x1xf32>
    %215 = math.rsqrt %214 : vector<32x1xf32>
    %216 = arith.mulf %212, %215 : vector<32x1xf32>
    %217 = vector.broadcast %216 : vector<32x1xf32> to vector<32x512xf32>
    %218 = arith.mulf %206, %217 : vector<32x512xf32>
    %c0_165 = arith.constant 0 : index
    %c0_166 = arith.constant 0 : index
    %219 = vector.load %arg7[%c0_165, %c0_166] : memref<32x1xf32, #tpu.memory_space<vmem>>, vector<32x1xf32>
    %220 = vector.broadcast %219 : vector<32x1xf32> to vector<32x512xf32>
    %221 = arith.addf %218, %220 : vector<32x512xf32>
    %cst_167 = arith.constant 2.000000e-01 : f32
    %222 = vector.broadcast %cst_167 : f32 to vector<32x512xf32>
    %223 = arith.mulf %222, %221 : vector<32x512xf32>
    %224 = arith.maximumf %221, %223 : vector<32x512xf32>
    %c0_168 = arith.constant 0 : index
    %c128_169 = arith.constant 128 : index
    %225 = vector.load %arg17[%c0_168, %c128_169] : memref<32x768xf32, #tpu.memory_space<vmem>>, vector<32x512xf32>
    tpu.vector_store %arg17[%c0_168, %c128_169], %224 {strides = array<i32>} : memref<32x768xf32, #tpu.memory_space<vmem>>, vector<32x512xf32>,
    %c0_170 = arith.constant 0 : index
    %c111_171 = arith.constant 111 : index
    %226 = vector.load %arg17[%c0_170, %c111_171] : memref<32x768xf32, #tpu.memory_space<vmem>>, vector<32x512xf32>
    %c0_172 = arith.constant 0 : index
    %c0_173 = arith.constant 0 : index
    %c0_174 = arith.constant 0 : index
    %227 = vector.load %arg0[%c0_172, %c0_173, %c0_174] : memref<9x1x512xf32, #tpu.memory_space<vmem>>, vector<1x1x512xf32>
    %228 = vector.shape_cast %227 : vector<1x1x512xf32> to vector<1x512xf32>
    %229 = vector.broadcast %228 : vector<1x512xf32> to vector<32x512xf32>
    %230 = arith.mulf %226, %229 : vector<32x512xf32>
    %231 = arith.truncf %230 : vector<32x512xf32> to vector<32x512xbf16>
    %c0_175 = arith.constant 0 : index
    %c0_176 = arith.constant 0 : index
    %c0_177 = arith.constant 0 : index
    %232 = vector.load %arg8[%c0_175, %c0_176, %c0_177] : memref<9x32x32xbf16, #tpu.memory_space<vmem>>, vector<1x32x32xbf16>
    %233 = vector.shape_cast %232 : vector<1x32x32xbf16> to vector<32x32xbf16>
    %cst_178 = arith.constant dense<0.000000e+00> : vector<32x512xf32>
    %234 = tpu.matmul %233, %231, %cst_178 {dimension_numbers = #tpu.dot_dimension_numbers<[1], [0], [0], [1], [0, 0, 1, 1], [], []>} : vector<32x32xbf16>, vector<32x512xbf16>, vector<32x512xf32> -> vector<32x512xf32>
    %c0_179 = arith.constant 0 : index
    %c112_180 = arith.constant 112 : index
    %235 = vector.load %arg17[%c0_179, %c112_180] : memref<32x768xf32, #tpu.memory_space<vmem>>, vector<32x512xf32>
    %c1_181 = arith.constant 1 : index
    %c0_182 = arith.constant 0 : index
    %c0_183 = arith.constant 0 : index
    %236 = vector.load %arg0[%c1_181, %c0_182, %c0_183] : memref<9x1x512xf32, #tpu.memory_space<vmem>>, vector<1x1x512xf32>
    %237 = vector.shape_cast %236 : vector<1x1x512xf32> to vector<1x512xf32>
    %238 = vector.broadcast %237 : vector<1x512xf32> to vector<32x512xf32>
    %239 = arith.mulf %235, %238 : vector<32x512xf32>
    %240 = arith.truncf %239 : vector<32x512xf32> to vector<32x512xbf16>
    %c1_184 = arith.constant 1 : index
    %c0_185 = arith.constant 0 : index
    %c0_186 = arith.constant 0 : index
    %241 = vector.load %arg8[%c1_184, %c0_185, %c0_186] : memref<9x32x32xbf16, #tpu.memory_space<vmem>>, vector<1x32x32xbf16>
    %242 = vector.shape_cast %241 : vector<1x32x32xbf16> to vector<32x32xbf16>
    %cst_187 = arith.constant dense<0.000000e+00> : vector<32x512xf32>
    %243 = tpu.matmul %242, %240, %cst_187 {dimension_numbers = #tpu.dot_dimension_numbers<[1], [0], [0], [1], [0, 0, 1, 1], [], []>} : vector<32x32xbf16>, vector<32x512xbf16>, vector<32x512xf32> -> vector<32x512xf32>
    %244 = arith.addf %234, %243 : vector<32x512xf32>
    %c0_188 = arith.constant 0 : index
    %c113_189 = arith.constant 113 : index
    %245 = vector.load %arg17[%c0_188, %c113_189] : memref<32x768xf32, #tpu.memory_space<vmem>>, vector<32x512xf32>
    %c2_190 = arith.constant 2 : index
    %c0_191 = arith.constant 0 : index
    %c0_192 = arith.constant 0 : index
    %246 = vector.load %arg0[%c2_190, %c0_191, %c0_192] : memref<9x1x512xf32, #tpu.memory_space<vmem>>, vector<1x1x512xf32>
    %247 = vector.shape_cast %246 : vector<1x1x512xf32> to vector<1x512xf32>
    %248 = vector.broadcast %247 : vector<1x512xf32> to vector<32x512xf32>
    %249 = arith.mulf %245, %248 : vector<32x512xf32>
    %250 = arith.truncf %249 : vector<32x512xf32> to vector<32x512xbf16>
    %c2_193 = arith.constant 2 : index
    %c0_194 = arith.constant 0 : index
    %c0_195 = arith.constant 0 : index
    %251 = vector.load %arg8[%c2_193, %c0_194, %c0_195] : memref<9x32x32xbf16, #tpu.memory_space<vmem>>, vector<1x32x32xbf16>
    %252 = vector.shape_cast %251 : vector<1x32x32xbf16> to vector<32x32xbf16>
    %cst_196 = arith.constant dense<0.000000e+00> : vector<32x512xf32>
    %253 = tpu.matmul %252, %250, %cst_196 {dimension_numbers = #tpu.dot_dimension_numbers<[1], [0], [0], [1], [0, 0, 1, 1], [], []>} : vector<32x32xbf16>, vector<32x512xbf16>, vector<32x512xf32> -> vector<32x512xf32>
    %254 = arith.addf %244, %253 : vector<32x512xf32>
    %c0_197 = arith.constant 0 : index
    %c127_198 = arith.constant 127 : index
    %255 = vector.load %arg17[%c0_197, %c127_198] : memref<32x768xf32, #tpu.memory_space<vmem>>, vector<32x512xf32>
    %c3_199 = arith.constant 3 : index
    %c0_200 = arith.constant 0 : index
    %c0_201 = arith.constant 0 : index
    %256 = vector.load %arg0[%c3_199, %c0_200, %c0_201] : memref<9x1x512xf32, #tpu.memory_space<vmem>>, vector<1x1x512xf32>
    %257 = vector.shape_cast %256 : vector<1x1x512xf32> to vector<1x512xf32>
    %258 = vector.broadcast %257 : vector<1x512xf32> to vector<32x512xf32>
    %259 = arith.mulf %255, %258 : vector<32x512xf32>
    %260 = arith.truncf %259 : vector<32x512xf32> to vector<32x512xbf16>
    %c3_202 = arith.constant 3 : index
    %c0_203 = arith.constant 0 : index
    %c0_204 = arith.constant 0 : index
    %261 = vector.load %arg8[%c3_202, %c0_203, %c0_204] : memref<9x32x32xbf16, #tpu.memory_space<vmem>>, vector<1x32x32xbf16>
    %262 = vector.shape_cast %261 : vector<1x32x32xbf16> to vector<32x32xbf16>
    %cst_205 = arith.constant dense<0.000000e+00> : vector<32x512xf32>
    %263 = tpu.matmul %262, %260, %cst_205 {dimension_numbers = #tpu.dot_dimension_numbers<[1], [0], [0], [1], [0, 0, 1, 1], [], []>} : vector<32x32xbf16>, vector<32x512xbf16>, vector<32x512xf32> -> vector<32x512xf32>
    %264 = arith.addf %254, %263 : vector<32x512xf32>
    %c0_206 = arith.constant 0 : index
    %c128_207 = arith.constant 128 : index
    %265 = vector.load %arg17[%c0_206, %c128_207] : memref<32x768xf32, #tpu.memory_space<vmem>>, vector<32x512xf32>
    %266 = arith.truncf %265 : vector<32x512xf32> to vector<32x512xbf16>
    %c4_208 = arith.constant 4 : index
    %c0_209 = arith.constant 0 : index
    %c0_210 = arith.constant 0 : index
    %267 = vector.load %arg8[%c4_208, %c0_209, %c0_210] : memref<9x32x32xbf16, #tpu.memory_space<vmem>>, vector<1x32x32xbf16>
    %268 = vector.shape_cast %267 : vector<1x32x32xbf16> to vector<32x32xbf16>
    %cst_211 = arith.constant dense<0.000000e+00> : vector<32x512xf32>
    %269 = tpu.matmul %268, %266, %cst_211 {dimension_numbers = #tpu.dot_dimension_numbers<[1], [0], [0], [1], [0, 0, 1, 1], [], []>} : vector<32x32xbf16>, vector<32x512xbf16>, vector<32x512xf32> -> vector<32x512xf32>
    %270 = arith.addf %264, %269 : vector<32x512xf32>
    %c0_212 = arith.constant 0 : index
    %c129_213 = arith.constant 129 : index
    %271 = vector.load %arg17[%c0_212, %c129_213] : memref<32x768xf32, #tpu.memory_space<vmem>>, vector<32x512xf32>
    %c5_214 = arith.constant 5 : index
    %c0_215 = arith.constant 0 : index
    %c0_216 = arith.constant 0 : index
    %272 = vector.load %arg0[%c5_214, %c0_215, %c0_216] : memref<9x1x512xf32, #tpu.memory_space<vmem>>, vector<1x1x512xf32>
    %273 = vector.shape_cast %272 : vector<1x1x512xf32> to vector<1x512xf32>
    %274 = vector.broadcast %273 : vector<1x512xf32> to vector<32x512xf32>
    %275 = arith.mulf %271, %274 : vector<32x512xf32>
    %276 = arith.truncf %275 : vector<32x512xf32> to vector<32x512xbf16>
    %c5_217 = arith.constant 5 : index
    %c0_218 = arith.constant 0 : index
    %c0_219 = arith.constant 0 : index
    %277 = vector.load %arg8[%c5_217, %c0_218, %c0_219] : memref<9x32x32xbf16, #tpu.memory_space<vmem>>, vector<1x32x32xbf16>
    %278 = vector.shape_cast %277 : vector<1x32x32xbf16> to vector<32x32xbf16>
    %cst_220 = arith.constant dense<0.000000e+00> : vector<32x512xf32>
    %279 = tpu.matmul %278, %276, %cst_220 {dimension_numbers = #tpu.dot_dimension_numbers<[1], [0], [0], [1], [0, 0, 1, 1], [], []>} : vector<32x32xbf16>, vector<32x512xbf16>, vector<32x512xf32> -> vector<32x512xf32>
    %280 = arith.addf %270, %279 : vector<32x512xf32>
    %c0_221 = arith.constant 0 : index
    %c143_222 = arith.constant 143 : index
    %281 = vector.load %arg17[%c0_221, %c143_222] : memref<32x768xf32, #tpu.memory_space<vmem>>, vector<32x512xf32>
    %c6_223 = arith.constant 6 : index
    %c0_224 = arith.constant 0 : index
    %c0_225 = arith.constant 0 : index
    %282 = vector.load %arg0[%c6_223, %c0_224, %c0_225] : memref<9x1x512xf32, #tpu.memory_space<vmem>>, vector<1x1x512xf32>
    %283 = vector.shape_cast %282 : vector<1x1x512xf32> to vector<1x512xf32>
    %284 = vector.broadcast %283 : vector<1x512xf32> to vector<32x512xf32>
    %285 = arith.mulf %281, %284 : vector<32x512xf32>
    %286 = arith.truncf %285 : vector<32x512xf32> to vector<32x512xbf16>
    %c6_226 = arith.constant 6 : index
    %c0_227 = arith.constant 0 : index
    %c0_228 = arith.constant 0 : index
    %287 = vector.load %arg8[%c6_226, %c0_227, %c0_228] : memref<9x32x32xbf16, #tpu.memory_space<vmem>>, vector<1x32x32xbf16>
    %288 = vector.shape_cast %287 : vector<1x32x32xbf16> to vector<32x32xbf16>
    %cst_229 = arith.constant dense<0.000000e+00> : vector<32x512xf32>
    %289 = tpu.matmul %288, %286, %cst_229 {dimension_numbers = #tpu.dot_dimension_numbers<[1], [0], [0], [1], [0, 0, 1, 1], [], []>} : vector<32x32xbf16>, vector<32x512xbf16>, vector<32x512xf32> -> vector<32x512xf32>
    %290 = arith.addf %280, %289 : vector<32x512xf32>
    %c0_230 = arith.constant 0 : index
    %c144_231 = arith.constant 144 : index
    %291 = vector.load %arg17[%c0_230, %c144_231] : memref<32x768xf32, #tpu.memory_space<vmem>>, vector<32x512xf32>
    %c7_232 = arith.constant 7 : index
    %c0_233 = arith.constant 0 : index
    %c0_234 = arith.constant 0 : index
    %292 = vector.load %arg0[%c7_232, %c0_233, %c0_234] : memref<9x1x512xf32, #tpu.memory_space<vmem>>, vector<1x1x512xf32>
    %293 = vector.shape_cast %292 : vector<1x1x512xf32> to vector<1x512xf32>
    %294 = vector.broadcast %293 : vector<1x512xf32> to vector<32x512xf32>
    %295 = arith.mulf %291, %294 : vector<32x512xf32>
    %296 = arith.truncf %295 : vector<32x512xf32> to vector<32x512xbf16>
    %c7_235 = arith.constant 7 : index
    %c0_236 = arith.constant 0 : index
    %c0_237 = arith.constant 0 : index
    %297 = vector.load %arg8[%c7_235, %c0_236, %c0_237] : memref<9x32x32xbf16, #tpu.memory_space<vmem>>, vector<1x32x32xbf16>
    %298 = vector.shape_cast %297 : vector<1x32x32xbf16> to vector<32x32xbf16>
    %cst_238 = arith.constant dense<0.000000e+00> : vector<32x512xf32>
    %299 = tpu.matmul %298, %296, %cst_238 {dimension_numbers = #tpu.dot_dimension_numbers<[1], [0], [0], [1], [0, 0, 1, 1], [], []>} : vector<32x32xbf16>, vector<32x512xbf16>, vector<32x512xf32> -> vector<32x512xf32>
    %300 = arith.addf %290, %299 : vector<32x512xf32>
    %c0_239 = arith.constant 0 : index
    %c145_240 = arith.constant 145 : index
    %301 = vector.load %arg17[%c0_239, %c145_240] : memref<32x768xf32, #tpu.memory_space<vmem>>, vector<32x512xf32>
    %c8_241 = arith.constant 8 : index
    %c0_242 = arith.constant 0 : index
    %c0_243 = arith.constant 0 : index
    %302 = vector.load %arg0[%c8_241, %c0_242, %c0_243] : memref<9x1x512xf32, #tpu.memory_space<vmem>>, vector<1x1x512xf32>
    %303 = vector.shape_cast %302 : vector<1x1x512xf32> to vector<1x512xf32>
    %304 = vector.broadcast %303 : vector<1x512xf32> to vector<32x512xf32>
    %305 = arith.mulf %301, %304 : vector<32x512xf32>
    %306 = arith.truncf %305 : vector<32x512xf32> to vector<32x512xbf16>
    %c8_244 = arith.constant 8 : index
    %c0_245 = arith.constant 0 : index
    %c0_246 = arith.constant 0 : index
    %307 = vector.load %arg8[%c8_244, %c0_245, %c0_246] : memref<9x32x32xbf16, #tpu.memory_space<vmem>>, vector<1x32x32xbf16>
    %308 = vector.shape_cast %307 : vector<1x32x32xbf16> to vector<32x32xbf16>
    %cst_247 = arith.constant dense<0.000000e+00> : vector<32x512xf32>
    %309 = tpu.matmul %308, %306, %cst_247 {dimension_numbers = #tpu.dot_dimension_numbers<[1], [0], [0], [1], [0, 0, 1, 1], [], []>} : vector<32x32xbf16>, vector<32x512xbf16>, vector<32x512xf32> -> vector<32x512xf32>
    %310 = arith.addf %300, %309 : vector<32x512xf32>
    %cst_248 = arith.constant dense<0.000000e+00> : vector<32xf32>
    %311 = vector.multi_reduction <add>, %310, %cst_248 [1] : vector<32x512xf32> to vector<32xf32>
    %312 = vector.shape_cast %311 : vector<32xf32> to vector<32x1xf32>
    %cst_249 = arith.constant 0.001953125 : f32
    %313 = vector.broadcast %cst_249 : f32 to vector<32x1xf32>
    %314 = arith.mulf %312, %313 : vector<32x1xf32>
    %315 = vector.broadcast %314 : vector<32x1xf32> to vector<32x512xf32>
    %316 = arith.subf %310, %315 : vector<32x512xf32>
    %317 = arith.mulf %316, %316 : vector<32x512xf32>
    %cst_250 = arith.constant dense<0.000000e+00> : vector<32xf32>
    %318 = vector.multi_reduction <add>, %317, %cst_250 [1] : vector<32x512xf32> to vector<32xf32>
    %319 = vector.shape_cast %318 : vector<32xf32> to vector<32x1xf32>
    %cst_251 = arith.constant 0.001953125 : f32
    %320 = vector.broadcast %cst_251 : f32 to vector<32x1xf32>
    %321 = arith.mulf %319, %320 : vector<32x1xf32>
    %c0_252 = arith.constant 0 : index
    %c0_253 = arith.constant 0 : index
    %322 = vector.load %arg9[%c0_252, %c0_253] : memref<32x1xf32, #tpu.memory_space<vmem>>, vector<32x1xf32>
    %cst_254 = arith.constant 9.99999974E-6 : f32
    %323 = vector.broadcast %cst_254 : f32 to vector<32x1xf32>
    %324 = arith.addf %321, %323 : vector<32x1xf32>
    %325 = math.rsqrt %324 : vector<32x1xf32>
    %326 = arith.mulf %322, %325 : vector<32x1xf32>
    %327 = vector.broadcast %326 : vector<32x1xf32> to vector<32x512xf32>
    %328 = arith.mulf %316, %327 : vector<32x512xf32>
    %c0_255 = arith.constant 0 : index
    %c0_256 = arith.constant 0 : index
    %329 = vector.load %arg10[%c0_255, %c0_256] : memref<32x1xf32, #tpu.memory_space<vmem>>, vector<32x1xf32>
    %330 = vector.broadcast %329 : vector<32x1xf32> to vector<32x512xf32>
    %331 = arith.addf %328, %330 : vector<32x512xf32>
    %cst_257 = arith.constant 2.000000e-01 : f32
    %332 = vector.broadcast %cst_257 : f32 to vector<32x512xf32>
    %333 = arith.mulf %332, %331 : vector<32x512xf32>
    %334 = arith.maximumf %331, %333 : vector<32x512xf32>
    %c0_258 = arith.constant 0 : index
    %c128_259 = arith.constant 128 : index
    %335 = vector.load %arg17[%c0_258, %c128_259] : memref<32x768xf32, #tpu.memory_space<vmem>>, vector<32x512xf32>
    tpu.vector_store %arg17[%c0_258, %c128_259], %334 {strides = array<i32>} : memref<32x768xf32, #tpu.memory_space<vmem>>, vector<32x512xf32>,
    %c0_260 = arith.constant 0 : index
    %c111_261 = arith.constant 111 : index
    %336 = vector.load %arg17[%c0_260, %c111_261] : memref<32x768xf32, #tpu.memory_space<vmem>>, vector<32x512xf32>
    %c0_262 = arith.constant 0 : index
    %c0_263 = arith.constant 0 : index
    %c0_264 = arith.constant 0 : index
    %337 = vector.load %arg0[%c0_262, %c0_263, %c0_264] : memref<9x1x512xf32, #tpu.memory_space<vmem>>, vector<1x1x512xf32>
    %338 = vector.shape_cast %337 : vector<1x1x512xf32> to vector<1x512xf32>
    %339 = vector.broadcast %338 : vector<1x512xf32> to vector<32x512xf32>
    %340 = arith.mulf %336, %339 : vector<32x512xf32>
    %341 = arith.truncf %340 : vector<32x512xf32> to vector<32x512xbf16>
    %c0_265 = arith.constant 0 : index
    %c0_266 = arith.constant 0 : index
    %c0_267 = arith.constant 0 : index
    %342 = vector.load %arg11[%c0_265, %c0_266, %c0_267] : memref<9x32x32xbf16, #tpu.memory_space<vmem>>, vector<1x32x32xbf16>
    %343 = vector.shape_cast %342 : vector<1x32x32xbf16> to vector<32x32xbf16>
    %cst_268 = arith.constant dense<0.000000e+00> : vector<32x512xf32>
    %344 = tpu.matmul %343, %341, %cst_268 {dimension_numbers = #tpu.dot_dimension_numbers<[1], [0], [0], [1], [0, 0, 1, 1], [], []>} : vector<32x32xbf16>, vector<32x512xbf16>, vector<32x512xf32> -> vector<32x512xf32>
    %c0_269 = arith.constant 0 : index
    %c112_270 = arith.constant 112 : index
    %345 = vector.load %arg17[%c0_269, %c112_270] : memref<32x768xf32, #tpu.memory_space<vmem>>, vector<32x512xf32>
    %c1_271 = arith.constant 1 : index
    %c0_272 = arith.constant 0 : index
    %c0_273 = arith.constant 0 : index
    %346 = vector.load %arg0[%c1_271, %c0_272, %c0_273] : memref<9x1x512xf32, #tpu.memory_space<vmem>>, vector<1x1x512xf32>
    %347 = vector.shape_cast %346 : vector<1x1x512xf32> to vector<1x512xf32>
    %348 = vector.broadcast %347 : vector<1x512xf32> to vector<32x512xf32>
    %349 = arith.mulf %345, %348 : vector<32x512xf32>
    %350 = arith.truncf %349 : vector<32x512xf32> to vector<32x512xbf16>
    %c1_274 = arith.constant 1 : index
    %c0_275 = arith.constant 0 : index
    %c0_276 = arith.constant 0 : index
    %351 = vector.load %arg11[%c1_274, %c0_275, %c0_276] : memref<9x32x32xbf16, #tpu.memory_space<vmem>>, vector<1x32x32xbf16>
    %352 = vector.shape_cast %351 : vector<1x32x32xbf16> to vector<32x32xbf16>
    %cst_277 = arith.constant dense<0.000000e+00> : vector<32x512xf32>
    %353 = tpu.matmul %352, %350, %cst_277 {dimension_numbers = #tpu.dot_dimension_numbers<[1], [0], [0], [1], [0, 0, 1, 1], [], []>} : vector<32x32xbf16>, vector<32x512xbf16>, vector<32x512xf32> -> vector<32x512xf32>
    %354 = arith.addf %344, %353 : vector<32x512xf32>
    %c0_278 = arith.constant 0 : index
    %c113_279 = arith.constant 113 : index
    %355 = vector.load %arg17[%c0_278, %c113_279] : memref<32x768xf32, #tpu.memory_space<vmem>>, vector<32x512xf32>
    %c2_280 = arith.constant 2 : index
    %c0_281 = arith.constant 0 : index
    %c0_282 = arith.constant 0 : index
    %356 = vector.load %arg0[%c2_280, %c0_281, %c0_282] : memref<9x1x512xf32, #tpu.memory_space<vmem>>, vector<1x1x512xf32>
    %357 = vector.shape_cast %356 : vector<1x1x512xf32> to vector<1x512xf32>
    %358 = vector.broadcast %357 : vector<1x512xf32> to vector<32x512xf32>
    %359 = arith.mulf %355, %358 : vector<32x512xf32>
    %360 = arith.truncf %359 : vector<32x512xf32> to vector<32x512xbf16>
    %c2_283 = arith.constant 2 : index
    %c0_284 = arith.constant 0 : index
    %c0_285 = arith.constant 0 : index
    %361 = vector.load %arg11[%c2_283, %c0_284, %c0_285] : memref<9x32x32xbf16, #tpu.memory_space<vmem>>, vector<1x32x32xbf16>
    %362 = vector.shape_cast %361 : vector<1x32x32xbf16> to vector<32x32xbf16>
    %cst_286 = arith.constant dense<0.000000e+00> : vector<32x512xf32>
    %363 = tpu.matmul %362, %360, %cst_286 {dimension_numbers = #tpu.dot_dimension_numbers<[1], [0], [0], [1], [0, 0, 1, 1], [], []>} : vector<32x32xbf16>, vector<32x512xbf16>, vector<32x512xf32> -> vector<32x512xf32>
    %364 = arith.addf %354, %363 : vector<32x512xf32>
    %c0_287 = arith.constant 0 : index
    %c127_288 = arith.constant 127 : index
    %365 = vector.load %arg17[%c0_287, %c127_288] : memref<32x768xf32, #tpu.memory_space<vmem>>, vector<32x512xf32>
    %c3_289 = arith.constant 3 : index
    %c0_290 = arith.constant 0 : index
    %c0_291 = arith.constant 0 : index
    %366 = vector.load %arg0[%c3_289, %c0_290, %c0_291] : memref<9x1x512xf32, #tpu.memory_space<vmem>>, vector<1x1x512xf32>
    %367 = vector.shape_cast %366 : vector<1x1x512xf32> to vector<1x512xf32>
    %368 = vector.broadcast %367 : vector<1x512xf32> to vector<32x512xf32>
    %369 = arith.mulf %365, %368 : vector<32x512xf32>
    %370 = arith.truncf %369 : vector<32x512xf32> to vector<32x512xbf16>
    %c3_292 = arith.constant 3 : index
    %c0_293 = arith.constant 0 : index
    %c0_294 = arith.constant 0 : index
    %371 = vector.load %arg11[%c3_292, %c0_293, %c0_294] : memref<9x32x32xbf16, #tpu.memory_space<vmem>>, vector<1x32x32xbf16>
    %372 = vector.shape_cast %371 : vector<1x32x32xbf16> to vector<32x32xbf16>
    %cst_295 = arith.constant dense<0.000000e+00> : vector<32x512xf32>
    %373 = tpu.matmul %372, %370, %cst_295 {dimension_numbers = #tpu.dot_dimension_numbers<[1], [0], [0], [1], [0, 0, 1, 1], [], []>} : vector<32x32xbf16>, vector<32x512xbf16>, vector<32x512xf32> -> vector<32x512xf32>
    %374 = arith.addf %364, %373 : vector<32x512xf32>
    %c0_296 = arith.constant 0 : index
    %c128_297 = arith.constant 128 : index
    %375 = vector.load %arg17[%c0_296, %c128_297] : memref<32x768xf32, #tpu.memory_space<vmem>>, vector<32x512xf32>
    %376 = arith.truncf %375 : vector<32x512xf32> to vector<32x512xbf16>
    %c4_298 = arith.constant 4 : index
    %c0_299 = arith.constant 0 : index
    %c0_300 = arith.constant 0 : index
    %377 = vector.load %arg11[%c4_298, %c0_299, %c0_300] : memref<9x32x32xbf16, #tpu.memory_space<vmem>>, vector<1x32x32xbf16>
    %378 = vector.shape_cast %377 : vector<1x32x32xbf16> to vector<32x32xbf16>
    %cst_301 = arith.constant dense<0.000000e+00> : vector<32x512xf32>
    %379 = tpu.matmul %378, %376, %cst_301 {dimension_numbers = #tpu.dot_dimension_numbers<[1], [0], [0], [1], [0, 0, 1, 1], [], []>} : vector<32x32xbf16>, vector<32x512xbf16>, vector<32x512xf32> -> vector<32x512xf32>
    %380 = arith.addf %374, %379 : vector<32x512xf32>
    %c0_302 = arith.constant 0 : index
    %c129_303 = arith.constant 129 : index
    %381 = vector.load %arg17[%c0_302, %c129_303] : memref<32x768xf32, #tpu.memory_space<vmem>>, vector<32x512xf32>
    %c5_304 = arith.constant 5 : index
    %c0_305 = arith.constant 0 : index
    %c0_306 = arith.constant 0 : index
    %382 = vector.load %arg0[%c5_304, %c0_305, %c0_306] : memref<9x1x512xf32, #tpu.memory_space<vmem>>, vector<1x1x512xf32>
    %383 = vector.shape_cast %382 : vector<1x1x512xf32> to vector<1x512xf32>
    %384 = vector.broadcast %383 : vector<1x512xf32> to vector<32x512xf32>
    %385 = arith.mulf %381, %384 : vector<32x512xf32>
    %386 = arith.truncf %385 : vector<32x512xf32> to vector<32x512xbf16>
    %c5_307 = arith.constant 5 : index
    %c0_308 = arith.constant 0 : index
    %c0_309 = arith.constant 0 : index
    %387 = vector.load %arg11[%c5_307, %c0_308, %c0_309] : memref<9x32x32xbf16, #tpu.memory_space<vmem>>, vector<1x32x32xbf16>
    %388 = vector.shape_cast %387 : vector<1x32x32xbf16> to vector<32x32xbf16>
    %cst_310 = arith.constant dense<0.000000e+00> : vector<32x512xf32>
    %389 = tpu.matmul %388, %386, %cst_310 {dimension_numbers = #tpu.dot_dimension_numbers<[1], [0], [0], [1], [0, 0, 1, 1], [], []>} : vector<32x32xbf16>, vector<32x512xbf16>, vector<32x512xf32> -> vector<32x512xf32>
    %390 = arith.addf %380, %389 : vector<32x512xf32>
    %c0_311 = arith.constant 0 : index
    %c143_312 = arith.constant 143 : index
    %391 = vector.load %arg17[%c0_311, %c143_312] : memref<32x768xf32, #tpu.memory_space<vmem>>, vector<32x512xf32>
    %c6_313 = arith.constant 6 : index
    %c0_314 = arith.constant 0 : index
    %c0_315 = arith.constant 0 : index
    %392 = vector.load %arg0[%c6_313, %c0_314, %c0_315] : memref<9x1x512xf32, #tpu.memory_space<vmem>>, vector<1x1x512xf32>
    %393 = vector.shape_cast %392 : vector<1x1x512xf32> to vector<1x512xf32>
    %394 = vector.broadcast %393 : vector<1x512xf32> to vector<32x512xf32>
    %395 = arith.mulf %391, %394 : vector<32x512xf32>
    %396 = arith.truncf %395 : vector<32x512xf32> to vector<32x512xbf16>
    %c6_316 = arith.constant 6 : index
    %c0_317 = arith.constant 0 : index
    %c0_318 = arith.constant 0 : index
    %397 = vector.load %arg11[%c6_316, %c0_317, %c0_318] : memref<9x32x32xbf16, #tpu.memory_space<vmem>>, vector<1x32x32xbf16>
    %398 = vector.shape_cast %397 : vector<1x32x32xbf16> to vector<32x32xbf16>
    %cst_319 = arith.constant dense<0.000000e+00> : vector<32x512xf32>
    %399 = tpu.matmul %398, %396, %cst_319 {dimension_numbers = #tpu.dot_dimension_numbers<[1], [0], [0], [1], [0, 0, 1, 1], [], []>} : vector<32x32xbf16>, vector<32x512xbf16>, vector<32x512xf32> -> vector<32x512xf32>
    %400 = arith.addf %390, %399 : vector<32x512xf32>
    %c0_320 = arith.constant 0 : index
    %c144_321 = arith.constant 144 : index
    %401 = vector.load %arg17[%c0_320, %c144_321] : memref<32x768xf32, #tpu.memory_space<vmem>>, vector<32x512xf32>
    %c7_322 = arith.constant 7 : index
    %c0_323 = arith.constant 0 : index
    %c0_324 = arith.constant 0 : index
    %402 = vector.load %arg0[%c7_322, %c0_323, %c0_324] : memref<9x1x512xf32, #tpu.memory_space<vmem>>, vector<1x1x512xf32>
    %403 = vector.shape_cast %402 : vector<1x1x512xf32> to vector<1x512xf32>
    %404 = vector.broadcast %403 : vector<1x512xf32> to vector<32x512xf32>
    %405 = arith.mulf %401, %404 : vector<32x512xf32>
    %406 = arith.truncf %405 : vector<32x512xf32> to vector<32x512xbf16>
    %c7_325 = arith.constant 7 : index
    %c0_326 = arith.constant 0 : index
    %c0_327 = arith.constant 0 : index
    %407 = vector.load %arg11[%c7_325, %c0_326, %c0_327] : memref<9x32x32xbf16, #tpu.memory_space<vmem>>, vector<1x32x32xbf16>
    %408 = vector.shape_cast %407 : vector<1x32x32xbf16> to vector<32x32xbf16>
    %cst_328 = arith.constant dense<0.000000e+00> : vector<32x512xf32>
    %409 = tpu.matmul %408, %406, %cst_328 {dimension_numbers = #tpu.dot_dimension_numbers<[1], [0], [0], [1], [0, 0, 1, 1], [], []>} : vector<32x32xbf16>, vector<32x512xbf16>, vector<32x512xf32> -> vector<32x512xf32>
    %410 = arith.addf %400, %409 : vector<32x512xf32>
    %c0_329 = arith.constant 0 : index
    %c145_330 = arith.constant 145 : index
    %411 = vector.load %arg17[%c0_329, %c145_330] : memref<32x768xf32, #tpu.memory_space<vmem>>, vector<32x512xf32>
    %c8_331 = arith.constant 8 : index
    %c0_332 = arith.constant 0 : index
    %c0_333 = arith.constant 0 : index
    %412 = vector.load %arg0[%c8_331, %c0_332, %c0_333] : memref<9x1x512xf32, #tpu.memory_space<vmem>>, vector<1x1x512xf32>
    %413 = vector.shape_cast %412 : vector<1x1x512xf32> to vector<1x512xf32>
    %414 = vector.broadcast %413 : vector<1x512xf32> to vector<32x512xf32>
    %415 = arith.mulf %411, %414 : vector<32x512xf32>
    %416 = arith.truncf %415 : vector<32x512xf32> to vector<32x512xbf16>
    %c8_334 = arith.constant 8 : index
    %c0_335 = arith.constant 0 : index
    %c0_336 = arith.constant 0 : index
    %417 = vector.load %arg11[%c8_334, %c0_335, %c0_336] : memref<9x32x32xbf16, #tpu.memory_space<vmem>>, vector<1x32x32xbf16>
    %418 = vector.shape_cast %417 : vector<1x32x32xbf16> to vector<32x32xbf16>
    %cst_337 = arith.constant dense<0.000000e+00> : vector<32x512xf32>
    %419 = tpu.matmul %418, %416, %cst_337 {dimension_numbers = #tpu.dot_dimension_numbers<[1], [0], [0], [1], [0, 0, 1, 1], [], []>} : vector<32x32xbf16>, vector<32x512xbf16>, vector<32x512xf32> -> vector<32x512xf32>
    %420 = arith.addf %410, %419 : vector<32x512xf32>
    %cst_338 = arith.constant dense<0.000000e+00> : vector<32xf32>
    %421 = vector.multi_reduction <add>, %420, %cst_338 [1] : vector<32x512xf32> to vector<32xf32>
    %422 = vector.shape_cast %421 : vector<32xf32> to vector<32x1xf32>
    %cst_339 = arith.constant 0.001953125 : f32
    %423 = vector.broadcast %cst_339 : f32 to vector<32x1xf32>
    %424 = arith.mulf %422, %423 : vector<32x1xf32>
    %425 = vector.broadcast %424 : vector<32x1xf32> to vector<32x512xf32>
    %426 = arith.subf %420, %425 : vector<32x512xf32>
    %427 = arith.mulf %426, %426 : vector<32x512xf32>
    %cst_340 = arith.constant dense<0.000000e+00> : vector<32xf32>
    %428 = vector.multi_reduction <add>, %427, %cst_340 [1] : vector<32x512xf32> to vector<32xf32>
    %429 = vector.shape_cast %428 : vector<32xf32> to vector<32x1xf32>
    %cst_341 = arith.constant 0.001953125 : f32
    %430 = vector.broadcast %cst_341 : f32 to vector<32x1xf32>
    %431 = arith.mulf %429, %430 : vector<32x1xf32>
    %c0_342 = arith.constant 0 : index
    %c0_343 = arith.constant 0 : index
    %432 = vector.load %arg12[%c0_342, %c0_343] : memref<32x1xf32, #tpu.memory_space<vmem>>, vector<32x1xf32>
    %cst_344 = arith.constant 9.99999974E-6 : f32
    %433 = vector.broadcast %cst_344 : f32 to vector<32x1xf32>
    %434 = arith.addf %431, %433 : vector<32x1xf32>
    %435 = math.rsqrt %434 : vector<32x1xf32>
    %436 = arith.mulf %432, %435 : vector<32x1xf32>
    %437 = vector.broadcast %436 : vector<32x1xf32> to vector<32x512xf32>
    %438 = arith.mulf %426, %437 : vector<32x512xf32>
    %c0_345 = arith.constant 0 : index
    %c0_346 = arith.constant 0 : index
    %439 = vector.load %arg13[%c0_345, %c0_346] : memref<32x1xf32, #tpu.memory_space<vmem>>, vector<32x1xf32>
    %440 = vector.broadcast %439 : vector<32x1xf32> to vector<32x512xf32>
    %441 = arith.addf %438, %440 : vector<32x512xf32>
    %cst_347 = arith.constant 2.000000e-01 : f32
    %442 = vector.broadcast %cst_347 : f32 to vector<32x512xf32>
    %443 = arith.mulf %442, %441 : vector<32x512xf32>
    %444 = arith.maximumf %441, %443 : vector<32x512xf32>
    %c0_348 = arith.constant 0 : index
    %c128_349 = arith.constant 128 : index
    %445 = vector.load %arg17[%c0_348, %c128_349] : memref<32x768xf32, #tpu.memory_space<vmem>>, vector<32x512xf32>
    tpu.vector_store %arg17[%c0_348, %c128_349], %444 {strides = array<i32>} : memref<32x768xf32, #tpu.memory_space<vmem>>, vector<32x512xf32>,
    %c0_350 = arith.constant 0 : index
    %c111_351 = arith.constant 111 : index
    %446 = vector.load %arg17[%c0_350, %c111_351] : memref<32x768xf32, #tpu.memory_space<vmem>>, vector<32x512xf32>
    %c0_352 = arith.constant 0 : index
    %c0_353 = arith.constant 0 : index
    %c0_354 = arith.constant 0 : index
    %447 = vector.load %arg0[%c0_352, %c0_353, %c0_354] : memref<9x1x512xf32, #tpu.memory_space<vmem>>, vector<1x1x512xf32>
    %448 = vector.shape_cast %447 : vector<1x1x512xf32> to vector<1x512xf32>
    %449 = vector.broadcast %448 : vector<1x512xf32> to vector<32x512xf32>
    %450 = arith.mulf %446, %449 : vector<32x512xf32>
    %451 = arith.truncf %450 : vector<32x512xf32> to vector<32x512xbf16>
    %c0_355 = arith.constant 0 : index
    %c0_356 = arith.constant 0 : index
    %c0_357 = arith.constant 0 : index
    %452 = vector.load %arg14[%c0_355, %c0_356, %c0_357] : memref<9x8x32xbf16, #tpu.memory_space<vmem>>, vector<1x8x32xbf16>
    %453 = vector.shape_cast %452 : vector<1x8x32xbf16> to vector<8x32xbf16>
    %cst_358 = arith.constant dense<0.000000e+00> : vector<8x512xf32>
    %454 = tpu.matmul %453, %451, %cst_358 {dimension_numbers = #tpu.dot_dimension_numbers<[1], [0], [0], [1], [0, 0, 1, 1], [], []>} : vector<8x32xbf16>, vector<32x512xbf16>, vector<8x512xf32> -> vector<8x512xf32>
    %c0_359 = arith.constant 0 : index
    %c112_360 = arith.constant 112 : index
    %455 = vector.load %arg17[%c0_359, %c112_360] : memref<32x768xf32, #tpu.memory_space<vmem>>, vector<32x512xf32>
    %c1_361 = arith.constant 1 : index
    %c0_362 = arith.constant 0 : index
    %c0_363 = arith.constant 0 : index
    %456 = vector.load %arg0[%c1_361, %c0_362, %c0_363] : memref<9x1x512xf32, #tpu.memory_space<vmem>>, vector<1x1x512xf32>
    %457 = vector.shape_cast %456 : vector<1x1x512xf32> to vector<1x512xf32>
    %458 = vector.broadcast %457 : vector<1x512xf32> to vector<32x512xf32>
    %459 = arith.mulf %455, %458 : vector<32x512xf32>
    %460 = arith.truncf %459 : vector<32x512xf32> to vector<32x512xbf16>
    %c1_364 = arith.constant 1 : index
    %c0_365 = arith.constant 0 : index
    %c0_366 = arith.constant 0 : index
    %461 = vector.load %arg14[%c1_364, %c0_365, %c0_366] : memref<9x8x32xbf16, #tpu.memory_space<vmem>>, vector<1x8x32xbf16>
    %462 = vector.shape_cast %461 : vector<1x8x32xbf16> to vector<8x32xbf16>
    %cst_367 = arith.constant dense<0.000000e+00> : vector<8x512xf32>
    %463 = tpu.matmul %462, %460, %cst_367 {dimension_numbers = #tpu.dot_dimension_numbers<[1], [0], [0], [1], [0, 0, 1, 1], [], []>} : vector<8x32xbf16>, vector<32x512xbf16>, vector<8x512xf32> -> vector<8x512xf32>
    %464 = arith.addf %454, %463 : vector<8x512xf32>
    %c0_368 = arith.constant 0 : index
    %c113_369 = arith.constant 113 : index
    %465 = vector.load %arg17[%c0_368, %c113_369] : memref<32x768xf32, #tpu.memory_space<vmem>>, vector<32x512xf32>
    %c2_370 = arith.constant 2 : index
    %c0_371 = arith.constant 0 : index
    %c0_372 = arith.constant 0 : index
    %466 = vector.load %arg0[%c2_370, %c0_371, %c0_372] : memref<9x1x512xf32, #tpu.memory_space<vmem>>, vector<1x1x512xf32>
    %467 = vector.shape_cast %466 : vector<1x1x512xf32> to vector<1x512xf32>
    %468 = vector.broadcast %467 : vector<1x512xf32> to vector<32x512xf32>
    %469 = arith.mulf %465, %468 : vector<32x512xf32>
    %470 = arith.truncf %469 : vector<32x512xf32> to vector<32x512xbf16>
    %c2_373 = arith.constant 2 : index
    %c0_374 = arith.constant 0 : index
    %c0_375 = arith.constant 0 : index
    %471 = vector.load %arg14[%c2_373, %c0_374, %c0_375] : memref<9x8x32xbf16, #tpu.memory_space<vmem>>, vector<1x8x32xbf16>
    %472 = vector.shape_cast %471 : vector<1x8x32xbf16> to vector<8x32xbf16>
    %cst_376 = arith.constant dense<0.000000e+00> : vector<8x512xf32>
    %473 = tpu.matmul %472, %470, %cst_376 {dimension_numbers = #tpu.dot_dimension_numbers<[1], [0], [0], [1], [0, 0, 1, 1], [], []>} : vector<8x32xbf16>, vector<32x512xbf16>, vector<8x512xf32> -> vector<8x512xf32>
    %474 = arith.addf %464, %473 : vector<8x512xf32>
    %c0_377 = arith.constant 0 : index
    %c127_378 = arith.constant 127 : index
    %475 = vector.load %arg17[%c0_377, %c127_378] : memref<32x768xf32, #tpu.memory_space<vmem>>, vector<32x512xf32>
    %c3_379 = arith.constant 3 : index
    %c0_380 = arith.constant 0 : index
    %c0_381 = arith.constant 0 : index
    %476 = vector.load %arg0[%c3_379, %c0_380, %c0_381] : memref<9x1x512xf32, #tpu.memory_space<vmem>>, vector<1x1x512xf32>
    %477 = vector.shape_cast %476 : vector<1x1x512xf32> to vector<1x512xf32>
    %478 = vector.broadcast %477 : vector<1x512xf32> to vector<32x512xf32>
    %479 = arith.mulf %475, %478 : vector<32x512xf32>
    %480 = arith.truncf %479 : vector<32x512xf32> to vector<32x512xbf16>
    %c3_382 = arith.constant 3 : index
    %c0_383 = arith.constant 0 : index
    %c0_384 = arith.constant 0 : index
    %481 = vector.load %arg14[%c3_382, %c0_383, %c0_384] : memref<9x8x32xbf16, #tpu.memory_space<vmem>>, vector<1x8x32xbf16>
    %482 = vector.shape_cast %481 : vector<1x8x32xbf16> to vector<8x32xbf16>
    %cst_385 = arith.constant dense<0.000000e+00> : vector<8x512xf32>
    %483 = tpu.matmul %482, %480, %cst_385 {dimension_numbers = #tpu.dot_dimension_numbers<[1], [0], [0], [1], [0, 0, 1, 1], [], []>} : vector<8x32xbf16>, vector<32x512xbf16>, vector<8x512xf32> -> vector<8x512xf32>
    %484 = arith.addf %474, %483 : vector<8x512xf32>
    %c0_386 = arith.constant 0 : index
    %c128_387 = arith.constant 128 : index
    %485 = vector.load %arg17[%c0_386, %c128_387] : memref<32x768xf32, #tpu.memory_space<vmem>>, vector<32x512xf32>
    %486 = arith.truncf %485 : vector<32x512xf32> to vector<32x512xbf16>
    %c4_388 = arith.constant 4 : index
    %c0_389 = arith.constant 0 : index
    %c0_390 = arith.constant 0 : index
    %487 = vector.load %arg14[%c4_388, %c0_389, %c0_390] : memref<9x8x32xbf16, #tpu.memory_space<vmem>>, vector<1x8x32xbf16>
    %488 = vector.shape_cast %487 : vector<1x8x32xbf16> to vector<8x32xbf16>
    %cst_391 = arith.constant dense<0.000000e+00> : vector<8x512xf32>
    %489 = tpu.matmul %488, %486, %cst_391 {dimension_numbers = #tpu.dot_dimension_numbers<[1], [0], [0], [1], [0, 0, 1, 1], [], []>} : vector<8x32xbf16>, vector<32x512xbf16>, vector<8x512xf32> -> vector<8x512xf32>
    %490 = arith.addf %484, %489 : vector<8x512xf32>
    %c0_392 = arith.constant 0 : index
    %c129_393 = arith.constant 129 : index
    %491 = vector.load %arg17[%c0_392, %c129_393] : memref<32x768xf32, #tpu.memory_space<vmem>>, vector<32x512xf32>
    %c5_394 = arith.constant 5 : index
    %c0_395 = arith.constant 0 : index
    %c0_396 = arith.constant 0 : index
    %492 = vector.load %arg0[%c5_394, %c0_395, %c0_396] : memref<9x1x512xf32, #tpu.memory_space<vmem>>, vector<1x1x512xf32>
    %493 = vector.shape_cast %492 : vector<1x1x512xf32> to vector<1x512xf32>
    %494 = vector.broadcast %493 : vector<1x512xf32> to vector<32x512xf32>
    %495 = arith.mulf %491, %494 : vector<32x512xf32>
    %496 = arith.truncf %495 : vector<32x512xf32> to vector<32x512xbf16>
    %c5_397 = arith.constant 5 : index
    %c0_398 = arith.constant 0 : index
    %c0_399 = arith.constant 0 : index
    %497 = vector.load %arg14[%c5_397, %c0_398, %c0_399] : memref<9x8x32xbf16, #tpu.memory_space<vmem>>, vector<1x8x32xbf16>
    %498 = vector.shape_cast %497 : vector<1x8x32xbf16> to vector<8x32xbf16>
    %cst_400 = arith.constant dense<0.000000e+00> : vector<8x512xf32>
    %499 = tpu.matmul %498, %496, %cst_400 {dimension_numbers = #tpu.dot_dimension_numbers<[1], [0], [0], [1], [0, 0, 1, 1], [], []>} : vector<8x32xbf16>, vector<32x512xbf16>, vector<8x512xf32> -> vector<8x512xf32>
    %500 = arith.addf %490, %499 : vector<8x512xf32>
    %c0_401 = arith.constant 0 : index
    %c143_402 = arith.constant 143 : index
    %501 = vector.load %arg17[%c0_401, %c143_402] : memref<32x768xf32, #tpu.memory_space<vmem>>, vector<32x512xf32>
    %c6_403 = arith.constant 6 : index
    %c0_404 = arith.constant 0 : index
    %c0_405 = arith.constant 0 : index
    %502 = vector.load %arg0[%c6_403, %c0_404, %c0_405] : memref<9x1x512xf32, #tpu.memory_space<vmem>>, vector<1x1x512xf32>
    %503 = vector.shape_cast %502 : vector<1x1x512xf32> to vector<1x512xf32>
    %504 = vector.broadcast %503 : vector<1x512xf32> to vector<32x512xf32>
    %505 = arith.mulf %501, %504 : vector<32x512xf32>
    %506 = arith.truncf %505 : vector<32x512xf32> to vector<32x512xbf16>
    %c6_406 = arith.constant 6 : index
    %c0_407 = arith.constant 0 : index
    %c0_408 = arith.constant 0 : index
    %507 = vector.load %arg14[%c6_406, %c0_407, %c0_408] : memref<9x8x32xbf16, #tpu.memory_space<vmem>>, vector<1x8x32xbf16>
    %508 = vector.shape_cast %507 : vector<1x8x32xbf16> to vector<8x32xbf16>
    %cst_409 = arith.constant dense<0.000000e+00> : vector<8x512xf32>
    %509 = tpu.matmul %508, %506, %cst_409 {dimension_numbers = #tpu.dot_dimension_numbers<[1], [0], [0], [1], [0, 0, 1, 1], [], []>} : vector<8x32xbf16>, vector<32x512xbf16>, vector<8x512xf32> -> vector<8x512xf32>
    %510 = arith.addf %500, %509 : vector<8x512xf32>
    %c0_410 = arith.constant 0 : index
    %c144_411 = arith.constant 144 : index
    %511 = vector.load %arg17[%c0_410, %c144_411] : memref<32x768xf32, #tpu.memory_space<vmem>>, vector<32x512xf32>
    %c7_412 = arith.constant 7 : index
    %c0_413 = arith.constant 0 : index
    %c0_414 = arith.constant 0 : index
    %512 = vector.load %arg0[%c7_412, %c0_413, %c0_414] : memref<9x1x512xf32, #tpu.memory_space<vmem>>, vector<1x1x512xf32>
    %513 = vector.shape_cast %512 : vector<1x1x512xf32> to vector<1x512xf32>
    %514 = vector.broadcast %513 : vector<1x512xf32> to vector<32x512xf32>
    %515 = arith.mulf %511, %514 : vector<32x512xf32>
    %516 = arith.truncf %515 : vector<32x512xf32> to vector<32x512xbf16>
    %c7_415 = arith.constant 7 : index
    %c0_416 = arith.constant 0 : index
    %c0_417 = arith.constant 0 : index
    %517 = vector.load %arg14[%c7_415, %c0_416, %c0_417] : memref<9x8x32xbf16, #tpu.memory_space<vmem>>, vector<1x8x32xbf16>
    %518 = vector.shape_cast %517 : vector<1x8x32xbf16> to vector<8x32xbf16>
    %cst_418 = arith.constant dense<0.000000e+00> : vector<8x512xf32>
    %519 = tpu.matmul %518, %516, %cst_418 {dimension_numbers = #tpu.dot_dimension_numbers<[1], [0], [0], [1], [0, 0, 1, 1], [], []>} : vector<8x32xbf16>, vector<32x512xbf16>, vector<8x512xf32> -> vector<8x512xf32>
    %520 = arith.addf %510, %519 : vector<8x512xf32>
    %c0_419 = arith.constant 0 : index
    %c145_420 = arith.constant 145 : index
    %521 = vector.load %arg17[%c0_419, %c145_420] : memref<32x768xf32, #tpu.memory_space<vmem>>, vector<32x512xf32>
    %c8_421 = arith.constant 8 : index
    %c0_422 = arith.constant 0 : index
    %c0_423 = arith.constant 0 : index
    %522 = vector.load %arg0[%c8_421, %c0_422, %c0_423] : memref<9x1x512xf32, #tpu.memory_space<vmem>>, vector<1x1x512xf32>
    %523 = vector.shape_cast %522 : vector<1x1x512xf32> to vector<1x512xf32>
    %524 = vector.broadcast %523 : vector<1x512xf32> to vector<32x512xf32>
    %525 = arith.mulf %521, %524 : vector<32x512xf32>
    %526 = arith.truncf %525 : vector<32x512xf32> to vector<32x512xbf16>
    %c8_424 = arith.constant 8 : index
    %c0_425 = arith.constant 0 : index
    %c0_426 = arith.constant 0 : index
    %527 = vector.load %arg14[%c8_424, %c0_425, %c0_426] : memref<9x8x32xbf16, #tpu.memory_space<vmem>>, vector<1x8x32xbf16>
    %528 = vector.shape_cast %527 : vector<1x8x32xbf16> to vector<8x32xbf16>
    %cst_427 = arith.constant dense<0.000000e+00> : vector<8x512xf32>
    %529 = tpu.matmul %528, %526, %cst_427 {dimension_numbers = #tpu.dot_dimension_numbers<[1], [0], [0], [1], [0, 0, 1, 1], [], []>} : vector<8x32xbf16>, vector<32x512xbf16>, vector<8x512xf32> -> vector<8x512xf32>
    %530 = arith.addf %520, %529 : vector<8x512xf32>
    %c0_428 = arith.constant 0 : index
    %c0_429 = arith.constant 0 : index
    %531 = vector.load %arg15[%c0_428, %c0_429] : memref<8x1xf32, #tpu.memory_space<vmem>>, vector<8x1xf32>
    %532 = vector.broadcast %531 : vector<8x1xf32> to vector<8x512xf32>
    %533 = arith.addf %530, %532 : vector<8x512xf32>
    %534 = vector.extract_strided_slice %533 {offsets = [0, 0], sizes = [1, 512], strides = [1, 1]} : vector<8x512xf32> to vector<1x512xf32>
    %c0_430 = arith.constant 0 : index
    %c0_431 = arith.constant 0 : index
    %535 = vector.load %arg16[%c0_430, %c0_431] : memref<1x512xf32, #tpu.memory_space<vmem>>, vector<1x512xf32>
    tpu.vector_store %arg16[%c0_430, %c0_431], %534 {strides = array<i32>} : memref<1x512xf32, #tpu.memory_space<vmem>>, vector<1x512xf32>,
    return
  }
}

</mosaic_0001>

<llo_original>
// kernel: wdiscriminator_forward.1
$region0: #{wdiscriminator_forward.1}
  #allocation0 [shape = 'u32[]', space=smem, size = 0x4, offset = 0x4, fixed_abs, tag = 'smem constant byte address 0x4 - core index']
  #allocation1 [shape = 'u32[144,128]{1,0:T(1,128)}', space=vmem, size = 0x12000, scoped, tag = 'internal scratch']
  #allocation2 [shape = 'f32[32,768]{1,0:T(8,128)}', space=vmem, size = 0x18000, scoped, tag = 'scratch operand']
  %s0 = inlined_call_operand.vmem [shape: f32[9,1,512], index: 0, kind: input, shape index: {}]
  %s1 = inlined_call_operand.vmem [shape: f32[32,512], index: 1, kind: input, shape index: {}]
  %s2 = inlined_call_operand.vmem [shape: bf16[9,32,32], index: 2, kind: input, shape index: {}]
  %s3 = inlined_call_operand.vmem [shape: f32[32,1], index: 3, kind: input, shape index: {}]
  %s4 = inlined_call_operand.vmem [shape: f32[32,1], index: 4, kind: input, shape index: {}]
  %s5 = inlined_call_operand.vmem [shape: bf16[9,32,32], index: 5, kind: input, shape index: {}]
  %s6 = inlined_call_operand.vmem [shape: f32[32,1], index: 6, kind: input, shape index: {}]
  %s7 = inlined_call_operand.vmem [shape: f32[32,1], index: 7, kind: input, shape index: {}]
  %s8 = inlined_call_operand.vmem [shape: bf16[9,32,32], index: 8, kind: input, shape index: {}]
  %s9 = inlined_call_operand.vmem [shape: f32[32,1], index: 9, kind: input, shape index: {}]
  %s10 = inlined_call_operand.vmem [shape: f32[32,1], index: 10, kind: input, shape index: {}]
  %s11 = inlined_call_operand.vmem [shape: bf16[9,32,32], index: 11, kind: input, shape index: {}]
  %s12 = inlined_call_operand.vmem [shape: f32[32,1], index: 12, kind: input, shape index: {}]
  %s13 = inlined_call_operand.vmem [shape: f32[32,1], index: 13, kind: input, shape index: {}]
  %s14 = inlined_call_operand.vmem [shape: bf16[9,8,32], index: 14, kind: input, shape index: {}]
  %s15 = inlined_call_operand.vmem [shape: f32[8,1], index: 15, kind: input, shape index: {}]
  %s16 = inlined_call_operand.vmem [shape: f32[1,512], index: 16, kind: output, shape index: {}]
  %s17 = sld [smem:[#allocation0]]
  $region74: #{wdiscriminator_forward.1} parent=0
    _
  %s19 = ssub.s32 1, %s17
  %s20 = scalar_select 0, %s19, %s17
  // Predicated region
  $region2: #{wdiscriminator_forward.1} parent=0 // pred_check
    _
  $region3: #{wdiscriminator_forward.1} parent=0 // pred_check_branch
    %22 = sbr.rel (0) target = $region5
  $region4: #{wdiscriminator_forward.1} parent=0 // pred_region
    _
  $region5: #{wdiscriminator_forward.1} parent=0 // pred_fallthru
    _
  // Predicated region
  $region6: #{wdiscriminator_forward.1} parent=0 // pred_check
    _
  $region7: #{wdiscriminator_forward.1} parent=0 // pred_check_branch
    %24 = sbr.rel (0) target = $region9
  $region8: #{wdiscriminator_forward.1} parent=0 // pred_region
    _
  $region9: #{wdiscriminator_forward.1} parent=0 // pred_fallthru
    _
  // Predicated region
  $region10: #{wdiscriminator_forward.1} parent=0 // pred_check
    _
  $region11: #{wdiscriminator_forward.1} parent=0 // pred_check_branch
    %26 = sbr.rel (0) target = $region13
  $region12: #{wdiscriminator_forward.1} parent=0 // pred_region
    _
  $region13: #{wdiscriminator_forward.1} parent=0 // pred_fallthru
    _
  // Predicated region
  $region14: #{wdiscriminator_forward.1} parent=0 // pred_check
    _
  $region15: #{wdiscriminator_forward.1} parent=0 // pred_check_branch
    %28 = sbr.rel (0) target = $region17
  $region16: #{wdiscriminator_forward.1} parent=0 // pred_region
    _
  $region17: #{wdiscriminator_forward.1} parent=0 // pred_fallthru
    _
  // Predicated region
  $region18: #{wdiscriminator_forward.1} parent=0 // pred_check
    _
  $region19: #{wdiscriminator_forward.1} parent=0 // pred_check_branch
    %30 = sbr.rel (0) target = $region21
  $region20: #{wdiscriminator_forward.1} parent=0 // pred_region
    _
  $region21: #{wdiscriminator_forward.1} parent=0 // pred_fallthru
    _
  // Predicated region
  $region22: #{wdiscriminator_forward.1} parent=0 // pred_check
    _
  $region23: #{wdiscriminator_forward.1} parent=0 // pred_check_branch
    %32 = sbr.rel (0) target = $region25
  $region24: #{wdiscriminator_forward.1} parent=0 // pred_region
    _
  $region25: #{wdiscriminator_forward.1} parent=0 // pred_fallthru
    _
  // Predicated region
  $region26: #{wdiscriminator_forward.1} parent=0 // pred_check
    _
  $region27: #{wdiscriminator_forward.1} parent=0 // pred_check_branch
    %34 = sbr.rel (0) target = $region29
  $region28: #{wdiscriminator_forward.1} parent=0 // pred_region
    _
  $region29: #{wdiscriminator_forward.1} parent=0 // pred_fallthru
    _
  // Predicated region
  $region30: #{wdiscriminator_forward.1} parent=0 // pred_check
    _
  $region31: #{wdiscriminator_forward.1} parent=0 // pred_check_branch
    %36 = sbr.rel (0) target = $region33
  $region32: #{wdiscriminator_forward.1} parent=0 // pred_region
    _
  $region33: #{wdiscriminator_forward.1} parent=0 // pred_fallthru
    _
  // Predicated region
  $region34: #{wdiscriminator_forward.1} parent=0 // pred_check
    _
  $region35: #{wdiscriminator_forward.1} parent=0 // pred_check_branch
    %38 = sbr.rel (0) target = $region37
  $region36: #{wdiscriminator_forward.1} parent=0 // pred_region
    _
  $region37: #{wdiscriminator_forward.1} parent=0 // pred_fallthru
    _
  // Predicated region
  $region38: #{wdiscriminator_forward.1} parent=0 // pred_check
    _
  $region39: #{wdiscriminator_forward.1} parent=0 // pred_check_branch
    %40 = sbr.rel (0) target = $region41
  $region40: #{wdiscriminator_forward.1} parent=0 // pred_region
    _
  $region41: #{wdiscriminator_forward.1} parent=0 // pred_fallthru
    _
  // Predicated region
  $region42: #{wdiscriminator_forward.1} parent=0 // pred_check
    _
  $region43: #{wdiscriminator_forward.1} parent=0 // pred_check_branch
    %42 = sbr.rel (0) target = $region45
  $region44: #{wdiscriminator_forward.1} parent=0 // pred_region
    _
  $region45: #{wdiscriminator_forward.1} parent=0 // pred_fallthru
    _
  // Predicated region
  $region46: #{wdiscriminator_forward.1} parent=0 // pred_check
    _
  $region47: #{wdiscriminator_forward.1} parent=0 // pred_check_branch
    %44 = sbr.rel (0) target = $region49
  $region48: #{wdiscriminator_forward.1} parent=0 // pred_region
    _
  $region49: #{wdiscriminator_forward.1} parent=0 // pred_fallthru
    _
  // Predicated region
  $region50: #{wdiscriminator_forward.1} parent=0 // pred_check
    _
  $region51: #{wdiscriminator_forward.1} parent=0 // pred_check_branch
    %46 = sbr.rel (0) target = $region53
  $region52: #{wdiscriminator_forward.1} parent=0 // pred_region
    _
  $region53: #{wdiscriminator_forward.1} parent=0 // pred_fallthru
    _
  // Predicated region
  $region54: #{wdiscriminator_forward.1} parent=0 // pred_check
    _
  $region55: #{wdiscriminator_forward.1} parent=0 // pred_check_branch
    %48 = sbr.rel (0) target = $region57
  $region56: #{wdiscriminator_forward.1} parent=0 // pred_region
    _
  $region57: #{wdiscriminator_forward.1} parent=0 // pred_fallthru
    _
  // Predicated region
  $region58: #{wdiscriminator_forward.1} parent=0 // pred_check
    _
  $region59: #{wdiscriminator_forward.1} parent=0 // pred_check_branch
    %50 = sbr.rel (0) target = $region61
  $region60: #{wdiscriminator_forward.1} parent=0 // pred_region
    _
  $region61: #{wdiscriminator_forward.1} parent=0 // pred_fallthru
    _
  // Predicated region
  $region62: #{wdiscriminator_forward.1} parent=0 // pred_check
    _
  $region63: #{wdiscriminator_forward.1} parent=0 // pred_check_branch
    %52 = sbr.rel (0) target = $region65
  $region64: #{wdiscriminator_forward.1} parent=0 // pred_region
    _
  $region65: #{wdiscriminator_forward.1} parent=0 // pred_fallthru
    _
  %54 = vst [vmem:[#allocation2] sm:$0xff] 0.0
  %55 = vst [vmem:[#allocation2 + $0x30] sm:$0xff] 0.0
  %56 = vst [vmem:[#allocation2 + $0x60] sm:$0xff] 0.0
  %57 = vst [vmem:[#allocation2 + $0x90] sm:$0xff] 0.0
  %58 = vst [vmem:[#allocation2 + $0x28] sm:$0xff] 0.0
  %59 = vst [vmem:[#allocation2 + $0x58] sm:$0xff] 0.0
  %60 = vst [vmem:[#allocation2 + $0x88] sm:$0xff] 0.0
  %61 = vst [vmem:[#allocation2 + $0xb8] sm:$0xff] 0.0
  %v62 = vld [vmem:[%s1] sm:$0xff]
  %v63 = vld [vmem:[%s1 + $0x8] sm:$0xff]
  %v64 = vld [vmem:[%s1 + $0x10] sm:$0xff]
  %v65 = vld [vmem:[%s1 + $0x18] sm:$0xff]
  %v66 = vld [vmem:[%s1 + $0x20] sm:$0xff]
  %v67 = vld [vmem:[%s1 + $0x28] sm:$0xff]
  %v68 = vld [vmem:[%s1 + $0x30] sm:$0xff]
  %v69 = vld [vmem:[%s1 + $0x38] sm:$0xff]
  %v70 = vld [vmem:[%s1 + $0x40] sm:$0xff]
  %v71 = vld [vmem:[%s1 + $0x48] sm:$0xff]
  %v72 = vld [vmem:[%s1 + $0x50] sm:$0xff]
  %v73 = vld [vmem:[%s1 + $0x58] sm:$0xff]
  %v74 = vld [vmem:[%s1 + $0x60] sm:$0xff]
  %v75 = vld [vmem:[%s1 + $0x68] sm:$0xff]
  %v76 = vld [vmem:[%s1 + $0x70] sm:$0xff]
  %v77 = vld [vmem:[%s1 + $0x78] sm:$0xff]
  %78 = vst [vmem:[#allocation2 + $0x8] sm:$0xff] %v62
  %79 = vst [vmem:[#allocation2 + $0x10] sm:$0xff] %v63
  %80 = vst [vmem:[#allocation2 + $0x18] sm:$0xff] %v64
  %81 = vst [vmem:[#allocation2 + $0x20] sm:$0xff] %v65
  %82 = vst [vmem:[#allocation2 + $0x38] sm:$0xff] %v66
  %83 = vst [vmem:[#allocation2 + $0x40] sm:$0xff] %v67
  %84 = vst [vmem:[#allocation2 + $0x48] sm:$0xff] %v68
  %85 = vst [vmem:[#allocation2 + $0x50] sm:$0xff] %v69
  %86 = vst [vmem:[#allocation2 + $0x68] sm:$0xff] %v70
  %87 = vst [vmem:[#allocation2 + $0x70] sm:$0xff] %v71
  %88 = vst [vmem:[#allocation2 + $0x78] sm:$0xff] %v72
  %89 = vst [vmem:[#allocation2 + $0x80] sm:$0xff] %v73
  %90 = vst [vmem:[#allocation2 + $0x98] sm:$0xff] %v74
  %91 = vst [vmem:[#allocation2 + $0xa0] sm:$0xff] %v75
  %92 = vst [vmem:[#allocation2 + $0xa8] sm:$0xff] %v76
  %93 = vst [vmem:[#allocation2 + $0xb0] sm:$0xff] %v77
  %v94 = vld [vmem:[#allocation2] sm:$0xff]
  %v95 = vld [vmem:[#allocation2 + $0x8] sm:$0xff]
  %v96 = vld [vmem:[#allocation2 + $0x10] sm:$0xff]
  %v97 = vld [vmem:[#allocation2 + $0x18] sm:$0xff]
  %v98 = vld [vmem:[#allocation2 + $0x20] sm:$0xff]
  %v99 = vld [vmem:[#allocation2 + $0x30] sm:$0xff]
  %v100 = vld [vmem:[#allocation2 + $0x38] sm:$0xff]
  %v101 = vld [vmem:[#allocation2 + $0x40] sm:$0xff]
  %v102 = vld [vmem:[#allocation2 + $0x48] sm:$0xff]
  %v103 = vld [vmem:[#allocation2 + $0x50] sm:$0xff]
  %v104 = vld [vmem:[#allocation2 + $0x60] sm:$0xff]
  %v105 = vld [vmem:[#allocation2 + $0x68] sm:$0xff]
  %v106 = vld [vmem:[#allocation2 + $0x70] sm:$0xff]
  %v107 = vld [vmem:[#allocation2 + $0x78] sm:$0xff]
  %v108 = vld [vmem:[#allocation2 + $0x80] sm:$0xff]
  %v109 = vld [vmem:[#allocation2 + $0x90] sm:$0xff]
  %v110 = vld [vmem:[#allocation2 + $0x98] sm:$0xff]
  %v111 = vld [vmem:[#allocation2 + $0xa0] sm:$0xff]
  %v112 = vld [vmem:[#allocation2 + $0xa8] sm:$0xff]
  %v113 = vld [vmem:[#allocation2 + $0xb0] sm:$0xff]
  %v114 = vld [vmem:[%s0] sm:$0xf]
  %v116 = vlaneseq
  %v117 = vshrl.u32 %v116, 7
  %v118 = vsub.s32 0, %v117
  %v119 = vrot.slane %v114, %v118
  %v120 = vlaneseq
  %v121 = vshrl.u32 %v120, 7
  %v122 = vsub.s32 1, %v121
  %v123 = vrot.slane %v114, %v122
  %v124 = vlaneseq
  %v125 = vshrl.u32 %v124, 7
  %v126 = vsub.s32 2, %v125
  %v127 = vrot.slane %v114, %v126
  %v128 = vlaneseq
  %v129 = vshrl.u32 %v128, 7
  %v130 = vsub.s32 3, %v129
  %v131 = vrot.slane %v114, %v130
  %132 = vrot.lane.b32.xlu0 %v119, 111
  %v133 = vpop.permute.xlu0 %132
  %134 = vrot.lane.b32.xlu0 %v123, 111
  %v135 = vpop.permute.xlu0 %134
  %136 = vrot.lane.b32.xlu0 %v127, 111
  %v137 = vpop.permute.xlu0 %136
  %138 = vrot.lane.b32.xlu0 %v131, 111
  %v139 = vpop.permute.xlu0 %138
  %vm140 = vcmask 908288
  %v141 = vsel %vm140, %v133, %v135
  %v142 = vsel %vm140, %v135, %v137
  %v143 = vsel %vm140, %v137, %v139
  %v149 = vmul.f32 %v94, %v133
  %v150 = vmul.f32 %v95, %v141
  %v151 = vmul.f32 %v96, %v142
  %v152 = vmul.f32 %v97, %v143
  %v153 = vmul.f32 %v98, %v139
  %v154 = vmul.f32 %v99, %v133
  %v155 = vmul.f32 %v100, %v141
  %v156 = vmul.f32 %v101, %v142
  %v157 = vmul.f32 %v102, %v143
  %v158 = vmul.f32 %v103, %v139
  %v159 = vmul.f32 %v104, %v133
  %v160 = vmul.f32 %v105, %v141
  %v161 = vmul.f32 %v106, %v142
  %v162 = vmul.f32 %v107, %v143
  %v163 = vmul.f32 %v108, %v139
  %v164 = vmul.f32 %v109, %v133
  %v165 = vmul.f32 %v110, %v141
  %v166 = vmul.f32 %v111, %v142
  %v167 = vmul.f32 %v112, %v143
  %v168 = vmul.f32 %v113, %v139
  %v169 = vpack.c.bf16 %v154, %v149
  %v170 = vpack.c.bf16 %v155, %v150
  %v171 = vpack.c.bf16 %v156, %v151
  %v172 = vpack.c.bf16 %v157, %v152
  %v173 = vpack.c.bf16 %v158, %v153
  %v174 = vpack.c.bf16 %v164, %v159
  %v175 = vpack.c.bf16 %v165, %v160
  %v176 = vpack.c.bf16 %v166, %v161
  %v177 = vpack.c.bf16 %v167, %v162
  %v178 = vpack.c.bf16 %v168, %v163
  %v179 = vld [vmem:[%s2] sm:$0xf]
  %v180 = vld [vmem:[%s2 + $0x4] sm:$0xf]
  %v181 = vld [vmem:[%s2 + $0x8] sm:$0xf]
  %v182 = vld [vmem:[%s2 + $0xc] sm:$0xf]
  %s183 = scalar_lea.vmem %s0, 4
  %v184 = vld [vmem:[%s183] sm:$0xf]
  %v186 = vlaneseq
  %v187 = vshrl.u32 %v186, 7
  %v188 = vsub.s32 0, %v187
  %v189 = vrot.slane %v184, %v188
  %v190 = vlaneseq
  %v191 = vshrl.u32 %v190, 7
  %v192 = vsub.s32 1, %v191
  %v193 = vrot.slane %v184, %v192
  %v194 = vlaneseq
  %v195 = vshrl.u32 %v194, 7
  %v196 = vsub.s32 2, %v195
  %v197 = vrot.slane %v184, %v196
  %v198 = vlaneseq
  %v199 = vshrl.u32 %v198, 7
  %v200 = vsub.s32 3, %v199
  %v201 = vrot.slane %v184, %v200
  %202 = vrot.lane.b32.xlu0 %v189, 112
  %v203 = vpop.permute.xlu0 %202
  %204 = vrot.lane.b32.xlu0 %v193, 112
  %v205 = vpop.permute.xlu0 %204
  %206 = vrot.lane.b32.xlu0 %v197, 112
  %v207 = vpop.permute.xlu0 %206
  %208 = vrot.lane.b32.xlu0 %v201, 112
  %v209 = vpop.permute.xlu0 %208
  %vm210 = vcmask 916480
  %v211 = vsel %vm210, %v203, %v205
  %v212 = vsel %vm210, %v205, %v207
  %v213 = vsel %vm210, %v207, %v209
  %v219 = vmul.f32 %v94, %v203
  %v220 = vmul.f32 %v95, %v211
  %v221 = vmul.f32 %v96, %v212
  %v222 = vmul.f32 %v97, %v213
  %v223 = vmul.f32 %v98, %v209
  %v224 = vmul.f32 %v99, %v203
  %v225 = vmul.f32 %v100, %v211
  %v226 = vmul.f32 %v101, %v212
  %v227 = vmul.f32 %v102, %v213
  %v228 = vmul.f32 %v103, %v209
  %v229 = vmul.f32 %v104, %v203
  %v230 = vmul.f32 %v105, %v211
  %v231 = vmul.f32 %v106, %v212
  %v232 = vmul.f32 %v107, %v213
  %v233 = vmul.f32 %v108, %v209
  %v234 = vmul.f32 %v109, %v203
  %v235 = vmul.f32 %v110, %v211
  %v236 = vmul.f32 %v111, %v212
  %v237 = vmul.f32 %v112, %v213
  %v238 = vmul.f32 %v113, %v209
  %v239 = vpack.c.bf16 %v224, %v219
  %v240 = vpack.c.bf16 %v225, %v220
  %v241 = vpack.c.bf16 %v226, %v221
  %v242 = vpack.c.bf16 %v227, %v222
  %v243 = vpack.c.bf16 %v228, %v223
  %v244 = vpack.c.bf16 %v234, %v229
  %v245 = vpack.c.bf16 %v235, %v230
  %v246 = vpack.c.bf16 %v236, %v231
  %v247 = vpack.c.bf16 %v237, %v232
  %v248 = vpack.c.bf16 %v238, %v233
  %s249 = scalar_lea.vmem %s2, 16
  %v250 = vld [vmem:[%s249] sm:$0xf]
  %v251 = vld [vmem:[%s249 + $0x4] sm:$0xf]
  %v252 = vld [vmem:[%s249 + $0x8] sm:$0xf]
  %v253 = vld [vmem:[%s249 + $0xc] sm:$0xf]
  %v258 = vunpack.c.l.b16 %v250
  %v259 = vunpack.c.l.b16 %v251
  %v260 = vunpack.c.l.b16 %v252
  %v261 = vunpack.c.l.b16 %v253
  %v262 = vpack.c.b16 %v259, %v258
  %v263 = vpack.c.b16 %v261, %v260
  %274 = vrot.lane.b32.xlu0 %v239, 16
  %v275 = vpop.permute.xlu0 %274
  %276 = vrot.lane.b32.xlu0 %v240, 16
  %v277 = vpop.permute.xlu0 %276
  %278 = vrot.lane.b32.xlu0 %v241, 16
  %v279 = vpop.permute.xlu0 %278
  %280 = vrot.lane.b32.xlu0 %v242, 16
  %v281 = vpop.permute.xlu0 %280
  %282 = vrot.lane.b32.xlu0 %v243, 16
  %v283 = vpop.permute.xlu0 %282
  %284 = vrot.lane.b32.xlu0 %v244, 16
  %v285 = vpop.permute.xlu0 %284
  %286 = vrot.lane.b32.xlu0 %v245, 16
  %v287 = vpop.permute.xlu0 %286
  %288 = vrot.lane.b32.xlu0 %v246, 16
  %v289 = vpop.permute.xlu0 %288
  %290 = vrot.lane.b32.xlu0 %v247, 16
  %v291 = vpop.permute.xlu0 %290
  %292 = vrot.lane.b32.xlu0 %v248, 16
  %v293 = vpop.permute.xlu0 %292
  %vm294 = vcmask 130048
  %v295 = vsel %vm294, %v275, %v277
  %v296 = vsel %vm294, %v277, %v279
  %v297 = vsel %vm294, %v279, %v281
  %v298 = vsel %vm294, %v281, %v283
  %v299 = vsel %vm294, %v285, %v287
  %v300 = vsel %vm294, %v287, %v289
  %v301 = vsel %vm294, %v289, %v291
  %v302 = vsel %vm294, %v291, %v293
  %vm311 = vcmask 261120
  %v313 = vsel %vm311, %v262, 0
  %v316 = vsel %vm311, %v263, 0
  %318 = vmatprep.subr.bf16.mxu0 %v296
  %319 = vmatpush1.bf16.msra.mxu0 %v295
  %320 = vmatprep.subr.bf16.mxu0 %v300
  %321 = vmatpush1.bf16.msra.mxu0 %v299
  %322 = vmatprep.subr.bf16.mxu0 0
  %323 = vmatpush1.bf16.msra.mxu0 0
  %324 = vmatprep.subr.bf16.mxu0 0
  %325 = vmatpush1.bf16.msra.mxu0 0
  %326 = vmatprep.subr.bf16.mxu0 0
  %327 = vmatpush1.bf16.msra.mxu0 0
  %328 = vmatprep.subr.bf16.mxu0 0
  %329 = vmatpush1.bf16.msra.mxu0 0
  %330 = vmatprep.subr.bf16.mxu0 0
  %331 = vmatpush1.bf16.msra.mxu0 0
  %332 = vmatprep.subr.bf16.mxu0 0
  %333 = vmatpush1.bf16.msra.mxu0 0
  %334 = vmatprep.subr.bf16.mxu0 0
  %335 = vmatpush1.bf16.msra.mxu0 0
  %336 = vmatprep.subr.bf16.mxu0 0
  %337 = vmatpush1.bf16.msra.mxu0 0
  %338 = vmatprep.subr.bf16.mxu0 0
  %339 = vmatpush1.bf16.msra.mxu0 0
  %340 = vmatprep.subr.bf16.mxu0 0
  %341 = vmatpush1.bf16.msra.mxu0 0
  %342 = vmatprep.subr.bf16.mxu0 0
  %343 = vmatpush1.bf16.msra.mxu0 0
  %344 = vmatprep.subr.bf16.mxu0 0
  %345 = vmatpush1.bf16.msra.mxu0 0
  %346 = vmatprep.subr.bf16.mxu0 0
  %347 = vmatpush1.bf16.msra.mxu0 0
  %348 = vmatprep.subr.bf16.mxu0 0
  %349 = vmatpush1.bf16.msra.mxu0 0
  %350 = vmatprep.mubr.bf16.mxu0 0
  %351 = vmatmul.mubr.bf16.gmra.mrb[0].mxu0 %v313
  %v352 = vpop.f32.mrb[0].mxu0
  %v353 = vadd.f32 0.0, %v352
  %v354 = vpop.f32.mrb[0].mxu0
  %v355 = vadd.f32 0.0, %v354
  %v356 = vpop.f32.mrb[0].mxu0
  %v357 = vadd.f32 0.0, %v356
  %v358 = vpop.f32.mrb[0].mxu0
  %v359 = vadd.f32 0.0, %v358
  %360 = vmatprep.mubr.bf16.mxu0 0
  %361 = vmatmul.mubr.bf16.gmra.mrb[0].mxu0 %v316
  %v362 = vpop.f32.mrb[0].mxu0
  %v363 = vadd.f32 0.0, %v362
  %v364 = vpop.f32.mrb[0].mxu0
  %v365 = vadd.f32 0.0, %v364
  %v366 = vpop.f32.mrb[0].mxu0
  %v367 = vadd.f32 0.0, %v366
  %v368 = vpop.f32.mrb[0].mxu0
  %v369 = vadd.f32 0.0, %v368
  %370 = vdwg.mxu0
  %371 = vmatprep.subr.bf16.mxu0 %v298
  %372 = vmatpush1.bf16.msra.mxu0 %v297
  %373 = vmatprep.subr.bf16.mxu0 %v302
  %374 = vmatpush1.bf16.msra.mxu0 %v301
  %375 = vmatprep.subr.bf16.mxu0 0
  %376 = vmatpush1.bf16.msra.mxu0 0
  %377 = vmatprep.subr.bf16.mxu0 0
  %378 = vmatpush1.bf16.msra.mxu0 0
  %379 = vmatprep.subr.bf16.mxu0 0
  %380 = vmatpush1.bf16.msra.mxu0 0
  %381 = vmatprep.subr.bf16.mxu0 0
  %382 = vmatpush1.bf16.msra.mxu0 0
  %383 = vmatprep.subr.bf16.mxu0 0
  %384 = vmatpush1.bf16.msra.mxu0 0
  %385 = vmatprep.subr.bf16.mxu0 0
  %386 = vmatpush1.bf16.msra.mxu0 0
  %387 = vmatprep.subr.bf16.mxu0 0
  %388 = vmatpush1.bf16.msra.mxu0 0
  %389 = vmatprep.subr.bf16.mxu0 0
  %390 = vmatpush1.bf16.msra.mxu0 0
  %391 = vmatprep.subr.bf16.mxu0 0
  %392 = vmatpush1.bf16.msra.mxu0 0
  %393 = vmatprep.subr.bf16.mxu0 0
  %394 = vmatpush1.bf16.msra.mxu0 0
  %395 = vmatprep.subr.bf16.mxu0 0
  %396 = vmatpush1.bf16.msra.mxu0 0
  %397 = vmatprep.subr.bf16.mxu0 0
  %398 = vmatpush1.bf16.msra.mxu0 0
  %399 = vmatprep.subr.bf16.mxu0 0
  %400 = vmatpush1.bf16.msra.mxu0 0
  %401 = vmatprep.subr.bf16.mxu0 0
  %402 = vmatpush1.bf16.msra.mxu0 0
  %403 = vmatprep.mubr.bf16.mxu0 0
  %404 = vmatmul.mubr.bf16.gmra.mrb[0].mxu0 %v313
  %v405 = vpop.f32.mrb[0].mxu0
  %v406 = vadd.f32 0.0, %v405
  %v407 = vpop.f32.mrb[0].mxu0
  %v408 = vadd.f32 0.0, %v407
  %v409 = vpop.f32.mrb[0].mxu0
  %v410 = vadd.f32 0.0, %v409
  %v411 = vpop.f32.mrb[0].mxu0
  %v412 = vadd.f32 0.0, %v411
  %413 = vmatprep.mubr.bf16.mxu0 0
  %414 = vmatmul.mubr.bf16.gmra.mrb[0].mxu0 %v316
  %v415 = vpop.f32.mrb[0].mxu0
  %v416 = vadd.f32 0.0, %v415
  %v417 = vpop.f32.mrb[0].mxu0
  %v418 = vadd.f32 0.0, %v417
  %v419 = vpop.f32.mrb[0].mxu0
  %v420 = vadd.f32 0.0, %v419
  %v421 = vpop.f32.mrb[0].mxu0
  %v422 = vadd.f32 0.0, %v421
  %423 = vdwg.mxu0
  %v428 = vunpack.c.l.b16 %v179
  %v429 = vunpack.c.l.b16 %v180
  %v430 = vunpack.c.l.b16 %v181
  %v431 = vunpack.c.l.b16 %v182
  %v432 = vpack.c.b16 %v429, %v428
  %v433 = vpack.c.b16 %v431, %v430
  %444 = vrot.lane.b32.xlu0 %v169, 17
  %v445 = vpop.permute.xlu0 %444
  %446 = vrot.lane.b32.xlu0 %v170, 17
  %v447 = vpop.permute.xlu0 %446
  %448 = vrot.lane.b32.xlu0 %v171, 17
  %v449 = vpop.permute.xlu0 %448
  %450 = vrot.lane.b32.xlu0 %v172, 17
  %v451 = vpop.permute.xlu0 %450
  %452 = vrot.lane.b32.xlu0 %v173, 17
  %v453 = vpop.permute.xlu0 %452
  %454 = vrot.lane.b32.xlu0 %v174, 17
  %v455 = vpop.permute.xlu0 %454
  %456 = vrot.lane.b32.xlu0 %v175, 17
  %v457 = vpop.permute.xlu0 %456
  %458 = vrot.lane.b32.xlu0 %v176, 17
  %v459 = vpop.permute.xlu0 %458
  %460 = vrot.lane.b32.xlu0 %v177, 17
  %v461 = vpop.permute.xlu0 %460
  %462 = vrot.lane.b32.xlu0 %v178, 17
  %v463 = vpop.permute.xlu0 %462
  %vm464 = vcmask 138240
  %v465 = vsel %vm464, %v445, %v447
  %v466 = vsel %vm464, %v447, %v449
  %v467 = vsel %vm464, %v449, %v451
  %v468 = vsel %vm464, %v451, %v453
  %v469 = vsel %vm464, %v455, %v457
  %v470 = vsel %vm464, %v457, %v459
  %v471 = vsel %vm464, %v459, %v461
  %v472 = vsel %vm464, %v461, %v463
  %v482 = vsel %vm311, %v432, 0
  %v485 = vsel %vm311, %v433, 0
  %487 = vmatprep.subr.bf16.mxu0 %v466
  %488 = vmatpush1.bf16.msra.mxu0 %v465
  %489 = vmatprep.subr.bf16.mxu0 %v470
  %490 = vmatpush1.bf16.msra.mxu0 %v469
  %491 = vmatprep.subr.bf16.mxu0 0
  %492 = vmatpush1.bf16.msra.mxu0 0
  %493 = vmatprep.subr.bf16.mxu0 0
  %494 = vmatpush1.bf16.msra.mxu0 0
  %495 = vmatprep.subr.bf16.mxu0 0
  %496 = vmatpush1.bf16.msra.mxu0 0
  %497 = vmatprep.subr.bf16.mxu0 0
  %498 = vmatpush1.bf16.msra.mxu0 0
  %499 = vmatprep.subr.bf16.mxu0 0
  %500 = vmatpush1.bf16.msra.mxu0 0
  %501 = vmatprep.subr.bf16.mxu0 0
  %502 = vmatpush1.bf16.msra.mxu0 0
  %503 = vmatprep.subr.bf16.mxu0 0
  %504 = vmatpush1.bf16.msra.mxu0 0
  %505 = vmatprep.subr.bf16.mxu0 0
  %506 = vmatpush1.bf16.msra.mxu0 0
  %507 = vmatprep.subr.bf16.mxu0 0
  %508 = vmatpush1.bf16.msra.mxu0 0
  %509 = vmatprep.subr.bf16.mxu0 0
  %510 = vmatpush1.bf16.msra.mxu0 0
  %511 = vmatprep.subr.bf16.mxu0 0
  %512 = vmatpush1.bf16.msra.mxu0 0
  %513 = vmatprep.subr.bf16.mxu0 0
  %514 = vmatpush1.bf16.msra.mxu0 0
  %515 = vmatprep.subr.bf16.mxu0 0
  %516 = vmatpush1.bf16.msra.mxu0 0
  %517 = vmatprep.subr.bf16.mxu0 0
  %518 = vmatpush1.bf16.msra.mxu0 0
  %519 = vmatprep.mubr.bf16.mxu0 0
  %520 = vmatmul.mubr.bf16.gmra.mrb[0].mxu0 %v482
  %v521 = vpop.f32.mrb[0].mxu0
  %v522 = vadd.f32 %v353, %v521
  %v523 = vpop.f32.mrb[0].mxu0
  %v524 = vadd.f32 %v355, %v523
  %v525 = vpop.f32.mrb[0].mxu0
  %v526 = vadd.f32 %v357, %v525
  %v527 = vpop.f32.mrb[0].mxu0
  %v528 = vadd.f32 %v359, %v527
  %529 = vmatprep.mubr.bf16.mxu0 0
  %530 = vmatmul.mubr.bf16.gmra.mrb[0].mxu0 %v485
  %v531 = vpop.f32.mrb[0].mxu0
  %v532 = vadd.f32 %v363, %v531
  %v533 = vpop.f32.mrb[0].mxu0
  %v534 = vadd.f32 %v365, %v533
  %v535 = vpop.f32.mrb[0].mxu0
  %v536 = vadd.f32 %v367, %v535
  %v537 = vpop.f32.mrb[0].mxu0
  %v538 = vadd.f32 %v369, %v537
  %539 = vdwg.mxu0
  %540 = vmatprep.subr.bf16.mxu0 %v468
  %541 = vmatpush1.bf16.msra.mxu0 %v467
  %542 = vmatprep.subr.bf16.mxu0 %v472
  %543 = vmatpush1.bf16.msra.mxu0 %v471
  %544 = vmatprep.subr.bf16.mxu0 0
  %545 = vmatpush1.bf16.msra.mxu0 0
  %546 = vmatprep.subr.bf16.mxu0 0
  %547 = vmatpush1.bf16.msra.mxu0 0
  %548 = vmatprep.subr.bf16.mxu0 0
  %549 = vmatpush1.bf16.msra.mxu0 0
  %550 = vmatprep.subr.bf16.mxu0 0
  %551 = vmatpush1.bf16.msra.mxu0 0
  %552 = vmatprep.subr.bf16.mxu0 0
  %553 = vmatpush1.bf16.msra.mxu0 0
  %554 = vmatprep.subr.bf16.mxu0 0
  %555 = vmatpush1.bf16.msra.mxu0 0
  %556 = vmatprep.subr.bf16.mxu0 0
  %557 = vmatpush1.bf16.msra.mxu0 0
  %558 = vmatprep.subr.bf16.mxu0 0
  %559 = vmatpush1.bf16.msra.mxu0 0
  %560 = vmatprep.subr.bf16.mxu0 0
  %561 = vmatpush1.bf16.msra.mxu0 0
  %562 = vmatprep.subr.bf16.mxu0 0
  %563 = vmatpush1.bf16.msra.mxu0 0
  %564 = vmatprep.subr.bf16.mxu0 0
  %565 = vmatpush1.bf16.msra.mxu0 0
  %566 = vmatprep.subr.bf16.mxu0 0
  %567 = vmatpush1.bf16.msra.mxu0 0
  %568 = vmatprep.subr.bf16.mxu0 0
  %569 = vmatpush1.bf16.msra.mxu0 0
  %570 = vmatprep.subr.bf16.mxu0 0
  %571 = vmatpush1.bf16.msra.mxu0 0
  %572 = vmatprep.mubr.bf16.mxu0 0
  %573 = vmatmul.mubr.bf16.gmra.mrb[0].mxu0 %v482
  %v574 = vpop.f32.mrb[0].mxu0
  %v575 = vadd.f32 %v406, %v574
  %v576 = vpop.f32.mrb[0].mxu0
  %v577 = vadd.f32 %v408, %v576
  %v578 = vpop.f32.mrb[0].mxu0
  %v579 = vadd.f32 %v410, %v578
  %v580 = vpop.f32.mrb[0].mxu0
  %v581 = vadd.f32 %v412, %v580
  %582 = vmatprep.mubr.bf16.mxu0 0
  %583 = vmatmul.mubr.bf16.gmra.mrb[0].mxu0 %v485
  %v584 = vpop.f32.mrb[0].mxu0
  %v585 = vadd.f32 %v416, %v584
  %v586 = vpop.f32.mrb[0].mxu0
  %v587 = vadd.f32 %v418, %v586
  %v588 = vpop.f32.mrb[0].mxu0
  %v589 = vadd.f32 %v420, %v588
  %v590 = vpop.f32.mrb[0].mxu0
  %v591 = vadd.f32 %v422, %v590
  %592 = vdwg.mxu0
  %s593 = scalar_lea.vmem %s0, 8
  %v594 = vld [vmem:[%s593] sm:$0xf]
  %v596 = vlaneseq
  %v597 = vshrl.u32 %v596, 7
  %v598 = vsub.s32 0, %v597
  %v599 = vrot.slane %v594, %v598
  %v600 = vlaneseq
  %v601 = vshrl.u32 %v600, 7
  %v602 = vsub.s32 1, %v601
  %v603 = vrot.slane %v594, %v602
  %v604 = vlaneseq
  %v605 = vshrl.u32 %v604, 7
  %v606 = vsub.s32 2, %v605
  %v607 = vrot.slane %v594, %v606
  %v608 = vlaneseq
  %v609 = vshrl.u32 %v608, 7
  %v610 = vsub.s32 3, %v609
  %v611 = vrot.slane %v594, %v610
  %612 = vrot.lane.b32.xlu0 %v599, 113
  %v613 = vpop.permute.xlu0 %612
  %614 = vrot.lane.b32.xlu0 %v603, 113
  %v615 = vpop.permute.xlu0 %614
  %616 = vrot.lane.b32.xlu0 %v607, 113
  %v617 = vpop.permute.xlu0 %616
  %618 = vrot.lane.b32.xlu0 %v611, 113
  %v619 = vpop.permute.xlu0 %618
  %vm620 = vcmask 924672
  %v621 = vsel %vm620, %v613, %v615
  %v622 = vsel %vm620, %v615, %v617
  %v623 = vsel %vm620, %v617, %v619
  %v629 = vmul.f32 %v94, %v613
  %v630 = vmul.f32 %v95, %v621
  %v631 = vmul.f32 %v96, %v622
  %v632 = vmul.f32 %v97, %v623
  %v633 = vmul.f32 %v98, %v619
  %v634 = vmul.f32 %v99, %v613
  %v635 = vmul.f32 %v100, %v621
  %v636 = vmul.f32 %v101, %v622
  %v637 = vmul.f32 %v102, %v623
  %v638 = vmul.f32 %v103, %v619
  %v639 = vmul.f32 %v104, %v613
  %v640 = vmul.f32 %v105, %v621
  %v641 = vmul.f32 %v106, %v622
  %v642 = vmul.f32 %v107, %v623
  %v643 = vmul.f32 %v108, %v619
  %v644 = vmul.f32 %v109, %v613
  %v645 = vmul.f32 %v110, %v621
  %v646 = vmul.f32 %v111, %v622
  %v647 = vmul.f32 %v112, %v623
  %v648 = vmul.f32 %v113, %v619
  %v649 = vpack.c.bf16 %v634, %v629
  %v650 = vpack.c.bf16 %v635, %v630
  %v651 = vpack.c.bf16 %v636, %v631
  %v652 = vpack.c.bf16 %v637, %v632
  %v653 = vpack.c.bf16 %v638, %v633
  %v654 = vpack.c.bf16 %v644, %v639
  %v655 = vpack.c.bf16 %v645, %v640
  %v656 = vpack.c.bf16 %v646, %v641
  %v657 = vpack.c.bf16 %v647, %v642
  %v658 = vpack.c.bf16 %v648, %v643
  %s659 = scalar_lea.vmem %s2, 32
  %v660 = vld [vmem:[%s659] sm:$0xf]
  %v661 = vld [vmem:[%s659 + $0x4] sm:$0xf]
  %v662 = vld [vmem:[%s659 + $0x8] sm:$0xf]
  %v663 = vld [vmem:[%s659 + $0xc] sm:$0xf]
  %v668 = vunpack.c.l.b16 %v660
  %v669 = vunpack.c.l.b16 %v661
  %v670 = vunpack.c.l.b16 %v662
  %v671 = vunpack.c.l.b16 %v663
  %v672 = vpack.c.b16 %v669, %v668
  %v673 = vpack.c.b16 %v671, %v670
  %684 = vrot.lane.b32.xlu0 %v649, 15
  %v685 = vpop.permute.xlu0 %684
  %686 = vrot.lane.b32.xlu0 %v650, 15
  %v687 = vpop.permute.xlu0 %686
  %688 = vrot.lane.b32.xlu0 %v651, 15
  %v689 = vpop.permute.xlu0 %688
  %690 = vrot.lane.b32.xlu0 %v652, 15
  %v691 = vpop.permute.xlu0 %690
  %692 = vrot.lane.b32.xlu0 %v653, 15
  %v693 = vpop.permute.xlu0 %692
  %694 = vrot.lane.b32.xlu0 %v654, 15
  %v695 = vpop.permute.xlu0 %694
  %696 = vrot.lane.b32.xlu0 %v655, 15
  %v697 = vpop.permute.xlu0 %696
  %698 = vrot.lane.b32.xlu0 %v656, 15
  %v699 = vpop.permute.xlu0 %698
  %700 = vrot.lane.b32.xlu0 %v657, 15
  %v701 = vpop.permute.xlu0 %700
  %702 = vrot.lane.b32.xlu0 %v658, 15
  %v703 = vpop.permute.xlu0 %702
  %vm704 = vcmask 121856
  %v705 = vsel %vm704, %v685, %v687
  %v706 = vsel %vm704, %v687, %v689
  %v707 = vsel %vm704, %v689, %v691
  %v708 = vsel %vm704, %v691, %v693
  %v709 = vsel %vm704, %v695, %v697
  %v710 = vsel %vm704, %v697, %v699
  %v711 = vsel %vm704, %v699, %v701
  %v712 = vsel %vm704, %v701, %v703
  %v722 = vsel %vm311, %v672, 0
  %v725 = vsel %vm311, %v673, 0
  %727 = vmatprep.subr.bf16.mxu0 %v706
  %728 = vmatpush1.bf16.msra.mxu0 %v705
  %729 = vmatprep.subr.bf16.mxu0 %v710
  %730 = vmatpush1.bf16.msra.mxu0 %v709
  %731 = vmatprep.subr.bf16.mxu0 0
  %732 = vmatpush1.bf16.msra.mxu0 0
  %733 = vmatprep.subr.bf16.mxu0 0
  %734 = vmatpush1.bf16.msra.mxu0 0
  %735 = vmatprep.subr.bf16.mxu0 0
  %736 = vmatpush1.bf16.msra.mxu0 0
  %737 = vmatprep.subr.bf16.mxu0 0
  %738 = vmatpush1.bf16.msra.mxu0 0
  %739 = vmatprep.subr.bf16.mxu0 0
  %740 = vmatpush1.bf16.msra.mxu0 0
  %741 = vmatprep.subr.bf16.mxu0 0
  %742 = vmatpush1.bf16.msra.mxu0 0
  %743 = vmatprep.subr.bf16.mxu0 0
  %744 = vmatpush1.bf16.msra.mxu0 0
  %745 = vmatprep.subr.bf16.mxu0 0
  %746 = vmatpush1.bf16.msra.mxu0 0
  %747 = vmatprep.subr.bf16.mxu0 0
  %748 = vmatpush1.bf16.msra.mxu0 0
  %749 = vmatprep.subr.bf16.mxu0 0
  %750 = vmatpush1.bf16.msra.mxu0 0
  %751 = vmatprep.subr.bf16.mxu0 0
  %752 = vmatpush1.bf16.msra.mxu0 0
  %753 = vmatprep.subr.bf16.mxu0 0
  %754 = vmatpush1.bf16.msra.mxu0 0
  %755 = vmatprep.subr.bf16.mxu0 0
  %756 = vmatpush1.bf16.msra.mxu0 0
  %757 = vmatprep.subr.bf16.mxu0 0
  %758 = vmatpush1.bf16.msra.mxu0 0
  %759 = vmatprep.mubr.bf16.mxu0 0
  %760 = vmatmul.mubr.bf16.gmra.mrb[0].mxu0 %v722
  %v761 = vpop.f32.mrb[0].mxu0
  %v762 = vadd.f32 0.0, %v761
  %v763 = vpop.f32.mrb[0].mxu0
  %v764 = vadd.f32 0.0, %v763
  %v765 = vpop.f32.mrb[0].mxu0
  %v766 = vadd.f32 0.0, %v765
  %v767 = vpop.f32.mrb[0].mxu0
  %v768 = vadd.f32 0.0, %v767
  %769 = vmatprep.mubr.bf16.mxu0 0
  %770 = vmatmul.mubr.bf16.gmra.mrb[0].mxu0 %v725
  %v771 = vpop.f32.mrb[0].mxu0
  %v772 = vadd.f32 0.0, %v771
  %v773 = vpop.f32.mrb[0].mxu0
  %v774 = vadd.f32 0.0, %v773
  %v775 = vpop.f32.mrb[0].mxu0
  %v776 = vadd.f32 0.0, %v775
  %v777 = vpop.f32.mrb[0].mxu0
  %v778 = vadd.f32 0.0, %v777
  %779 = vdwg.mxu0
  %780 = vmatprep.subr.bf16.mxu0 %v708
  %781 = vmatpush1.bf16.msra.mxu0 %v707
  %782 = vmatprep.subr.bf16.mxu0 %v712
  %783 = vmatpush1.bf16.msra.mxu0 %v711
  %784 = vmatprep.subr.bf16.mxu0 0
  %785 = vmatpush1.bf16.msra.mxu0 0
  %786 = vmatprep.subr.bf16.mxu0 0
  %787 = vmatpush1.bf16.msra.mxu0 0
  %788 = vmatprep.subr.bf16.mxu0 0
  %789 = vmatpush1.bf16.msra.mxu0 0
  %790 = vmatprep.subr.bf16.mxu0 0
  %791 = vmatpush1.bf16.msra.mxu0 0
  %792 = vmatprep.subr.bf16.mxu0 0
  %793 = vmatpush1.bf16.msra.mxu0 0
  %794 = vmatprep.subr.bf16.mxu0 0
  %795 = vmatpush1.bf16.msra.mxu0 0
  %796 = vmatprep.subr.bf16.mxu0 0
  %797 = vmatpush1.bf16.msra.mxu0 0
  %798 = vmatprep.subr.bf16.mxu0 0
  %799 = vmatpush1.bf16.msra.mxu0 0
  %800 = vmatprep.subr.bf16.mxu0 0
  %801 = vmatpush1.bf16.msra.mxu0 0
  %802 = vmatprep.subr.bf16.mxu0 0
  %803 = vmatpush1.bf16.msra.mxu0 0
  %804 = vmatprep.subr.bf16.mxu0 0
  %805 = vmatpush1.bf16.msra.mxu0 0
  %806 = vmatprep.subr.bf16.mxu0 0
  %807 = vmatpush1.bf16.msra.mxu0 0
  %808 = vmatprep.subr.bf16.mxu0 0
  %809 = vmatpush1.bf16.msra.mxu0 0
  %810 = vmatprep.subr.bf16.mxu0 0
  %811 = vmatpush1.bf16.msra.mxu0 0
  %812 = vmatprep.mubr.bf16.mxu0 0
  %813 = vmatmul.mubr.bf16.gmra.mrb[0].mxu0 %v722
  %v814 = vpop.f32.mrb[0].mxu0
  %v815 = vadd.f32 0.0, %v814
  %v816 = vpop.f32.mrb[0].mxu0
  %v817 = vadd.f32 0.0, %v816
  %v818 = vpop.f32.mrb[0].mxu0
  %v819 = vadd.f32 0.0, %v818
  %v820 = vpop.f32.mrb[0].mxu0
  %v821 = vadd.f32 0.0, %v820
  %822 = vmatprep.mubr.bf16.mxu0 0
  %823 = vmatmul.mubr.bf16.gmra.mrb[0].mxu0 %v725
  %v824 = vpop.f32.mrb[0].mxu0
  %v825 = vadd.f32 0.0, %v824
  %v826 = vpop.f32.mrb[0].mxu0
  %v827 = vadd.f32 0.0, %v826
  %v828 = vpop.f32.mrb[0].mxu0
  %v829 = vadd.f32 0.0, %v828
  %v830 = vpop.f32.mrb[0].mxu0
  %v831 = vadd.f32 0.0, %v830
  %832 = vdwg.mxu0
  %v833 = vadd.f32 %v522, %v762
  %v834 = vadd.f32 %v524, %v764
  %v835 = vadd.f32 %v575, %v815
  %v836 = vadd.f32 %v577, %v817
  %v837 = vadd.f32 %v526, %v766
  %v838 = vadd.f32 %v528, %v768
  %v839 = vadd.f32 %v579, %v819
  %v840 = vadd.f32 %v581, %v821
  %v841 = vadd.f32 %v532, %v772
  %v842 = vadd.f32 %v534, %v774
  %v843 = vadd.f32 %v585, %v825
  %v844 = vadd.f32 %v587, %v827
  %v845 = vadd.f32 %v536, %v776
  %v846 = vadd.f32 %v538, %v778
  %v847 = vadd.f32 %v589, %v829
  %v848 = vadd.f32 %v591, %v831
  %s849 = scalar_lea.vmem %s0, 12
  %v850 = vld [vmem:[%s849] sm:$0xf]
  %v852 = vlaneseq
  %v853 = vshrl.u32 %v852, 7
  %v854 = vsub.s32 0, %v853
  %v855 = vrot.slane %v850, %v854
  %v856 = vlaneseq
  %v857 = vshrl.u32 %v856, 7
  %v858 = vsub.s32 1, %v857
  %v859 = vrot.slane %v850, %v858
  %v860 = vlaneseq
  %v861 = vshrl.u32 %v860, 7
  %v862 = vsub.s32 2, %v861
  %v863 = vrot.slane %v850, %v862
  %v864 = vlaneseq
  %v865 = vshrl.u32 %v864, 7
  %v866 = vsub.s32 3, %v865
  %v867 = vrot.slane %v850, %v866
  %868 = vrot.lane.b32.xlu0 %v855, 127
  %v869 = vpop.permute.xlu0 %868
  %870 = vrot.lane.b32.xlu0 %v859, 127
  %v871 = vpop.permute.xlu0 %870
  %872 = vrot.lane.b32.xlu0 %v863, 127
  %v873 = vpop.permute.xlu0 %872
  %874 = vrot.lane.b32.xlu0 %v867, 127
  %v875 = vpop.permute.xlu0 %874
  %vm876 = vcmask 1039360
  %v877 = vsel %vm876, %v869, %v871
  %v878 = vsel %vm876, %v871, %v873
  %v879 = vsel %vm876, %v873, %v875
  %v885 = vmul.f32 %v94, %v869
  %v886 = vmul.f32 %v95, %v877
  %v887 = vmul.f32 %v96, %v878
  %v888 = vmul.f32 %v97, %v879
  %v889 = vmul.f32 %v98, %v875
  %v890 = vmul.f32 %v99, %v869
  %v891 = vmul.f32 %v100, %v877
  %v892 = vmul.f32 %v101, %v878
  %v893 = vmul.f32 %v102, %v879
  %v894 = vmul.f32 %v103, %v875
  %v895 = vmul.f32 %v104, %v869
  %v896 = vmul.f32 %v105, %v877
  %v897 = vmul.f32 %v106, %v878
  %v898 = vmul.f32 %v107, %v879
  %v899 = vmul.f32 %v108, %v875
  %v900 = vmul.f32 %v109, %v869
  %v901 = vmul.f32 %v110, %v877
  %v902 = vmul.f32 %v111, %v878
  %v903 = vmul.f32 %v112, %v879
  %v904 = vmul.f32 %v113, %v875
  %v905 = vpack.c.bf16 %v890, %v885
  %v906 = vpack.c.bf16 %v891, %v886
  %v907 = vpack.c.bf16 %v892, %v887
  %v908 = vpack.c.bf16 %v893, %v888
  %v909 = vpack.c.bf16 %v894, %v889
  %v910 = vpack.c.bf16 %v900, %v895
  %v911 = vpack.c.bf16 %v901, %v896
  %v912 = vpack.c.bf16 %v902, %v897
  %v913 = vpack.c.bf16 %v903, %v898
  %v914 = vpack.c.bf16 %v904, %v899
  %s915 = scalar_lea.vmem %s2, 48
  %v916 = vld [vmem:[%s915] sm:$0xf]
  %v917 = vld [vmem:[%s915 + $0x4] sm:$0xf]
  %v918 = vld [vmem:[%s915 + $0x8] sm:$0xf]
  %v919 = vld [vmem:[%s915 + $0xc] sm:$0xf]
  %v924 = vunpack.c.l.b16 %v916
  %v925 = vunpack.c.l.b16 %v917
  %v926 = vunpack.c.l.b16 %v918
  %v927 = vunpack.c.l.b16 %v919
  %v928 = vpack.c.b16 %v925, %v924
  %v929 = vpack.c.b16 %v927, %v926
  %940 = vrot.lane.b32.xlu0 %v905, 1
  %v941 = vpop.permute.xlu0 %940
  %942 = vrot.lane.b32.xlu0 %v906, 1
  %v943 = vpop.permute.xlu0 %942
  %944 = vrot.lane.b32.xlu0 %v907, 1
  %v945 = vpop.permute.xlu0 %944
  %946 = vrot.lane.b32.xlu0 %v908, 1
  %v947 = vpop.permute.xlu0 %946
  %948 = vrot.lane.b32.xlu0 %v909, 1
  %v949 = vpop.permute.xlu0 %948
  %950 = vrot.lane.b32.xlu0 %v910, 1
  %v951 = vpop.permute.xlu0 %950
  %952 = vrot.lane.b32.xlu0 %v911, 1
  %v953 = vpop.permute.xlu0 %952
  %954 = vrot.lane.b32.xlu0 %v912, 1
  %v955 = vpop.permute.xlu0 %954
  %956 = vrot.lane.b32.xlu0 %v913, 1
  %v957 = vpop.permute.xlu0 %956
  %958 = vrot.lane.b32.xlu0 %v914, 1
  %v959 = vpop.permute.xlu0 %958
  %vm960 = vcmask 7168
  %v961 = vsel %vm960, %v941, %v943
  %v962 = vsel %vm960, %v943, %v945
  %v963 = vsel %vm960, %v945, %v947
  %v964 = vsel %vm960, %v947, %v949
  %v965 = vsel %vm960, %v951, %v953
  %v966 = vsel %vm960, %v953, %v955
  %v967 = vsel %vm960, %v955, %v957
  %v968 = vsel %vm960, %v957, %v959
  %v978 = vsel %vm311, %v928, 0
  %v981 = vsel %vm311, %v929, 0
  %983 = vmatprep.subr.bf16.mxu0 %v962
  %984 = vmatpush1.bf16.msra.mxu0 %v961
  %985 = vmatprep.subr.bf16.mxu0 %v966
  %986 = vmatpush1.bf16.msra.mxu0 %v965
  %987 = vmatprep.subr.bf16.mxu0 0
  %988 = vmatpush1.bf16.msra.mxu0 0
  %989 = vmatprep.subr.bf16.mxu0 0
  %990 = vmatpush1.bf16.msra.mxu0 0
  %991 = vmatprep.subr.bf16.mxu0 0
  %992 = vmatpush1.bf16.msra.mxu0 0
  %993 = vmatprep.subr.bf16.mxu0 0
  %994 = vmatpush1.bf16.msra.mxu0 0
  %995 = vmatprep.subr.bf16.mxu0 0
  %996 = vmatpush1.bf16.msra.mxu0 0
  %997 = vmatprep.subr.bf16.mxu0 0
  %998 = vmatpush1.bf16.msra.mxu0 0
  %999 = vmatprep.subr.bf16.mxu0 0
  %1000 = vmatpush1.bf16.msra.mxu0 0
  %1001 = vmatprep.subr.bf16.mxu0 0
  %1002 = vmatpush1.bf16.msra.mxu0 0
  %1003 = vmatprep.subr.bf16.mxu0 0
  %1004 = vmatpush1.bf16.msra.mxu0 0
  %1005 = vmatprep.subr.bf16.mxu0 0
  %1006 = vmatpush1.bf16.msra.mxu0 0
  %1007 = vmatprep.subr.bf16.mxu0 0
  %1008 = vmatpush1.bf16.msra.mxu0 0
  %1009 = vmatprep.subr.bf16.mxu0 0
  %1010 = vmatpush1.bf16.msra.mxu0 0
  %1011 = vmatprep.subr.bf16.mxu0 0
  %1012 = vmatpush1.bf16.msra.mxu0 0
  %1013 = vmatprep.subr.bf16.mxu0 0
  %1014 = vmatpush1.bf16.msra.mxu0 0
  %1015 = vmatprep.mubr.bf16.mxu0 0
  %1016 = vmatmul.mubr.bf16.gmra.mrb[0].mxu0 %v978
  %v1017 = vpop.f32.mrb[0].mxu0
  %v1018 = vadd.f32 0.0, %v1017
  %v1019 = vpop.f32.mrb[0].mxu0
  %v1020 = vadd.f32 0.0, %v1019
  %v1021 = vpop.f32.mrb[0].mxu0
  %v1022 = vadd.f32 0.0, %v1021
  %v1023 = vpop.f32.mrb[0].mxu0
  %v1024 = vadd.f32 0.0, %v1023
  %1025 = vmatprep.mubr.bf16.mxu0 0
  %1026 = vmatmul.mubr.bf16.gmra.mrb[0].mxu0 %v981
  %v1027 = vpop.f32.mrb[0].mxu0
  %v1028 = vadd.f32 0.0, %v1027
  %v1029 = vpop.f32.mrb[0].mxu0
  %v1030 = vadd.f32 0.0, %v1029
  %v1031 = vpop.f32.mrb[0].mxu0
  %v1032 = vadd.f32 0.0, %v1031
  %v1033 = vpop.f32.mrb[0].mxu0
  %v1034 = vadd.f32 0.0, %v1033
  %1035 = vdwg.mxu0
  %1036 = vmatprep.subr.bf16.mxu0 %v964
  %1037 = vmatpush1.bf16.msra.mxu0 %v963
  %1038 = vmatprep.subr.bf16.mxu0 %v968
  %1039 = vmatpush1.bf16.msra.mxu0 %v967
  %1040 = vmatprep.subr.bf16.mxu0 0
  %1041 = vmatpush1.bf16.msra.mxu0 0
  %1042 = vmatprep.subr.bf16.mxu0 0
  %1043 = vmatpush1.bf16.msra.mxu0 0
  %1044 = vmatprep.subr.bf16.mxu0 0
  %1045 = vmatpush1.bf16.msra.mxu0 0
  %1046 = vmatprep.subr.bf16.mxu0 0
  %1047 = vmatpush1.bf16.msra.mxu0 0
  %1048 = vmatprep.subr.bf16.mxu0 0
  %1049 = vmatpush1.bf16.msra.mxu0 0
  %1050 = vmatprep.subr.bf16.mxu0 0
  %1051 = vmatpush1.bf16.msra.mxu0 0
  %1052 = vmatprep.subr.bf16.mxu0 0
  %1053 = vmatpush1.bf16.msra.mxu0 0
  %1054 = vmatprep.subr.bf16.mxu0 0
  %1055 = vmatpush1.bf16.msra.mxu0 0
  %1056 = vmatprep.subr.bf16.mxu0 0
  %1057 = vmatpush1.bf16.msra.mxu0 0
  %1058 = vmatprep.subr.bf16.mxu0 0
  %1059 = vmatpush1.bf16.msra.mxu0 0
  %1060 = vmatprep.subr.bf16.mxu0 0
  %1061 = vmatpush1.bf16.msra.mxu0 0
  %1062 = vmatprep.subr.bf16.mxu0 0
  %1063 = vmatpush1.bf16.msra.mxu0 0
  %1064 = vmatprep.subr.bf16.mxu0 0
  %1065 = vmatpush1.bf16.msra.mxu0 0
  %1066 = vmatprep.subr.bf16.mxu0 0
  %1067 = vmatpush1.bf16.msra.mxu0 0
  %1068 = vmatprep.mubr.bf16.mxu0 0
  %1069 = vmatmul.mubr.bf16.gmra.mrb[0].mxu0 %v978
  %v1070 = vpop.f32.mrb[0].mxu0
  %v1071 = vadd.f32 0.0, %v1070
  %v1072 = vpop.f32.mrb[0].mxu0
  %v1073 = vadd.f32 0.0, %v1072
  %v1074 = vpop.f32.mrb[0].mxu0
  %v1075 = vadd.f32 0.0, %v1074
  %v1076 = vpop.f32.mrb[0].mxu0
  %v1077 = vadd.f32 0.0, %v1076
  %1078 = vmatprep.mubr.bf16.mxu0 0
  %1079 = vmatmul.mubr.bf16.gmra.mrb[0].mxu0 %v981
  %v1080 = vpop.f32.mrb[0].mxu0
  %v1081 = vadd.f32 0.0, %v1080
  %v1082 = vpop.f32.mrb[0].mxu0
  %v1083 = vadd.f32 0.0, %v1082
  %v1084 = vpop.f32.mrb[0].mxu0
  %v1085 = vadd.f32 0.0, %v1084
  %v1086 = vpop.f32.mrb[0].mxu0
  %v1087 = vadd.f32 0.0, %v1086
  %1088 = vdwg.mxu0
  %v1089 = vadd.f32 %v833, %v1018
  %v1090 = vadd.f32 %v834, %v1020
  %v1091 = vadd.f32 %v835, %v1071
  %v1092 = vadd.f32 %v836, %v1073
  %v1093 = vadd.f32 %v837, %v1022
  %v1094 = vadd.f32 %v838, %v1024
  %v1095 = vadd.f32 %v839, %v1075
  %v1096 = vadd.f32 %v840, %v1077
  %v1097 = vadd.f32 %v841, %v1028
  %v1098 = vadd.f32 %v842, %v1030
  %v1099 = vadd.f32 %v843, %v1081
  %v1100 = vadd.f32 %v844, %v1083
  %v1101 = vadd.f32 %v845, %v1032
  %v1102 = vadd.f32 %v846, %v1034
  %v1103 = vadd.f32 %v847, %v1085
  %v1104 = vadd.f32 %v848, %v1087
  %v1105 = vpack.c.bf16 %v100, %v95
  %v1106 = vpack.c.bf16 %v101, %v96
  %v1107 = vpack.c.bf16 %v102, %v97
  %v1108 = vpack.c.bf16 %v103, %v98
  %v1109 = vpack.c.bf16 %v110, %v105
  %v1110 = vpack.c.bf16 %v111, %v106
  %v1111 = vpack.c.bf16 %v112, %v107
  %v1112 = vpack.c.bf16 %v113, %v108
  %s1113 = scalar_lea.vmem %s2, 64
  %v1114 = vld [vmem:[%s1113] sm:$0xf]
  %v1115 = vld [vmem:[%s1113 + $0x4] sm:$0xf]
  %v1116 = vld [vmem:[%s1113 + $0x8] sm:$0xf]
  %v1117 = vld [vmem:[%s1113 + $0xc] sm:$0xf]
  %v1122 = vunpack.c.l.b16 %v1114
  %v1123 = vunpack.c.l.b16 %v1115
  %v1124 = vunpack.c.l.b16 %v1116
  %v1125 = vunpack.c.l.b16 %v1117
  %v1126 = vpack.c.b16 %v1123, %v1122
  %v1127 = vpack.c.b16 %v1125, %v1124
  %v1129 = vsel %vm311, %v1126, 0
  %v1132 = vsel %vm311, %v1127, 0
  %1134 = vmatprep.subr.bf16.mxu0 %v1106
  %1135 = vmatpush1.bf16.msra.mxu0 %v1105
  %1136 = vmatprep.subr.bf16.mxu0 %v1110
  %1137 = vmatpush1.bf16.msra.mxu0 %v1109
  %1138 = vmatprep.subr.bf16.mxu0 0
  %1139 = vmatpush1.bf16.msra.mxu0 0
  %1140 = vmatprep.subr.bf16.mxu0 0
  %1141 = vmatpush1.bf16.msra.mxu0 0
  %1142 = vmatprep.subr.bf16.mxu0 0
  %1143 = vmatpush1.bf16.msra.mxu0 0
  %1144 = vmatprep.subr.bf16.mxu0 0
  %1145 = vmatpush1.bf16.msra.mxu0 0
  %1146 = vmatprep.subr.bf16.mxu0 0
  %1147 = vmatpush1.bf16.msra.mxu0 0
  %1148 = vmatprep.subr.bf16.mxu0 0
  %1149 = vmatpush1.bf16.msra.mxu0 0
  %1150 = vmatprep.subr.bf16.mxu0 0
  %1151 = vmatpush1.bf16.msra.mxu0 0
  %1152 = vmatprep.subr.bf16.mxu0 0
  %1153 = vmatpush1.bf16.msra.mxu0 0
  %1154 = vmatprep.subr.bf16.mxu0 0
  %1155 = vmatpush1.bf16.msra.mxu0 0
  %1156 = vmatprep.subr.bf16.mxu0 0
  %1157 = vmatpush1.bf16.msra.mxu0 0
  %1158 = vmatprep.subr.bf16.mxu0 0
  %1159 = vmatpush1.bf16.msra.mxu0 0
  %1160 = vmatprep.subr.bf16.mxu0 0
  %1161 = vmatpush1.bf16.msra.mxu0 0
  %1162 = vmatprep.subr.bf16.mxu0 0
  %1163 = vmatpush1.bf16.msra.mxu0 0
  %1164 = vmatprep.subr.bf16.mxu0 0
  %1165 = vmatpush1.bf16.msra.mxu0 0
  %1166 = vmatprep.mubr.bf16.mxu0 0
  %1167 = vmatmul.mubr.bf16.gmra.mrb[0].mxu0 %v1129
  %v1168 = vpop.f32.mrb[0].mxu0
  %v1169 = vadd.f32 0.0, %v1168
  %v1170 = vpop.f32.mrb[0].mxu0
  %v1171 = vadd.f32 0.0, %v1170
  %v1172 = vpop.f32.mrb[0].mxu0
  %v1173 = vadd.f32 0.0, %v1172
  %v1174 = vpop.f32.mrb[0].mxu0
  %v1175 = vadd.f32 0.0, %v1174
  %1176 = vmatprep.mubr.bf16.mxu0 0
  %1177 = vmatmul.mubr.bf16.gmra.mrb[0].mxu0 %v1132
  %v1178 = vpop.f32.mrb[0].mxu0
  %v1179 = vadd.f32 0.0, %v1178
  %v1180 = vpop.f32.mrb[0].mxu0
  %v1181 = vadd.f32 0.0, %v1180
  %v1182 = vpop.f32.mrb[0].mxu0
  %v1183 = vadd.f32 0.0, %v1182
  %v1184 = vpop.f32.mrb[0].mxu0
  %v1185 = vadd.f32 0.0, %v1184
  %1186 = vdwg.mxu0
  %1187 = vmatprep.subr.bf16.mxu0 %v1108
  %1188 = vmatpush1.bf16.msra.mxu0 %v1107
  %1189 = vmatprep.subr.bf16.mxu0 %v1112
  %1190 = vmatpush1.bf16.msra.mxu0 %v1111
  %1191 = vmatprep.subr.bf16.mxu0 0
  %1192 = vmatpush1.bf16.msra.mxu0 0
  %1193 = vmatprep.subr.bf16.mxu0 0
  %1194 = vmatpush1.bf16.msra.mxu0 0
  %1195 = vmatprep.subr.bf16.mxu0 0
  %1196 = vmatpush1.bf16.msra.mxu0 0
  %1197 = vmatprep.subr.bf16.mxu0 0
  %1198 = vmatpush1.bf16.msra.mxu0 0
  %1199 = vmatprep.subr.bf16.mxu0 0
  %1200 = vmatpush1.bf16.msra.mxu0 0
  %1201 = vmatprep.subr.bf16.mxu0 0
  %1202 = vmatpush1.bf16.msra.mxu0 0
  %1203 = vmatprep.subr.bf16.mxu0 0
  %1204 = vmatpush1.bf16.msra.mxu0 0
  %1205 = vmatprep.subr.bf16.mxu0 0
  %1206 = vmatpush1.bf16.msra.mxu0 0
  %1207 = vmatprep.subr.bf16.mxu0 0
  %1208 = vmatpush1.bf16.msra.mxu0 0
  %1209 = vmatprep.subr.bf16.mxu0 0
  %1210 = vmatpush1.bf16.msra.mxu0 0
  %1211 = vmatprep.subr.bf16.mxu0 0
  %1212 = vmatpush1.bf16.msra.mxu0 0
  %1213 = vmatprep.subr.bf16.mxu0 0
  %1214 = vmatpush1.bf16.msra.mxu0 0
  %1215 = vmatprep.subr.bf16.mxu0 0
  %1216 = vmatpush1.bf16.msra.mxu0 0
  %1217 = vmatprep.subr.bf16.mxu0 0
  %1218 = vmatpush1.bf16.msra.mxu0 0
  %1219 = vmatprep.mubr.bf16.mxu0 0
  %1220 = vmatmul.mubr.bf16.gmra.mrb[0].mxu0 %v1129
  %v1221 = vpop.f32.mrb[0].mxu0
  %v1222 = vadd.f32 0.0, %v1221
  %v1223 = vpop.f32.mrb[0].mxu0
  %v1224 = vadd.f32 0.0, %v1223
  %v1225 = vpop.f32.mrb[0].mxu0
  %v1226 = vadd.f32 0.0, %v1225
  %v1227 = vpop.f32.mrb[0].mxu0
  %v1228 = vadd.f32 0.0, %v1227
  %1229 = vmatprep.mubr.bf16.mxu0 0
  %1230 = vmatmul.mubr.bf16.gmra.mrb[0].mxu0 %v1132
  %v1231 = vpop.f32.mrb[0].mxu0
  %v1232 = vadd.f32 0.0, %v1231
  %v1233 = vpop.f32.mrb[0].mxu0
  %v1234 = vadd.f32 0.0, %v1233
  %v1235 = vpop.f32.mrb[0].mxu0
  %v1236 = vadd.f32 0.0, %v1235
  %v1237 = vpop.f32.mrb[0].mxu0
  %v1238 = vadd.f32 0.0, %v1237
  %1239 = vdwg.mxu0
  %v1240 = vadd.f32 %v1089, %v1169
  %v1241 = vadd.f32 %v1090, %v1171
  %v1242 = vadd.f32 %v1091, %v1222
  %v1243 = vadd.f32 %v1092, %v1224
  %v1244 = vadd.f32 %v1093, %v1173
  %v1245 = vadd.f32 %v1094, %v1175
  %v1246 = vadd.f32 %v1095, %v1226
  %v1247 = vadd.f32 %v1096, %v1228
  %v1248 = vadd.f32 %v1097, %v1179
  %v1249 = vadd.f32 %v1098, %v1181
  %v1250 = vadd.f32 %v1099, %v1232
  %v1251 = vadd.f32 %v1100, %v1234
  %v1252 = vadd.f32 %v1101, %v1183
  %v1253 = vadd.f32 %v1102, %v1185
  %v1254 = vadd.f32 %v1103, %v1236
  %v1255 = vadd.f32 %v1104, %v1238
  %v1256 = vld [vmem:[#allocation2 + $0x8] sm:$0xff]
  %v1257 = vld [vmem:[#allocation2 + $0x10] sm:$0xff]
  %v1258 = vld [vmem:[#allocation2 + $0x18] sm:$0xff]
  %v1259 = vld [vmem:[#allocation2 + $0x20] sm:$0xff]
  %v1260 = vld [vmem:[#allocation2 + $0x28] sm:$0xff]
  %v1261 = vld [vmem:[#allocation2 + $0x38] sm:$0xff]
  %v1262 = vld [vmem:[#allocation2 + $0x40] sm:$0xff]
  %v1263 = vld [vmem:[#allocation2 + $0x48] sm:$0xff]
  %v1264 = vld [vmem:[#allocation2 + $0x50] sm:$0xff]
  %v1265 = vld [vmem:[#allocation2 + $0x58] sm:$0xff]
  %v1266 = vld [vmem:[#allocation2 + $0x68] sm:$0xff]
  %v1267 = vld [vmem:[#allocation2 + $0x70] sm:$0xff]
  %v1268 = vld [vmem:[#allocation2 + $0x78] sm:$0xff]
  %v1269 = vld [vmem:[#allocation2 + $0x80] sm:$0xff]
  %v1270 = vld [vmem:[#allocation2 + $0x88] sm:$0xff]
  %v1271 = vld [vmem:[#allocation2 + $0x98] sm:$0xff]
  %v1272 = vld [vmem:[#allocation2 + $0xa0] sm:$0xff]
  %v1273 = vld [vmem:[#allocation2 + $0xa8] sm:$0xff]
  %v1274 = vld [vmem:[#allocation2 + $0xb0] sm:$0xff]
  %v1275 = vld [vmem:[#allocation2 + $0xb8] sm:$0xff]
  %s1276 = scalar_lea.vmem %s0, 20
  %v1277 = vld [vmem:[%s1276] sm:$0xf]
  %v1279 = vlaneseq
  %v1280 = vshrl.u32 %v1279, 7
  %v1281 = vsub.s32 0, %v1280
  %v1282 = vrot.slane %v1277, %v1281
  %v1283 = vlaneseq
  %v1284 = vshrl.u32 %v1283, 7
  %v1285 = vsub.s32 1, %v1284
  %v1286 = vrot.slane %v1277, %v1285
  %v1287 = vlaneseq
  %v1288 = vshrl.u32 %v1287, 7
  %v1289 = vsub.s32 2, %v1288
  %v1290 = vrot.slane %v1277, %v1289
  %v1291 = vlaneseq
  %v1292 = vshrl.u32 %v1291, 7
  %v1293 = vsub.s32 3, %v1292
  %v1294 = vrot.slane %v1277, %v1293
  %1295 = vrot.lane.b32.xlu0 %v1282, 1
  %v1296 = vpop.permute.xlu0 %1295
  %1297 = vrot.lane.b32.xlu0 %v1286, 1
  %v1298 = vpop.permute.xlu0 %1297
  %1299 = vrot.lane.b32.xlu0 %v1290, 1
  %v1300 = vpop.permute.xlu0 %1299
  %1301 = vrot.lane.b32.xlu0 %v1294, 1
  %v1302 = vpop.permute.xlu0 %1301
  %vm1303 = vcmask 7168
  %v1304 = vsel %vm1303, %v1296, %v1298
  %v1305 = vsel %vm1303, %v1298, %v1300
  %v1306 = vsel %vm1303, %v1300, %v1302
  %v1312 = vmul.f32 %v1256, %v1296
  %v1313 = vmul.f32 %v1257, %v1304
  %v1314 = vmul.f32 %v1258, %v1305
  %v1315 = vmul.f32 %v1259, %v1306
  %v1316 = vmul.f32 %v1260, %v1302
  %v1317 = vmul.f32 %v1261, %v1296
  %v1318 = vmul.f32 %v1262, %v1304
  %v1319 = vmul.f32 %v1263, %v1305
  %v1320 = vmul.f32 %v1264, %v1306
  %v1321 = vmul.f32 %v1265, %v1302
  %v1322 = vmul.f32 %v1266, %v1296
  %v1323 = vmul.f32 %v1267, %v1304
  %v1324 = vmul.f32 %v1268, %v1305
  %v1325 = vmul.f32 %v1269, %v1306
  %v1326 = vmul.f32 %v1270, %v1302
  %v1327 = vmul.f32 %v1271, %v1296
  %v1328 = vmul.f32 %v1272, %v1304
  %v1329 = vmul.f32 %v1273, %v1305
  %v1330 = vmul.f32 %v1274, %v1306
  %v1331 = vmul.f32 %v1275, %v1302
  %v1332 = vpack.c.bf16 %v1317, %v1312
  %v1333 = vpack.c.bf16 %v1318, %v1313
  %v1334 = vpack.c.bf16 %v1319, %v1314
  %v1335 = vpack.c.bf16 %v1320, %v1315
  %v1336 = vpack.c.bf16 %v1321, %v1316
  %v1337 = vpack.c.bf16 %v1327, %v1322
  %v1338 = vpack.c.bf16 %v1328, %v1323
  %v1339 = vpack.c.bf16 %v1329, %v1324
  %v1340 = vpack.c.bf16 %v1330, %v1325
  %v1341 = vpack.c.bf16 %v1331, %v1326
  %s1342 = scalar_lea.vmem %s2, 80
  %v1343 = vld [vmem:[%s1342] sm:$0xf]
  %v1344 = vld [vmem:[%s1342 + $0x4] sm:$0xf]
  %v1345 = vld [vmem:[%s1342 + $0x8] sm:$0xf]
  %v1346 = vld [vmem:[%s1342 + $0xc] sm:$0xf]
  %v1351 = vunpack.c.l.b16 %v1343
  %v1352 = vunpack.c.l.b16 %v1344
  %v1353 = vunpack.c.l.b16 %v1345
  %v1354 = vunpack.c.l.b16 %v1346
  %v1355 = vpack.c.b16 %v1352, %v1351
  %v1356 = vpack.c.b16 %v1354, %v1353
  %1367 = vrot.lane.b32.xlu0 %v1332, 127
  %v1368 = vpop.permute.xlu0 %1367
  %1369 = vrot.lane.b32.xlu0 %v1333, 127
  %v1370 = vpop.permute.xlu0 %1369
  %1371 = vrot.lane.b32.xlu0 %v1334, 127
  %v1372 = vpop.permute.xlu0 %1371
  %1373 = vrot.lane.b32.xlu0 %v1335, 127
  %v1374 = vpop.permute.xlu0 %1373
  %1375 = vrot.lane.b32.xlu0 %v1336, 127
  %v1376 = vpop.permute.xlu0 %1375
  %1377 = vrot.lane.b32.xlu0 %v1337, 127
  %v1378 = vpop.permute.xlu0 %1377
  %1379 = vrot.lane.b32.xlu0 %v1338, 127
  %v1380 = vpop.permute.xlu0 %1379
  %1381 = vrot.lane.b32.xlu0 %v1339, 127
  %v1382 = vpop.permute.xlu0 %1381
  %1383 = vrot.lane.b32.xlu0 %v1340, 127
  %v1384 = vpop.permute.xlu0 %1383
  %1385 = vrot.lane.b32.xlu0 %v1341, 127
  %v1386 = vpop.permute.xlu0 %1385
  %vm1387 = vcmask 1039360
  %v1388 = vsel %vm1387, %v1368, %v1370
  %v1389 = vsel %vm1387, %v1370, %v1372
  %v1390 = vsel %vm1387, %v1372, %v1374
  %v1391 = vsel %vm1387, %v1374, %v1376
  %v1392 = vsel %vm1387, %v1378, %v1380
  %v1393 = vsel %vm1387, %v1380, %v1382
  %v1394 = vsel %vm1387, %v1382, %v1384
  %v1395 = vsel %vm1387, %v1384, %v1386
  %v1405 = vsel %vm311, %v1355, 0
  %v1408 = vsel %vm311, %v1356, 0
  %1410 = vmatprep.subr.bf16.mxu0 %v1389
  %1411 = vmatpush1.bf16.msra.mxu0 %v1388
  %1412 = vmatprep.subr.bf16.mxu0 %v1393
  %1413 = vmatpush1.bf16.msra.mxu0 %v1392
  %1414 = vmatprep.subr.bf16.mxu0 0
  %1415 = vmatpush1.bf16.msra.mxu0 0
  %1416 = vmatprep.subr.bf16.mxu0 0
  %1417 = vmatpush1.bf16.msra.mxu0 0
  %1418 = vmatprep.subr.bf16.mxu0 0
  %1419 = vmatpush1.bf16.msra.mxu0 0
  %1420 = vmatprep.subr.bf16.mxu0 0
  %1421 = vmatpush1.bf16.msra.mxu0 0
  %1422 = vmatprep.subr.bf16.mxu0 0
  %1423 = vmatpush1.bf16.msra.mxu0 0
  %1424 = vmatprep.subr.bf16.mxu0 0
  %1425 = vmatpush1.bf16.msra.mxu0 0
  %1426 = vmatprep.subr.bf16.mxu0 0
  %1427 = vmatpush1.bf16.msra.mxu0 0
  %1428 = vmatprep.subr.bf16.mxu0 0
  %1429 = vmatpush1.bf16.msra.mxu0 0
  %1430 = vmatprep.subr.bf16.mxu0 0
  %1431 = vmatpush1.bf16.msra.mxu0 0
  %1432 = vmatprep.subr.bf16.mxu0 0
  %1433 = vmatpush1.bf16.msra.mxu0 0
  %1434 = vmatprep.subr.bf16.mxu0 0
  %1435 = vmatpush1.bf16.msra.mxu0 0
  %1436 = vmatprep.subr.bf16.mxu0 0
  %1437 = vmatpush1.bf16.msra.mxu0 0
  %1438 = vmatprep.subr.bf16.mxu0 0
  %1439 = vmatpush1.bf16.msra.mxu0 0
  %1440 = vmatprep.subr.bf16.mxu0 0
  %1441 = vmatpush1.bf16.msra.mxu0 0
  %1442 = vmatprep.mubr.bf16.mxu0 0
  %1443 = vmatmul.mubr.bf16.gmra.mrb[0].mxu0 %v1405
  %v1444 = vpop.f32.mrb[0].mxu0
  %v1445 = vadd.f32 0.0, %v1444
  %v1446 = vpop.f32.mrb[0].mxu0
  %v1447 = vadd.f32 0.0, %v1446
  %v1448 = vpop.f32.mrb[0].mxu0
  %v1449 = vadd.f32 0.0, %v1448
  %v1450 = vpop.f32.mrb[0].mxu0
  %v1451 = vadd.f32 0.0, %v1450
  %1452 = vmatprep.mubr.bf16.mxu0 0
  %1453 = vmatmul.mubr.bf16.gmra.mrb[0].mxu0 %v1408
  %v1454 = vpop.f32.mrb[0].mxu0
  %v1455 = vadd.f32 0.0, %v1454
  %v1456 = vpop.f32.mrb[0].mxu0
  %v1457 = vadd.f32 0.0, %v1456
  %v1458 = vpop.f32.mrb[0].mxu0
  %v1459 = vadd.f32 0.0, %v1458
  %v1460 = vpop.f32.mrb[0].mxu0
  %v1461 = vadd.f32 0.0, %v1460
  %1462 = vdwg.mxu0
  %1463 = vmatprep.subr.bf16.mxu0 %v1391
  %1464 = vmatpush1.bf16.msra.mxu0 %v1390
  %1465 = vmatprep.subr.bf16.mxu0 %v1395
  %1466 = vmatpush1.bf16.msra.mxu0 %v1394
  %1467 = vmatprep.subr.bf16.mxu0 0
  %1468 = vmatpush1.bf16.msra.mxu0 0
  %1469 = vmatprep.subr.bf16.mxu0 0
  %1470 = vmatpush1.bf16.msra.mxu0 0
  %1471 = vmatprep.subr.bf16.mxu0 0
  %1472 = vmatpush1.bf16.msra.mxu0 0
  %1473 = vmatprep.subr.bf16.mxu0 0
  %1474 = vmatpush1.bf16.msra.mxu0 0
  %1475 = vmatprep.subr.bf16.mxu0 0
  %1476 = vmatpush1.bf16.msra.mxu0 0
  %1477 = vmatprep.subr.bf16.mxu0 0
  %1478 = vmatpush1.bf16.msra.mxu0 0
  %1479 = vmatprep.subr.bf16.mxu0 0
  %1480 = vmatpush1.bf16.msra.mxu0 0
  %1481 = vmatprep.subr.bf16.mxu0 0
  %1482 = vmatpush1.bf16.msra.mxu0 0
  %1483 = vmatprep.subr.bf16.mxu0 0
  %1484 = vmatpush1.bf16.msra.mxu0 0
  %1485 = vmatprep.subr.bf16.mxu0 0
  %1486 = vmatpush1.bf16.msra.mxu0 0
  %1487 = vmatprep.subr.bf16.mxu0 0
  %1488 = vmatpush1.bf16.msra.mxu0 0
  %1489 = vmatprep.subr.bf16.mxu0 0
  %1490 = vmatpush1.bf16.msra.mxu0 0
  %1491 = vmatprep.subr.bf16.mxu0 0
  %1492 = vmatpush1.bf16.msra.mxu0 0
  %1493 = vmatprep.subr.bf16.mxu0 0
  %1494 = vmatpush1.bf16.msra.mxu0 0
  %1495 = vmatprep.mubr.bf16.mxu0 0
  %1496 = vmatmul.mubr.bf16.gmra.mrb[0].mxu0 %v1405
  %v1497 = vpop.f32.mrb[0].mxu0
  %v1498 = vadd.f32 0.0, %v1497
  %v1499 = vpop.f32.mrb[0].mxu0
  %v1500 = vadd.f32 0.0, %v1499
  %v1501 = vpop.f32.mrb[0].mxu0
  %v1502 = vadd.f32 0.0, %v1501
  %v1503 = vpop.f32.mrb[0].mxu0
  %v1504 = vadd.f32 0.0, %v1503
  %1505 = vmatprep.mubr.bf16.mxu0 0
  %1506 = vmatmul.mubr.bf16.gmra.mrb[0].mxu0 %v1408
  %v1507 = vpop.f32.mrb[0].mxu0
  %v1508 = vadd.f32 0.0, %v1507
  %v1509 = vpop.f32.mrb[0].mxu0
  %v1510 = vadd.f32 0.0, %v1509
  %v1511 = vpop.f32.mrb[0].mxu0
  %v1512 = vadd.f32 0.0, %v1511
  %v1513 = vpop.f32.mrb[0].mxu0
  %v1514 = vadd.f32 0.0, %v1513
  %1515 = vdwg.mxu0
  %v1516 = vadd.f32 %v1240, %v1445
  %v1517 = vadd.f32 %v1241, %v1447
  %v1518 = vadd.f32 %v1242, %v1498
  %v1519 = vadd.f32 %v1243, %v1500
  %v1520 = vadd.f32 %v1244, %v1449
  %v1521 = vadd.f32 %v1245, %v1451
  %v1522 = vadd.f32 %v1246, %v1502
  %v1523 = vadd.f32 %v1247, %v1504
  %v1524 = vadd.f32 %v1248, %v1455
  %v1525 = vadd.f32 %v1249, %v1457
  %v1526 = vadd.f32 %v1250, %v1508
  %v1527 = vadd.f32 %v1251, %v1510
  %v1528 = vadd.f32 %v1252, %v1459
  %v1529 = vadd.f32 %v1253, %v1461
  %v1530 = vadd.f32 %v1254, %v1512
  %v1531 = vadd.f32 %v1255, %v1514
  %s1532 = scalar_lea.vmem %s0, 24
  %v1533 = vld [vmem:[%s1532] sm:$0xf]
  %v1535 = vlaneseq
  %v1536 = vshrl.u32 %v1535, 7
  %v1537 = vsub.s32 0, %v1536
  %v1538 = vrot.slane %v1533, %v1537
  %v1539 = vlaneseq
  %v1540 = vshrl.u32 %v1539, 7
  %v1541 = vsub.s32 1, %v1540
  %v1542 = vrot.slane %v1533, %v1541
  %v1543 = vlaneseq
  %v1544 = vshrl.u32 %v1543, 7
  %v1545 = vsub.s32 2, %v1544
  %v1546 = vrot.slane %v1533, %v1545
  %v1547 = vlaneseq
  %v1548 = vshrl.u32 %v1547, 7
  %v1549 = vsub.s32 3, %v1548
  %v1550 = vrot.slane %v1533, %v1549
  %1551 = vrot.lane.b32.xlu0 %v1538, 15
  %v1552 = vpop.permute.xlu0 %1551
  %1553 = vrot.lane.b32.xlu0 %v1542, 15
  %v1554 = vpop.permute.xlu0 %1553
  %1555 = vrot.lane.b32.xlu0 %v1546, 15
  %v1556 = vpop.permute.xlu0 %1555
  %1557 = vrot.lane.b32.xlu0 %v1550, 15
  %v1558 = vpop.permute.xlu0 %1557
  %vm1559 = vcmask 121856
  %v1560 = vsel %vm1559, %v1552, %v1554
  %v1561 = vsel %vm1559, %v1554, %v1556
  %v1562 = vsel %vm1559, %v1556, %v1558
  %v1568 = vmul.f32 %v1256, %v1552
  %v1569 = vmul.f32 %v1257, %v1560
  %v1570 = vmul.f32 %v1258, %v1561
  %v1571 = vmul.f32 %v1259, %v1562
  %v1572 = vmul.f32 %v1260, %v1558
  %v1573 = vmul.f32 %v1261, %v1552
  %v1574 = vmul.f32 %v1262, %v1560
  %v1575 = vmul.f32 %v1263, %v1561
  %v1576 = vmul.f32 %v1264, %v1562
  %v1577 = vmul.f32 %v1265, %v1558
  %v1578 = vmul.f32 %v1266, %v1552
  %v1579 = vmul.f32 %v1267, %v1560
  %v1580 = vmul.f32 %v1268, %v1561
  %v1581 = vmul.f32 %v1269, %v1562
  %v1582 = vmul.f32 %v1270, %v1558
  %v1583 = vmul.f32 %v1271, %v1552
  %v1584 = vmul.f32 %v1272, %v1560
  %v1585 = vmul.f32 %v1273, %v1561
  %v1586 = vmul.f32 %v1274, %v1562
  %v1587 = vmul.f32 %v1275, %v1558
  %v1588 = vpack.c.bf16 %v1573, %v1568
  %v1589 = vpack.c.bf16 %v1574, %v1569
  %v1590 = vpack.c.bf16 %v1575, %v1570
  %v1591 = vpack.c.bf16 %v1576, %v1571
  %v1592 = vpack.c.bf16 %v1577, %v1572
  %v1593 = vpack.c.bf16 %v1583, %v1578
  %v1594 = vpack.c.bf16 %v1584, %v1579
  %v1595 = vpack.c.bf16 %v1585, %v1580
  %v1596 = vpack.c.bf16 %v1586, %v1581
  %v1597 = vpack.c.bf16 %v1587, %v1582
  %s1598 = scalar_lea.vmem %s2, 96
  %v1599 = vld [vmem:[%s1598] sm:$0xf]
  %v1600 = vld [vmem:[%s1598 + $0x4] sm:$0xf]
  %v1601 = vld [vmem:[%s1598 + $0x8] sm:$0xf]
  %v1602 = vld [vmem:[%s1598 + $0xc] sm:$0xf]
  %v1607 = vunpack.c.l.b16 %v1599
  %v1608 = vunpack.c.l.b16 %v1600
  %v1609 = vunpack.c.l.b16 %v1601
  %v1610 = vunpack.c.l.b16 %v1602
  %v1611 = vpack.c.b16 %v1608, %v1607
  %v1612 = vpack.c.b16 %v1610, %v1609
  %1623 = vrot.lane.b32.xlu0 %v1588, 113
  %v1624 = vpop.permute.xlu0 %1623
  %1625 = vrot.lane.b32.xlu0 %v1589, 113
  %v1626 = vpop.permute.xlu0 %1625
  %1627 = vrot.lane.b32.xlu0 %v1590, 113
  %v1628 = vpop.permute.xlu0 %1627
  %1629 = vrot.lane.b32.xlu0 %v1591, 113
  %v1630 = vpop.permute.xlu0 %1629
  %1631 = vrot.lane.b32.xlu0 %v1592, 113
  %v1632 = vpop.permute.xlu0 %1631
  %1633 = vrot.lane.b32.xlu0 %v1593, 113
  %v1634 = vpop.permute.xlu0 %1633
  %1635 = vrot.lane.b32.xlu0 %v1594, 113
  %v1636 = vpop.permute.xlu0 %1635
  %1637 = vrot.lane.b32.xlu0 %v1595, 113
  %v1638 = vpop.permute.xlu0 %1637
  %1639 = vrot.lane.b32.xlu0 %v1596, 113
  %v1640 = vpop.permute.xlu0 %1639
  %1641 = vrot.lane.b32.xlu0 %v1597, 113
  %v1642 = vpop.permute.xlu0 %1641
  %vm1643 = vcmask 924672
  %v1644 = vsel %vm1643, %v1624, %v1626
  %v1645 = vsel %vm1643, %v1626, %v1628
  %v1646 = vsel %vm1643, %v1628, %v1630
  %v1647 = vsel %vm1643, %v1630, %v1632
  %v1648 = vsel %vm1643, %v1634, %v1636
  %v1649 = vsel %vm1643, %v1636, %v1638
  %v1650 = vsel %vm1643, %v1638, %v1640
  %v1651 = vsel %vm1643, %v1640, %v1642
  %v1661 = vsel %vm311, %v1611, 0
  %v1664 = vsel %vm311, %v1612, 0
  %1666 = vmatprep.subr.bf16.mxu0 %v1645
  %1667 = vmatpush1.bf16.msra.mxu0 %v1644
  %1668 = vmatprep.subr.bf16.mxu0 %v1649
  %1669 = vmatpush1.bf16.msra.mxu0 %v1648
  %1670 = vmatprep.subr.bf16.mxu0 0
  %1671 = vmatpush1.bf16.msra.mxu0 0
  %1672 = vmatprep.subr.bf16.mxu0 0
  %1673 = vmatpush1.bf16.msra.mxu0 0
  %1674 = vmatprep.subr.bf16.mxu0 0
  %1675 = vmatpush1.bf16.msra.mxu0 0
  %1676 = vmatprep.subr.bf16.mxu0 0
  %1677 = vmatpush1.bf16.msra.mxu0 0
  %1678 = vmatprep.subr.bf16.mxu0 0
  %1679 = vmatpush1.bf16.msra.mxu0 0
  %1680 = vmatprep.subr.bf16.mxu0 0
  %1681 = vmatpush1.bf16.msra.mxu0 0
  %1682 = vmatprep.subr.bf16.mxu0 0
  %1683 = vmatpush1.bf16.msra.mxu0 0
  %1684 = vmatprep.subr.bf16.mxu0 0
  %1685 = vmatpush1.bf16.msra.mxu0 0
  %1686 = vmatprep.subr.bf16.mxu0 0
  %1687 = vmatpush1.bf16.msra.mxu0 0
  %1688 = vmatprep.subr.bf16.mxu0 0
  %1689 = vmatpush1.bf16.msra.mxu0 0
  %1690 = vmatprep.subr.bf16.mxu0 0
  %1691 = vmatpush1.bf16.msra.mxu0 0
  %1692 = vmatprep.subr.bf16.mxu0 0
  %1693 = vmatpush1.bf16.msra.mxu0 0
  %1694 = vmatprep.subr.bf16.mxu0 0
  %1695 = vmatpush1.bf16.msra.mxu0 0
  %1696 = vmatprep.subr.bf16.mxu0 0
  %1697 = vmatpush1.bf16.msra.mxu0 0
  %1698 = vmatprep.mubr.bf16.mxu0 0
  %1699 = vmatmul.mubr.bf16.gmra.mrb[0].mxu0 %v1661
  %v1700 = vpop.f32.mrb[0].mxu0
  %v1701 = vadd.f32 0.0, %v1700
  %v1702 = vpop.f32.mrb[0].mxu0
  %v1703 = vadd.f32 0.0, %v1702
  %v1704 = vpop.f32.mrb[0].mxu0
  %v1705 = vadd.f32 0.0, %v1704
  %v1706 = vpop.f32.mrb[0].mxu0
  %v1707 = vadd.f32 0.0, %v1706
  %1708 = vmatprep.mubr.bf16.mxu0 0
  %1709 = vmatmul.mubr.bf16.gmra.mrb[0].mxu0 %v1664
  %v1710 = vpop.f32.mrb[0].mxu0
  %v1711 = vadd.f32 0.0, %v1710
  %v1712 = vpop.f32.mrb[0].mxu0
  %v1713 = vadd.f32 0.0, %v1712
  %v1714 = vpop.f32.mrb[0].mxu0
  %v1715 = vadd.f32 0.0, %v1714
  %v1716 = vpop.f32.mrb[0].mxu0
  %v1717 = vadd.f32 0.0, %v1716
  %1718 = vdwg.mxu0
  %1719 = vmatprep.subr.bf16.mxu0 %v1647
  %1720 = vmatpush1.bf16.msra.mxu0 %v1646
  %1721 = vmatprep.subr.bf16.mxu0 %v1651
  %1722 = vmatpush1.bf16.msra.mxu0 %v1650
  %1723 = vmatprep.subr.bf16.mxu0 0
  %1724 = vmatpush1.bf16.msra.mxu0 0
  %1725 = vmatprep.subr.bf16.mxu0 0
  %1726 = vmatpush1.bf16.msra.mxu0 0
  %1727 = vmatprep.subr.bf16.mxu0 0
  %1728 = vmatpush1.bf16.msra.mxu0 0
  %1729 = vmatprep.subr.bf16.mxu0 0
  %1730 = vmatpush1.bf16.msra.mxu0 0
  %1731 = vmatprep.subr.bf16.mxu0 0
  %1732 = vmatpush1.bf16.msra.mxu0 0
  %1733 = vmatprep.subr.bf16.mxu0 0
  %1734 = vmatpush1.bf16.msra.mxu0 0
  %1735 = vmatprep.subr.bf16.mxu0 0
  %1736 = vmatpush1.bf16.msra.mxu0 0
  %1737 = vmatprep.subr.bf16.mxu0 0
  %1738 = vmatpush1.bf16.msra.mxu0 0
  %1739 = vmatprep.subr.bf16.mxu0 0
  %1740 = vmatpush1.bf16.msra.mxu0 0
  %1741 = vmatprep.subr.bf16.mxu0 0
  %1742 = vmatpush1.bf16.msra.mxu0 0
  %1743 = vmatprep.subr.bf16.mxu0 0
  %1744 = vmatpush1.bf16.msra.mxu0 0
  %1745 = vmatprep.subr.bf16.mxu0 0
  %1746 = vmatpush1.bf16.msra.mxu0 0
  %1747 = vmatprep.subr.bf16.mxu0 0
  %1748 = vmatpush1.bf16.msra.mxu0 0
  %1749 = vmatprep.subr.bf16.mxu0 0
  %1750 = vmatpush1.bf16.msra.mxu0 0
  %1751 = vmatprep.mubr.bf16.mxu0 0
  %1752 = vmatmul.mubr.bf16.gmra.mrb[0].mxu0 %v1661
  %v1753 = vpop.f32.mrb[0].mxu0
  %v1754 = vadd.f32 0.0, %v1753
  %v1755 = vpop.f32.mrb[0].mxu0
  %v1756 = vadd.f32 0.0, %v1755
  %v1757 = vpop.f32.mrb[0].mxu0
  %v1758 = vadd.f32 0.0, %v1757
  %v1759 = vpop.f32.mrb[0].mxu0
  %v1760 = vadd.f32 0.0, %v1759
  %1761 = vmatprep.mubr.bf16.mxu0 0
  %1762 = vmatmul.mubr.bf16.gmra.mrb[0].mxu0 %v1664
  %v1763 = vpop.f32.mrb[0].mxu0
  %v1764 = vadd.f32 0.0, %v1763
  %v1765 = vpop.f32.mrb[0].mxu0
  %v1766 = vadd.f32 0.0, %v1765
  %v1767 = vpop.f32.mrb[0].mxu0
  %v1768 = vadd.f32 0.0, %v1767
  %v1769 = vpop.f32.mrb[0].mxu0
  %v1770 = vadd.f32 0.0, %v1769
  %1771 = vdwg.mxu0
  %v1772 = vadd.f32 %v1516, %v1701
  %v1773 = vadd.f32 %v1517, %v1703
  %v1774 = vadd.f32 %v1518, %v1754
  %v1775 = vadd.f32 %v1519, %v1756
  %v1776 = vadd.f32 %v1520, %v1705
  %v1777 = vadd.f32 %v1521, %v1707
  %v1778 = vadd.f32 %v1522, %v1758
  %v1779 = vadd.f32 %v1523, %v1760
  %v1780 = vadd.f32 %v1524, %v1711
  %v1781 = vadd.f32 %v1525, %v1713
  %v1782 = vadd.f32 %v1526, %v1764
  %v1783 = vadd.f32 %v1527, %v1766
  %v1784 = vadd.f32 %v1528, %v1715
  %v1785 = vadd.f32 %v1529, %v1717
  %v1786 = vadd.f32 %v1530, %v1768
  %v1787 = vadd.f32 %v1531, %v1770
  %s1788 = scalar_lea.vmem %s0, 28
  %v1789 = vld [vmem:[%s1788] sm:$0xf]
  %v1791 = vlaneseq
  %v1792 = vshrl.u32 %v1791, 7
  %v1793 = vsub.s32 0, %v1792
  %v1794 = vrot.slane %v1789, %v1793
  %v1795 = vlaneseq
  %v1796 = vshrl.u32 %v1795, 7
  %v1797 = vsub.s32 1, %v1796
  %v1798 = vrot.slane %v1789, %v1797
  %v1799 = vlaneseq
  %v1800 = vshrl.u32 %v1799, 7
  %v1801 = vsub.s32 2, %v1800
  %v1802 = vrot.slane %v1789, %v1801
  %v1803 = vlaneseq
  %v1804 = vshrl.u32 %v1803, 7
  %v1805 = vsub.s32 3, %v1804
  %v1806 = vrot.slane %v1789, %v1805
  %1807 = vrot.lane.b32.xlu0 %v1794, 16
  %v1808 = vpop.permute.xlu0 %1807
  %1809 = vrot.lane.b32.xlu0 %v1798, 16
  %v1810 = vpop.permute.xlu0 %1809
  %1811 = vrot.lane.b32.xlu0 %v1802, 16
  %v1812 = vpop.permute.xlu0 %1811
  %1813 = vrot.lane.b32.xlu0 %v1806, 16
  %v1814 = vpop.permute.xlu0 %1813
  %vm1815 = vcmask 130048
  %v1816 = vsel %vm1815, %v1808, %v1810
  %v1817 = vsel %vm1815, %v1810, %v1812
  %v1818 = vsel %vm1815, %v1812, %v1814
  %v1824 = vmul.f32 %v1256, %v1808
  %v1825 = vmul.f32 %v1257, %v1816
  %v1826 = vmul.f32 %v1258, %v1817
  %v1827 = vmul.f32 %v1259, %v1818
  %v1828 = vmul.f32 %v1260, %v1814
  %v1829 = vmul.f32 %v1261, %v1808
  %v1830 = vmul.f32 %v1262, %v1816
  %v1831 = vmul.f32 %v1263, %v1817
  %v1832 = vmul.f32 %v1264, %v1818
  %v1833 = vmul.f32 %v1265, %v1814
  %v1834 = vmul.f32 %v1266, %v1808
  %v1835 = vmul.f32 %v1267, %v1816
  %v1836 = vmul.f32 %v1268, %v1817
  %v1837 = vmul.f32 %v1269, %v1818
  %v1838 = vmul.f32 %v1270, %v1814
  %v1839 = vmul.f32 %v1271, %v1808
  %v1840 = vmul.f32 %v1272, %v1816
  %v1841 = vmul.f32 %v1273, %v1817
  %v1842 = vmul.f32 %v1274, %v1818
  %v1843 = vmul.f32 %v1275, %v1814
  %v1844 = vpack.c.bf16 %v1829, %v1824
  %v1845 = vpack.c.bf16 %v1830, %v1825
  %v1846 = vpack.c.bf16 %v1831, %v1826
  %v1847 = vpack.c.bf16 %v1832, %v1827
  %v1848 = vpack.c.bf16 %v1833, %v1828
  %v1849 = vpack.c.bf16 %v1839, %v1834
  %v1850 = vpack.c.bf16 %v1840, %v1835
  %v1851 = vpack.c.bf16 %v1841, %v1836
  %v1852 = vpack.c.bf16 %v1842, %v1837
  %v1853 = vpack.c.bf16 %v1843, %v1838
  %s1854 = scalar_lea.vmem %s2, 112
  %v1855 = vld [vmem:[%s1854] sm:$0xf]
  %v1856 = vld [vmem:[%s1854 + $0x4] sm:$0xf]
  %v1857 = vld [vmem:[%s1854 + $0x8] sm:$0xf]
  %v1858 = vld [vmem:[%s1854 + $0xc] sm:$0xf]
  %v1863 = vunpack.c.l.b16 %v1855
  %v1864 = vunpack.c.l.b16 %v1856
  %v1865 = vunpack.c.l.b16 %v1857
  %v1866 = vunpack.c.l.b16 %v1858
  %v1867 = vpack.c.b16 %v1864, %v1863
  %v1868 = vpack.c.b16 %v1866, %v1865
  %1879 = vrot.lane.b32.xlu0 %v1844, 112
  %v1880 = vpop.permute.xlu0 %1879
  %1881 = vrot.lane.b32.xlu0 %v1845, 112
  %v1882 = vpop.permute.xlu0 %1881
  %1883 = vrot.lane.b32.xlu0 %v1846, 112
  %v1884 = vpop.permute.xlu0 %1883
  %1885 = vrot.lane.b32.xlu0 %v1847, 112
  %v1886 = vpop.permute.xlu0 %1885
  %1887 = vrot.lane.b32.xlu0 %v1848, 112
  %v1888 = vpop.permute.xlu0 %1887
  %1889 = vrot.lane.b32.xlu0 %v1849, 112
  %v1890 = vpop.permute.xlu0 %1889
  %1891 = vrot.lane.b32.xlu0 %v1850, 112
  %v1892 = vpop.permute.xlu0 %1891
  %1893 = vrot.lane.b32.xlu0 %v1851, 112
  %v1894 = vpop.permute.xlu0 %1893
  %1895 = vrot.lane.b32.xlu0 %v1852, 112
  %v1896 = vpop.permute.xlu0 %1895
  %1897 = vrot.lane.b32.xlu0 %v1853, 112
  %v1898 = vpop.permute.xlu0 %1897
  %vm1899 = vcmask 916480
  %v1900 = vsel %vm1899, %v1880, %v1882
  %v1901 = vsel %vm1899, %v1882, %v1884
  %v1902 = vsel %vm1899, %v1884, %v1886
  %v1903 = vsel %vm1899, %v1886, %v1888
  %v1904 = vsel %vm1899, %v1890, %v1892
  %v1905 = vsel %vm1899, %v1892, %v1894
  %v1906 = vsel %vm1899, %v1894, %v1896
  %v1907 = vsel %vm1899, %v1896, %v1898
  %v1917 = vsel %vm311, %v1867, 0
  %v1920 = vsel %vm311, %v1868, 0
  %1922 = vmatprep.subr.bf16.mxu0 %v1901
  %1923 = vmatpush1.bf16.msra.mxu0 %v1900
  %1924 = vmatprep.subr.bf16.mxu0 %v1905
  %1925 = vmatpush1.bf16.msra.mxu0 %v1904
  %1926 = vmatprep.subr.bf16.mxu0 0
  %1927 = vmatpush1.bf16.msra.mxu0 0
  %1928 = vmatprep.subr.bf16.mxu0 0
  %1929 = vmatpush1.bf16.msra.mxu0 0
  %1930 = vmatprep.subr.bf16.mxu0 0
  %1931 = vmatpush1.bf16.msra.mxu0 0
  %1932 = vmatprep.subr.bf16.mxu0 0
  %1933 = vmatpush1.bf16.msra.mxu0 0
  %1934 = vmatprep.subr.bf16.mxu0 0
  %1935 = vmatpush1.bf16.msra.mxu0 0
  %1936 = vmatprep.subr.bf16.mxu0 0
  %1937 = vmatpush1.bf16.msra.mxu0 0
  %1938 = vmatprep.subr.bf16.mxu0 0
  %1939 = vmatpush1.bf16.msra.mxu0 0
  %1940 = vmatprep.subr.bf16.mxu0 0
  %1941 = vmatpush1.bf16.msra.mxu0 0
  %1942 = vmatprep.subr.bf16.mxu0 0
  %1943 = vmatpush1.bf16.msra.mxu0 0
  %1944 = vmatprep.subr.bf16.mxu0 0
  %1945 = vmatpush1.bf16.msra.mxu0 0
  %1946 = vmatprep.subr.bf16.mxu0 0
  %1947 = vmatpush1.bf16.msra.mxu0 0
  %1948 = vmatprep.subr.bf16.mxu0 0
  %1949 = vmatpush1.bf16.msra.mxu0 0
  %1950 = vmatprep.subr.bf16.mxu0 0
  %1951 = vmatpush1.bf16.msra.mxu0 0
  %1952 = vmatprep.subr.bf16.mxu0 0
  %1953 = vmatpush1.bf16.msra.mxu0 0
  %1954 = vmatprep.mubr.bf16.mxu0 0
  %1955 = vmatmul.mubr.bf16.gmra.mrb[0].mxu0 %v1917
  %v1956 = vpop.f32.mrb[0].mxu0
  %v1957 = vadd.f32 0.0, %v1956
  %v1958 = vpop.f32.mrb[0].mxu0
  %v1959 = vadd.f32 0.0, %v1958
  %v1960 = vpop.f32.mrb[0].mxu0
  %v1961 = vadd.f32 0.0, %v1960
  %v1962 = vpop.f32.mrb[0].mxu0
  %v1963 = vadd.f32 0.0, %v1962
  %1964 = vmatprep.mubr.bf16.mxu0 0
  %1965 = vmatmul.mubr.bf16.gmra.mrb[0].mxu0 %v1920
  %v1966 = vpop.f32.mrb[0].mxu0
  %v1967 = vadd.f32 0.0, %v1966
  %v1968 = vpop.f32.mrb[0].mxu0
  %v1969 = vadd.f32 0.0, %v1968
  %v1970 = vpop.f32.mrb[0].mxu0
  %v1971 = vadd.f32 0.0, %v1970
  %v1972 = vpop.f32.mrb[0].mxu0
  %v1973 = vadd.f32 0.0, %v1972
  %1974 = vdwg.mxu0
  %1975 = vmatprep.subr.bf16.mxu0 %v1903
  %1976 = vmatpush1.bf16.msra.mxu0 %v1902
  %1977 = vmatprep.subr.bf16.mxu0 %v1907
  %1978 = vmatpush1.bf16.msra.mxu0 %v1906
  %1979 = vmatprep.subr.bf16.mxu0 0
  %1980 = vmatpush1.bf16.msra.mxu0 0
  %1981 = vmatprep.subr.bf16.mxu0 0
  %1982 = vmatpush1.bf16.msra.mxu0 0
  %1983 = vmatprep.subr.bf16.mxu0 0
  %1984 = vmatpush1.bf16.msra.mxu0 0
  %1985 = vmatprep.subr.bf16.mxu0 0
  %1986 = vmatpush1.bf16.msra.mxu0 0
  %1987 = vmatprep.subr.bf16.mxu0 0
  %1988 = vmatpush1.bf16.msra.mxu0 0
  %1989 = vmatprep.subr.bf16.mxu0 0
  %1990 = vmatpush1.bf16.msra.mxu0 0
  %1991 = vmatprep.subr.bf16.mxu0 0
  %1992 = vmatpush1.bf16.msra.mxu0 0
  %1993 = vmatprep.subr.bf16.mxu0 0
  %1994 = vmatpush1.bf16.msra.mxu0 0
  %1995 = vmatprep.subr.bf16.mxu0 0
  %1996 = vmatpush1.bf16.msra.mxu0 0
  %1997 = vmatprep.subr.bf16.mxu0 0
  %1998 = vmatpush1.bf16.msra.mxu0 0
  %1999 = vmatprep.subr.bf16.mxu0 0
  %2000 = vmatpush1.bf16.msra.mxu0 0
  %2001 = vmatprep.subr.bf16.mxu0 0
  %2002 = vmatpush1.bf16.msra.mxu0 0
  %2003 = vmatprep.subr.bf16.mxu0 0
  %2004 = vmatpush1.bf16.msra.mxu0 0
  %2005 = vmatprep.subr.bf16.mxu0 0
  %2006 = vmatpush1.bf16.msra.mxu0 0
  %2007 = vmatprep.mubr.bf16.mxu0 0
  %2008 = vmatmul.mubr.bf16.gmra.mrb[0].mxu0 %v1917
  %v2009 = vpop.f32.mrb[0].mxu0
  %v2010 = vadd.f32 0.0, %v2009
  %v2011 = vpop.f32.mrb[0].mxu0
  %v2012 = vadd.f32 0.0, %v2011
  %v2013 = vpop.f32.mrb[0].mxu0
  %v2014 = vadd.f32 0.0, %v2013
  %v2015 = vpop.f32.mrb[0].mxu0
  %v2016 = vadd.f32 0.0, %v2015
  %2017 = vmatprep.mubr.bf16.mxu0 0
  %2018 = vmatmul.mubr.bf16.gmra.mrb[0].mxu0 %v1920
  %v2019 = vpop.f32.mrb[0].mxu0
  %v2020 = vadd.f32 0.0, %v2019
  %v2021 = vpop.f32.mrb[0].mxu0
  %v2022 = vadd.f32 0.0, %v2021
  %v2023 = vpop.f32.mrb[0].mxu0
  %v2024 = vadd.f32 0.0, %v2023
  %v2025 = vpop.f32.mrb[0].mxu0
  %v2026 = vadd.f32 0.0, %v2025
  %2027 = vdwg.mxu0
  %v2028 = vadd.f32 %v1772, %v1957
  %v2029 = vadd.f32 %v1773, %v1959
  %v2030 = vadd.f32 %v1774, %v2010
  %v2031 = vadd.f32 %v1775, %v2012
  %v2032 = vadd.f32 %v1776, %v1961
  %v2033 = vadd.f32 %v1777, %v1963
  %v2034 = vadd.f32 %v1778, %v2014
  %v2035 = vadd.f32 %v1779, %v2016
  %v2036 = vadd.f32 %v1780, %v1967
  %v2037 = vadd.f32 %v1781, %v1969
  %v2038 = vadd.f32 %v1782, %v2020
  %v2039 = vadd.f32 %v1783, %v2022
  %v2040 = vadd.f32 %v1784, %v1971
  %v2041 = vadd.f32 %v1785, %v1973
  %v2042 = vadd.f32 %v1786, %v2024
  %v2043 = vadd.f32 %v1787, %v2026
  %s2044 = scalar_lea.vmem %s0, 32
  %v2045 = vld [vmem:[%s2044] sm:$0xf]
  %v2047 = vlaneseq
  %v2048 = vshrl.u32 %v2047, 7
  %v2049 = vsub.s32 0, %v2048
  %v2050 = vrot.slane %v2045, %v2049
  %v2051 = vlaneseq
  %v2052 = vshrl.u32 %v2051, 7
  %v2053 = vsub.s32 1, %v2052
  %v2054 = vrot.slane %v2045, %v2053
  %v2055 = vlaneseq
  %v2056 = vshrl.u32 %v2055, 7
  %v2057 = vsub.s32 2, %v2056
  %v2058 = vrot.slane %v2045, %v2057
  %v2059 = vlaneseq
  %v2060 = vshrl.u32 %v2059, 7
  %v2061 = vsub.s32 3, %v2060
  %v2062 = vrot.slane %v2045, %v2061
  %2063 = vrot.lane.b32.xlu0 %v2050, 17
  %v2064 = vpop.permute.xlu0 %2063
  %2065 = vrot.lane.b32.xlu0 %v2054, 17
  %v2066 = vpop.permute.xlu0 %2065
  %2067 = vrot.lane.b32.xlu0 %v2058, 17
  %v2068 = vpop.permute.xlu0 %2067
  %2069 = vrot.lane.b32.xlu0 %v2062, 17
  %v2070 = vpop.permute.xlu0 %2069
  %vm2071 = vcmask 138240
  %v2072 = vsel %vm2071, %v2064, %v2066
  %v2073 = vsel %vm2071, %v2066, %v2068
  %v2074 = vsel %vm2071, %v2068, %v2070
  %v2080 = vmul.f32 %v1256, %v2064
  %v2081 = vmul.f32 %v1257, %v2072
  %v2082 = vmul.f32 %v1258, %v2073
  %v2083 = vmul.f32 %v1259, %v2074
  %v2084 = vmul.f32 %v1260, %v2070
  %v2085 = vmul.f32 %v1261, %v2064
  %v2086 = vmul.f32 %v1262, %v2072
  %v2087 = vmul.f32 %v1263, %v2073
  %v2088 = vmul.f32 %v1264, %v2074
  %v2089 = vmul.f32 %v1265, %v2070
  %v2090 = vmul.f32 %v1266, %v2064
  %v2091 = vmul.f32 %v1267, %v2072
  %v2092 = vmul.f32 %v1268, %v2073
  %v2093 = vmul.f32 %v1269, %v2074
  %v2094 = vmul.f32 %v1270, %v2070
  %v2095 = vmul.f32 %v1271, %v2064
  %v2096 = vmul.f32 %v1272, %v2072
  %v2097 = vmul.f32 %v1273, %v2073
  %v2098 = vmul.f32 %v1274, %v2074
  %v2099 = vmul.f32 %v1275, %v2070
  %v2100 = vpack.c.bf16 %v2085, %v2080
  %v2101 = vpack.c.bf16 %v2086, %v2081
  %v2102 = vpack.c.bf16 %v2087, %v2082
  %v2103 = vpack.c.bf16 %v2088, %v2083
  %v2104 = vpack.c.bf16 %v2089, %v2084
  %v2105 = vpack.c.bf16 %v2095, %v2090
  %v2106 = vpack.c.bf16 %v2096, %v2091
  %v2107 = vpack.c.bf16 %v2097, %v2092
  %v2108 = vpack.c.bf16 %v2098, %v2093
  %v2109 = vpack.c.bf16 %v2099, %v2094
  %s2110 = scalar_lea.vmem %s2, 128
  %v2111 = vld [vmem:[%s2110] sm:$0xf]
  %v2112 = vld [vmem:[%s2110 + $0x4] sm:$0xf]
  %v2113 = vld [vmem:[%s2110 + $0x8] sm:$0xf]
  %v2114 = vld [vmem:[%s2110 + $0xc] sm:$0xf]
  %v2119 = vunpack.c.l.b16 %v2111
  %v2120 = vunpack.c.l.b16 %v2112
  %v2121 = vunpack.c.l.b16 %v2113
  %v2122 = vunpack.c.l.b16 %v2114
  %v2123 = vpack.c.b16 %v2120, %v2119
  %v2124 = vpack.c.b16 %v2122, %v2121
  %2135 = vrot.lane.b32.xlu0 %v2100, 111
  %v2136 = vpop.permute.xlu0 %2135
  %2137 = vrot.lane.b32.xlu0 %v2101, 111
  %v2138 = vpop.permute.xlu0 %2137
  %2139 = vrot.lane.b32.xlu0 %v2102, 111
  %v2140 = vpop.permute.xlu0 %2139
  %2141 = vrot.lane.b32.xlu0 %v2103, 111
  %v2142 = vpop.permute.xlu0 %2141
  %2143 = vrot.lane.b32.xlu0 %v2104, 111
  %v2144 = vpop.permute.xlu0 %2143
  %2145 = vrot.lane.b32.xlu0 %v2105, 111
  %v2146 = vpop.permute.xlu0 %2145
  %2147 = vrot.lane.b32.xlu0 %v2106, 111
  %v2148 = vpop.permute.xlu0 %2147
  %2149 = vrot.lane.b32.xlu0 %v2107, 111
  %v2150 = vpop.permute.xlu0 %2149
  %2151 = vrot.lane.b32.xlu0 %v2108, 111
  %v2152 = vpop.permute.xlu0 %2151
  %2153 = vrot.lane.b32.xlu0 %v2109, 111
  %v2154 = vpop.permute.xlu0 %2153
  %vm2155 = vcmask 908288
  %v2156 = vsel %vm2155, %v2136, %v2138
  %v2157 = vsel %vm2155, %v2138, %v2140
  %v2158 = vsel %vm2155, %v2140, %v2142
  %v2159 = vsel %vm2155, %v2142, %v2144
  %v2160 = vsel %vm2155, %v2146, %v2148
  %v2161 = vsel %vm2155, %v2148, %v2150
  %v2162 = vsel %vm2155, %v2150, %v2152
  %v2163 = vsel %vm2155, %v2152, %v2154
  %v2173 = vsel %vm311, %v2123, 0
  %v2176 = vsel %vm311, %v2124, 0
  %2178 = vmatprep.subr.bf16.mxu0 %v2157
  %2179 = vmatpush1.bf16.msra.mxu0 %v2156
  %2180 = vmatprep.subr.bf16.mxu0 %v2161
  %2181 = vmatpush1.bf16.msra.mxu0 %v2160
  %2182 = vmatprep.subr.bf16.mxu0 0
  %2183 = vmatpush1.bf16.msra.mxu0 0
  %2184 = vmatprep.subr.bf16.mxu0 0
  %2185 = vmatpush1.bf16.msra.mxu0 0
  %2186 = vmatprep.subr.bf16.mxu0 0
  %2187 = vmatpush1.bf16.msra.mxu0 0
  %2188 = vmatprep.subr.bf16.mxu0 0
  %2189 = vmatpush1.bf16.msra.mxu0 0
  %2190 = vmatprep.subr.bf16.mxu0 0
  %2191 = vmatpush1.bf16.msra.mxu0 0
  %2192 = vmatprep.subr.bf16.mxu0 0
  %2193 = vmatpush1.bf16.msra.mxu0 0
  %2194 = vmatprep.subr.bf16.mxu0 0
  %2195 = vmatpush1.bf16.msra.mxu0 0
  %2196 = vmatprep.subr.bf16.mxu0 0
  %2197 = vmatpush1.bf16.msra.mxu0 0
  %2198 = vmatprep.subr.bf16.mxu0 0
  %2199 = vmatpush1.bf16.msra.mxu0 0
  %2200 = vmatprep.subr.bf16.mxu0 0
  %2201 = vmatpush1.bf16.msra.mxu0 0
  %2202 = vmatprep.subr.bf16.mxu0 0
  %2203 = vmatpush1.bf16.msra.mxu0 0
  %2204 = vmatprep.subr.bf16.mxu0 0
  %2205 = vmatpush1.bf16.msra.mxu0 0
  %2206 = vmatprep.subr.bf16.mxu0 0
  %2207 = vmatpush1.bf16.msra.mxu0 0
  %2208 = vmatprep.subr.bf16.mxu0 0
  %2209 = vmatpush1.bf16.msra.mxu0 0
  %2210 = vmatprep.mubr.bf16.mxu0 0
  %2211 = vmatmul.mubr.bf16.gmra.mrb[0].mxu0 %v2173
  %v2212 = vpop.f32.mrb[0].mxu0
  %v2213 = vadd.f32 0.0, %v2212
  %v2214 = vpop.f32.mrb[0].mxu0
  %v2215 = vadd.f32 0.0, %v2214
  %v2216 = vpop.f32.mrb[0].mxu0
  %v2217 = vadd.f32 0.0, %v2216
  %v2218 = vpop.f32.mrb[0].mxu0
  %v2219 = vadd.f32 0.0, %v2218
  %2220 = vmatprep.mubr.bf16.mxu0 0
  %2221 = vmatmul.mubr.bf16.gmra.mrb[0].mxu0 %v2176
  %v2222 = vpop.f32.mrb[0].mxu0
  %v2223 = vadd.f32 0.0, %v2222
  %v2224 = vpop.f32.mrb[0].mxu0
  %v2225 = vadd.f32 0.0, %v2224
  %v2226 = vpop.f32.mrb[0].mxu0
  %v2227 = vadd.f32 0.0, %v2226
  %v2228 = vpop.f32.mrb[0].mxu0
  %v2229 = vadd.f32 0.0, %v2228
  %2230 = vdwg.mxu0
  %2231 = vmatprep.subr.bf16.mxu0 %v2159
  %2232 = vmatpush1.bf16.msra.mxu0 %v2158
  %2233 = vmatprep.subr.bf16.mxu0 %v2163
  %2234 = vmatpush1.bf16.msra.mxu0 %v2162
  %2235 = vmatprep.subr.bf16.mxu0 0
  %2236 = vmatpush1.bf16.msra.mxu0 0
  %2237 = vmatprep.subr.bf16.mxu0 0
  %2238 = vmatpush1.bf16.msra.mxu0 0
  %2239 = vmatprep.subr.bf16.mxu0 0
  %2240 = vmatpush1.bf16.msra.mxu0 0
  %2241 = vmatprep.subr.bf16.mxu0 0
  %2242 = vmatpush1.bf16.msra.mxu0 0
  %2243 = vmatprep.subr.bf16.mxu0 0
  %2244 = vmatpush1.bf16.msra.mxu0 0
  %2245 = vmatprep.subr.bf16.mxu0 0
  %2246 = vmatpush1.bf16.msra.mxu0 0
  %2247 = vmatprep.subr.bf16.mxu0 0
  %2248 = vmatpush1.bf16.msra.mxu0 0
  %2249 = vmatprep.subr.bf16.mxu0 0
  %2250 = vmatpush1.bf16.msra.mxu0 0
  %2251 = vmatprep.subr.bf16.mxu0 0
  %2252 = vmatpush1.bf16.msra.mxu0 0
  %2253 = vmatprep.subr.bf16.mxu0 0
  %2254 = vmatpush1.bf16.msra.mxu0 0
  %2255 = vmatprep.subr.bf16.mxu0 0
  %2256 = vmatpush1.bf16.msra.mxu0 0
  %2257 = vmatprep.subr.bf16.mxu0 0
  %2258 = vmatpush1.bf16.msra.mxu0 0
  %2259 = vmatprep.subr.bf16.mxu0 0
  %2260 = vmatpush1.bf16.msra.mxu0 0
  %2261 = vmatprep.subr.bf16.mxu0 0
  %2262 = vmatpush1.bf16.msra.mxu0 0
  %2263 = vmatprep.mubr.bf16.mxu0 0
  %2264 = vmatmul.mubr.bf16.gmra.mrb[0].mxu0 %v2173
  %v2265 = vpop.f32.mrb[0].mxu0
  %v2266 = vadd.f32 0.0, %v2265
  %v2267 = vpop.f32.mrb[0].mxu0
  %v2268 = vadd.f32 0.0, %v2267
  %v2269 = vpop.f32.mrb[0].mxu0
  %v2270 = vadd.f32 0.0, %v2269
  %v2271 = vpop.f32.mrb[0].mxu0
  %v2272 = vadd.f32 0.0, %v2271
  %2273 = vmatprep.mubr.bf16.mxu0 0
  %2274 = vmatmul.mubr.bf16.gmra.mrb[0].mxu0 %v2176
  %v2275 = vpop.f32.mrb[0].mxu0
  %v2276 = vadd.f32 0.0, %v2275
  %v2277 = vpop.f32.mrb[0].mxu0
  %v2278 = vadd.f32 0.0, %v2277
  %v2279 = vpop.f32.mrb[0].mxu0
  %v2280 = vadd.f32 0.0, %v2279
  %v2281 = vpop.f32.mrb[0].mxu0
  %v2282 = vadd.f32 0.0, %v2281
  %2283 = vdwg.mxu0
  %v2284 = vadd.f32 %v2028, %v2213
  %v2285 = vadd.f32 %v2029, %v2215
  %v2286 = vadd.f32 %v2030, %v2266
  %v2287 = vadd.f32 %v2031, %v2268
  %v2288 = vadd.f32 %v2032, %v2217
  %v2289 = vadd.f32 %v2033, %v2219
  %v2290 = vadd.f32 %v2034, %v2270
  %v2291 = vadd.f32 %v2035, %v2272
  %v2292 = vadd.f32 %v2036, %v2223
  %v2293 = vadd.f32 %v2037, %v2225
  %v2294 = vadd.f32 %v2038, %v2276
  %v2295 = vadd.f32 %v2039, %v2278
  %v2296 = vadd.f32 %v2040, %v2227
  %v2297 = vadd.f32 %v2041, %v2229
  %v2298 = vadd.f32 %v2042, %v2280
  %v2299 = vadd.f32 %v2043, %v2282
  %v2300 = vadd.f32 %v2284, %v2285
  %v2301 = vadd.f32 %v2300, %v2286
  %v2302 = vadd.f32 %v2301, %v2287
  %2303 = vadd.xlane.f32.xlu0 %v2302
  %v2304 = vpop.xlane.xlu0 %2303
  %v2305 = vadd.f32 %v2288, %v2289
  %v2306 = vadd.f32 %v2305, %v2290
  %v2307 = vadd.f32 %v2306, %v2291
  %2308 = vadd.xlane.f32.xlu0 %v2307
  %v2309 = vpop.xlane.xlu0 %2308
  %v2310 = vadd.f32 %v2292, %v2293
  %v2311 = vadd.f32 %v2310, %v2294
  %v2312 = vadd.f32 %v2311, %v2295
  %2313 = vadd.xlane.f32.xlu0 %v2312
  %v2314 = vpop.xlane.xlu0 %2313
  %v2315 = vadd.f32 %v2296, %v2297
  %v2316 = vadd.f32 %v2315, %v2298
  %v2317 = vadd.f32 %v2316, %v2299
  %2318 = vadd.xlane.f32.xlu0 %v2317
  %v2319 = vpop.xlane.xlu0 %2318
  %v2320 = vmul.f32 %v2304, 0.001953125
  %v2321 = vmul.f32 %v2309, 0.001953125
  %v2322 = vmul.f32 %v2314, 0.001953125
  %v2323 = vmul.f32 %v2319, 0.001953125
  %v2324 = vsub.f32 %v2284, %v2320
  %v2325 = vsub.f32 %v2285, %v2320
  %v2326 = vsub.f32 %v2286, %v2320
  %v2327 = vsub.f32 %v2287, %v2320
  %v2328 = vsub.f32 %v2288, %v2321
  %v2329 = vsub.f32 %v2289, %v2321
  %v2330 = vsub.f32 %v2290, %v2321
  %v2331 = vsub.f32 %v2291, %v2321
  %v2332 = vsub.f32 %v2292, %v2322
  %v2333 = vsub.f32 %v2293, %v2322
  %v2334 = vsub.f32 %v2294, %v2322
  %v2335 = vsub.f32 %v2295, %v2322
  %v2336 = vsub.f32 %v2296, %v2323
  %v2337 = vsub.f32 %v2297, %v2323
  %v2338 = vsub.f32 %v2298, %v2323
  %v2339 = vsub.f32 %v2299, %v2323
  %v2340 = vmul.f32 %v2324, %v2324
  %v2341 = vmul.f32 %v2325, %v2325
  %v2342 = vmul.f32 %v2326, %v2326
  %v2343 = vmul.f32 %v2327, %v2327
  %v2344 = vmul.f32 %v2328, %v2328
  %v2345 = vmul.f32 %v2329, %v2329
  %v2346 = vmul.f32 %v2330, %v2330
  %v2347 = vmul.f32 %v2331, %v2331
  %v2348 = vmul.f32 %v2332, %v2332
  %v2349 = vmul.f32 %v2333, %v2333
  %v2350 = vmul.f32 %v2334, %v2334
  %v2351 = vmul.f32 %v2335, %v2335
  %v2352 = vmul.f32 %v2336, %v2336
  %v2353 = vmul.f32 %v2337, %v2337
  %v2354 = vmul.f32 %v2338, %v2338
  %v2355 = vmul.f32 %v2339, %v2339
  %v2356 = vadd.f32 %v2340, %v2341
  %v2357 = vadd.f32 %v2356, %v2342
  %v2358 = vadd.f32 %v2357, %v2343
  %2359 = vadd.xlane.f32.xlu0 %v2358
  %v2360 = vpop.xlane.xlu0 %2359
  %v2361 = vadd.f32 %v2344, %v2345
  %v2362 = vadd.f32 %v2361, %v2346
  %v2363 = vadd.f32 %v2362, %v2347
  %2364 = vadd.xlane.f32.xlu0 %v2363
  %v2365 = vpop.xlane.xlu0 %2364
  %v2366 = vadd.f32 %v2348, %v2349
  %v2367 = vadd.f32 %v2366, %v2350
  %v2368 = vadd.f32 %v2367, %v2351
  %2369 = vadd.xlane.f32.xlu0 %v2368
  %v2370 = vpop.xlane.xlu0 %2369
  %v2371 = vadd.f32 %v2352, %v2353
  %v2372 = vadd.f32 %v2371, %v2354
  %v2373 = vadd.f32 %v2372, %v2355
  %2374 = vadd.xlane.f32.xlu0 %v2373
  %v2375 = vpop.xlane.xlu0 %2374
  %v2376 = vmul.f32 %v2360, 0.001953125
  %v2377 = vmul.f32 %v2365, 0.001953125
  %v2378 = vmul.f32 %v2370, 0.001953125
  %v2379 = vmul.f32 %v2375, 0.001953125
  %v2380 = vld [vmem:[%s3] sm:$0xff]
  %v2381 = vld [vmem:[%s3 + $0x8] sm:$0xff]
  %v2382 = vld [vmem:[%s3 + $0x10] sm:$0xff]
  %v2383 = vld [vmem:[%s3 + $0x18] sm:$0xff]
  %v2384 = vadd.f32 %v2376, 1e-05
  %v2385 = vadd.f32 %v2377, 1e-05
  %v2386 = vadd.f32 %v2378, 1e-05
  %v2387 = vadd.f32 %v2379, 1e-05
  %v2388 = vrsqrt.pop %v2384
  %v2389 = vrsqrt.pop %v2385
  %v2390 = vrsqrt.pop %v2386
  %v2391 = vrsqrt.pop %v2387
  %v2392 = vmul.f32 %v2380, %v2388
  %v2393 = vmul.f32 %v2381, %v2389
  %v2394 = vmul.f32 %v2382, %v2390
  %v2395 = vmul.f32 %v2383, %v2391
  %2397 = vset.pattern.permute.xlu0 0
  %2398 = vperm.xlu0 %2397, %v2392
  %v2399 = vpop.permute.xlu0 %2398
  %2402 = vset.pattern.permute.xlu0 0
  %2403 = vperm.xlu0 %2402, %v2393
  %v2404 = vpop.permute.xlu0 %2403
  %2407 = vset.pattern.permute.xlu0 0
  %2408 = vperm.xlu0 %2407, %v2394
  %v2409 = vpop.permute.xlu0 %2408
  %2412 = vset.pattern.permute.xlu0 0
  %2413 = vperm.xlu0 %2412, %v2395
  %v2414 = vpop.permute.xlu0 %2413
  %v2416 = vmul.f32 %v2324, %v2399
  %v2417 = vmul.f32 %v2325, %v2399
  %v2418 = vmul.f32 %v2326, %v2399
  %v2419 = vmul.f32 %v2327, %v2399
  %v2420 = vmul.f32 %v2328, %v2404
  %v2421 = vmul.f32 %v2329, %v2404
  %v2422 = vmul.f32 %v2330, %v2404
  %v2423 = vmul.f32 %v2331, %v2404
  %v2424 = vmul.f32 %v2332, %v2409
  %v2425 = vmul.f32 %v2333, %v2409
  %v2426 = vmul.f32 %v2334, %v2409
  %v2427 = vmul.f32 %v2335, %v2409
  %v2428 = vmul.f32 %v2336, %v2414
  %v2429 = vmul.f32 %v2337, %v2414
  %v2430 = vmul.f32 %v2338, %v2414
  %v2431 = vmul.f32 %v2339, %v2414
  %v2432 = vld [vmem:[%s4] sm:$0xff]
  %v2433 = vld [vmem:[%s4 + $0x8] sm:$0xff]
  %v2434 = vld [vmem:[%s4 + $0x10] sm:$0xff]
  %v2435 = vld [vmem:[%s4 + $0x18] sm:$0xff]
  %2437 = vset.pattern.permute.xlu0 0
  %2438 = vperm.xlu0 %2437, %v2432
  %v2439 = vpop.permute.xlu0 %2438
  %2442 = vset.pattern.permute.xlu0 0
  %2443 = vperm.xlu0 %2442, %v2433
  %v2444 = vpop.permute.xlu0 %2443
  %2447 = vset.pattern.permute.xlu0 0
  %2448 = vperm.xlu0 %2447, %v2434
  %v2449 = vpop.permute.xlu0 %2448
  %2452 = vset.pattern.permute.xlu0 0
  %2453 = vperm.xlu0 %2452, %v2435
  %v2454 = vpop.permute.xlu0 %2453
  %v2456 = vadd.f32 %v2416, %v2439
  %v2457 = vadd.f32 %v2417, %v2439
  %v2458 = vadd.f32 %v2418, %v2439
  %v2459 = vadd.f32 %v2419, %v2439
  %v2460 = vadd.f32 %v2420, %v2444
  %v2461 = vadd.f32 %v2421, %v2444
  %v2462 = vadd.f32 %v2422, %v2444
  %v2463 = vadd.f32 %v2423, %v2444
  %v2464 = vadd.f32 %v2424, %v2449
  %v2465 = vadd.f32 %v2425, %v2449
  %v2466 = vadd.f32 %v2426, %v2449
  %v2467 = vadd.f32 %v2427, %v2449
  %v2468 = vadd.f32 %v2428, %v2454
  %v2469 = vadd.f32 %v2429, %v2454
  %v2470 = vadd.f32 %v2430, %v2454
  %v2471 = vadd.f32 %v2431, %v2454
  %v2472 = vmul.f32 %v2456, 0.2
  %v2473 = vmul.f32 %v2457, 0.2
  %v2474 = vmul.f32 %v2458, 0.2
  %v2475 = vmul.f32 %v2459, 0.2
  %v2476 = vmul.f32 %v2460, 0.2
  %v2477 = vmul.f32 %v2461, 0.2
  %v2478 = vmul.f32 %v2462, 0.2
  %v2479 = vmul.f32 %v2463, 0.2
  %v2480 = vmul.f32 %v2464, 0.2
  %v2481 = vmul.f32 %v2465, 0.2
  %v2482 = vmul.f32 %v2466, 0.2
  %v2483 = vmul.f32 %v2467, 0.2
  %v2484 = vmul.f32 %v2468, 0.2
  %v2485 = vmul.f32 %v2469, 0.2
  %v2486 = vmul.f32 %v2470, 0.2
  %v2487 = vmul.f32 %v2471, 0.2
  %v2488 = vmax.f32 %v2456, %v2472
  %v2489 = vmax.f32 %v2457, %v2473
  %v2490 = vmax.f32 %v2458, %v2474
  %v2491 = vmax.f32 %v2459, %v2475
  %v2492 = vmax.f32 %v2460, %v2476
  %v2493 = vmax.f32 %v2461, %v2477
  %v2494 = vmax.f32 %v2462, %v2478
  %v2495 = vmax.f32 %v2463, %v2479
  %v2496 = vmax.f32 %v2464, %v2480
  %v2497 = vmax.f32 %v2465, %v2481
  %v2498 = vmax.f32 %v2466, %v2482
  %v2499 = vmax.f32 %v2467, %v2483
  %v2500 = vmax.f32 %v2468, %v2484
  %v2501 = vmax.f32 %v2469, %v2485
  %v2502 = vmax.f32 %v2470, %v2486
  %v2503 = vmax.f32 %v2471, %v2487
  %2504 = vst [vmem:[#allocation2 + $0x8] sm:$0xff] %v2488
  %2505 = vst [vmem:[#allocation2 + $0x10] sm:$0xff] %v2489
  %2506 = vst [vmem:[#allocation2 + $0x18] sm:$0xff] %v2490
  %2507 = vst [vmem:[#allocation2 + $0x20] sm:$0xff] %v2491
  %2508 = vst [vmem:[#allocation2 + $0x38] sm:$0xff] %v2492
  %2509 = vst [vmem:[#allocation2 + $0x40] sm:$0xff] %v2493
  %2510 = vst [vmem:[#allocation2 + $0x48] sm:$0xff] %v2494
  %2511 = vst [vmem:[#allocation2 + $0x50] sm:$0xff] %v2495
  %2512 = vst [vmem:[#allocation2 + $0x68] sm:$0xff] %v2496
  %2513 = vst [vmem:[#allocation2 + $0x70] sm:$0xff] %v2497
  %2514 = vst [vmem:[#allocation2 + $0x78] sm:$0xff] %v2498
  %2515 = vst [vmem:[#allocation2 + $0x80] sm:$0xff] %v2499
  %2516 = vst [vmem:[#allocation2 + $0x98] sm:$0xff] %v2500
  %2517 = vst [vmem:[#allocation2 + $0xa0] sm:$0xff] %v2501
  %2518 = vst [vmem:[#allocation2 + $0xa8] sm:$0xff] %v2502
  %2519 = vst [vmem:[#allocation2 + $0xb0] sm:$0xff] %v2503
  %v2520 = vld [vmem:[#allocation2] sm:$0xff]
  %v2521 = vld [vmem:[#allocation2 + $0x8] sm:$0xff]
  %v2522 = vld [vmem:[#allocation2 + $0x10] sm:$0xff]
  %v2523 = vld [vmem:[#allocation2 + $0x18] sm:$0xff]
  %v2524 = vld [vmem:[#allocation2 + $0x20] sm:$0xff]
  %v2525 = vld [vmem:[#allocation2 + $0x30] sm:$0xff]
  %v2526 = vld [vmem:[#allocation2 + $0x38] sm:$0xff]
  %v2527 = vld [vmem:[#allocation2 + $0x40] sm:$0xff]
  %v2528 = vld [vmem:[#allocation2 + $0x48] sm:$0xff]
  %v2529 = vld [vmem:[#allocation2 + $0x50] sm:$0xff]
  %v2530 = vld [vmem:[#allocation2 + $0x60] sm:$0xff]
  %v2531 = vld [vmem:[#allocation2 + $0x68] sm:$0xff]
  %v2532 = vld [vmem:[#allocation2 + $0x70] sm:$0xff]
  %v2533 = vld [vmem:[#allocation2 + $0x78] sm:$0xff]
  %v2534 = vld [vmem:[#allocation2 + $0x80] sm:$0xff]
  %v2535 = vld [vmem:[#allocation2 + $0x90] sm:$0xff]
  %v2536 = vld [vmem:[#allocation2 + $0x98] sm:$0xff]
  %v2537 = vld [vmem:[#allocation2 + $0xa0] sm:$0xff]
  %v2538 = vld [vmem:[#allocation2 + $0xa8] sm:$0xff]
  %v2539 = vld [vmem:[#allocation2 + $0xb0] sm:$0xff]
  %v2540 = vld [vmem:[%s0] sm:$0xf]
  %v2542 = vlaneseq
  %v2543 = vshrl.u32 %v2542, 7
  %v2544 = vsub.s32 0, %v2543
  %v2545 = vrot.slane %v2540, %v2544
  %v2546 = vlaneseq
  %v2547 = vshrl.u32 %v2546, 7
  %v2548 = vsub.s32 1, %v2547
  %v2549 = vrot.slane %v2540, %v2548
  %v2550 = vlaneseq
  %v2551 = vshrl.u32 %v2550, 7
  %v2552 = vsub.s32 2, %v2551
  %v2553 = vrot.slane %v2540, %v2552
  %v2554 = vlaneseq
  %v2555 = vshrl.u32 %v2554, 7
  %v2556 = vsub.s32 3, %v2555
  %v2557 = vrot.slane %v2540, %v2556
  %2558 = vrot.lane.b32.xlu0 %v2545, 111
  %v2559 = vpop.permute.xlu0 %2558
  %2560 = vrot.lane.b32.xlu0 %v2549, 111
  %v2561 = vpop.permute.xlu0 %2560
  %2562 = vrot.lane.b32.xlu0 %v2553, 111
  %v2563 = vpop.permute.xlu0 %2562
  %2564 = vrot.lane.b32.xlu0 %v2557, 111
  %v2565 = vpop.permute.xlu0 %2564
  %v2566 = vsel %vm140, %v2559, %v2561
  %v2567 = vsel %vm140, %v2561, %v2563
  %v2568 = vsel %vm140, %v2563, %v2565
  %v2574 = vmul.f32 %v2520, %v2559
  %v2575 = vmul.f32 %v2521, %v2566
  %v2576 = vmul.f32 %v2522, %v2567
  %v2577 = vmul.f32 %v2523, %v2568
  %v2578 = vmul.f32 %v2524, %v2565
  %v2579 = vmul.f32 %v2525, %v2559
  %v2580 = vmul.f32 %v2526, %v2566
  %v2581 = vmul.f32 %v2527, %v2567
  %v2582 = vmul.f32 %v2528, %v2568
  %v2583 = vmul.f32 %v2529, %v2565
  %v2584 = vmul.f32 %v2530, %v2559
  %v2585 = vmul.f32 %v2531, %v2566
  %v2586 = vmul.f32 %v2532, %v2567
  %v2587 = vmul.f32 %v2533, %v2568
  %v2588 = vmul.f32 %v2534, %v2565
  %v2589 = vmul.f32 %v2535, %v2559
  %v2590 = vmul.f32 %v2536, %v2566
  %v2591 = vmul.f32 %v2537, %v2567
  %v2592 = vmul.f32 %v2538, %v2568
  %v2593 = vmul.f32 %v2539, %v2565
  %v2594 = vpack.c.bf16 %v2579, %v2574
  %v2595 = vpack.c.bf16 %v2580, %v2575
  %v2596 = vpack.c.bf16 %v2581, %v2576
  %v2597 = vpack.c.bf16 %v2582, %v2577
  %v2598 = vpack.c.bf16 %v2583, %v2578
  %v2599 = vpack.c.bf16 %v2589, %v2584
  %v2600 = vpack.c.bf16 %v2590, %v2585
  %v2601 = vpack.c.bf16 %v2591, %v2586
  %v2602 = vpack.c.bf16 %v2592, %v2587
  %v2603 = vpack.c.bf16 %v2593, %v2588
  %v2604 = vld [vmem:[%s5] sm:$0xf]
  %v2605 = vld [vmem:[%s5 + $0x4] sm:$0xf]
  %v2606 = vld [vmem:[%s5 + $0x8] sm:$0xf]
  %v2607 = vld [vmem:[%s5 + $0xc] sm:$0xf]
  %v2608 = vld [vmem:[%s183] sm:$0xf]
  %v2610 = vlaneseq
  %v2611 = vshrl.u32 %v2610, 7
  %v2612 = vsub.s32 0, %v2611
  %v2613 = vrot.slane %v2608, %v2612
  %v2614 = vlaneseq
  %v2615 = vshrl.u32 %v2614, 7
  %v2616 = vsub.s32 1, %v2615
  %v2617 = vrot.slane %v2608, %v2616
  %v2618 = vlaneseq
  %v2619 = vshrl.u32 %v2618, 7
  %v2620 = vsub.s32 2, %v2619
  %v2621 = vrot.slane %v2608, %v2620
  %v2622 = vlaneseq
  %v2623 = vshrl.u32 %v2622, 7
  %v2624 = vsub.s32 3, %v2623
  %v2625 = vrot.slane %v2608, %v2624
  %2626 = vrot.lane.b32.xlu0 %v2613, 112
  %v2627 = vpop.permute.xlu0 %2626
  %2628 = vrot.lane.b32.xlu0 %v2617, 112
  %v2629 = vpop.permute.xlu0 %2628
  %2630 = vrot.lane.b32.xlu0 %v2621, 112
  %v2631 = vpop.permute.xlu0 %2630
  %2632 = vrot.lane.b32.xlu0 %v2625, 112
  %v2633 = vpop.permute.xlu0 %2632
  %v2634 = vsel %vm210, %v2627, %v2629
  %v2635 = vsel %vm210, %v2629, %v2631
  %v2636 = vsel %vm210, %v2631, %v2633
  %v2642 = vmul.f32 %v2520, %v2627
  %v2643 = vmul.f32 %v2521, %v2634
  %v2644 = vmul.f32 %v2522, %v2635
  %v2645 = vmul.f32 %v2523, %v2636
  %v2646 = vmul.f32 %v2524, %v2633
  %v2647 = vmul.f32 %v2525, %v2627
  %v2648 = vmul.f32 %v2526, %v2634
  %v2649 = vmul.f32 %v2527, %v2635
  %v2650 = vmul.f32 %v2528, %v2636
  %v2651 = vmul.f32 %v2529, %v2633
  %v2652 = vmul.f32 %v2530, %v2627
  %v2653 = vmul.f32 %v2531, %v2634
  %v2654 = vmul.f32 %v2532, %v2635
  %v2655 = vmul.f32 %v2533, %v2636
  %v2656 = vmul.f32 %v2534, %v2633
  %v2657 = vmul.f32 %v2535, %v2627
  %v2658 = vmul.f32 %v2536, %v2634
  %v2659 = vmul.f32 %v2537, %v2635
  %v2660 = vmul.f32 %v2538, %v2636
  %v2661 = vmul.f32 %v2539, %v2633
  %v2662 = vpack.c.bf16 %v2647, %v2642
  %v2663 = vpack.c.bf16 %v2648, %v2643
  %v2664 = vpack.c.bf16 %v2649, %v2644
  %v2665 = vpack.c.bf16 %v2650, %v2645
  %v2666 = vpack.c.bf16 %v2651, %v2646
  %v2667 = vpack.c.bf16 %v2657, %v2652
  %v2668 = vpack.c.bf16 %v2658, %v2653
  %v2669 = vpack.c.bf16 %v2659, %v2654
  %v2670 = vpack.c.bf16 %v2660, %v2655
  %v2671 = vpack.c.bf16 %v2661, %v2656
  %s2672 = scalar_lea.vmem %s5, 16
  %v2673 = vld [vmem:[%s2672] sm:$0xf]
  %v2674 = vld [vmem:[%s2672 + $0x4] sm:$0xf]
  %v2675 = vld [vmem:[%s2672 + $0x8] sm:$0xf]
  %v2676 = vld [vmem:[%s2672 + $0xc] sm:$0xf]
  %v2681 = vunpack.c.l.b16 %v2673
  %v2682 = vunpack.c.l.b16 %v2674
  %v2683 = vunpack.c.l.b16 %v2675
  %v2684 = vunpack.c.l.b16 %v2676
  %v2685 = vpack.c.b16 %v2682, %v2681
  %v2686 = vpack.c.b16 %v2684, %v2683
  %2697 = vrot.lane.b32.xlu0 %v2662, 16
  %v2698 = vpop.permute.xlu0 %2697
  %2699 = vrot.lane.b32.xlu0 %v2663, 16
  %v2700 = vpop.permute.xlu0 %2699
  %2701 = vrot.lane.b32.xlu0 %v2664, 16
  %v2702 = vpop.permute.xlu0 %2701
  %2703 = vrot.lane.b32.xlu0 %v2665, 16
  %v2704 = vpop.permute.xlu0 %2703
  %2705 = vrot.lane.b32.xlu0 %v2666, 16
  %v2706 = vpop.permute.xlu0 %2705
  %2707 = vrot.lane.b32.xlu0 %v2667, 16
  %v2708 = vpop.permute.xlu0 %2707
  %2709 = vrot.lane.b32.xlu0 %v2668, 16
  %v2710 = vpop.permute.xlu0 %2709
  %2711 = vrot.lane.b32.xlu0 %v2669, 16
  %v2712 = vpop.permute.xlu0 %2711
  %2713 = vrot.lane.b32.xlu0 %v2670, 16
  %v2714 = vpop.permute.xlu0 %2713
  %2715 = vrot.lane.b32.xlu0 %v2671, 16
  %v2716 = vpop.permute.xlu0 %2715
  %v2717 = vsel %vm294, %v2698, %v2700
  %v2718 = vsel %vm294, %v2700, %v2702
  %v2719 = vsel %vm294, %v2702, %v2704
  %v2720 = vsel %vm294, %v2704, %v2706
  %v2721 = vsel %vm294, %v2708, %v2710
  %v2722 = vsel %vm294, %v2710, %v2712
  %v2723 = vsel %vm294, %v2712, %v2714
  %v2724 = vsel %vm294, %v2714, %v2716
  %v2734 = vsel %vm311, %v2685, 0
  %v2737 = vsel %vm311, %v2686, 0
  %2739 = vmatprep.subr.bf16.mxu0 %v2718
  %2740 = vmatpush1.bf16.msra.mxu0 %v2717
  %2741 = vmatprep.subr.bf16.mxu0 %v2722
  %2742 = vmatpush1.bf16.msra.mxu0 %v2721
  %2743 = vmatprep.subr.bf16.mxu0 0
  %2744 = vmatpush1.bf16.msra.mxu0 0
  %2745 = vmatprep.subr.bf16.mxu0 0
  %2746 = vmatpush1.bf16.msra.mxu0 0
  %2747 = vmatprep.subr.bf16.mxu0 0
  %2748 = vmatpush1.bf16.msra.mxu0 0
  %2749 = vmatprep.subr.bf16.mxu0 0
  %2750 = vmatpush1.bf16.msra.mxu0 0
  %2751 = vmatprep.subr.bf16.mxu0 0
  %2752 = vmatpush1.bf16.msra.mxu0 0
  %2753 = vmatprep.subr.bf16.mxu0 0
  %2754 = vmatpush1.bf16.msra.mxu0 0
  %2755 = vmatprep.subr.bf16.mxu0 0
  %2756 = vmatpush1.bf16.msra.mxu0 0
  %2757 = vmatprep.subr.bf16.mxu0 0
  %2758 = vmatpush1.bf16.msra.mxu0 0
  %2759 = vmatprep.subr.bf16.mxu0 0
  %2760 = vmatpush1.bf16.msra.mxu0 0
  %2761 = vmatprep.subr.bf16.mxu0 0
  %2762 = vmatpush1.bf16.msra.mxu0 0
  %2763 = vmatprep.subr.bf16.mxu0 0
  %2764 = vmatpush1.bf16.msra.mxu0 0
  %2765 = vmatprep.subr.bf16.mxu0 0
  %2766 = vmatpush1.bf16.msra.mxu0 0
  %2767 = vmatprep.subr.bf16.mxu0 0
  %2768 = vmatpush1.bf16.msra.mxu0 0
  %2769 = vmatprep.subr.bf16.mxu0 0
  %2770 = vmatpush1.bf16.msra.mxu0 0
  %2771 = vmatprep.mubr.bf16.mxu0 0
  %2772 = vmatmul.mubr.bf16.gmra.mrb[0].mxu0 %v2734
  %v2773 = vpop.f32.mrb[0].mxu0
  %v2774 = vadd.f32 0.0, %v2773
  %v2775 = vpop.f32.mrb[0].mxu0
  %v2776 = vadd.f32 0.0, %v2775
  %v2777 = vpop.f32.mrb[0].mxu0
  %v2778 = vadd.f32 0.0, %v2777
  %v2779 = vpop.f32.mrb[0].mxu0
  %v2780 = vadd.f32 0.0, %v2779
  %2781 = vmatprep.mubr.bf16.mxu0 0
  %2782 = vmatmul.mubr.bf16.gmra.mrb[0].mxu0 %v2737
  %v2783 = vpop.f32.mrb[0].mxu0
  %v2784 = vadd.f32 0.0, %v2783
  %v2785 = vpop.f32.mrb[0].mxu0
  %v2786 = vadd.f32 0.0, %v2785
  %v2787 = vpop.f32.mrb[0].mxu0
  %v2788 = vadd.f32 0.0, %v2787
  %v2789 = vpop.f32.mrb[0].mxu0
  %v2790 = vadd.f32 0.0, %v2789
  %2791 = vdwg.mxu0
  %2792 = vmatprep.subr.bf16.mxu0 %v2720
  %2793 = vmatpush1.bf16.msra.mxu0 %v2719
  %2794 = vmatprep.subr.bf16.mxu0 %v2724
  %2795 = vmatpush1.bf16.msra.mxu0 %v2723
  %2796 = vmatprep.subr.bf16.mxu0 0
  %2797 = vmatpush1.bf16.msra.mxu0 0
  %2798 = vmatprep.subr.bf16.mxu0 0
  %2799 = vmatpush1.bf16.msra.mxu0 0
  %2800 = vmatprep.subr.bf16.mxu0 0
  %2801 = vmatpush1.bf16.msra.mxu0 0
  %2802 = vmatprep.subr.bf16.mxu0 0
  %2803 = vmatpush1.bf16.msra.mxu0 0
  %2804 = vmatprep.subr.bf16.mxu0 0
  %2805 = vmatpush1.bf16.msra.mxu0 0
  %2806 = vmatprep.subr.bf16.mxu0 0
  %2807 = vmatpush1.bf16.msra.mxu0 0
  %2808 = vmatprep.subr.bf16.mxu0 0
  %2809 = vmatpush1.bf16.msra.mxu0 0
  %2810 = vmatprep.subr.bf16.mxu0 0
  %2811 = vmatpush1.bf16.msra.mxu0 0
  %2812 = vmatprep.subr.bf16.mxu0 0
  %2813 = vmatpush1.bf16.msra.mxu0 0
  %2814 = vmatprep.subr.bf16.mxu0 0
  %2815 = vmatpush1.bf16.msra.mxu0 0
  %2816 = vmatprep.subr.bf16.mxu0 0
  %2817 = vmatpush1.bf16.msra.mxu0 0
  %2818 = vmatprep.subr.bf16.mxu0 0
  %2819 = vmatpush1.bf16.msra.mxu0 0
  %2820 = vmatprep.subr.bf16.mxu0 0
  %2821 = vmatpush1.bf16.msra.mxu0 0
  %2822 = vmatprep.subr.bf16.mxu0 0
  %2823 = vmatpush1.bf16.msra.mxu0 0
  %2824 = vmatprep.mubr.bf16.mxu0 0
  %2825 = vmatmul.mubr.bf16.gmra.mrb[0].mxu0 %v2734
  %v2826 = vpop.f32.mrb[0].mxu0
  %v2827 = vadd.f32 0.0, %v2826
  %v2828 = vpop.f32.mrb[0].mxu0
  %v2829 = vadd.f32 0.0, %v2828
  %v2830 = vpop.f32.mrb[0].mxu0
  %v2831 = vadd.f32 0.0, %v2830
  %v2832 = vpop.f32.mrb[0].mxu0
  %v2833 = vadd.f32 0.0, %v2832
  %2834 = vmatprep.mubr.bf16.mxu0 0
  %2835 = vmatmul.mubr.bf16.gmra.mrb[0].mxu0 %v2737
  %v2836 = vpop.f32.mrb[0].mxu0
  %v2837 = vadd.f32 0.0, %v2836
  %v2838 = vpop.f32.mrb[0].mxu0
  %v2839 = vadd.f32 0.0, %v2838
  %v2840 = vpop.f32.mrb[0].mxu0
  %v2841 = vadd.f32 0.0, %v2840
  %v2842 = vpop.f32.mrb[0].mxu0
  %v2843 = vadd.f32 0.0, %v2842
  %2844 = vdwg.mxu0
  %v2849 = vunpack.c.l.b16 %v2604
  %v2850 = vunpack.c.l.b16 %v2605
  %v2851 = vunpack.c.l.b16 %v2606
  %v2852 = vunpack.c.l.b16 %v2607
  %v2853 = vpack.c.b16 %v2850, %v2849
  %v2854 = vpack.c.b16 %v2852, %v2851
  %2865 = vrot.lane.b32.xlu0 %v2594, 17
  %v2866 = vpop.permute.xlu0 %2865
  %2867 = vrot.lane.b32.xlu0 %v2595, 17
  %v2868 = vpop.permute.xlu0 %2867
  %2869 = vrot.lane.b32.xlu0 %v2596, 17
  %v2870 = vpop.permute.xlu0 %2869
  %2871 = vrot.lane.b32.xlu0 %v2597, 17
  %v2872 = vpop.permute.xlu0 %2871
  %2873 = vrot.lane.b32.xlu0 %v2598, 17
  %v2874 = vpop.permute.xlu0 %2873
  %2875 = vrot.lane.b32.xlu0 %v2599, 17
  %v2876 = vpop.permute.xlu0 %2875
  %2877 = vrot.lane.b32.xlu0 %v2600, 17
  %v2878 = vpop.permute.xlu0 %2877
  %2879 = vrot.lane.b32.xlu0 %v2601, 17
  %v2880 = vpop.permute.xlu0 %2879
  %2881 = vrot.lane.b32.xlu0 %v2602, 17
  %v2882 = vpop.permute.xlu0 %2881
  %2883 = vrot.lane.b32.xlu0 %v2603, 17
  %v2884 = vpop.permute.xlu0 %2883
  %v2885 = vsel %vm464, %v2866, %v2868
  %v2886 = vsel %vm464, %v2868, %v2870
  %v2887 = vsel %vm464, %v2870, %v2872
  %v2888 = vsel %vm464, %v2872, %v2874
  %v2889 = vsel %vm464, %v2876, %v2878
  %v2890 = vsel %vm464, %v2878, %v2880
  %v2891 = vsel %vm464, %v2880, %v2882
  %v2892 = vsel %vm464, %v2882, %v2884
  %v2902 = vsel %vm311, %v2853, 0
  %v2905 = vsel %vm311, %v2854, 0
  %2907 = vmatprep.subr.bf16.mxu0 %v2886
  %2908 = vmatpush1.bf16.msra.mxu0 %v2885
  %2909 = vmatprep.subr.bf16.mxu0 %v2890
  %2910 = vmatpush1.bf16.msra.mxu0 %v2889
  %2911 = vmatprep.subr.bf16.mxu0 0
  %2912 = vmatpush1.bf16.msra.mxu0 0
  %2913 = vmatprep.subr.bf16.mxu0 0
  %2914 = vmatpush1.bf16.msra.mxu0 0
  %2915 = vmatprep.subr.bf16.mxu0 0
  %2916 = vmatpush1.bf16.msra.mxu0 0
  %2917 = vmatprep.subr.bf16.mxu0 0
  %2918 = vmatpush1.bf16.msra.mxu0 0
  %2919 = vmatprep.subr.bf16.mxu0 0
  %2920 = vmatpush1.bf16.msra.mxu0 0
  %2921 = vmatprep.subr.bf16.mxu0 0
  %2922 = vmatpush1.bf16.msra.mxu0 0
  %2923 = vmatprep.subr.bf16.mxu0 0
  %2924 = vmatpush1.bf16.msra.mxu0 0
  %2925 = vmatprep.subr.bf16.mxu0 0
  %2926 = vmatpush1.bf16.msra.mxu0 0
  %2927 = vmatprep.subr.bf16.mxu0 0
  %2928 = vmatpush1.bf16.msra.mxu0 0
  %2929 = vmatprep.subr.bf16.mxu0 0
  %2930 = vmatpush1.bf16.msra.mxu0 0
  %2931 = vmatprep.subr.bf16.mxu0 0
  %2932 = vmatpush1.bf16.msra.mxu0 0
  %2933 = vmatprep.subr.bf16.mxu0 0
  %2934 = vmatpush1.bf16.msra.mxu0 0
  %2935 = vmatprep.subr.bf16.mxu0 0
  %2936 = vmatpush1.bf16.msra.mxu0 0
  %2937 = vmatprep.subr.bf16.mxu0 0
  %2938 = vmatpush1.bf16.msra.mxu0 0
  %2939 = vmatprep.mubr.bf16.mxu0 0
  %2940 = vmatmul.mubr.bf16.gmra.mrb[0].mxu0 %v2902
  %v2941 = vpop.f32.mrb[0].mxu0
  %v2942 = vadd.f32 %v2774, %v2941
  %v2943 = vpop.f32.mrb[0].mxu0
  %v2944 = vadd.f32 %v2776, %v2943
  %v2945 = vpop.f32.mrb[0].mxu0
  %v2946 = vadd.f32 %v2778, %v2945
  %v2947 = vpop.f32.mrb[0].mxu0
  %v2948 = vadd.f32 %v2780, %v2947
  %2949 = vmatprep.mubr.bf16.mxu0 0
  %2950 = vmatmul.mubr.bf16.gmra.mrb[0].mxu0 %v2905
  %v2951 = vpop.f32.mrb[0].mxu0
  %v2952 = vadd.f32 %v2784, %v2951
  %v2953 = vpop.f32.mrb[0].mxu0
  %v2954 = vadd.f32 %v2786, %v2953
  %v2955 = vpop.f32.mrb[0].mxu0
  %v2956 = vadd.f32 %v2788, %v2955
  %v2957 = vpop.f32.mrb[0].mxu0
  %v2958 = vadd.f32 %v2790, %v2957
  %2959 = vdwg.mxu0
  %2960 = vmatprep.subr.bf16.mxu0 %v2888
  %2961 = vmatpush1.bf16.msra.mxu0 %v2887
  %2962 = vmatprep.subr.bf16.mxu0 %v2892
  %2963 = vmatpush1.bf16.msra.mxu0 %v2891
  %2964 = vmatprep.subr.bf16.mxu0 0
  %2965 = vmatpush1.bf16.msra.mxu0 0
  %2966 = vmatprep.subr.bf16.mxu0 0
  %2967 = vmatpush1.bf16.msra.mxu0 0
  %2968 = vmatprep.subr.bf16.mxu0 0
  %2969 = vmatpush1.bf16.msra.mxu0 0
  %2970 = vmatprep.subr.bf16.mxu0 0
  %2971 = vmatpush1.bf16.msra.mxu0 0
  %2972 = vmatprep.subr.bf16.mxu0 0
  %2973 = vmatpush1.bf16.msra.mxu0 0
  %2974 = vmatprep.subr.bf16.mxu0 0
  %2975 = vmatpush1.bf16.msra.mxu0 0
  %2976 = vmatprep.subr.bf16.mxu0 0
  %2977 = vmatpush1.bf16.msra.mxu0 0
  %2978 = vmatprep.subr.bf16.mxu0 0
  %2979 = vmatpush1.bf16.msra.mxu0 0
  %2980 = vmatprep.subr.bf16.mxu0 0
  %2981 = vmatpush1.bf16.msra.mxu0 0
  %2982 = vmatprep.subr.bf16.mxu0 0
  %2983 = vmatpush1.bf16.msra.mxu0 0
  %2984 = vmatprep.subr.bf16.mxu0 0
  %2985 = vmatpush1.bf16.msra.mxu0 0
  %2986 = vmatprep.subr.bf16.mxu0 0
  %2987 = vmatpush1.bf16.msra.mxu0 0
  %2988 = vmatprep.subr.bf16.mxu0 0
  %2989 = vmatpush1.bf16.msra.mxu0 0
  %2990 = vmatprep.subr.bf16.mxu0 0
  %2991 = vmatpush1.bf16.msra.mxu0 0
  %2992 = vmatprep.mubr.bf16.mxu0 0
  %2993 = vmatmul.mubr.bf16.gmra.mrb[0].mxu0 %v2902
  %v2994 = vpop.f32.mrb[0].mxu0
  %v2995 = vadd.f32 %v2827, %v2994
  %v2996 = vpop.f32.mrb[0].mxu0
  %v2997 = vadd.f32 %v2829, %v2996
  %v2998 = vpop.f32.mrb[0].mxu0
  %v2999 = vadd.f32 %v2831, %v2998
  %v3000 = vpop.f32.mrb[0].mxu0
  %v3001 = vadd.f32 %v2833, %v3000
  %3002 = vmatprep.mubr.bf16.mxu0 0
  %3003 = vmatmul.mubr.bf16.gmra.mrb[0].mxu0 %v2905
  %v3004 = vpop.f32.mrb[0].mxu0
  %v3005 = vadd.f32 %v2837, %v3004
  %v3006 = vpop.f32.mrb[0].mxu0
  %v3007 = vadd.f32 %v2839, %v3006
  %v3008 = vpop.f32.mrb[0].mxu0
  %v3009 = vadd.f32 %v2841, %v3008
  %v3010 = vpop.f32.mrb[0].mxu0
  %v3011 = vadd.f32 %v2843, %v3010
  %3012 = vdwg.mxu0
  %v3013 = vld [vmem:[%s593] sm:$0xf]
  %v3015 = vlaneseq
  %v3016 = vshrl.u32 %v3015, 7
  %v3017 = vsub.s32 0, %v3016
  %v3018 = vrot.slane %v3013, %v3017
  %v3019 = vlaneseq
  %v3020 = vshrl.u32 %v3019, 7
  %v3021 = vsub.s32 1, %v3020
  %v3022 = vrot.slane %v3013, %v3021
  %v3023 = vlaneseq
  %v3024 = vshrl.u32 %v3023, 7
  %v3025 = vsub.s32 2, %v3024
  %v3026 = vrot.slane %v3013, %v3025
  %v3027 = vlaneseq
  %v3028 = vshrl.u32 %v3027, 7
  %v3029 = vsub.s32 3, %v3028
  %v3030 = vrot.slane %v3013, %v3029
  %3031 = vrot.lane.b32.xlu0 %v3018, 113
  %v3032 = vpop.permute.xlu0 %3031
  %3033 = vrot.lane.b32.xlu0 %v3022, 113
  %v3034 = vpop.permute.xlu0 %3033
  %3035 = vrot.lane.b32.xlu0 %v3026, 113
  %v3036 = vpop.permute.xlu0 %3035
  %3037 = vrot.lane.b32.xlu0 %v3030, 113
  %v3038 = vpop.permute.xlu0 %3037
  %v3039 = vsel %vm620, %v3032, %v3034
  %v3040 = vsel %vm620, %v3034, %v3036
  %v3041 = vsel %vm620, %v3036, %v3038
  %v3047 = vmul.f32 %v2520, %v3032
  %v3048 = vmul.f32 %v2521, %v3039
  %v3049 = vmul.f32 %v2522, %v3040
  %v3050 = vmul.f32 %v2523, %v3041
  %v3051 = vmul.f32 %v2524, %v3038
  %v3052 = vmul.f32 %v2525, %v3032
  %v3053 = vmul.f32 %v2526, %v3039
  %v3054 = vmul.f32 %v2527, %v3040
  %v3055 = vmul.f32 %v2528, %v3041
  %v3056 = vmul.f32 %v2529, %v3038
  %v3057 = vmul.f32 %v2530, %v3032
  %v3058 = vmul.f32 %v2531, %v3039
  %v3059 = vmul.f32 %v2532, %v3040
  %v3060 = vmul.f32 %v2533, %v3041
  %v3061 = vmul.f32 %v2534, %v3038
  %v3062 = vmul.f32 %v2535, %v3032
  %v3063 = vmul.f32 %v2536, %v3039
  %v3064 = vmul.f32 %v2537, %v3040
  %v3065 = vmul.f32 %v2538, %v3041
  %v3066 = vmul.f32 %v2539, %v3038
  %v3067 = vpack.c.bf16 %v3052, %v3047
  %v3068 = vpack.c.bf16 %v3053, %v3048
  %v3069 = vpack.c.bf16 %v3054, %v3049
  %v3070 = vpack.c.bf16 %v3055, %v3050
  %v3071 = vpack.c.bf16 %v3056, %v3051
  %v3072 = vpack.c.bf16 %v3062, %v3057
  %v3073 = vpack.c.bf16 %v3063, %v3058
  %v3074 = vpack.c.bf16 %v3064, %v3059
  %v3075 = vpack.c.bf16 %v3065, %v3060
  %v3076 = vpack.c.bf16 %v3066, %v3061
  %s3077 = scalar_lea.vmem %s5, 32
  %v3078 = vld [vmem:[%s3077] sm:$0xf]
  %v3079 = vld [vmem:[%s3077 + $0x4] sm:$0xf]
  %v3080 = vld [vmem:[%s3077 + $0x8] sm:$0xf]
  %v3081 = vld [vmem:[%s3077 + $0xc] sm:$0xf]
  %v3086 = vunpack.c.l.b16 %v3078
  %v3087 = vunpack.c.l.b16 %v3079
  %v3088 = vunpack.c.l.b16 %v3080
  %v3089 = vunpack.c.l.b16 %v3081
  %v3090 = vpack.c.b16 %v3087, %v3086
  %v3091 = vpack.c.b16 %v3089, %v3088
  %3102 = vrot.lane.b32.xlu0 %v3067, 15
  %v3103 = vpop.permute.xlu0 %3102
  %3104 = vrot.lane.b32.xlu0 %v3068, 15
  %v3105 = vpop.permute.xlu0 %3104
  %3106 = vrot.lane.b32.xlu0 %v3069, 15
  %v3107 = vpop.permute.xlu0 %3106
  %3108 = vrot.lane.b32.xlu0 %v3070, 15
  %v3109 = vpop.permute.xlu0 %3108
  %3110 = vrot.lane.b32.xlu0 %v3071, 15
  %v3111 = vpop.permute.xlu0 %3110
  %3112 = vrot.lane.b32.xlu0 %v3072, 15
  %v3113 = vpop.permute.xlu0 %3112
  %3114 = vrot.lane.b32.xlu0 %v3073, 15
  %v3115 = vpop.permute.xlu0 %3114
  %3116 = vrot.lane.b32.xlu0 %v3074, 15
  %v3117 = vpop.permute.xlu0 %3116
  %3118 = vrot.lane.b32.xlu0 %v3075, 15
  %v3119 = vpop.permute.xlu0 %3118
  %3120 = vrot.lane.b32.xlu0 %v3076, 15
  %v3121 = vpop.permute.xlu0 %3120
  %v3122 = vsel %vm704, %v3103, %v3105
  %v3123 = vsel %vm704, %v3105, %v3107
  %v3124 = vsel %vm704, %v3107, %v3109
  %v3125 = vsel %vm704, %v3109, %v3111
  %v3126 = vsel %vm704, %v3113, %v3115
  %v3127 = vsel %vm704, %v3115, %v3117
  %v3128 = vsel %vm704, %v3117, %v3119
  %v3129 = vsel %vm704, %v3119, %v3121
  %v3139 = vsel %vm311, %v3090, 0
  %v3142 = vsel %vm311, %v3091, 0
  %3144 = vmatprep.subr.bf16.mxu0 %v3123
  %3145 = vmatpush1.bf16.msra.mxu0 %v3122
  %3146 = vmatprep.subr.bf16.mxu0 %v3127
  %3147 = vmatpush1.bf16.msra.mxu0 %v3126
  %3148 = vmatprep.subr.bf16.mxu0 0
  %3149 = vmatpush1.bf16.msra.mxu0 0
  %3150 = vmatprep.subr.bf16.mxu0 0
  %3151 = vmatpush1.bf16.msra.mxu0 0
  %3152 = vmatprep.subr.bf16.mxu0 0
  %3153 = vmatpush1.bf16.msra.mxu0 0
  %3154 = vmatprep.subr.bf16.mxu0 0
  %3155 = vmatpush1.bf16.msra.mxu0 0
  %3156 = vmatprep.subr.bf16.mxu0 0
  %3157 = vmatpush1.bf16.msra.mxu0 0
  %3158 = vmatprep.subr.bf16.mxu0 0
  %3159 = vmatpush1.bf16.msra.mxu0 0
  %3160 = vmatprep.subr.bf16.mxu0 0
  %3161 = vmatpush1.bf16.msra.mxu0 0
  %3162 = vmatprep.subr.bf16.mxu0 0
  %3163 = vmatpush1.bf16.msra.mxu0 0
  %3164 = vmatprep.subr.bf16.mxu0 0
  %3165 = vmatpush1.bf16.msra.mxu0 0
  %3166 = vmatprep.subr.bf16.mxu0 0
  %3167 = vmatpush1.bf16.msra.mxu0 0
  %3168 = vmatprep.subr.bf16.mxu0 0
  %3169 = vmatpush1.bf16.msra.mxu0 0
  %3170 = vmatprep.subr.bf16.mxu0 0
  %3171 = vmatpush1.bf16.msra.mxu0 0
  %3172 = vmatprep.subr.bf16.mxu0 0
  %3173 = vmatpush1.bf16.msra.mxu0 0
  %3174 = vmatprep.subr.bf16.mxu0 0
  %3175 = vmatpush1.bf16.msra.mxu0 0
  %3176 = vmatprep.mubr.bf16.mxu0 0
  %3177 = vmatmul.mubr.bf16.gmra.mrb[0].mxu0 %v3139
  %v3178 = vpop.f32.mrb[0].mxu0
  %v3179 = vadd.f32 0.0, %v3178
  %v3180 = vpop.f32.mrb[0].mxu0
  %v3181 = vadd.f32 0.0, %v3180
  %v3182 = vpop.f32.mrb[0].mxu0
  %v3183 = vadd.f32 0.0, %v3182
  %v3184 = vpop.f32.mrb[0].mxu0
  %v3185 = vadd.f32 0.0, %v3184
  %3186 = vmatprep.mubr.bf16.mxu0 0
  %3187 = vmatmul.mubr.bf16.gmra.mrb[0].mxu0 %v3142
  %v3188 = vpop.f32.mrb[0].mxu0
  %v3189 = vadd.f32 0.0, %v3188
  %v3190 = vpop.f32.mrb[0].mxu0
  %v3191 = vadd.f32 0.0, %v3190
  %v3192 = vpop.f32.mrb[0].mxu0
  %v3193 = vadd.f32 0.0, %v3192
  %v3194 = vpop.f32.mrb[0].mxu0
  %v3195 = vadd.f32 0.0, %v3194
  %3196 = vdwg.mxu0
  %3197 = vmatprep.subr.bf16.mxu0 %v3125
  %3198 = vmatpush1.bf16.msra.mxu0 %v3124
  %3199 = vmatprep.subr.bf16.mxu0 %v3129
  %3200 = vmatpush1.bf16.msra.mxu0 %v3128
  %3201 = vmatprep.subr.bf16.mxu0 0
  %3202 = vmatpush1.bf16.msra.mxu0 0
  %3203 = vmatprep.subr.bf16.mxu0 0
  %3204 = vmatpush1.bf16.msra.mxu0 0
  %3205 = vmatprep.subr.bf16.mxu0 0
  %3206 = vmatpush1.bf16.msra.mxu0 0
  %3207 = vmatprep.subr.bf16.mxu0 0
  %3208 = vmatpush1.bf16.msra.mxu0 0
  %3209 = vmatprep.subr.bf16.mxu0 0
  %3210 = vmatpush1.bf16.msra.mxu0 0
  %3211 = vmatprep.subr.bf16.mxu0 0
  %3212 = vmatpush1.bf16.msra.mxu0 0
  %3213 = vmatprep.subr.bf16.mxu0 0
  %3214 = vmatpush1.bf16.msra.mxu0 0
  %3215 = vmatprep.subr.bf16.mxu0 0
  %3216 = vmatpush1.bf16.msra.mxu0 0
  %3217 = vmatprep.subr.bf16.mxu0 0
  %3218 = vmatpush1.bf16.msra.mxu0 0
  %3219 = vmatprep.subr.bf16.mxu0 0
  %3220 = vmatpush1.bf16.msra.mxu0 0
  %3221 = vmatprep.subr.bf16.mxu0 0
  %3222 = vmatpush1.bf16.msra.mxu0 0
  %3223 = vmatprep.subr.bf16.mxu0 0
  %3224 = vmatpush1.bf16.msra.mxu0 0
  %3225 = vmatprep.subr.bf16.mxu0 0
  %3226 = vmatpush1.bf16.msra.mxu0 0
  %3227 = vmatprep.subr.bf16.mxu0 0
  %3228 = vmatpush1.bf16.msra.mxu0 0
  %3229 = vmatprep.mubr.bf16.mxu0 0
  %3230 = vmatmul.mubr.bf16.gmra.mrb[0].mxu0 %v3139
  %v3231 = vpop.f32.mrb[0].mxu0
  %v3232 = vadd.f32 0.0, %v3231
  %v3233 = vpop.f32.mrb[0].mxu0
  %v3234 = vadd.f32 0.0, %v3233
  %v3235 = vpop.f32.mrb[0].mxu0
  %v3236 = vadd.f32 0.0, %v3235
  %v3237 = vpop.f32.mrb[0].mxu0
  %v3238 = vadd.f32 0.0, %v3237
  %3239 = vmatprep.mubr.bf16.mxu0 0
  %3240 = vmatmul.mubr.bf16.gmra.mrb[0].mxu0 %v3142
  %v3241 = vpop.f32.mrb[0].mxu0
  %v3242 = vadd.f32 0.0, %v3241
  %v3243 = vpop.f32.mrb[0].mxu0
  %v3244 = vadd.f32 0.0, %v3243
  %v3245 = vpop.f32.mrb[0].mxu0
  %v3246 = vadd.f32 0.0, %v3245
  %v3247 = vpop.f32.mrb[0].mxu0
  %v3248 = vadd.f32 0.0, %v3247
  %3249 = vdwg.mxu0
  %v3250 = vadd.f32 %v2942, %v3179
  %v3251 = vadd.f32 %v2944, %v3181
  %v3252 = vadd.f32 %v2995, %v3232
  %v3253 = vadd.f32 %v2997, %v3234
  %v3254 = vadd.f32 %v2946, %v3183
  %v3255 = vadd.f32 %v2948, %v3185
  %v3256 = vadd.f32 %v2999, %v3236
  %v3257 = vadd.f32 %v3001, %v3238
  %v3258 = vadd.f32 %v2952, %v3189
  %v3259 = vadd.f32 %v2954, %v3191
  %v3260 = vadd.f32 %v3005, %v3242
  %v3261 = vadd.f32 %v3007, %v3244
  %v3262 = vadd.f32 %v2956, %v3193
  %v3263 = vadd.f32 %v2958, %v3195
  %v3264 = vadd.f32 %v3009, %v3246
  %v3265 = vadd.f32 %v3011, %v3248
  %v3266 = vld [vmem:[%s849] sm:$0xf]
  %v3268 = vlaneseq
  %v3269 = vshrl.u32 %v3268, 7
  %v3270 = vsub.s32 0, %v3269
  %v3271 = vrot.slane %v3266, %v3270
  %v3272 = vlaneseq
  %v3273 = vshrl.u32 %v3272, 7
  %v3274 = vsub.s32 1, %v3273
  %v3275 = vrot.slane %v3266, %v3274
  %v3276 = vlaneseq
  %v3277 = vshrl.u32 %v3276, 7
  %v3278 = vsub.s32 2, %v3277
  %v3279 = vrot.slane %v3266, %v3278
  %v3280 = vlaneseq
  %v3281 = vshrl.u32 %v3280, 7
  %v3282 = vsub.s32 3, %v3281
  %v3283 = vrot.slane %v3266, %v3282
  %3284 = vrot.lane.b32.xlu0 %v3271, 127
  %v3285 = vpop.permute.xlu0 %3284
  %3286 = vrot.lane.b32.xlu0 %v3275, 127
  %v3287 = vpop.permute.xlu0 %3286
  %3288 = vrot.lane.b32.xlu0 %v3279, 127
  %v3289 = vpop.permute.xlu0 %3288
  %3290 = vrot.lane.b32.xlu0 %v3283, 127
  %v3291 = vpop.permute.xlu0 %3290
  %v3292 = vsel %vm876, %v3285, %v3287
  %v3293 = vsel %vm876, %v3287, %v3289
  %v3294 = vsel %vm876, %v3289, %v3291
  %v3300 = vmul.f32 %v2520, %v3285
  %v3301 = vmul.f32 %v2521, %v3292
  %v3302 = vmul.f32 %v2522, %v3293
  %v3303 = vmul.f32 %v2523, %v3294
  %v3304 = vmul.f32 %v2524, %v3291
  %v3305 = vmul.f32 %v2525, %v3285
  %v3306 = vmul.f32 %v2526, %v3292
  %v3307 = vmul.f32 %v2527, %v3293
  %v3308 = vmul.f32 %v2528, %v3294
  %v3309 = vmul.f32 %v2529, %v3291
  %v3310 = vmul.f32 %v2530, %v3285
  %v3311 = vmul.f32 %v2531, %v3292
  %v3312 = vmul.f32 %v2532, %v3293
  %v3313 = vmul.f32 %v2533, %v3294
  %v3314 = vmul.f32 %v2534, %v3291
  %v3315 = vmul.f32 %v2535, %v3285
  %v3316 = vmul.f32 %v2536, %v3292
  %v3317 = vmul.f32 %v2537, %v3293
  %v3318 = vmul.f32 %v2538, %v3294
  %v3319 = vmul.f32 %v2539, %v3291
  %v3320 = vpack.c.bf16 %v3305, %v3300
  %v3321 = vpack.c.bf16 %v3306, %v3301
  %v3322 = vpack.c.bf16 %v3307, %v3302
  %v3323 = vpack.c.bf16 %v3308, %v3303
  %v3324 = vpack.c.bf16 %v3309, %v3304
  %v3325 = vpack.c.bf16 %v3315, %v3310
  %v3326 = vpack.c.bf16 %v3316, %v3311
  %v3327 = vpack.c.bf16 %v3317, %v3312
  %v3328 = vpack.c.bf16 %v3318, %v3313
  %v3329 = vpack.c.bf16 %v3319, %v3314
  %s3330 = scalar_lea.vmem %s5, 48
  %v3331 = vld [vmem:[%s3330] sm:$0xf]
  %v3332 = vld [vmem:[%s3330 + $0x4] sm:$0xf]
  %v3333 = vld [vmem:[%s3330 + $0x8] sm:$0xf]
  %v3334 = vld [vmem:[%s3330 + $0xc] sm:$0xf]
  %v3339 = vunpack.c.l.b16 %v3331
  %v3340 = vunpack.c.l.b16 %v3332
  %v3341 = vunpack.c.l.b16 %v3333
  %v3342 = vunpack.c.l.b16 %v3334
  %v3343 = vpack.c.b16 %v3340, %v3339
  %v3344 = vpack.c.b16 %v3342, %v3341
  %3355 = vrot.lane.b32.xlu0 %v3320, 1
  %v3356 = vpop.permute.xlu0 %3355
  %3357 = vrot.lane.b32.xlu0 %v3321, 1
  %v3358 = vpop.permute.xlu0 %3357
  %3359 = vrot.lane.b32.xlu0 %v3322, 1
  %v3360 = vpop.permute.xlu0 %3359
  %3361 = vrot.lane.b32.xlu0 %v3323, 1
  %v3362 = vpop.permute.xlu0 %3361
  %3363 = vrot.lane.b32.xlu0 %v3324, 1
  %v3364 = vpop.permute.xlu0 %3363
  %3365 = vrot.lane.b32.xlu0 %v3325, 1
  %v3366 = vpop.permute.xlu0 %3365
  %3367 = vrot.lane.b32.xlu0 %v3326, 1
  %v3368 = vpop.permute.xlu0 %3367
  %3369 = vrot.lane.b32.xlu0 %v3327, 1
  %v3370 = vpop.permute.xlu0 %3369
  %3371 = vrot.lane.b32.xlu0 %v3328, 1
  %v3372 = vpop.permute.xlu0 %3371
  %3373 = vrot.lane.b32.xlu0 %v3329, 1
  %v3374 = vpop.permute.xlu0 %3373
  %v3375 = vsel %vm960, %v3356, %v3358
  %v3376 = vsel %vm960, %v3358, %v3360
  %v3377 = vsel %vm960, %v3360, %v3362
  %v3378 = vsel %vm960, %v3362, %v3364
  %v3379 = vsel %vm960, %v3366, %v3368
  %v3380 = vsel %vm960, %v3368, %v3370
  %v3381 = vsel %vm960, %v3370, %v3372
  %v3382 = vsel %vm960, %v3372, %v3374
  %v3392 = vsel %vm311, %v3343, 0
  %v3395 = vsel %vm311, %v3344, 0
  %3397 = vmatprep.subr.bf16.mxu0 %v3376
  %3398 = vmatpush1.bf16.msra.mxu0 %v3375
  %3399 = vmatprep.subr.bf16.mxu0 %v3380
  %3400 = vmatpush1.bf16.msra.mxu0 %v3379
  %3401 = vmatprep.subr.bf16.mxu0 0
  %3402 = vmatpush1.bf16.msra.mxu0 0
  %3403 = vmatprep.subr.bf16.mxu0 0
  %3404 = vmatpush1.bf16.msra.mxu0 0
  %3405 = vmatprep.subr.bf16.mxu0 0
  %3406 = vmatpush1.bf16.msra.mxu0 0
  %3407 = vmatprep.subr.bf16.mxu0 0
  %3408 = vmatpush1.bf16.msra.mxu0 0
  %3409 = vmatprep.subr.bf16.mxu0 0
  %3410 = vmatpush1.bf16.msra.mxu0 0
  %3411 = vmatprep.subr.bf16.mxu0 0
  %3412 = vmatpush1.bf16.msra.mxu0 0
  %3413 = vmatprep.subr.bf16.mxu0 0
  %3414 = vmatpush1.bf16.msra.mxu0 0
  %3415 = vmatprep.subr.bf16.mxu0 0
  %3416 = vmatpush1.bf16.msra.mxu0 0
  %3417 = vmatprep.subr.bf16.mxu0 0
  %3418 = vmatpush1.bf16.msra.mxu0 0
  %3419 = vmatprep.subr.bf16.mxu0 0
  %3420 = vmatpush1.bf16.msra.mxu0 0
  %3421 = vmatprep.subr.bf16.mxu0 0
  %3422 = vmatpush1.bf16.msra.mxu0 0
  %3423 = vmatprep.subr.bf16.mxu0 0
  %3424 = vmatpush1.bf16.msra.mxu0 0
  %3425 = vmatprep.subr.bf16.mxu0 0
  %3426 = vmatpush1.bf16.msra.mxu0 0
  %3427 = vmatprep.subr.bf16.mxu0 0
  %3428 = vmatpush1.bf16.msra.mxu0 0
  %3429 = vmatprep.mubr.bf16.mxu0 0
  %3430 = vmatmul.mubr.bf16.gmra.mrb[0].mxu0 %v3392
  %v3431 = vpop.f32.mrb[0].mxu0
  %v3432 = vadd.f32 0.0, %v3431
  %v3433 = vpop.f32.mrb[0].mxu0
  %v3434 = vadd.f32 0.0, %v3433
  %v3435 = vpop.f32.mrb[0].mxu0
  %v3436 = vadd.f32 0.0, %v3435
  %v3437 = vpop.f32.mrb[0].mxu0
  %v3438 = vadd.f32 0.0, %v3437
  %3439 = vmatprep.mubr.bf16.mxu0 0
  %3440 = vmatmul.mubr.bf16.gmra.mrb[0].mxu0 %v3395
  %v3441 = vpop.f32.mrb[0].mxu0
  %v3442 = vadd.f32 0.0, %v3441
  %v3443 = vpop.f32.mrb[0].mxu0
  %v3444 = vadd.f32 0.0, %v3443
  %v3445 = vpop.f32.mrb[0].mxu0
  %v3446 = vadd.f32 0.0, %v3445
  %v3447 = vpop.f32.mrb[0].mxu0
  %v3448 = vadd.f32 0.0, %v3447
  %3449 = vdwg.mxu0
  %3450 = vmatprep.subr.bf16.mxu0 %v3378
  %3451 = vmatpush1.bf16.msra.mxu0 %v3377
  %3452 = vmatprep.subr.bf16.mxu0 %v3382
  %3453 = vmatpush1.bf16.msra.mxu0 %v3381
  %3454 = vmatprep.subr.bf16.mxu0 0
  %3455 = vmatpush1.bf16.msra.mxu0 0
  %3456 = vmatprep.subr.bf16.mxu0 0
  %3457 = vmatpush1.bf16.msra.mxu0 0
  %3458 = vmatprep.subr.bf16.mxu0 0
  %3459 = vmatpush1.bf16.msra.mxu0 0
  %3460 = vmatprep.subr.bf16.mxu0 0
  %3461 = vmatpush1.bf16.msra.mxu0 0
  %3462 = vmatprep.subr.bf16.mxu0 0
  %3463 = vmatpush1.bf16.msra.mxu0 0
  %3464 = vmatprep.subr.bf16.mxu0 0
  %3465 = vmatpush1.bf16.msra.mxu0 0
  %3466 = vmatprep.subr.bf16.mxu0 0
  %3467 = vmatpush1.bf16.msra.mxu0 0
  %3468 = vmatprep.subr.bf16.mxu0 0
  %3469 = vmatpush1.bf16.msra.mxu0 0
  %3470 = vmatprep.subr.bf16.mxu0 0
  %3471 = vmatpush1.bf16.msra.mxu0 0
  %3472 = vmatprep.subr.bf16.mxu0 0
  %3473 = vmatpush1.bf16.msra.mxu0 0
  %3474 = vmatprep.subr.bf16.mxu0 0
  %3475 = vmatpush1.bf16.msra.mxu0 0
  %3476 = vmatprep.subr.bf16.mxu0 0
  %3477 = vmatpush1.bf16.msra.mxu0 0
  %3478 = vmatprep.subr.bf16.mxu0 0
  %3479 = vmatpush1.bf16.msra.mxu0 0
  %3480 = vmatprep.subr.bf16.mxu0 0
  %3481 = vmatpush1.bf16.msra.mxu0 0
  %3482 = vmatprep.mubr.bf16.mxu0 0
  %3483 = vmatmul.mubr.bf16.gmra.mrb[0].mxu0 %v3392
  %v3484 = vpop.f32.mrb[0].mxu0
  %v3485 = vadd.f32 0.0, %v3484
  %v3486 = vpop.f32.mrb[0].mxu0
  %v3487 = vadd.f32 0.0, %v3486
  %v3488 = vpop.f32.mrb[0].mxu0
  %v3489 = vadd.f32 0.0, %v3488
  %v3490 = vpop.f32.mrb[0].mxu0
  %v3491 = vadd.f32 0.0, %v3490
  %3492 = vmatprep.mubr.bf16.mxu0 0
  %3493 = vmatmul.mubr.bf16.gmra.mrb[0].mxu0 %v3395
  %v3494 = vpop.f32.mrb[0].mxu0
  %v3495 = vadd.f32 0.0, %v3494
  %v3496 = vpop.f32.mrb[0].mxu0
  %v3497 = vadd.f32 0.0, %v3496
  %v3498 = vpop.f32.mrb[0].mxu0
  %v3499 = vadd.f32 0.0, %v3498
  %v3500 = vpop.f32.mrb[0].mxu0
  %v3501 = vadd.f32 0.0, %v3500
  %3502 = vdwg.mxu0
  %v3503 = vadd.f32 %v3250, %v3432
  %v3504 = vadd.f32 %v3251, %v3434
  %v3505 = vadd.f32 %v3252, %v3485
  %v3506 = vadd.f32 %v3253, %v3487
  %v3507 = vadd.f32 %v3254, %v3436
  %v3508 = vadd.f32 %v3255, %v3438
  %v3509 = vadd.f32 %v3256, %v3489
  %v3510 = vadd.f32 %v3257, %v3491
  %v3511 = vadd.f32 %v3258, %v3442
  %v3512 = vadd.f32 %v3259, %v3444
  %v3513 = vadd.f32 %v3260, %v3495
  %v3514 = vadd.f32 %v3261, %v3497
  %v3515 = vadd.f32 %v3262, %v3446
  %v3516 = vadd.f32 %v3263, %v3448
  %v3517 = vadd.f32 %v3264, %v3499
  %v3518 = vadd.f32 %v3265, %v3501
  %v3519 = vpack.c.bf16 %v2526, %v2521
  %v3520 = vpack.c.bf16 %v2527, %v2522
  %v3521 = vpack.c.bf16 %v2528, %v2523
  %v3522 = vpack.c.bf16 %v2529, %v2524
  %v3523 = vpack.c.bf16 %v2536, %v2531
  %v3524 = vpack.c.bf16 %v2537, %v2532
  %v3525 = vpack.c.bf16 %v2538, %v2533
  %v3526 = vpack.c.bf16 %v2539, %v2534
  %s3527 = scalar_lea.vmem %s5, 64
  %v3528 = vld [vmem:[%s3527] sm:$0xf]
  %v3529 = vld [vmem:[%s3527 + $0x4] sm:$0xf]
  %v3530 = vld [vmem:[%s3527 + $0x8] sm:$0xf]
  %v3531 = vld [vmem:[%s3527 + $0xc] sm:$0xf]
  %v3536 = vunpack.c.l.b16 %v3528
  %v3537 = vunpack.c.l.b16 %v3529
  %v3538 = vunpack.c.l.b16 %v3530
  %v3539 = vunpack.c.l.b16 %v3531
  %v3540 = vpack.c.b16 %v3537, %v3536
  %v3541 = vpack.c.b16 %v3539, %v3538
  %v3543 = vsel %vm311, %v3540, 0
  %v3546 = vsel %vm311, %v3541, 0
  %3548 = vmatprep.subr.bf16.mxu0 %v3520
  %3549 = vmatpush1.bf16.msra.mxu0 %v3519
  %3550 = vmatprep.subr.bf16.mxu0 %v3524
  %3551 = vmatpush1.bf16.msra.mxu0 %v3523
  %3552 = vmatprep.subr.bf16.mxu0 0
  %3553 = vmatpush1.bf16.msra.mxu0 0
  %3554 = vmatprep.subr.bf16.mxu0 0
  %3555 = vmatpush1.bf16.msra.mxu0 0
  %3556 = vmatprep.subr.bf16.mxu0 0
  %3557 = vmatpush1.bf16.msra.mxu0 0
  %3558 = vmatprep.subr.bf16.mxu0 0
  %3559 = vmatpush1.bf16.msra.mxu0 0
  %3560 = vmatprep.subr.bf16.mxu0 0
  %3561 = vmatpush1.bf16.msra.mxu0 0
  %3562 = vmatprep.subr.bf16.mxu0 0
  %3563 = vmatpush1.bf16.msra.mxu0 0
  %3564 = vmatprep.subr.bf16.mxu0 0
  %3565 = vmatpush1.bf16.msra.mxu0 0
  %3566 = vmatprep.subr.bf16.mxu0 0
  %3567 = vmatpush1.bf16.msra.mxu0 0
  %3568 = vmatprep.subr.bf16.mxu0 0
  %3569 = vmatpush1.bf16.msra.mxu0 0
  %3570 = vmatprep.subr.bf16.mxu0 0
  %3571 = vmatpush1.bf16.msra.mxu0 0
  %3572 = vmatprep.subr.bf16.mxu0 0
  %3573 = vmatpush1.bf16.msra.mxu0 0
  %3574 = vmatprep.subr.bf16.mxu0 0
  %3575 = vmatpush1.bf16.msra.mxu0 0
  %3576 = vmatprep.subr.bf16.mxu0 0
  %3577 = vmatpush1.bf16.msra.mxu0 0
  %3578 = vmatprep.subr.bf16.mxu0 0
  %3579 = vmatpush1.bf16.msra.mxu0 0
  %3580 = vmatprep.mubr.bf16.mxu0 0
  %3581 = vmatmul.mubr.bf16.gmra.mrb[0].mxu0 %v3543
  %v3582 = vpop.f32.mrb[0].mxu0
  %v3583 = vadd.f32 0.0, %v3582
  %v3584 = vpop.f32.mrb[0].mxu0
  %v3585 = vadd.f32 0.0, %v3584
  %v3586 = vpop.f32.mrb[0].mxu0
  %v3587 = vadd.f32 0.0, %v3586
  %v3588 = vpop.f32.mrb[0].mxu0
  %v3589 = vadd.f32 0.0, %v3588
  %3590 = vmatprep.mubr.bf16.mxu0 0
  %3591 = vmatmul.mubr.bf16.gmra.mrb[0].mxu0 %v3546
  %v3592 = vpop.f32.mrb[0].mxu0
  %v3593 = vadd.f32 0.0, %v3592
  %v3594 = vpop.f32.mrb[0].mxu0
  %v3595 = vadd.f32 0.0, %v3594
  %v3596 = vpop.f32.mrb[0].mxu0
  %v3597 = vadd.f32 0.0, %v3596
  %v3598 = vpop.f32.mrb[0].mxu0
  %v3599 = vadd.f32 0.0, %v3598
  %3600 = vdwg.mxu0
  %3601 = vmatprep.subr.bf16.mxu0 %v3522
  %3602 = vmatpush1.bf16.msra.mxu0 %v3521
  %3603 = vmatprep.subr.bf16.mxu0 %v3526
  %3604 = vmatpush1.bf16.msra.mxu0 %v3525
  %3605 = vmatprep.subr.bf16.mxu0 0
  %3606 = vmatpush1.bf16.msra.mxu0 0
  %3607 = vmatprep.subr.bf16.mxu0 0
  %3608 = vmatpush1.bf16.msra.mxu0 0
  %3609 = vmatprep.subr.bf16.mxu0 0
  %3610 = vmatpush1.bf16.msra.mxu0 0
  %3611 = vmatprep.subr.bf16.mxu0 0
  %3612 = vmatpush1.bf16.msra.mxu0 0
  %3613 = vmatprep.subr.bf16.mxu0 0
  %3614 = vmatpush1.bf16.msra.mxu0 0
  %3615 = vmatprep.subr.bf16.mxu0 0
  %3616 = vmatpush1.bf16.msra.mxu0 0
  %3617 = vmatprep.subr.bf16.mxu0 0
  %3618 = vmatpush1.bf16.msra.mxu0 0
  %3619 = vmatprep.subr.bf16.mxu0 0
  %3620 = vmatpush1.bf16.msra.mxu0 0
  %3621 = vmatprep.subr.bf16.mxu0 0
  %3622 = vmatpush1.bf16.msra.mxu0 0
  %3623 = vmatprep.subr.bf16.mxu0 0
  %3624 = vmatpush1.bf16.msra.mxu0 0
  %3625 = vmatprep.subr.bf16.mxu0 0
  %3626 = vmatpush1.bf16.msra.mxu0 0
  %3627 = vmatprep.subr.bf16.mxu0 0
  %3628 = vmatpush1.bf16.msra.mxu0 0
  %3629 = vmatprep.subr.bf16.mxu0 0
  %3630 = vmatpush1.bf16.msra.mxu0 0
  %3631 = vmatprep.subr.bf16.mxu0 0
  %3632 = vmatpush1.bf16.msra.mxu0 0
  %3633 = vmatprep.mubr.bf16.mxu0 0
  %3634 = vmatmul.mubr.bf16.gmra.mrb[0].mxu0 %v3543
  %v3635 = vpop.f32.mrb[0].mxu0
  %v3636 = vadd.f32 0.0, %v3635
  %v3637 = vpop.f32.mrb[0].mxu0
  %v3638 = vadd.f32 0.0, %v3637
  %v3639 = vpop.f32.mrb[0].mxu0
  %v3640 = vadd.f32 0.0, %v3639
  %v3641 = vpop.f32.mrb[0].mxu0
  %v3642 = vadd.f32 0.0, %v3641
  %3643 = vmatprep.mubr.bf16.mxu0 0
  %3644 = vmatmul.mubr.bf16.gmra.mrb[0].mxu0 %v3546
  %v3645 = vpop.f32.mrb[0].mxu0
  %v3646 = vadd.f32 0.0, %v3645
  %v3647 = vpop.f32.mrb[0].mxu0
  %v3648 = vadd.f32 0.0, %v3647
  %v3649 = vpop.f32.mrb[0].mxu0
  %v3650 = vadd.f32 0.0, %v3649
  %v3651 = vpop.f32.mrb[0].mxu0
  %v3652 = vadd.f32 0.0, %v3651
  %3653 = vdwg.mxu0
  %v3654 = vadd.f32 %v3503, %v3583
  %v3655 = vadd.f32 %v3504, %v3585
  %v3656 = vadd.f32 %v3505, %v3636
  %v3657 = vadd.f32 %v3506, %v3638
  %v3658 = vadd.f32 %v3507, %v3587
  %v3659 = vadd.f32 %v3508, %v3589
  %v3660 = vadd.f32 %v3509, %v3640
  %v3661 = vadd.f32 %v3510, %v3642
  %v3662 = vadd.f32 %v3511, %v3593
  %v3663 = vadd.f32 %v3512, %v3595
  %v3664 = vadd.f32 %v3513, %v3646
  %v3665 = vadd.f32 %v3514, %v3648
  %v3666 = vadd.f32 %v3515, %v3597
  %v3667 = vadd.f32 %v3516, %v3599
  %v3668 = vadd.f32 %v3517, %v3650
  %v3669 = vadd.f32 %v3518, %v3652
  %v3670 = vld [vmem:[#allocation2 + $0x8] sm:$0xff]
  %v3671 = vld [vmem:[#allocation2 + $0x10] sm:$0xff]
  %v3672 = vld [vmem:[#allocation2 + $0x18] sm:$0xff]
  %v3673 = vld [vmem:[#allocation2 + $0x20] sm:$0xff]
  %v3674 = vld [vmem:[#allocation2 + $0x28] sm:$0xff]
  %v3675 = vld [vmem:[#allocation2 + $0x38] sm:$0xff]
  %v3676 = vld [vmem:[#allocation2 + $0x40] sm:$0xff]
  %v3677 = vld [vmem:[#allocation2 + $0x48] sm:$0xff]
  %v3678 = vld [vmem:[#allocation2 + $0x50] sm:$0xff]
  %v3679 = vld [vmem:[#allocation2 + $0x58] sm:$0xff]
  %v3680 = vld [vmem:[#allocation2 + $0x68] sm:$0xff]
  %v3681 = vld [vmem:[#allocation2 + $0x70] sm:$0xff]
  %v3682 = vld [vmem:[#allocation2 + $0x78] sm:$0xff]
  %v3683 = vld [vmem:[#allocation2 + $0x80] sm:$0xff]
  %v3684 = vld [vmem:[#allocation2 + $0x88] sm:$0xff]
  %v3685 = vld [vmem:[#allocation2 + $0x98] sm:$0xff]
  %v3686 = vld [vmem:[#allocation2 + $0xa0] sm:$0xff]
  %v3687 = vld [vmem:[#allocation2 + $0xa8] sm:$0xff]
  %v3688 = vld [vmem:[#allocation2 + $0xb0] sm:$0xff]
  %v3689 = vld [vmem:[#allocation2 + $0xb8] sm:$0xff]
  %v3690 = vld [vmem:[%s1276] sm:$0xf]
  %v3692 = vlaneseq
  %v3693 = vshrl.u32 %v3692, 7
  %v3694 = vsub.s32 0, %v3693
  %v3695 = vrot.slane %v3690, %v3694
  %v3696 = vlaneseq
  %v3697 = vshrl.u32 %v3696, 7
  %v3698 = vsub.s32 1, %v3697
  %v3699 = vrot.slane %v3690, %v3698
  %v3700 = vlaneseq
  %v3701 = vshrl.u32 %v3700, 7
  %v3702 = vsub.s32 2, %v3701
  %v3703 = vrot.slane %v3690, %v3702
  %v3704 = vlaneseq
  %v3705 = vshrl.u32 %v3704, 7
  %v3706 = vsub.s32 3, %v3705
  %v3707 = vrot.slane %v3690, %v3706
  %3708 = vrot.lane.b32.xlu0 %v3695, 1
  %v3709 = vpop.permute.xlu0 %3708
  %3710 = vrot.lane.b32.xlu0 %v3699, 1
  %v3711 = vpop.permute.xlu0 %3710
  %3712 = vrot.lane.b32.xlu0 %v3703, 1
  %v3713 = vpop.permute.xlu0 %3712
  %3714 = vrot.lane.b32.xlu0 %v3707, 1
  %v3715 = vpop.permute.xlu0 %3714
  %v3716 = vsel %vm1303, %v3709, %v3711
  %v3717 = vsel %vm1303, %v3711, %v3713
  %v3718 = vsel %vm1303, %v3713, %v3715
  %v3724 = vmul.f32 %v3670, %v3709
  %v3725 = vmul.f32 %v3671, %v3716
  %v3726 = vmul.f32 %v3672, %v3717
  %v3727 = vmul.f32 %v3673, %v3718
  %v3728 = vmul.f32 %v3674, %v3715
  %v3729 = vmul.f32 %v3675, %v3709
  %v3730 = vmul.f32 %v3676, %v3716
  %v3731 = vmul.f32 %v3677, %v3717
  %v3732 = vmul.f32 %v3678, %v3718
  %v3733 = vmul.f32 %v3679, %v3715
  %v3734 = vmul.f32 %v3680, %v3709
  %v3735 = vmul.f32 %v3681, %v3716
  %v3736 = vmul.f32 %v3682, %v3717
  %v3737 = vmul.f32 %v3683, %v3718
  %v3738 = vmul.f32 %v3684, %v3715
  %v3739 = vmul.f32 %v3685, %v3709
  %v3740 = vmul.f32 %v3686, %v3716
  %v3741 = vmul.f32 %v3687, %v3717
  %v3742 = vmul.f32 %v3688, %v3718
  %v3743 = vmul.f32 %v3689, %v3715
  %v3744 = vpack.c.bf16 %v3729, %v3724
  %v3745 = vpack.c.bf16 %v3730, %v3725
  %v3746 = vpack.c.bf16 %v3731, %v3726
  %v3747 = vpack.c.bf16 %v3732, %v3727
  %v3748 = vpack.c.bf16 %v3733, %v3728
  %v3749 = vpack.c.bf16 %v3739, %v3734
  %v3750 = vpack.c.bf16 %v3740, %v3735
  %v3751 = vpack.c.bf16 %v3741, %v3736
  %v3752 = vpack.c.bf16 %v3742, %v3737
  %v3753 = vpack.c.bf16 %v3743, %v3738
  %s3754 = scalar_lea.vmem %s5, 80
  %v3755 = vld [vmem:[%s3754] sm:$0xf]
  %v3756 = vld [vmem:[%s3754 + $0x4] sm:$0xf]
  %v3757 = vld [vmem:[%s3754 + $0x8] sm:$0xf]
  %v3758 = vld [vmem:[%s3754 + $0xc] sm:$0xf]
  %v3763 = vunpack.c.l.b16 %v3755
  %v3764 = vunpack.c.l.b16 %v3756
  %v3765 = vunpack.c.l.b16 %v3757
  %v3766 = vunpack.c.l.b16 %v3758
  %v3767 = vpack.c.b16 %v3764, %v3763
  %v3768 = vpack.c.b16 %v3766, %v3765
  %3779 = vrot.lane.b32.xlu0 %v3744, 127
  %v3780 = vpop.permute.xlu0 %3779
  %3781 = vrot.lane.b32.xlu0 %v3745, 127
  %v3782 = vpop.permute.xlu0 %3781
  %3783 = vrot.lane.b32.xlu0 %v3746, 127
  %v3784 = vpop.permute.xlu0 %3783
  %3785 = vrot.lane.b32.xlu0 %v3747, 127
  %v3786 = vpop.permute.xlu0 %3785
  %3787 = vrot.lane.b32.xlu0 %v3748, 127
  %v3788 = vpop.permute.xlu0 %3787
  %3789 = vrot.lane.b32.xlu0 %v3749, 127
  %v3790 = vpop.permute.xlu0 %3789
  %3791 = vrot.lane.b32.xlu0 %v3750, 127
  %v3792 = vpop.permute.xlu0 %3791
  %3793 = vrot.lane.b32.xlu0 %v3751, 127
  %v3794 = vpop.permute.xlu0 %3793
  %3795 = vrot.lane.b32.xlu0 %v3752, 127
  %v3796 = vpop.permute.xlu0 %3795
  %3797 = vrot.lane.b32.xlu0 %v3753, 127
  %v3798 = vpop.permute.xlu0 %3797
  %v3799 = vsel %vm1387, %v3780, %v3782
  %v3800 = vsel %vm1387, %v3782, %v3784
  %v3801 = vsel %vm1387, %v3784, %v3786
  %v3802 = vsel %vm1387, %v3786, %v3788
  %v3803 = vsel %vm1387, %v3790, %v3792
  %v3804 = vsel %vm1387, %v3792, %v3794
  %v3805 = vsel %vm1387, %v3794, %v3796
  %v3806 = vsel %vm1387, %v3796, %v3798
  %v3816 = vsel %vm311, %v3767, 0
  %v3819 = vsel %vm311, %v3768, 0
  %3821 = vmatprep.subr.bf16.mxu0 %v3800
  %3822 = vmatpush1.bf16.msra.mxu0 %v3799
  %3823 = vmatprep.subr.bf16.mxu0 %v3804
  %3824 = vmatpush1.bf16.msra.mxu0 %v3803
  %3825 = vmatprep.subr.bf16.mxu0 0
  %3826 = vmatpush1.bf16.msra.mxu0 0
  %3827 = vmatprep.subr.bf16.mxu0 0
  %3828 = vmatpush1.bf16.msra.mxu0 0
  %3829 = vmatprep.subr.bf16.mxu0 0
  %3830 = vmatpush1.bf16.msra.mxu0 0
  %3831 = vmatprep.subr.bf16.mxu0 0
  %3832 = vmatpush1.bf16.msra.mxu0 0
  %3833 = vmatprep.subr.bf16.mxu0 0
  %3834 = vmatpush1.bf16.msra.mxu0 0
  %3835 = vmatprep.subr.bf16.mxu0 0
  %3836 = vmatpush1.bf16.msra.mxu0 0
  %3837 = vmatprep.subr.bf16.mxu0 0
  %3838 = vmatpush1.bf16.msra.mxu0 0
  %3839 = vmatprep.subr.bf16.mxu0 0
  %3840 = vmatpush1.bf16.msra.mxu0 0
  %3841 = vmatprep.subr.bf16.mxu0 0
  %3842 = vmatpush1.bf16.msra.mxu0 0
  %3843 = vmatprep.subr.bf16.mxu0 0
  %3844 = vmatpush1.bf16.msra.mxu0 0
  %3845 = vmatprep.subr.bf16.mxu0 0
  %3846 = vmatpush1.bf16.msra.mxu0 0
  %3847 = vmatprep.subr.bf16.mxu0 0
  %3848 = vmatpush1.bf16.msra.mxu0 0
  %3849 = vmatprep.subr.bf16.mxu0 0
  %3850 = vmatpush1.bf16.msra.mxu0 0
  %3851 = vmatprep.subr.bf16.mxu0 0
  %3852 = vmatpush1.bf16.msra.mxu0 0
  %3853 = vmatprep.mubr.bf16.mxu0 0
  %3854 = vmatmul.mubr.bf16.gmra.mrb[0].mxu0 %v3816
  %v3855 = vpop.f32.mrb[0].mxu0
  %v3856 = vadd.f32 0.0, %v3855
  %v3857 = vpop.f32.mrb[0].mxu0
  %v3858 = vadd.f32 0.0, %v3857
  %v3859 = vpop.f32.mrb[0].mxu0
  %v3860 = vadd.f32 0.0, %v3859
  %v3861 = vpop.f32.mrb[0].mxu0
  %v3862 = vadd.f32 0.0, %v3861
  %3863 = vmatprep.mubr.bf16.mxu0 0
  %3864 = vmatmul.mubr.bf16.gmra.mrb[0].mxu0 %v3819
  %v3865 = vpop.f32.mrb[0].mxu0
  %v3866 = vadd.f32 0.0, %v3865
  %v3867 = vpop.f32.mrb[0].mxu0
  %v3868 = vadd.f32 0.0, %v3867
  %v3869 = vpop.f32.mrb[0].mxu0
  %v3870 = vadd.f32 0.0, %v3869
  %v3871 = vpop.f32.mrb[0].mxu0
  %v3872 = vadd.f32 0.0, %v3871
  %3873 = vdwg.mxu0
  %3874 = vmatprep.subr.bf16.mxu0 %v3802
  %3875 = vmatpush1.bf16.msra.mxu0 %v3801
  %3876 = vmatprep.subr.bf16.mxu0 %v3806
  %3877 = vmatpush1.bf16.msra.mxu0 %v3805
  %3878 = vmatprep.subr.bf16.mxu0 0
  %3879 = vmatpush1.bf16.msra.mxu0 0
  %3880 = vmatprep.subr.bf16.mxu0 0
  %3881 = vmatpush1.bf16.msra.mxu0 0
  %3882 = vmatprep.subr.bf16.mxu0 0
  %3883 = vmatpush1.bf16.msra.mxu0 0
  %3884 = vmatprep.subr.bf16.mxu0 0
  %3885 = vmatpush1.bf16.msra.mxu0 0
  %3886 = vmatprep.subr.bf16.mxu0 0
  %3887 = vmatpush1.bf16.msra.mxu0 0
  %3888 = vmatprep.subr.bf16.mxu0 0
  %3889 = vmatpush1.bf16.msra.mxu0 0
  %3890 = vmatprep.subr.bf16.mxu0 0
  %3891 = vmatpush1.bf16.msra.mxu0 0
  %3892 = vmatprep.subr.bf16.mxu0 0
  %3893 = vmatpush1.bf16.msra.mxu0 0
  %3894 = vmatprep.subr.bf16.mxu0 0
  %3895 = vmatpush1.bf16.msra.mxu0 0
  %3896 = vmatprep.subr.bf16.mxu0 0
  %3897 = vmatpush1.bf16.msra.mxu0 0
  %3898 = vmatprep.subr.bf16.mxu0 0
  %3899 = vmatpush1.bf16.msra.mxu0 0
  %3900 = vmatprep.subr.bf16.mxu0 0
  %3901 = vmatpush1.bf16.msra.mxu0 0
  %3902 = vmatprep.subr.bf16.mxu0 0
  %3903 = vmatpush1.bf16.msra.mxu0 0
  %3904 = vmatprep.subr.bf16.mxu0 0
  %3905 = vmatpush1.bf16.msra.mxu0 0
  %3906 = vmatprep.mubr.bf16.mxu0 0
  %3907 = vmatmul.mubr.bf16.gmra.mrb[0].mxu0 %v3816
  %v3908 = vpop.f32.mrb[0].mxu0
  %v3909 = vadd.f32 0.0, %v3908
  %v3910 = vpop.f32.mrb[0].mxu0
  %v3911 = vadd.f32 0.0, %v3910
  %v3912 = vpop.f32.mrb[0].mxu0
  %v3913 = vadd.f32 0.0, %v3912
  %v3914 = vpop.f32.mrb[0].mxu0
  %v3915 = vadd.f32 0.0, %v3914
  %3916 = vmatprep.mubr.bf16.mxu0 0
  %3917 = vmatmul.mubr.bf16.gmra.mrb[0].mxu0 %v3819
  %v3918 = vpop.f32.mrb[0].mxu0
  %v3919 = vadd.f32 0.0, %v3918
  %v3920 = vpop.f32.mrb[0].mxu0
  %v3921 = vadd.f32 0.0, %v3920
  %v3922 = vpop.f32.mrb[0].mxu0
  %v3923 = vadd.f32 0.0, %v3922
  %v3924 = vpop.f32.mrb[0].mxu0
  %v3925 = vadd.f32 0.0, %v3924
  %3926 = vdwg.mxu0
  %v3927 = vadd.f32 %v3654, %v3856
  %v3928 = vadd.f32 %v3655, %v3858
  %v3929 = vadd.f32 %v3656, %v3909
  %v3930 = vadd.f32 %v3657, %v3911
  %v3931 = vadd.f32 %v3658, %v3860
  %v3932 = vadd.f32 %v3659, %v3862
  %v3933 = vadd.f32 %v3660, %v3913
  %v3934 = vadd.f32 %v3661, %v3915
  %v3935 = vadd.f32 %v3662, %v3866
  %v3936 = vadd.f32 %v3663, %v3868
  %v3937 = vadd.f32 %v3664, %v3919
  %v3938 = vadd.f32 %v3665, %v3921
  %v3939 = vadd.f32 %v3666, %v3870
  %v3940 = vadd.f32 %v3667, %v3872
  %v3941 = vadd.f32 %v3668, %v3923
  %v3942 = vadd.f32 %v3669, %v3925
  %v3943 = vld [vmem:[%s1532] sm:$0xf]
  %v3945 = vlaneseq
  %v3946 = vshrl.u32 %v3945, 7
  %v3947 = vsub.s32 0, %v3946
  %v3948 = vrot.slane %v3943, %v3947
  %v3949 = vlaneseq
  %v3950 = vshrl.u32 %v3949, 7
  %v3951 = vsub.s32 1, %v3950
  %v3952 = vrot.slane %v3943, %v3951
  %v3953 = vlaneseq
  %v3954 = vshrl.u32 %v3953, 7
  %v3955 = vsub.s32 2, %v3954
  %v3956 = vrot.slane %v3943, %v3955
  %v3957 = vlaneseq
  %v3958 = vshrl.u32 %v3957, 7
  %v3959 = vsub.s32 3, %v3958
  %v3960 = vrot.slane %v3943, %v3959
  %3961 = vrot.lane.b32.xlu0 %v3948, 15
  %v3962 = vpop.permute.xlu0 %3961
  %3963 = vrot.lane.b32.xlu0 %v3952, 15
  %v3964 = vpop.permute.xlu0 %3963
  %3965 = vrot.lane.b32.xlu0 %v3956, 15
  %v3966 = vpop.permute.xlu0 %3965
  %3967 = vrot.lane.b32.xlu0 %v3960, 15
  %v3968 = vpop.permute.xlu0 %3967
  %v3969 = vsel %vm1559, %v3962, %v3964
  %v3970 = vsel %vm1559, %v3964, %v3966
  %v3971 = vsel %vm1559, %v3966, %v3968
  %v3977 = vmul.f32 %v3670, %v3962
  %v3978 = vmul.f32 %v3671, %v3969
  %v3979 = vmul.f32 %v3672, %v3970
  %v3980 = vmul.f32 %v3673, %v3971
  %v3981 = vmul.f32 %v3674, %v3968
  %v3982 = vmul.f32 %v3675, %v3962
  %v3983 = vmul.f32 %v3676, %v3969
  %v3984 = vmul.f32 %v3677, %v3970
  %v3985 = vmul.f32 %v3678, %v3971
  %v3986 = vmul.f32 %v3679, %v3968
  %v3987 = vmul.f32 %v3680, %v3962
  %v3988 = vmul.f32 %v3681, %v3969
  %v3989 = vmul.f32 %v3682, %v3970
  %v3990 = vmul.f32 %v3683, %v3971
  %v3991 = vmul.f32 %v3684, %v3968
  %v3992 = vmul.f32 %v3685, %v3962
  %v3993 = vmul.f32 %v3686, %v3969
  %v3994 = vmul.f32 %v3687, %v3970
  %v3995 = vmul.f32 %v3688, %v3971
  %v3996 = vmul.f32 %v3689, %v3968
  %v3997 = vpack.c.bf16 %v3982, %v3977
  %v3998 = vpack.c.bf16 %v3983, %v3978
  %v3999 = vpack.c.bf16 %v3984, %v3979
  %v4000 = vpack.c.bf16 %v3985, %v3980
  %v4001 = vpack.c.bf16 %v3986, %v3981
  %v4002 = vpack.c.bf16 %v3992, %v3987
  %v4003 = vpack.c.bf16 %v3993, %v3988
  %v4004 = vpack.c.bf16 %v3994, %v3989
  %v4005 = vpack.c.bf16 %v3995, %v3990
  %v4006 = vpack.c.bf16 %v3996, %v3991
  %s4007 = scalar_lea.vmem %s5, 96
  %v4008 = vld [vmem:[%s4007] sm:$0xf]
  %v4009 = vld [vmem:[%s4007 + $0x4] sm:$0xf]
  %v4010 = vld [vmem:[%s4007 + $0x8] sm:$0xf]
  %v4011 = vld [vmem:[%s4007 + $0xc] sm:$0xf]
  %v4016 = vunpack.c.l.b16 %v4008
  %v4017 = vunpack.c.l.b16 %v4009
  %v4018 = vunpack.c.l.b16 %v4010
  %v4019 = vunpack.c.l.b16 %v4011
  %v4020 = vpack.c.b16 %v4017, %v4016
  %v4021 = vpack.c.b16 %v4019, %v4018
  %4032 = vrot.lane.b32.xlu0 %v3997, 113
  %v4033 = vpop.permute.xlu0 %4032
  %4034 = vrot.lane.b32.xlu0 %v3998, 113
  %v4035 = vpop.permute.xlu0 %4034
  %4036 = vrot.lane.b32.xlu0 %v3999, 113
  %v4037 = vpop.permute.xlu0 %4036
  %4038 = vrot.lane.b32.xlu0 %v4000, 113
  %v4039 = vpop.permute.xlu0 %4038
  %4040 = vrot.lane.b32.xlu0 %v4001, 113
  %v4041 = vpop.permute.xlu0 %4040
  %4042 = vrot.lane.b32.xlu0 %v4002, 113
  %v4043 = vpop.permute.xlu0 %4042
  %4044 = vrot.lane.b32.xlu0 %v4003, 113
  %v4045 = vpop.permute.xlu0 %4044
  %4046 = vrot.lane.b32.xlu0 %v4004, 113
  %v4047 = vpop.permute.xlu0 %4046
  %4048 = vrot.lane.b32.xlu0 %v4005, 113
  %v4049 = vpop.permute.xlu0 %4048
  %4050 = vrot.lane.b32.xlu0 %v4006, 113
  %v4051 = vpop.permute.xlu0 %4050
  %v4052 = vsel %vm1643, %v4033, %v4035
  %v4053 = vsel %vm1643, %v4035, %v4037
  %v4054 = vsel %vm1643, %v4037, %v4039
  %v4055 = vsel %vm1643, %v4039, %v4041
  %v4056 = vsel %vm1643, %v4043, %v4045
  %v4057 = vsel %vm1643, %v4045, %v4047
  %v4058 = vsel %vm1643, %v4047, %v4049
  %v4059 = vsel %vm1643, %v4049, %v4051
  %v4069 = vsel %vm311, %v4020, 0
  %v4072 = vsel %vm311, %v4021, 0
  %4074 = vmatprep.subr.bf16.mxu0 %v4053
  %4075 = vmatpush1.bf16.msra.mxu0 %v4052
  %4076 = vmatprep.subr.bf16.mxu0 %v4057
  %4077 = vmatpush1.bf16.msra.mxu0 %v4056
  %4078 = vmatprep.subr.bf16.mxu0 0
  %4079 = vmatpush1.bf16.msra.mxu0 0
  %4080 = vmatprep.subr.bf16.mxu0 0
  %4081 = vmatpush1.bf16.msra.mxu0 0
  %4082 = vmatprep.subr.bf16.mxu0 0
  %4083 = vmatpush1.bf16.msra.mxu0 0
  %4084 = vmatprep.subr.bf16.mxu0 0
  %4085 = vmatpush1.bf16.msra.mxu0 0
  %4086 = vmatprep.subr.bf16.mxu0 0
  %4087 = vmatpush1.bf16.msra.mxu0 0
  %4088 = vmatprep.subr.bf16.mxu0 0
  %4089 = vmatpush1.bf16.msra.mxu0 0
  %4090 = vmatprep.subr.bf16.mxu0 0
  %4091 = vmatpush1.bf16.msra.mxu0 0
  %4092 = vmatprep.subr.bf16.mxu0 0
  %4093 = vmatpush1.bf16.msra.mxu0 0
  %4094 = vmatprep.subr.bf16.mxu0 0
  %4095 = vmatpush1.bf16.msra.mxu0 0
  %4096 = vmatprep.subr.bf16.mxu0 0
  %4097 = vmatpush1.bf16.msra.mxu0 0
  %4098 = vmatprep.subr.bf16.mxu0 0
  %4099 = vmatpush1.bf16.msra.mxu0 0
  %4100 = vmatprep.subr.bf16.mxu0 0
  %4101 = vmatpush1.bf16.msra.mxu0 0
  %4102 = vmatprep.subr.bf16.mxu0 0
  %4103 = vmatpush1.bf16.msra.mxu0 0
  %4104 = vmatprep.subr.bf16.mxu0 0
  %4105 = vmatpush1.bf16.msra.mxu0 0
  %4106 = vmatprep.mubr.bf16.mxu0 0
  %4107 = vmatmul.mubr.bf16.gmra.mrb[0].mxu0 %v4069
  %v4108 = vpop.f32.mrb[0].mxu0
  %v4109 = vadd.f32 0.0, %v4108
  %v4110 = vpop.f32.mrb[0].mxu0
  %v4111 = vadd.f32 0.0, %v4110
  %v4112 = vpop.f32.mrb[0].mxu0
  %v4113 = vadd.f32 0.0, %v4112
  %v4114 = vpop.f32.mrb[0].mxu0
  %v4115 = vadd.f32 0.0, %v4114
  %4116 = vmatprep.mubr.bf16.mxu0 0
  %4117 = vmatmul.mubr.bf16.gmra.mrb[0].mxu0 %v4072
  %v4118 = vpop.f32.mrb[0].mxu0
  %v4119 = vadd.f32 0.0, %v4118
  %v4120 = vpop.f32.mrb[0].mxu0
  %v4121 = vadd.f32 0.0, %v4120
  %v4122 = vpop.f32.mrb[0].mxu0
  %v4123 = vadd.f32 0.0, %v4122
  %v4124 = vpop.f32.mrb[0].mxu0
  %v4125 = vadd.f32 0.0, %v4124
  %4126 = vdwg.mxu0
  %4127 = vmatprep.subr.bf16.mxu0 %v4055
  %4128 = vmatpush1.bf16.msra.mxu0 %v4054
  %4129 = vmatprep.subr.bf16.mxu0 %v4059
  %4130 = vmatpush1.bf16.msra.mxu0 %v4058
  %4131 = vmatprep.subr.bf16.mxu0 0
  %4132 = vmatpush1.bf16.msra.mxu0 0
  %4133 = vmatprep.subr.bf16.mxu0 0
  %4134 = vmatpush1.bf16.msra.mxu0 0
  %4135 = vmatprep.subr.bf16.mxu0 0
  %4136 = vmatpush1.bf16.msra.mxu0 0
  %4137 = vmatprep.subr.bf16.mxu0 0
  %4138 = vmatpush1.bf16.msra.mxu0 0
  %4139 = vmatprep.subr.bf16.mxu0 0
  %4140 = vmatpush1.bf16.msra.mxu0 0
  %4141 = vmatprep.subr.bf16.mxu0 0
  %4142 = vmatpush1.bf16.msra.mxu0 0
  %4143 = vmatprep.subr.bf16.mxu0 0
  %4144 = vmatpush1.bf16.msra.mxu0 0
  %4145 = vmatprep.subr.bf16.mxu0 0
  %4146 = vmatpush1.bf16.msra.mxu0 0
  %4147 = vmatprep.subr.bf16.mxu0 0
  %4148 = vmatpush1.bf16.msra.mxu0 0
  %4149 = vmatprep.subr.bf16.mxu0 0
  %4150 = vmatpush1.bf16.msra.mxu0 0
  %4151 = vmatprep.subr.bf16.mxu0 0
  %4152 = vmatpush1.bf16.msra.mxu0 0
  %4153 = vmatprep.subr.bf16.mxu0 0
  %4154 = vmatpush1.bf16.msra.mxu0 0
  %4155 = vmatprep.subr.bf16.mxu0 0
  %4156 = vmatpush1.bf16.msra.mxu0 0
  %4157 = vmatprep.subr.bf16.mxu0 0
  %4158 = vmatpush1.bf16.msra.mxu0 0
  %4159 = vmatprep.mubr.bf16.mxu0 0
  %4160 = vmatmul.mubr.bf16.gmra.mrb[0].mxu0 %v4069
  %v4161 = vpop.f32.mrb[0].mxu0
  %v4162 = vadd.f32 0.0, %v4161
  %v4163 = vpop.f32.mrb[0].mxu0
  %v4164 = vadd.f32 0.0, %v4163
  %v4165 = vpop.f32.mrb[0].mxu0
  %v4166 = vadd.f32 0.0, %v4165
  %v4167 = vpop.f32.mrb[0].mxu0
  %v4168 = vadd.f32 0.0, %v4167
  %4169 = vmatprep.mubr.bf16.mxu0 0
  %4170 = vmatmul.mubr.bf16.gmra.mrb[0].mxu0 %v4072
  %v4171 = vpop.f32.mrb[0].mxu0
  %v4172 = vadd.f32 0.0, %v4171
  %v4173 = vpop.f32.mrb[0].mxu0
  %v4174 = vadd.f32 0.0, %v4173
  %v4175 = vpop.f32.mrb[0].mxu0
  %v4176 = vadd.f32 0.0, %v4175
  %v4177 = vpop.f32.mrb[0].mxu0
  %v4178 = vadd.f32 0.0, %v4177
  %4179 = vdwg.mxu0
  %v4180 = vadd.f32 %v3927, %v4109
  %v4181 = vadd.f32 %v3928, %v4111
  %v4182 = vadd.f32 %v3929, %v4162
  %v4183 = vadd.f32 %v3930, %v4164
  %v4184 = vadd.f32 %v3931, %v4113
  %v4185 = vadd.f32 %v3932, %v4115
  %v4186 = vadd.f32 %v3933, %v4166
  %v4187 = vadd.f32 %v3934, %v4168
  %v4188 = vadd.f32 %v3935, %v4119
  %v4189 = vadd.f32 %v3936, %v4121
  %v4190 = vadd.f32 %v3937, %v4172
  %v4191 = vadd.f32 %v3938, %v4174
  %v4192 = vadd.f32 %v3939, %v4123
  %v4193 = vadd.f32 %v3940, %v4125
  %v4194 = vadd.f32 %v3941, %v4176
  %v4195 = vadd.f32 %v3942, %v4178
  %v4196 = vld [vmem:[%s1788] sm:$0xf]
  %v4198 = vlaneseq
  %v4199 = vshrl.u32 %v4198, 7
  %v4200 = vsub.s32 0, %v4199
  %v4201 = vrot.slane %v4196, %v4200
  %v4202 = vlaneseq
  %v4203 = vshrl.u32 %v4202, 7
  %v4204 = vsub.s32 1, %v4203
  %v4205 = vrot.slane %v4196, %v4204
  %v4206 = vlaneseq
  %v4207 = vshrl.u32 %v4206, 7
  %v4208 = vsub.s32 2, %v4207
  %v4209 = vrot.slane %v4196, %v4208
  %v4210 = vlaneseq
  %v4211 = vshrl.u32 %v4210, 7
  %v4212 = vsub.s32 3, %v4211
  %v4213 = vrot.slane %v4196, %v4212
  %4214 = vrot.lane.b32.xlu0 %v4201, 16
  %v4215 = vpop.permute.xlu0 %4214
  %4216 = vrot.lane.b32.xlu0 %v4205, 16
  %v4217 = vpop.permute.xlu0 %4216
  %4218 = vrot.lane.b32.xlu0 %v4209, 16
  %v4219 = vpop.permute.xlu0 %4218
  %4220 = vrot.lane.b32.xlu0 %v4213, 16
  %v4221 = vpop.permute.xlu0 %4220
  %v4222 = vsel %vm1815, %v4215, %v4217
  %v4223 = vsel %vm1815, %v4217, %v4219
  %v4224 = vsel %vm1815, %v4219, %v4221
  %v4230 = vmul.f32 %v3670, %v4215
  %v4231 = vmul.f32 %v3671, %v4222
  %v4232 = vmul.f32 %v3672, %v4223
  %v4233 = vmul.f32 %v3673, %v4224
  %v4234 = vmul.f32 %v3674, %v4221
  %v4235 = vmul.f32 %v3675, %v4215
  %v4236 = vmul.f32 %v3676, %v4222
  %v4237 = vmul.f32 %v3677, %v4223
  %v4238 = vmul.f32 %v3678, %v4224
  %v4239 = vmul.f32 %v3679, %v4221
  %v4240 = vmul.f32 %v3680, %v4215
  %v4241 = vmul.f32 %v3681, %v4222
  %v4242 = vmul.f32 %v3682, %v4223
  %v4243 = vmul.f32 %v3683, %v4224
  %v4244 = vmul.f32 %v3684, %v4221
  %v4245 = vmul.f32 %v3685, %v4215
  %v4246 = vmul.f32 %v3686, %v4222
  %v4247 = vmul.f32 %v3687, %v4223
  %v4248 = vmul.f32 %v3688, %v4224
  %v4249 = vmul.f32 %v3689, %v4221
  %v4250 = vpack.c.bf16 %v4235, %v4230
  %v4251 = vpack.c.bf16 %v4236, %v4231
  %v4252 = vpack.c.bf16 %v4237, %v4232
  %v4253 = vpack.c.bf16 %v4238, %v4233
  %v4254 = vpack.c.bf16 %v4239, %v4234
  %v4255 = vpack.c.bf16 %v4245, %v4240
  %v4256 = vpack.c.bf16 %v4246, %v4241
  %v4257 = vpack.c.bf16 %v4247, %v4242
  %v4258 = vpack.c.bf16 %v4248, %v4243
  %v4259 = vpack.c.bf16 %v4249, %v4244
  %s4260 = scalar_lea.vmem %s5, 112
  %v4261 = vld [vmem:[%s4260] sm:$0xf]
  %v4262 = vld [vmem:[%s4260 + $0x4] sm:$0xf]
  %v4263 = vld [vmem:[%s4260 + $0x8] sm:$0xf]
  %v4264 = vld [vmem:[%s4260 + $0xc] sm:$0xf]
  %v4269 = vunpack.c.l.b16 %v4261
  %v4270 = vunpack.c.l.b16 %v4262
  %v4271 = vunpack.c.l.b16 %v4263
  %v4272 = vunpack.c.l.b16 %v4264
  %v4273 = vpack.c.b16 %v4270, %v4269
  %v4274 = vpack.c.b16 %v4272, %v4271
  %4285 = vrot.lane.b32.xlu0 %v4250, 112
  %v4286 = vpop.permute.xlu0 %4285
  %4287 = vrot.lane.b32.xlu0 %v4251, 112
  %v4288 = vpop.permute.xlu0 %4287
  %4289 = vrot.lane.b32.xlu0 %v4252, 112
  %v4290 = vpop.permute.xlu0 %4289
  %4291 = vrot.lane.b32.xlu0 %v4253, 112
  %v4292 = vpop.permute.xlu0 %4291
  %4293 = vrot.lane.b32.xlu0 %v4254, 112
  %v4294 = vpop.permute.xlu0 %4293
  %4295 = vrot.lane.b32.xlu0 %v4255, 112
  %v4296 = vpop.permute.xlu0 %4295
  %4297 = vrot.lane.b32.xlu0 %v4256, 112
  %v4298 = vpop.permute.xlu0 %4297
  %4299 = vrot.lane.b32.xlu0 %v4257, 112
  %v4300 = vpop.permute.xlu0 %4299
  %4301 = vrot.lane.b32.xlu0 %v4258, 112
  %v4302 = vpop.permute.xlu0 %4301
  %4303 = vrot.lane.b32.xlu0 %v4259, 112
  %v4304 = vpop.permute.xlu0 %4303
  %v4305 = vsel %vm1899, %v4286, %v4288
  %v4306 = vsel %vm1899, %v4288, %v4290
  %v4307 = vsel %vm1899, %v4290, %v4292
  %v4308 = vsel %vm1899, %v4292, %v4294
  %v4309 = vsel %vm1899, %v4296, %v4298
  %v4310 = vsel %vm1899, %v4298, %v4300
  %v4311 = vsel %vm1899, %v4300, %v4302
  %v4312 = vsel %vm1899, %v4302, %v4304
  %v4322 = vsel %vm311, %v4273, 0
  %v4325 = vsel %vm311, %v4274, 0
  %4327 = vmatprep.subr.bf16.mxu0 %v4306
  %4328 = vmatpush1.bf16.msra.mxu0 %v4305
  %4329 = vmatprep.subr.bf16.mxu0 %v4310
  %4330 = vmatpush1.bf16.msra.mxu0 %v4309
  %4331 = vmatprep.subr.bf16.mxu0 0
  %4332 = vmatpush1.bf16.msra.mxu0 0
  %4333 = vmatprep.subr.bf16.mxu0 0
  %4334 = vmatpush1.bf16.msra.mxu0 0
  %4335 = vmatprep.subr.bf16.mxu0 0
  %4336 = vmatpush1.bf16.msra.mxu0 0
  %4337 = vmatprep.subr.bf16.mxu0 0
  %4338 = vmatpush1.bf16.msra.mxu0 0
  %4339 = vmatprep.subr.bf16.mxu0 0
  %4340 = vmatpush1.bf16.msra.mxu0 0
  %4341 = vmatprep.subr.bf16.mxu0 0
  %4342 = vmatpush1.bf16.msra.mxu0 0
  %4343 = vmatprep.subr.bf16.mxu0 0
  %4344 = vmatpush1.bf16.msra.mxu0 0
  %4345 = vmatprep.subr.bf16.mxu0 0
  %4346 = vmatpush1.bf16.msra.mxu0 0
  %4347 = vmatprep.subr.bf16.mxu0 0
  %4348 = vmatpush1.bf16.msra.mxu0 0
  %4349 = vmatprep.subr.bf16.mxu0 0
  %4350 = vmatpush1.bf16.msra.mxu0 0
  %4351 = vmatprep.subr.bf16.mxu0 0
  %4352 = vmatpush1.bf16.msra.mxu0 0
  %4353 = vmatprep.subr.bf16.mxu0 0
  %4354 = vmatpush1.bf16.msra.mxu0 0
  %4355 = vmatprep.subr.bf16.mxu0 0
  %4356 = vmatpush1.bf16.msra.mxu0 0
  %4357 = vmatprep.subr.bf16.mxu0 0
  %4358 = vmatpush1.bf16.msra.mxu0 0
  %4359 = vmatprep.mubr.bf16.mxu0 0
  %4360 = vmatmul.mubr.bf16.gmra.mrb[0].mxu0 %v4322
  %v4361 = vpop.f32.mrb[0].mxu0
  %v4362 = vadd.f32 0.0, %v4361
  %v4363 = vpop.f32.mrb[0].mxu0
  %v4364 = vadd.f32 0.0, %v4363
  %v4365 = vpop.f32.mrb[0].mxu0
  %v4366 = vadd.f32 0.0, %v4365
  %v4367 = vpop.f32.mrb[0].mxu0
  %v4368 = vadd.f32 0.0, %v4367
  %4369 = vmatprep.mubr.bf16.mxu0 0
  %4370 = vmatmul.mubr.bf16.gmra.mrb[0].mxu0 %v4325
  %v4371 = vpop.f32.mrb[0].mxu0
  %v4372 = vadd.f32 0.0, %v4371
  %v4373 = vpop.f32.mrb[0].mxu0
  %v4374 = vadd.f32 0.0, %v4373
  %v4375 = vpop.f32.mrb[0].mxu0
  %v4376 = vadd.f32 0.0, %v4375
  %v4377 = vpop.f32.mrb[0].mxu0
  %v4378 = vadd.f32 0.0, %v4377
  %4379 = vdwg.mxu0
  %4380 = vmatprep.subr.bf16.mxu0 %v4308
  %4381 = vmatpush1.bf16.msra.mxu0 %v4307
  %4382 = vmatprep.subr.bf16.mxu0 %v4312
  %4383 = vmatpush1.bf16.msra.mxu0 %v4311
  %4384 = vmatprep.subr.bf16.mxu0 0
  %4385 = vmatpush1.bf16.msra.mxu0 0
  %4386 = vmatprep.subr.bf16.mxu0 0
  %4387 = vmatpush1.bf16.msra.mxu0 0
  %4388 = vmatprep.subr.bf16.mxu0 0
  %4389 = vmatpush1.bf16.msra.mxu0 0
  %4390 = vmatprep.subr.bf16.mxu0 0
  %4391 = vmatpush1.bf16.msra.mxu0 0
  %4392 = vmatprep.subr.bf16.mxu0 0
  %4393 = vmatpush1.bf16.msra.mxu0 0
  %4394 = vmatprep.subr.bf16.mxu0 0
  %4395 = vmatpush1.bf16.msra.mxu0 0
  %4396 = vmatprep.subr.bf16.mxu0 0
  %4397 = vmatpush1.bf16.msra.mxu0 0
  %4398 = vmatprep.subr.bf16.mxu0 0
  %4399 = vmatpush1.bf16.msra.mxu0 0
  %4400 = vmatprep.subr.bf16.mxu0 0
  %4401 = vmatpush1.bf16.msra.mxu0 0
  %4402 = vmatprep.subr.bf16.mxu0 0
  %4403 = vmatpush1.bf16.msra.mxu0 0
  %4404 = vmatprep.subr.bf16.mxu0 0
  %4405 = vmatpush1.bf16.msra.mxu0 0
  %4406 = vmatprep.subr.bf16.mxu0 0
  %4407 = vmatpush1.bf16.msra.mxu0 0
  %4408 = vmatprep.subr.bf16.mxu0 0
  %4409 = vmatpush1.bf16.msra.mxu0 0
  %4410 = vmatprep.subr.bf16.mxu0 0
  %4411 = vmatpush1.bf16.msra.mxu0 0
  %4412 = vmatprep.mubr.bf16.mxu0 0
  %4413 = vmatmul.mubr.bf16.gmra.mrb[0].mxu0 %v4322
  %v4414 = vpop.f32.mrb[0].mxu0
  %v4415 = vadd.f32 0.0, %v4414
  %v4416 = vpop.f32.mrb[0].mxu0
  %v4417 = vadd.f32 0.0, %v4416
  %v4418 = vpop.f32.mrb[0].mxu0
  %v4419 = vadd.f32 0.0, %v4418
  %v4420 = vpop.f32.mrb[0].mxu0
  %v4421 = vadd.f32 0.0, %v4420
  %4422 = vmatprep.mubr.bf16.mxu0 0
  %4423 = vmatmul.mubr.bf16.gmra.mrb[0].mxu0 %v4325
  %v4424 = vpop.f32.mrb[0].mxu0
  %v4425 = vadd.f32 0.0, %v4424
  %v4426 = vpop.f32.mrb[0].mxu0
  %v4427 = vadd.f32 0.0, %v4426
  %v4428 = vpop.f32.mrb[0].mxu0
  %v4429 = vadd.f32 0.0, %v4428
  %v4430 = vpop.f32.mrb[0].mxu0
  %v4431 = vadd.f32 0.0, %v4430
  %4432 = vdwg.mxu0
  %v4433 = vadd.f32 %v4180, %v4362
  %v4434 = vadd.f32 %v4181, %v4364
  %v4435 = vadd.f32 %v4182, %v4415
  %v4436 = vadd.f32 %v4183, %v4417
  %v4437 = vadd.f32 %v4184, %v4366
  %v4438 = vadd.f32 %v4185, %v4368
  %v4439 = vadd.f32 %v4186, %v4419
  %v4440 = vadd.f32 %v4187, %v4421
  %v4441 = vadd.f32 %v4188, %v4372
  %v4442 = vadd.f32 %v4189, %v4374
  %v4443 = vadd.f32 %v4190, %v4425
  %v4444 = vadd.f32 %v4191, %v4427
  %v4445 = vadd.f32 %v4192, %v4376
  %v4446 = vadd.f32 %v4193, %v4378
  %v4447 = vadd.f32 %v4194, %v4429
  %v4448 = vadd.f32 %v4195, %v4431
  %v4449 = vld [vmem:[%s2044] sm:$0xf]
  %v4451 = vlaneseq
  %v4452 = vshrl.u32 %v4451, 7
  %v4453 = vsub.s32 0, %v4452
  %v4454 = vrot.slane %v4449, %v4453
  %v4455 = vlaneseq
  %v4456 = vshrl.u32 %v4455, 7
  %v4457 = vsub.s32 1, %v4456
  %v4458 = vrot.slane %v4449, %v4457
  %v4459 = vlaneseq
  %v4460 = vshrl.u32 %v4459, 7
  %v4461 = vsub.s32 2, %v4460
  %v4462 = vrot.slane %v4449, %v4461
  %v4463 = vlaneseq
  %v4464 = vshrl.u32 %v4463, 7
  %v4465 = vsub.s32 3, %v4464
  %v4466 = vrot.slane %v4449, %v4465
  %4467 = vrot.lane.b32.xlu0 %v4454, 17
  %v4468 = vpop.permute.xlu0 %4467
  %4469 = vrot.lane.b32.xlu0 %v4458, 17
  %v4470 = vpop.permute.xlu0 %4469
  %4471 = vrot.lane.b32.xlu0 %v4462, 17
  %v4472 = vpop.permute.xlu0 %4471
  %4473 = vrot.lane.b32.xlu0 %v4466, 17
  %v4474 = vpop.permute.xlu0 %4473
  %v4475 = vsel %vm2071, %v4468, %v4470
  %v4476 = vsel %vm2071, %v4470, %v4472
  %v4477 = vsel %vm2071, %v4472, %v4474
  %v4483 = vmul.f32 %v3670, %v4468
  %v4484 = vmul.f32 %v3671, %v4475
  %v4485 = vmul.f32 %v3672, %v4476
  %v4486 = vmul.f32 %v3673, %v4477
  %v4487 = vmul.f32 %v3674, %v4474
  %v4488 = vmul.f32 %v3675, %v4468
  %v4489 = vmul.f32 %v3676, %v4475
  %v4490 = vmul.f32 %v3677, %v4476
  %v4491 = vmul.f32 %v3678, %v4477
  %v4492 = vmul.f32 %v3679, %v4474
  %v4493 = vmul.f32 %v3680, %v4468
  %v4494 = vmul.f32 %v3681, %v4475
  %v4495 = vmul.f32 %v3682, %v4476
  %v4496 = vmul.f32 %v3683, %v4477
  %v4497 = vmul.f32 %v3684, %v4474
  %v4498 = vmul.f32 %v3685, %v4468
  %v4499 = vmul.f32 %v3686, %v4475
  %v4500 = vmul.f32 %v3687, %v4476
  %v4501 = vmul.f32 %v3688, %v4477
  %v4502 = vmul.f32 %v3689, %v4474
  %v4503 = vpack.c.bf16 %v4488, %v4483
  %v4504 = vpack.c.bf16 %v4489, %v4484
  %v4505 = vpack.c.bf16 %v4490, %v4485
  %v4506 = vpack.c.bf16 %v4491, %v4486
  %v4507 = vpack.c.bf16 %v4492, %v4487
  %v4508 = vpack.c.bf16 %v4498, %v4493
  %v4509 = vpack.c.bf16 %v4499, %v4494
  %v4510 = vpack.c.bf16 %v4500, %v4495
  %v4511 = vpack.c.bf16 %v4501, %v4496
  %v4512 = vpack.c.bf16 %v4502, %v4497
  %s4513 = scalar_lea.vmem %s5, 128
  %v4514 = vld [vmem:[%s4513] sm:$0xf]
  %v4515 = vld [vmem:[%s4513 + $0x4] sm:$0xf]
  %v4516 = vld [vmem:[%s4513 + $0x8] sm:$0xf]
  %v4517 = vld [vmem:[%s4513 + $0xc] sm:$0xf]
  %v4522 = vunpack.c.l.b16 %v4514
  %v4523 = vunpack.c.l.b16 %v4515
  %v4524 = vunpack.c.l.b16 %v4516
  %v4525 = vunpack.c.l.b16 %v4517
  %v4526 = vpack.c.b16 %v4523, %v4522
  %v4527 = vpack.c.b16 %v4525, %v4524
  %4538 = vrot.lane.b32.xlu0 %v4503, 111
  %v4539 = vpop.permute.xlu0 %4538
  %4540 = vrot.lane.b32.xlu0 %v4504, 111
  %v4541 = vpop.permute.xlu0 %4540
  %4542 = vrot.lane.b32.xlu0 %v4505, 111
  %v4543 = vpop.permute.xlu0 %4542
  %4544 = vrot.lane.b32.xlu0 %v4506, 111
  %v4545 = vpop.permute.xlu0 %4544
  %4546 = vrot.lane.b32.xlu0 %v4507, 111
  %v4547 = vpop.permute.xlu0 %4546
  %4548 = vrot.lane.b32.xlu0 %v4508, 111
  %v4549 = vpop.permute.xlu0 %4548
  %4550 = vrot.lane.b32.xlu0 %v4509, 111
  %v4551 = vpop.permute.xlu0 %4550
  %4552 = vrot.lane.b32.xlu0 %v4510, 111
  %v4553 = vpop.permute.xlu0 %4552
  %4554 = vrot.lane.b32.xlu0 %v4511, 111
  %v4555 = vpop.permute.xlu0 %4554
  %4556 = vrot.lane.b32.xlu0 %v4512, 111
  %v4557 = vpop.permute.xlu0 %4556
  %v4558 = vsel %vm2155, %v4539, %v4541
  %v4559 = vsel %vm2155, %v4541, %v4543
  %v4560 = vsel %vm2155, %v4543, %v4545
  %v4561 = vsel %vm2155, %v4545, %v4547
  %v4562 = vsel %vm2155, %v4549, %v4551
  %v4563 = vsel %vm2155, %v4551, %v4553
  %v4564 = vsel %vm2155, %v4553, %v4555
  %v4565 = vsel %vm2155, %v4555, %v4557
  %v4575 = vsel %vm311, %v4526, 0
  %v4578 = vsel %vm311, %v4527, 0
  %4580 = vmatprep.subr.bf16.mxu0 %v4559
  %4581 = vmatpush1.bf16.msra.mxu0 %v4558
  %4582 = vmatprep.subr.bf16.mxu0 %v4563
  %4583 = vmatpush1.bf16.msra.mxu0 %v4562
  %4584 = vmatprep.subr.bf16.mxu0 0
  %4585 = vmatpush1.bf16.msra.mxu0 0
  %4586 = vmatprep.subr.bf16.mxu0 0
  %4587 = vmatpush1.bf16.msra.mxu0 0
  %4588 = vmatprep.subr.bf16.mxu0 0
  %4589 = vmatpush1.bf16.msra.mxu0 0
  %4590 = vmatprep.subr.bf16.mxu0 0
  %4591 = vmatpush1.bf16.msra.mxu0 0
  %4592 = vmatprep.subr.bf16.mxu0 0
  %4593 = vmatpush1.bf16.msra.mxu0 0
  %4594 = vmatprep.subr.bf16.mxu0 0
  %4595 = vmatpush1.bf16.msra.mxu0 0
  %4596 = vmatprep.subr.bf16.mxu0 0
  %4597 = vmatpush1.bf16.msra.mxu0 0
  %4598 = vmatprep.subr.bf16.mxu0 0
  %4599 = vmatpush1.bf16.msra.mxu0 0
  %4600 = vmatprep.subr.bf16.mxu0 0
  %4601 = vmatpush1.bf16.msra.mxu0 0
  %4602 = vmatprep.subr.bf16.mxu0 0
  %4603 = vmatpush1.bf16.msra.mxu0 0
  %4604 = vmatprep.subr.bf16.mxu0 0
  %4605 = vmatpush1.bf16.msra.mxu0 0
  %4606 = vmatprep.subr.bf16.mxu0 0
  %4607 = vmatpush1.bf16.msra.mxu0 0
  %4608 = vmatprep.subr.bf16.mxu0 0
  %4609 = vmatpush1.bf16.msra.mxu0 0
  %4610 = vmatprep.subr.bf16.mxu0 0
  %4611 = vmatpush1.bf16.msra.mxu0 0
  %4612 = vmatprep.mubr.bf16.mxu0 0
  %4613 = vmatmul.mubr.bf16.gmra.mrb[0].mxu0 %v4575
  %v4614 = vpop.f32.mrb[0].mxu0
  %v4615 = vadd.f32 0.0, %v4614
  %v4616 = vpop.f32.mrb[0].mxu0
  %v4617 = vadd.f32 0.0, %v4616
  %v4618 = vpop.f32.mrb[0].mxu0
  %v4619 = vadd.f32 0.0, %v4618
  %v4620 = vpop.f32.mrb[0].mxu0
  %v4621 = vadd.f32 0.0, %v4620
  %4622 = vmatprep.mubr.bf16.mxu0 0
  %4623 = vmatmul.mubr.bf16.gmra.mrb[0].mxu0 %v4578
  %v4624 = vpop.f32.mrb[0].mxu0
  %v4625 = vadd.f32 0.0, %v4624
  %v4626 = vpop.f32.mrb[0].mxu0
  %v4627 = vadd.f32 0.0, %v4626
  %v4628 = vpop.f32.mrb[0].mxu0
  %v4629 = vadd.f32 0.0, %v4628
  %v4630 = vpop.f32.mrb[0].mxu0
  %v4631 = vadd.f32 0.0, %v4630
  %4632 = vdwg.mxu0
  %4633 = vmatprep.subr.bf16.mxu0 %v4561
  %4634 = vmatpush1.bf16.msra.mxu0 %v4560
  %4635 = vmatprep.subr.bf16.mxu0 %v4565
  %4636 = vmatpush1.bf16.msra.mxu0 %v4564
  %4637 = vmatprep.subr.bf16.mxu0 0
  %4638 = vmatpush1.bf16.msra.mxu0 0
  %4639 = vmatprep.subr.bf16.mxu0 0
  %4640 = vmatpush1.bf16.msra.mxu0 0
  %4641 = vmatprep.subr.bf16.mxu0 0
  %4642 = vmatpush1.bf16.msra.mxu0 0
  %4643 = vmatprep.subr.bf16.mxu0 0
  %4644 = vmatpush1.bf16.msra.mxu0 0
  %4645 = vmatprep.subr.bf16.mxu0 0
  %4646 = vmatpush1.bf16.msra.mxu0 0
  %4647 = vmatprep.subr.bf16.mxu0 0
  %4648 = vmatpush1.bf16.msra.mxu0 0
  %4649 = vmatprep.subr.bf16.mxu0 0
  %4650 = vmatpush1.bf16.msra.mxu0 0
  %4651 = vmatprep.subr.bf16.mxu0 0
  %4652 = vmatpush1.bf16.msra.mxu0 0
  %4653 = vmatprep.subr.bf16.mxu0 0
  %4654 = vmatpush1.bf16.msra.mxu0 0
  %4655 = vmatprep.subr.bf16.mxu0 0
  %4656 = vmatpush1.bf16.msra.mxu0 0
  %4657 = vmatprep.subr.bf16.mxu0 0
  %4658 = vmatpush1.bf16.msra.mxu0 0
  %4659 = vmatprep.subr.bf16.mxu0 0
  %4660 = vmatpush1.bf16.msra.mxu0 0
  %4661 = vmatprep.subr.bf16.mxu0 0
  %4662 = vmatpush1.bf16.msra.mxu0 0
  %4663 = vmatprep.subr.bf16.mxu0 0
  %4664 = vmatpush1.bf16.msra.mxu0 0
  %4665 = vmatprep.mubr.bf16.mxu0 0
  %4666 = vmatmul.mubr.bf16.gmra.mrb[0].mxu0 %v4575
  %v4667 = vpop.f32.mrb[0].mxu0
  %v4668 = vadd.f32 0.0, %v4667
  %v4669 = vpop.f32.mrb[0].mxu0
  %v4670 = vadd.f32 0.0, %v4669
  %v4671 = vpop.f32.mrb[0].mxu0
  %v4672 = vadd.f32 0.0, %v4671
  %v4673 = vpop.f32.mrb[0].mxu0
  %v4674 = vadd.f32 0.0, %v4673
  %4675 = vmatprep.mubr.bf16.mxu0 0
  %4676 = vmatmul.mubr.bf16.gmra.mrb[0].mxu0 %v4578
  %v4677 = vpop.f32.mrb[0].mxu0
  %v4678 = vadd.f32 0.0, %v4677
  %v4679 = vpop.f32.mrb[0].mxu0
  %v4680 = vadd.f32 0.0, %v4679
  %v4681 = vpop.f32.mrb[0].mxu0
  %v4682 = vadd.f32 0.0, %v4681
  %v4683 = vpop.f32.mrb[0].mxu0
  %v4684 = vadd.f32 0.0, %v4683
  %4685 = vdwg.mxu0
  %v4686 = vadd.f32 %v4433, %v4615
  %v4687 = vadd.f32 %v4434, %v4617
  %v4688 = vadd.f32 %v4435, %v4668
  %v4689 = vadd.f32 %v4436, %v4670
  %v4690 = vadd.f32 %v4437, %v4619
  %v4691 = vadd.f32 %v4438, %v4621
  %v4692 = vadd.f32 %v4439, %v4672
  %v4693 = vadd.f32 %v4440, %v4674
  %v4694 = vadd.f32 %v4441, %v4625
  %v4695 = vadd.f32 %v4442, %v4627
  %v4696 = vadd.f32 %v4443, %v4678
  %v4697 = vadd.f32 %v4444, %v4680
  %v4698 = vadd.f32 %v4445, %v4629
  %v4699 = vadd.f32 %v4446, %v4631
  %v4700 = vadd.f32 %v4447, %v4682
  %v4701 = vadd.f32 %v4448, %v4684
  %v4702 = vadd.f32 %v4686, %v4687
  %v4703 = vadd.f32 %v4702, %v4688
  %v4704 = vadd.f32 %v4703, %v4689
  %4705 = vadd.xlane.f32.xlu0 %v4704
  %v4706 = vpop.xlane.xlu0 %4705
  %v4707 = vadd.f32 %v4690, %v4691
  %v4708 = vadd.f32 %v4707, %v4692
  %v4709 = vadd.f32 %v4708, %v4693
  %4710 = vadd.xlane.f32.xlu0 %v4709
  %v4711 = vpop.xlane.xlu0 %4710
  %v4712 = vadd.f32 %v4694, %v4695
  %v4713 = vadd.f32 %v4712, %v4696
  %v4714 = vadd.f32 %v4713, %v4697
  %4715 = vadd.xlane.f32.xlu0 %v4714
  %v4716 = vpop.xlane.xlu0 %4715
  %v4717 = vadd.f32 %v4698, %v4699
  %v4718 = vadd.f32 %v4717, %v4700
  %v4719 = vadd.f32 %v4718, %v4701
  %4720 = vadd.xlane.f32.xlu0 %v4719
  %v4721 = vpop.xlane.xlu0 %4720
  %v4722 = vmul.f32 %v4706, 0.001953125
  %v4723 = vmul.f32 %v4711, 0.001953125
  %v4724 = vmul.f32 %v4716, 0.001953125
  %v4725 = vmul.f32 %v4721, 0.001953125
  %v4726 = vsub.f32 %v4686, %v4722
  %v4727 = vsub.f32 %v4687, %v4722
  %v4728 = vsub.f32 %v4688, %v4722
  %v4729 = vsub.f32 %v4689, %v4722
  %v4730 = vsub.f32 %v4690, %v4723
  %v4731 = vsub.f32 %v4691, %v4723
  %v4732 = vsub.f32 %v4692, %v4723
  %v4733 = vsub.f32 %v4693, %v4723
  %v4734 = vsub.f32 %v4694, %v4724
  %v4735 = vsub.f32 %v4695, %v4724
  %v4736 = vsub.f32 %v4696, %v4724
  %v4737 = vsub.f32 %v4697, %v4724
  %v4738 = vsub.f32 %v4698, %v4725
  %v4739 = vsub.f32 %v4699, %v4725
  %v4740 = vsub.f32 %v4700, %v4725
  %v4741 = vsub.f32 %v4701, %v4725
  %v4742 = vmul.f32 %v4726, %v4726
  %v4743 = vmul.f32 %v4727, %v4727
  %v4744 = vmul.f32 %v4728, %v4728
  %v4745 = vmul.f32 %v4729, %v4729
  %v4746 = vmul.f32 %v4730, %v4730
  %v4747 = vmul.f32 %v4731, %v4731
  %v4748 = vmul.f32 %v4732, %v4732
  %v4749 = vmul.f32 %v4733, %v4733
  %v4750 = vmul.f32 %v4734, %v4734
  %v4751 = vmul.f32 %v4735, %v4735
  %v4752 = vmul.f32 %v4736, %v4736
  %v4753 = vmul.f32 %v4737, %v4737
  %v4754 = vmul.f32 %v4738, %v4738
  %v4755 = vmul.f32 %v4739, %v4739
  %v4756 = vmul.f32 %v4740, %v4740
  %v4757 = vmul.f32 %v4741, %v4741
  %v4758 = vadd.f32 %v4742, %v4743
  %v4759 = vadd.f32 %v4758, %v4744
  %v4760 = vadd.f32 %v4759, %v4745
  %4761 = vadd.xlane.f32.xlu0 %v4760
  %v4762 = vpop.xlane.xlu0 %4761
  %v4763 = vadd.f32 %v4746, %v4747
  %v4764 = vadd.f32 %v4763, %v4748
  %v4765 = vadd.f32 %v4764, %v4749
  %4766 = vadd.xlane.f32.xlu0 %v4765
  %v4767 = vpop.xlane.xlu0 %4766
  %v4768 = vadd.f32 %v4750, %v4751
  %v4769 = vadd.f32 %v4768, %v4752
  %v4770 = vadd.f32 %v4769, %v4753
  %4771 = vadd.xlane.f32.xlu0 %v4770
  %v4772 = vpop.xlane.xlu0 %4771
  %v4773 = vadd.f32 %v4754, %v4755
  %v4774 = vadd.f32 %v4773, %v4756
  %v4775 = vadd.f32 %v4774, %v4757
  %4776 = vadd.xlane.f32.xlu0 %v4775
  %v4777 = vpop.xlane.xlu0 %4776
  %v4778 = vmul.f32 %v4762, 0.001953125
  %v4779 = vmul.f32 %v4767, 0.001953125
  %v4780 = vmul.f32 %v4772, 0.001953125
  %v4781 = vmul.f32 %v4777, 0.001953125
  %v4782 = vld [vmem:[%s6] sm:$0xff]
  %v4783 = vld [vmem:[%s6 + $0x8] sm:$0xff]
  %v4784 = vld [vmem:[%s6 + $0x10] sm:$0xff]
  %v4785 = vld [vmem:[%s6 + $0x18] sm:$0xff]
  %v4786 = vadd.f32 %v4778, 1e-05
  %v4787 = vadd.f32 %v4779, 1e-05
  %v4788 = vadd.f32 %v4780, 1e-05
  %v4789 = vadd.f32 %v4781, 1e-05
  %v4790 = vrsqrt.pop %v4786
  %v4791 = vrsqrt.pop %v4787
  %v4792 = vrsqrt.pop %v4788
  %v4793 = vrsqrt.pop %v4789
  %v4794 = vmul.f32 %v4782, %v4790
  %v4795 = vmul.f32 %v4783, %v4791
  %v4796 = vmul.f32 %v4784, %v4792
  %v4797 = vmul.f32 %v4785, %v4793
  %4799 = vset.pattern.permute.xlu0 0
  %4800 = vperm.xlu0 %4799, %v4794
  %v4801 = vpop.permute.xlu0 %4800
  %4804 = vset.pattern.permute.xlu0 0
  %4805 = vperm.xlu0 %4804, %v4795
  %v4806 = vpop.permute.xlu0 %4805
  %4809 = vset.pattern.permute.xlu0 0
  %4810 = vperm.xlu0 %4809, %v4796
  %v4811 = vpop.permute.xlu0 %4810
  %4814 = vset.pattern.permute.xlu0 0
  %4815 = vperm.xlu0 %4814, %v4797
  %v4816 = vpop.permute.xlu0 %4815
  %v4818 = vmul.f32 %v4726, %v4801
  %v4819 = vmul.f32 %v4727, %v4801
  %v4820 = vmul.f32 %v4728, %v4801
  %v4821 = vmul.f32 %v4729, %v4801
  %v4822 = vmul.f32 %v4730, %v4806
  %v4823 = vmul.f32 %v4731, %v4806
  %v4824 = vmul.f32 %v4732, %v4806
  %v4825 = vmul.f32 %v4733, %v4806
  %v4826 = vmul.f32 %v4734, %v4811
  %v4827 = vmul.f32 %v4735, %v4811
  %v4828 = vmul.f32 %v4736, %v4811
  %v4829 = vmul.f32 %v4737, %v4811
  %v4830 = vmul.f32 %v4738, %v4816
  %v4831 = vmul.f32 %v4739, %v4816
  %v4832 = vmul.f32 %v4740, %v4816
  %v4833 = vmul.f32 %v4741, %v4816
  %v4834 = vld [vmem:[%s7] sm:$0xff]
  %v4835 = vld [vmem:[%s7 + $0x8] sm:$0xff]
  %v4836 = vld [vmem:[%s7 + $0x10] sm:$0xff]
  %v4837 = vld [vmem:[%s7 + $0x18] sm:$0xff]
  %4839 = vset.pattern.permute.xlu0 0
  %4840 = vperm.xlu0 %4839, %v4834
  %v4841 = vpop.permute.xlu0 %4840
  %4844 = vset.pattern.permute.xlu0 0
  %4845 = vperm.xlu0 %4844, %v4835
  %v4846 = vpop.permute.xlu0 %4845
  %4849 = vset.pattern.permute.xlu0 0
  %4850 = vperm.xlu0 %4849, %v4836
  %v4851 = vpop.permute.xlu0 %4850
  %4854 = vset.pattern.permute.xlu0 0
  %4855 = vperm.xlu0 %4854, %v4837
  %v4856 = vpop.permute.xlu0 %4855
  %v4858 = vadd.f32 %v4818, %v4841
  %v4859 = vadd.f32 %v4819, %v4841
  %v4860 = vadd.f32 %v4820, %v4841
  %v4861 = vadd.f32 %v4821, %v4841
  %v4862 = vadd.f32 %v4822, %v4846
  %v4863 = vadd.f32 %v4823, %v4846
  %v4864 = vadd.f32 %v4824, %v4846
  %v4865 = vadd.f32 %v4825, %v4846
  %v4866 = vadd.f32 %v4826, %v4851
  %v4867 = vadd.f32 %v4827, %v4851
  %v4868 = vadd.f32 %v4828, %v4851
  %v4869 = vadd.f32 %v4829, %v4851
  %v4870 = vadd.f32 %v4830, %v4856
  %v4871 = vadd.f32 %v4831, %v4856
  %v4872 = vadd.f32 %v4832, %v4856
  %v4873 = vadd.f32 %v4833, %v4856
  %v4874 = vmul.f32 %v4858, 0.2
  %v4875 = vmul.f32 %v4859, 0.2
  %v4876 = vmul.f32 %v4860, 0.2
  %v4877 = vmul.f32 %v4861, 0.2
  %v4878 = vmul.f32 %v4862, 0.2
  %v4879 = vmul.f32 %v4863, 0.2
  %v4880 = vmul.f32 %v4864, 0.2
  %v4881 = vmul.f32 %v4865, 0.2
  %v4882 = vmul.f32 %v4866, 0.2
  %v4883 = vmul.f32 %v4867, 0.2
  %v4884 = vmul.f32 %v4868, 0.2
  %v4885 = vmul.f32 %v4869, 0.2
  %v4886 = vmul.f32 %v4870, 0.2
  %v4887 = vmul.f32 %v4871, 0.2
  %v4888 = vmul.f32 %v4872, 0.2
  %v4889 = vmul.f32 %v4873, 0.2
  %v4890 = vmax.f32 %v4858, %v4874
  %v4891 = vmax.f32 %v4859, %v4875
  %v4892 = vmax.f32 %v4860, %v4876
  %v4893 = vmax.f32 %v4861, %v4877
  %v4894 = vmax.f32 %v4862, %v4878
  %v4895 = vmax.f32 %v4863, %v4879
  %v4896 = vmax.f32 %v4864, %v4880
  %v4897 = vmax.f32 %v4865, %v4881
  %v4898 = vmax.f32 %v4866, %v4882
  %v4899 = vmax.f32 %v4867, %v4883
  %v4900 = vmax.f32 %v4868, %v4884
  %v4901 = vmax.f32 %v4869, %v4885
  %v4902 = vmax.f32 %v4870, %v4886
  %v4903 = vmax.f32 %v4871, %v4887
  %v4904 = vmax.f32 %v4872, %v4888
  %v4905 = vmax.f32 %v4873, %v4889
  %4906 = vst [vmem:[#allocation2 + $0x8] sm:$0xff] %v4890
  %4907 = vst [vmem:[#allocation2 + $0x10] sm:$0xff] %v4891
  %4908 = vst [vmem:[#allocation2 + $0x18] sm:$0xff] %v4892
  %4909 = vst [vmem:[#allocation2 + $0x20] sm:$0xff] %v4893
  %4910 = vst [vmem:[#allocation2 + $0x38] sm:$0xff] %v4894
  %4911 = vst [vmem:[#allocation2 + $0x40] sm:$0xff] %v4895
  %4912 = vst [vmem:[#allocation2 + $0x48] sm:$0xff] %v4896
  %4913 = vst [vmem:[#allocation2 + $0x50] sm:$0xff] %v4897
  %4914 = vst [vmem:[#allocation2 + $0x68] sm:$0xff] %v4898
  %4915 = vst [vmem:[#allocation2 + $0x70] sm:$0xff] %v4899
  %4916 = vst [vmem:[#allocation2 + $0x78] sm:$0xff] %v4900
  %4917 = vst [vmem:[#allocation2 + $0x80] sm:$0xff] %v4901
  %4918 = vst [vmem:[#allocation2 + $0x98] sm:$0xff] %v4902
  %4919 = vst [vmem:[#allocation2 + $0xa0] sm:$0xff] %v4903
  %4920 = vst [vmem:[#allocation2 + $0xa8] sm:$0xff] %v4904
  %4921 = vst [vmem:[#allocation2 + $0xb0] sm:$0xff] %v4905
  %v4922 = vld [vmem:[#allocation2] sm:$0xff]
  %v4923 = vld [vmem:[#allocation2 + $0x8] sm:$0xff]
  %v4924 = vld [vmem:[#allocation2 + $0x10] sm:$0xff]
  %v4925 = vld [vmem:[#allocation2 + $0x18] sm:$0xff]
  %v4926 = vld [vmem:[#allocation2 + $0x20] sm:$0xff]
  %v4927 = vld [vmem:[#allocation2 + $0x30] sm:$0xff]
  %v4928 = vld [vmem:[#allocation2 + $0x38] sm:$0xff]
  %v4929 = vld [vmem:[#allocation2 + $0x40] sm:$0xff]
  %v4930 = vld [vmem:[#allocation2 + $0x48] sm:$0xff]
  %v4931 = vld [vmem:[#allocation2 + $0x50] sm:$0xff]
  %v4932 = vld [vmem:[#allocation2 + $0x60] sm:$0xff]
  %v4933 = vld [vmem:[#allocation2 + $0x68] sm:$0xff]
  %v4934 = vld [vmem:[#allocation2 + $0x70] sm:$0xff]
  %v4935 = vld [vmem:[#allocation2 + $0x78] sm:$0xff]
  %v4936 = vld [vmem:[#allocation2 + $0x80] sm:$0xff]
  %v4937 = vld [vmem:[#allocation2 + $0x90] sm:$0xff]
  %v4938 = vld [vmem:[#allocation2 + $0x98] sm:$0xff]
  %v4939 = vld [vmem:[#allocation2 + $0xa0] sm:$0xff]
  %v4940 = vld [vmem:[#allocation2 + $0xa8] sm:$0xff]
  %v4941 = vld [vmem:[#allocation2 + $0xb0] sm:$0xff]
  %v4942 = vld [vmem:[%s0] sm:$0xf]
  %v4944 = vlaneseq
  %v4945 = vshrl.u32 %v4944, 7
  %v4946 = vsub.s32 0, %v4945
  %v4947 = vrot.slane %v4942, %v4946
  %v4948 = vlaneseq
  %v4949 = vshrl.u32 %v4948, 7
  %v4950 = vsub.s32 1, %v4949
  %v4951 = vrot.slane %v4942, %v4950
  %v4952 = vlaneseq
  %v4953 = vshrl.u32 %v4952, 7
  %v4954 = vsub.s32 2, %v4953
  %v4955 = vrot.slane %v4942, %v4954
  %v4956 = vlaneseq
  %v4957 = vshrl.u32 %v4956, 7
  %v4958 = vsub.s32 3, %v4957
  %v4959 = vrot.slane %v4942, %v4958
  %4960 = vrot.lane.b32.xlu0 %v4947, 111
  %v4961 = vpop.permute.xlu0 %4960
  %4962 = vrot.lane.b32.xlu0 %v4951, 111
  %v4963 = vpop.permute.xlu0 %4962
  %4964 = vrot.lane.b32.xlu0 %v4955, 111
  %v4965 = vpop.permute.xlu0 %4964
  %4966 = vrot.lane.b32.xlu0 %v4959, 111
  %v4967 = vpop.permute.xlu0 %4966
  %v4968 = vsel %vm140, %v4961, %v4963
  %v4969 = vsel %vm140, %v4963, %v4965
  %v4970 = vsel %vm140, %v4965, %v4967
  %v4976 = vmul.f32 %v4922, %v4961
  %v4977 = vmul.f32 %v4923, %v4968
  %v4978 = vmul.f32 %v4924, %v4969
  %v4979 = vmul.f32 %v4925, %v4970
  %v4980 = vmul.f32 %v4926, %v4967
  %v4981 = vmul.f32 %v4927, %v4961
  %v4982 = vmul.f32 %v4928, %v4968
  %v4983 = vmul.f32 %v4929, %v4969
  %v4984 = vmul.f32 %v4930, %v4970
  %v4985 = vmul.f32 %v4931, %v4967
  %v4986 = vmul.f32 %v4932, %v4961
  %v4987 = vmul.f32 %v4933, %v4968
  %v4988 = vmul.f32 %v4934, %v4969
  %v4989 = vmul.f32 %v4935, %v4970
  %v4990 = vmul.f32 %v4936, %v4967
  %v4991 = vmul.f32 %v4937, %v4961
  %v4992 = vmul.f32 %v4938, %v4968
  %v4993 = vmul.f32 %v4939, %v4969
  %v4994 = vmul.f32 %v4940, %v4970
  %v4995 = vmul.f32 %v4941, %v4967
  %v4996 = vpack.c.bf16 %v4981, %v4976
  %v4997 = vpack.c.bf16 %v4982, %v4977
  %v4998 = vpack.c.bf16 %v4983, %v4978
  %v4999 = vpack.c.bf16 %v4984, %v4979
  %v5000 = vpack.c.bf16 %v4985, %v4980
  %v5001 = vpack.c.bf16 %v4991, %v4986
  %v5002 = vpack.c.bf16 %v4992, %v4987
  %v5003 = vpack.c.bf16 %v4993, %v4988
  %v5004 = vpack.c.bf16 %v4994, %v4989
  %v5005 = vpack.c.bf16 %v4995, %v4990
  %v5006 = vld [vmem:[%s8] sm:$0xf]
  %v5007 = vld [vmem:[%s8 + $0x4] sm:$0xf]
  %v5008 = vld [vmem:[%s8 + $0x8] sm:$0xf]
  %v5009 = vld [vmem:[%s8 + $0xc] sm:$0xf]
  %v5010 = vld [vmem:[%s183] sm:$0xf]
  %v5012 = vlaneseq
  %v5013 = vshrl.u32 %v5012, 7
  %v5014 = vsub.s32 0, %v5013
  %v5015 = vrot.slane %v5010, %v5014
  %v5016 = vlaneseq
  %v5017 = vshrl.u32 %v5016, 7
  %v5018 = vsub.s32 1, %v5017
  %v5019 = vrot.slane %v5010, %v5018
  %v5020 = vlaneseq
  %v5021 = vshrl.u32 %v5020, 7
  %v5022 = vsub.s32 2, %v5021
  %v5023 = vrot.slane %v5010, %v5022
  %v5024 = vlaneseq
  %v5025 = vshrl.u32 %v5024, 7
  %v5026 = vsub.s32 3, %v5025
  %v5027 = vrot.slane %v5010, %v5026
  %5028 = vrot.lane.b32.xlu0 %v5015, 112
  %v5029 = vpop.permute.xlu0 %5028
  %5030 = vrot.lane.b32.xlu0 %v5019, 112
  %v5031 = vpop.permute.xlu0 %5030
  %5032 = vrot.lane.b32.xlu0 %v5023, 112
  %v5033 = vpop.permute.xlu0 %5032
  %5034 = vrot.lane.b32.xlu0 %v5027, 112
  %v5035 = vpop.permute.xlu0 %5034
  %v5036 = vsel %vm210, %v5029, %v5031
  %v5037 = vsel %vm210, %v5031, %v5033
  %v5038 = vsel %vm210, %v5033, %v5035
  %v5044 = vmul.f32 %v4922, %v5029
  %v5045 = vmul.f32 %v4923, %v5036
  %v5046 = vmul.f32 %v4924, %v5037
  %v5047 = vmul.f32 %v4925, %v5038
  %v5048 = vmul.f32 %v4926, %v5035
  %v5049 = vmul.f32 %v4927, %v5029
  %v5050 = vmul.f32 %v4928, %v5036
  %v5051 = vmul.f32 %v4929, %v5037
  %v5052 = vmul.f32 %v4930, %v5038
  %v5053 = vmul.f32 %v4931, %v5035
  %v5054 = vmul.f32 %v4932, %v5029
  %v5055 = vmul.f32 %v4933, %v5036
  %v5056 = vmul.f32 %v4934, %v5037
  %v5057 = vmul.f32 %v4935, %v5038
  %v5058 = vmul.f32 %v4936, %v5035
  %v5059 = vmul.f32 %v4937, %v5029
  %v5060 = vmul.f32 %v4938, %v5036
  %v5061 = vmul.f32 %v4939, %v5037
  %v5062 = vmul.f32 %v4940, %v5038
  %v5063 = vmul.f32 %v4941, %v5035
  %v5064 = vpack.c.bf16 %v5049, %v5044
  %v5065 = vpack.c.bf16 %v5050, %v5045
  %v5066 = vpack.c.bf16 %v5051, %v5046
  %v5067 = vpack.c.bf16 %v5052, %v5047
  %v5068 = vpack.c.bf16 %v5053, %v5048
  %v5069 = vpack.c.bf16 %v5059, %v5054
  %v5070 = vpack.c.bf16 %v5060, %v5055
  %v5071 = vpack.c.bf16 %v5061, %v5056
  %v5072 = vpack.c.bf16 %v5062, %v5057
  %v5073 = vpack.c.bf16 %v5063, %v5058
  %s5074 = scalar_lea.vmem %s8, 16
  %v5075 = vld [vmem:[%s5074] sm:$0xf]
  %v5076 = vld [vmem:[%s5074 + $0x4] sm:$0xf]
  %v5077 = vld [vmem:[%s5074 + $0x8] sm:$0xf]
  %v5078 = vld [vmem:[%s5074 + $0xc] sm:$0xf]
  %v5083 = vunpack.c.l.b16 %v5075
  %v5084 = vunpack.c.l.b16 %v5076
  %v5085 = vunpack.c.l.b16 %v5077
  %v5086 = vunpack.c.l.b16 %v5078
  %v5087 = vpack.c.b16 %v5084, %v5083
  %v5088 = vpack.c.b16 %v5086, %v5085
  %5099 = vrot.lane.b32.xlu0 %v5064, 16
  %v5100 = vpop.permute.xlu0 %5099
  %5101 = vrot.lane.b32.xlu0 %v5065, 16
  %v5102 = vpop.permute.xlu0 %5101
  %5103 = vrot.lane.b32.xlu0 %v5066, 16
  %v5104 = vpop.permute.xlu0 %5103
  %5105 = vrot.lane.b32.xlu0 %v5067, 16
  %v5106 = vpop.permute.xlu0 %5105
  %5107 = vrot.lane.b32.xlu0 %v5068, 16
  %v5108 = vpop.permute.xlu0 %5107
  %5109 = vrot.lane.b32.xlu0 %v5069, 16
  %v5110 = vpop.permute.xlu0 %5109
  %5111 = vrot.lane.b32.xlu0 %v5070, 16
  %v5112 = vpop.permute.xlu0 %5111
  %5113 = vrot.lane.b32.xlu0 %v5071, 16
  %v5114 = vpop.permute.xlu0 %5113
  %5115 = vrot.lane.b32.xlu0 %v5072, 16
  %v5116 = vpop.permute.xlu0 %5115
  %5117 = vrot.lane.b32.xlu0 %v5073, 16
  %v5118 = vpop.permute.xlu0 %5117
  %v5119 = vsel %vm294, %v5100, %v5102
  %v5120 = vsel %vm294, %v5102, %v5104
  %v5121 = vsel %vm294, %v5104, %v5106
  %v5122 = vsel %vm294, %v5106, %v5108
  %v5123 = vsel %vm294, %v5110, %v5112
  %v5124 = vsel %vm294, %v5112, %v5114
  %v5125 = vsel %vm294, %v5114, %v5116
  %v5126 = vsel %vm294, %v5116, %v5118
  %v5136 = vsel %vm311, %v5087, 0
  %v5139 = vsel %vm311, %v5088, 0
  %5141 = vmatprep.subr.bf16.mxu0 %v5120
  %5142 = vmatpush1.bf16.msra.mxu0 %v5119
  %5143 = vmatprep.subr.bf16.mxu0 %v5124
  %5144 = vmatpush1.bf16.msra.mxu0 %v5123
  %5145 = vmatprep.subr.bf16.mxu0 0
  %5146 = vmatpush1.bf16.msra.mxu0 0
  %5147 = vmatprep.subr.bf16.mxu0 0
  %5148 = vmatpush1.bf16.msra.mxu0 0
  %5149 = vmatprep.subr.bf16.mxu0 0
  %5150 = vmatpush1.bf16.msra.mxu0 0
  %5151 = vmatprep.subr.bf16.mxu0 0
  %5152 = vmatpush1.bf16.msra.mxu0 0
  %5153 = vmatprep.subr.bf16.mxu0 0
  %5154 = vmatpush1.bf16.msra.mxu0 0
  %5155 = vmatprep.subr.bf16.mxu0 0
  %5156 = vmatpush1.bf16.msra.mxu0 0
  %5157 = vmatprep.subr.bf16.mxu0 0
  %5158 = vmatpush1.bf16.msra.mxu0 0
  %5159 = vmatprep.subr.bf16.mxu0 0
  %5160 = vmatpush1.bf16.msra.mxu0 0
  %5161 = vmatprep.subr.bf16.mxu0 0
  %5162 = vmatpush1.bf16.msra.mxu0 0
  %5163 = vmatprep.subr.bf16.mxu0 0
  %5164 = vmatpush1.bf16.msra.mxu0 0
  %5165 = vmatprep.subr.bf16.mxu0 0
  %5166 = vmatpush1.bf16.msra.mxu0 0
  %5167 = vmatprep.subr.bf16.mxu0 0
  %5168 = vmatpush1.bf16.msra.mxu0 0
  %5169 = vmatprep.subr.bf16.mxu0 0
  %5170 = vmatpush1.bf16.msra.mxu0 0
  %5171 = vmatprep.subr.bf16.mxu0 0
  %5172 = vmatpush1.bf16.msra.mxu0 0
  %5173 = vmatprep.mubr.bf16.mxu0 0
  %5174 = vmatmul.mubr.bf16.gmra.mrb[0].mxu0 %v5136
  %v5175 = vpop.f32.mrb[0].mxu0
  %v5176 = vadd.f32 0.0, %v5175
  %v5177 = vpop.f32.mrb[0].mxu0
  %v5178 = vadd.f32 0.0, %v5177
  %v5179 = vpop.f32.mrb[0].mxu0
  %v5180 = vadd.f32 0.0, %v5179
  %v5181 = vpop.f32.mrb[0].mxu0
  %v5182 = vadd.f32 0.0, %v5181
  %5183 = vmatprep.mubr.bf16.mxu0 0
  %5184 = vmatmul.mubr.bf16.gmra.mrb[0].mxu0 %v5139
  %v5185 = vpop.f32.mrb[0].mxu0
  %v5186 = vadd.f32 0.0, %v5185
  %v5187 = vpop.f32.mrb[0].mxu0
  %v5188 = vadd.f32 0.0, %v5187
  %v5189 = vpop.f32.mrb[0].mxu0
  %v5190 = vadd.f32 0.0, %v5189
  %v5191 = vpop.f32.mrb[0].mxu0
  %v5192 = vadd.f32 0.0, %v5191
  %5193 = vdwg.mxu0
  %5194 = vmatprep.subr.bf16.mxu0 %v5122
  %5195 = vmatpush1.bf16.msra.mxu0 %v5121
  %5196 = vmatprep.subr.bf16.mxu0 %v5126
  %5197 = vmatpush1.bf16.msra.mxu0 %v5125
  %5198 = vmatprep.subr.bf16.mxu0 0
  %5199 = vmatpush1.bf16.msra.mxu0 0
  %5200 = vmatprep.subr.bf16.mxu0 0
  %5201 = vmatpush1.bf16.msra.mxu0 0
  %5202 = vmatprep.subr.bf16.mxu0 0
  %5203 = vmatpush1.bf16.msra.mxu0 0
  %5204 = vmatprep.subr.bf16.mxu0 0
  %5205 = vmatpush1.bf16.msra.mxu0 0
  %5206 = vmatprep.subr.bf16.mxu0 0
  %5207 = vmatpush1.bf16.msra.mxu0 0
  %5208 = vmatprep.subr.bf16.mxu0 0
  %5209 = vmatpush1.bf16.msra.mxu0 0
  %5210 = vmatprep.subr.bf16.mxu0 0
  %5211 = vmatpush1.bf16.msra.mxu0 0
  %5212 = vmatprep.subr.bf16.mxu0 0
  %5213 = vmatpush1.bf16.msra.mxu0 0
  %5214 = vmatprep.subr.bf16.mxu0 0
  %5215 = vmatpush1.bf16.msra.mxu0 0
  %5216 = vmatprep.subr.bf16.mxu0 0
  %5217 = vmatpush1.bf16.msra.mxu0 0
  %5218 = vmatprep.subr.bf16.mxu0 0
  %5219 = vmatpush1.bf16.msra.mxu0 0
  %5220 = vmatprep.subr.bf16.mxu0 0
  %5221 = vmatpush1.bf16.msra.mxu0 0
  %5222 = vmatprep.subr.bf16.mxu0 0
  %5223 = vmatpush1.bf16.msra.mxu0 0
  %5224 = vmatprep.subr.bf16.mxu0 0
  %5225 = vmatpush1.bf16.msra.mxu0 0
  %5226 = vmatprep.mubr.bf16.mxu0 0
  %5227 = vmatmul.mubr.bf16.gmra.mrb[0].mxu0 %v5136
  %v5228 = vpop.f32.mrb[0].mxu0
  %v5229 = vadd.f32 0.0, %v5228
  %v5230 = vpop.f32.mrb[0].mxu0
  %v5231 = vadd.f32 0.0, %v5230
  %v5232 = vpop.f32.mrb[0].mxu0
  %v5233 = vadd.f32 0.0, %v5232
  %v5234 = vpop.f32.mrb[0].mxu0
  %v5235 = vadd.f32 0.0, %v5234
  %5236 = vmatprep.mubr.bf16.mxu0 0
  %5237 = vmatmul.mubr.bf16.gmra.mrb[0].mxu0 %v5139
  %v5238 = vpop.f32.mrb[0].mxu0
  %v5239 = vadd.f32 0.0, %v5238
  %v5240 = vpop.f32.mrb[0].mxu0
  %v5241 = vadd.f32 0.0, %v5240
  %v5242 = vpop.f32.mrb[0].mxu0
  %v5243 = vadd.f32 0.0, %v5242
  %v5244 = vpop.f32.mrb[0].mxu0
  %v5245 = vadd.f32 0.0, %v5244
  %5246 = vdwg.mxu0
  %v5251 = vunpack.c.l.b16 %v5006
  %v5252 = vunpack.c.l.b16 %v5007
  %v5253 = vunpack.c.l.b16 %v5008
  %v5254 = vunpack.c.l.b16 %v5009
  %v5255 = vpack.c.b16 %v5252, %v5251
  %v5256 = vpack.c.b16 %v5254, %v5253
  %5267 = vrot.lane.b32.xlu0 %v4996, 17
  %v5268 = vpop.permute.xlu0 %5267
  %5269 = vrot.lane.b32.xlu0 %v4997, 17
  %v5270 = vpop.permute.xlu0 %5269
  %5271 = vrot.lane.b32.xlu0 %v4998, 17
  %v5272 = vpop.permute.xlu0 %5271
  %5273 = vrot.lane.b32.xlu0 %v4999, 17
  %v5274 = vpop.permute.xlu0 %5273
  %5275 = vrot.lane.b32.xlu0 %v5000, 17
  %v5276 = vpop.permute.xlu0 %5275
  %5277 = vrot.lane.b32.xlu0 %v5001, 17
  %v5278 = vpop.permute.xlu0 %5277
  %5279 = vrot.lane.b32.xlu0 %v5002, 17
  %v5280 = vpop.permute.xlu0 %5279
  %5281 = vrot.lane.b32.xlu0 %v5003, 17
  %v5282 = vpop.permute.xlu0 %5281
  %5283 = vrot.lane.b32.xlu0 %v5004, 17
  %v5284 = vpop.permute.xlu0 %5283
  %5285 = vrot.lane.b32.xlu0 %v5005, 17
  %v5286 = vpop.permute.xlu0 %5285
  %v5287 = vsel %vm464, %v5268, %v5270
  %v5288 = vsel %vm464, %v5270, %v5272
  %v5289 = vsel %vm464, %v5272, %v5274
  %v5290 = vsel %vm464, %v5274, %v5276
  %v5291 = vsel %vm464, %v5278, %v5280
  %v5292 = vsel %vm464, %v5280, %v5282
  %v5293 = vsel %vm464, %v5282, %v5284
  %v5294 = vsel %vm464, %v5284, %v5286
  %v5304 = vsel %vm311, %v5255, 0
  %v5307 = vsel %vm311, %v5256, 0
  %5309 = vmatprep.subr.bf16.mxu0 %v5288
  %5310 = vmatpush1.bf16.msra.mxu0 %v5287
  %5311 = vmatprep.subr.bf16.mxu0 %v5292
  %5312 = vmatpush1.bf16.msra.mxu0 %v5291
  %5313 = vmatprep.subr.bf16.mxu0 0
  %5314 = vmatpush1.bf16.msra.mxu0 0
  %5315 = vmatprep.subr.bf16.mxu0 0
  %5316 = vmatpush1.bf16.msra.mxu0 0
  %5317 = vmatprep.subr.bf16.mxu0 0
  %5318 = vmatpush1.bf16.msra.mxu0 0
  %5319 = vmatprep.subr.bf16.mxu0 0
  %5320 = vmatpush1.bf16.msra.mxu0 0
  %5321 = vmatprep.subr.bf16.mxu0 0
  %5322 = vmatpush1.bf16.msra.mxu0 0
  %5323 = vmatprep.subr.bf16.mxu0 0
  %5324 = vmatpush1.bf16.msra.mxu0 0
  %5325 = vmatprep.subr.bf16.mxu0 0
  %5326 = vmatpush1.bf16.msra.mxu0 0
  %5327 = vmatprep.subr.bf16.mxu0 0
  %5328 = vmatpush1.bf16.msra.mxu0 0
  %5329 = vmatprep.subr.bf16.mxu0 0
  %5330 = vmatpush1.bf16.msra.mxu0 0
  %5331 = vmatprep.subr.bf16.mxu0 0
  %5332 = vmatpush1.bf16.msra.mxu0 0
  %5333 = vmatprep.subr.bf16.mxu0 0
  %5334 = vmatpush1.bf16.msra.mxu0 0
  %5335 = vmatprep.subr.bf16.mxu0 0
  %5336 = vmatpush1.bf16.msra.mxu0 0
  %5337 = vmatprep.subr.bf16.mxu0 0
  %5338 = vmatpush1.bf16.msra.mxu0 0
  %5339 = vmatprep.subr.bf16.mxu0 0
  %5340 = vmatpush1.bf16.msra.mxu0 0
  %5341 = vmatprep.mubr.bf16.mxu0 0
  %5342 = vmatmul.mubr.bf16.gmra.mrb[0].mxu0 %v5304
  %v5343 = vpop.f32.mrb[0].mxu0
  %v5344 = vadd.f32 %v5176, %v5343
  %v5345 = vpop.f32.mrb[0].mxu0
  %v5346 = vadd.f32 %v5178, %v5345
  %v5347 = vpop.f32.mrb[0].mxu0
  %v5348 = vadd.f32 %v5180, %v5347
  %v5349 = vpop.f32.mrb[0].mxu0
  %v5350 = vadd.f32 %v5182, %v5349
  %5351 = vmatprep.mubr.bf16.mxu0 0
  %5352 = vmatmul.mubr.bf16.gmra.mrb[0].mxu0 %v5307
  %v5353 = vpop.f32.mrb[0].mxu0
  %v5354 = vadd.f32 %v5186, %v5353
  %v5355 = vpop.f32.mrb[0].mxu0
  %v5356 = vadd.f32 %v5188, %v5355
  %v5357 = vpop.f32.mrb[0].mxu0
  %v5358 = vadd.f32 %v5190, %v5357
  %v5359 = vpop.f32.mrb[0].mxu0
  %v5360 = vadd.f32 %v5192, %v5359
  %5361 = vdwg.mxu0
  %5362 = vmatprep.subr.bf16.mxu0 %v5290
  %5363 = vmatpush1.bf16.msra.mxu0 %v5289
  %5364 = vmatprep.subr.bf16.mxu0 %v5294
  %5365 = vmatpush1.bf16.msra.mxu0 %v5293
  %5366 = vmatprep.subr.bf16.mxu0 0
  %5367 = vmatpush1.bf16.msra.mxu0 0
  %5368 = vmatprep.subr.bf16.mxu0 0
  %5369 = vmatpush1.bf16.msra.mxu0 0
  %5370 = vmatprep.subr.bf16.mxu0 0
  %5371 = vmatpush1.bf16.msra.mxu0 0
  %5372 = vmatprep.subr.bf16.mxu0 0
  %5373 = vmatpush1.bf16.msra.mxu0 0
  %5374 = vmatprep.subr.bf16.mxu0 0
  %5375 = vmatpush1.bf16.msra.mxu0 0
  %5376 = vmatprep.subr.bf16.mxu0 0
  %5377 = vmatpush1.bf16.msra.mxu0 0
  %5378 = vmatprep.subr.bf16.mxu0 0
  %5379 = vmatpush1.bf16.msra.mxu0 0
  %5380 = vmatprep.subr.bf16.mxu0 0
  %5381 = vmatpush1.bf16.msra.mxu0 0
  %5382 = vmatprep.subr.bf16.mxu0 0
  %5383 = vmatpush1.bf16.msra.mxu0 0
  %5384 = vmatprep.subr.bf16.mxu0 0
  %5385 = vmatpush1.bf16.msra.mxu0 0
  %5386 = vmatprep.subr.bf16.mxu0 0
  %5387 = vmatpush1.bf16.msra.mxu0 0
  %5388 = vmatprep.subr.bf16.mxu0 0
  %5389 = vmatpush1.bf16.msra.mxu0 0
  %5390 = vmatprep.subr.bf16.mxu0 0
  %5391 = vmatpush1.bf16.msra.mxu0 0
  %5392 = vmatprep.subr.bf16.mxu0 0
  %5393 = vmatpush1.bf16.msra.mxu0 0
  %5394 = vmatprep.mubr.bf16.mxu0 0
  %5395 = vmatmul.mubr.bf16.gmra.mrb[0].mxu0 %v5304
  %v5396 = vpop.f32.mrb[0].mxu0
  %v5397 = vadd.f32 %v5229, %v5396
  %v5398 = vpop.f32.mrb[0].mxu0
  %v5399 = vadd.f32 %v5231, %v5398
  %v5400 = vpop.f32.mrb[0].mxu0
  %v5401 = vadd.f32 %v5233, %v5400
  %v5402 = vpop.f32.mrb[0].mxu0
  %v5403 = vadd.f32 %v5235, %v5402
  %5404 = vmatprep.mubr.bf16.mxu0 0
  %5405 = vmatmul.mubr.bf16.gmra.mrb[0].mxu0 %v5307
  %v5406 = vpop.f32.mrb[0].mxu0
  %v5407 = vadd.f32 %v5239, %v5406
  %v5408 = vpop.f32.mrb[0].mxu0
  %v5409 = vadd.f32 %v5241, %v5408
  %v5410 = vpop.f32.mrb[0].mxu0
  %v5411 = vadd.f32 %v5243, %v5410
  %v5412 = vpop.f32.mrb[0].mxu0
  %v5413 = vadd.f32 %v5245, %v5412
  %5414 = vdwg.mxu0
  %v5415 = vld [vmem:[%s593] sm:$0xf]
  %v5417 = vlaneseq
  %v5418 = vshrl.u32 %v5417, 7
  %v5419 = vsub.s32 0, %v5418
  %v5420 = vrot.slane %v5415, %v5419
  %v5421 = vlaneseq
  %v5422 = vshrl.u32 %v5421, 7
  %v5423 = vsub.s32 1, %v5422
  %v5424 = vrot.slane %v5415, %v5423
  %v5425 = vlaneseq
  %v5426 = vshrl.u32 %v5425, 7
  %v5427 = vsub.s32 2, %v5426
  %v5428 = vrot.slane %v5415, %v5427
  %v5429 = vlaneseq
  %v5430 = vshrl.u32 %v5429, 7
  %v5431 = vsub.s32 3, %v5430
  %v5432 = vrot.slane %v5415, %v5431
  %5433 = vrot.lane.b32.xlu0 %v5420, 113
  %v5434 = vpop.permute.xlu0 %5433
  %5435 = vrot.lane.b32.xlu0 %v5424, 113
  %v5436 = vpop.permute.xlu0 %5435
  %5437 = vrot.lane.b32.xlu0 %v5428, 113
  %v5438 = vpop.permute.xlu0 %5437
  %5439 = vrot.lane.b32.xlu0 %v5432, 113
  %v5440 = vpop.permute.xlu0 %5439
  %v5441 = vsel %vm620, %v5434, %v5436
  %v5442 = vsel %vm620, %v5436, %v5438
  %v5443 = vsel %vm620, %v5438, %v5440
  %v5449 = vmul.f32 %v4922, %v5434
  %v5450 = vmul.f32 %v4923, %v5441
  %v5451 = vmul.f32 %v4924, %v5442
  %v5452 = vmul.f32 %v4925, %v5443
  %v5453 = vmul.f32 %v4926, %v5440
  %v5454 = vmul.f32 %v4927, %v5434
  %v5455 = vmul.f32 %v4928, %v5441
  %v5456 = vmul.f32 %v4929, %v5442
  %v5457 = vmul.f32 %v4930, %v5443
  %v5458 = vmul.f32 %v4931, %v5440
  %v5459 = vmul.f32 %v4932, %v5434
  %v5460 = vmul.f32 %v4933, %v5441
  %v5461 = vmul.f32 %v4934, %v5442
  %v5462 = vmul.f32 %v4935, %v5443
  %v5463 = vmul.f32 %v4936, %v5440
  %v5464 = vmul.f32 %v4937, %v5434
  %v5465 = vmul.f32 %v4938, %v5441
  %v5466 = vmul.f32 %v4939, %v5442
  %v5467 = vmul.f32 %v4940, %v5443
  %v5468 = vmul.f32 %v4941, %v5440
  %v5469 = vpack.c.bf16 %v5454, %v5449
  %v5470 = vpack.c.bf16 %v5455, %v5450
  %v5471 = vpack.c.bf16 %v5456, %v5451
  %v5472 = vpack.c.bf16 %v5457, %v5452
  %v5473 = vpack.c.bf16 %v5458, %v5453
  %v5474 = vpack.c.bf16 %v5464, %v5459
  %v5475 = vpack.c.bf16 %v5465, %v5460
  %v5476 = vpack.c.bf16 %v5466, %v5461
  %v5477 = vpack.c.bf16 %v5467, %v5462
  %v5478 = vpack.c.bf16 %v5468, %v5463
  %s5479 = scalar_lea.vmem %s8, 32
  %v5480 = vld [vmem:[%s5479] sm:$0xf]
  %v5481 = vld [vmem:[%s5479 + $0x4] sm:$0xf]
  %v5482 = vld [vmem:[%s5479 + $0x8] sm:$0xf]
  %v5483 = vld [vmem:[%s5479 + $0xc] sm:$0xf]
  %v5488 = vunpack.c.l.b16 %v5480
  %v5489 = vunpack.c.l.b16 %v5481
  %v5490 = vunpack.c.l.b16 %v5482
  %v5491 = vunpack.c.l.b16 %v5483
  %v5492 = vpack.c.b16 %v5489, %v5488
  %v5493 = vpack.c.b16 %v5491, %v5490
  %5504 = vrot.lane.b32.xlu0 %v5469, 15
  %v5505 = vpop.permute.xlu0 %5504
  %5506 = vrot.lane.b32.xlu0 %v5470, 15
  %v5507 = vpop.permute.xlu0 %5506
  %5508 = vrot.lane.b32.xlu0 %v5471, 15
  %v5509 = vpop.permute.xlu0 %5508
  %5510 = vrot.lane.b32.xlu0 %v5472, 15
  %v5511 = vpop.permute.xlu0 %5510
  %5512 = vrot.lane.b32.xlu0 %v5473, 15
  %v5513 = vpop.permute.xlu0 %5512
  %5514 = vrot.lane.b32.xlu0 %v5474, 15
  %v5515 = vpop.permute.xlu0 %5514
  %5516 = vrot.lane.b32.xlu0 %v5475, 15
  %v5517 = vpop.permute.xlu0 %5516
  %5518 = vrot.lane.b32.xlu0 %v5476, 15
  %v5519 = vpop.permute.xlu0 %5518
  %5520 = vrot.lane.b32.xlu0 %v5477, 15
  %v5521 = vpop.permute.xlu0 %5520
  %5522 = vrot.lane.b32.xlu0 %v5478, 15
  %v5523 = vpop.permute.xlu0 %5522
  %v5524 = vsel %vm704, %v5505, %v5507
  %v5525 = vsel %vm704, %v5507, %v5509
  %v5526 = vsel %vm704, %v5509, %v5511
  %v5527 = vsel %vm704, %v5511, %v5513
  %v5528 = vsel %vm704, %v5515, %v5517
  %v5529 = vsel %vm704, %v5517, %v5519
  %v5530 = vsel %vm704, %v5519, %v5521
  %v5531 = vsel %vm704, %v5521, %v5523
  %v5541 = vsel %vm311, %v5492, 0
  %v5544 = vsel %vm311, %v5493, 0
  %5546 = vmatprep.subr.bf16.mxu0 %v5525
  %5547 = vmatpush1.bf16.msra.mxu0 %v5524
  %5548 = vmatprep.subr.bf16.mxu0 %v5529
  %5549 = vmatpush1.bf16.msra.mxu0 %v5528
  %5550 = vmatprep.subr.bf16.mxu0 0
  %5551 = vmatpush1.bf16.msra.mxu0 0
  %5552 = vmatprep.subr.bf16.mxu0 0
  %5553 = vmatpush1.bf16.msra.mxu0 0
  %5554 = vmatprep.subr.bf16.mxu0 0
  %5555 = vmatpush1.bf16.msra.mxu0 0
  %5556 = vmatprep.subr.bf16.mxu0 0
  %5557 = vmatpush1.bf16.msra.mxu0 0
  %5558 = vmatprep.subr.bf16.mxu0 0
  %5559 = vmatpush1.bf16.msra.mxu0 0
  %5560 = vmatprep.subr.bf16.mxu0 0
  %5561 = vmatpush1.bf16.msra.mxu0 0
  %5562 = vmatprep.subr.bf16.mxu0 0
  %5563 = vmatpush1.bf16.msra.mxu0 0
  %5564 = vmatprep.subr.bf16.mxu0 0
  %5565 = vmatpush1.bf16.msra.mxu0 0
  %5566 = vmatprep.subr.bf16.mxu0 0
  %5567 = vmatpush1.bf16.msra.mxu0 0
  %5568 = vmatprep.subr.bf16.mxu0 0
  %5569 = vmatpush1.bf16.msra.mxu0 0
  %5570 = vmatprep.subr.bf16.mxu0 0
  %5571 = vmatpush1.bf16.msra.mxu0 0
  %5572 = vmatprep.subr.bf16.mxu0 0
  %5573 = vmatpush1.bf16.msra.mxu0 0
  %5574 = vmatprep.subr.bf16.mxu0 0
  %5575 = vmatpush1.bf16.msra.mxu0 0
  %5576 = vmatprep.subr.bf16.mxu0 0
  %5577 = vmatpush1.bf16.msra.mxu0 0
  %5578 = vmatprep.mubr.bf16.mxu0 0
  %5579 = vmatmul.mubr.bf16.gmra.mrb[0].mxu0 %v5541
  %v5580 = vpop.f32.mrb[0].mxu0
  %v5581 = vadd.f32 0.0, %v5580
  %v5582 = vpop.f32.mrb[0].mxu0
  %v5583 = vadd.f32 0.0, %v5582
  %v5584 = vpop.f32.mrb[0].mxu0
  %v5585 = vadd.f32 0.0, %v5584
  %v5586 = vpop.f32.mrb[0].mxu0
  %v5587 = vadd.f32 0.0, %v5586
  %5588 = vmatprep.mubr.bf16.mxu0 0
  %5589 = vmatmul.mubr.bf16.gmra.mrb[0].mxu0 %v5544
  %v5590 = vpop.f32.mrb[0].mxu0
  %v5591 = vadd.f32 0.0, %v5590
  %v5592 = vpop.f32.mrb[0].mxu0
  %v5593 = vadd.f32 0.0, %v5592
  %v5594 = vpop.f32.mrb[0].mxu0
  %v5595 = vadd.f32 0.0, %v5594
  %v5596 = vpop.f32.mrb[0].mxu0
  %v5597 = vadd.f32 0.0, %v5596
  %5598 = vdwg.mxu0
  %5599 = vmatprep.subr.bf16.mxu0 %v5527
  %5600 = vmatpush1.bf16.msra.mxu0 %v5526
  %5601 = vmatprep.subr.bf16.mxu0 %v5531
  %5602 = vmatpush1.bf16.msra.mxu0 %v5530
  %5603 = vmatprep.subr.bf16.mxu0 0
  %5604 = vmatpush1.bf16.msra.mxu0 0
  %5605 = vmatprep.subr.bf16.mxu0 0
  %5606 = vmatpush1.bf16.msra.mxu0 0
  %5607 = vmatprep.subr.bf16.mxu0 0
  %5608 = vmatpush1.bf16.msra.mxu0 0
  %5609 = vmatprep.subr.bf16.mxu0 0
  %5610 = vmatpush1.bf16.msra.mxu0 0
  %5611 = vmatprep.subr.bf16.mxu0 0
  %5612 = vmatpush1.bf16.msra.mxu0 0
  %5613 = vmatprep.subr.bf16.mxu0 0
  %5614 = vmatpush1.bf16.msra.mxu0 0
  %5615 = vmatprep.subr.bf16.mxu0 0
  %5616 = vmatpush1.bf16.msra.mxu0 0
  %5617 = vmatprep.subr.bf16.mxu0 0
  %5618 = vmatpush1.bf16.msra.mxu0 0
  %5619 = vmatprep.subr.bf16.mxu0 0
  %5620 = vmatpush1.bf16.msra.mxu0 0
  %5621 = vmatprep.subr.bf16.mxu0 0
  %5622 = vmatpush1.bf16.msra.mxu0 0
  %5623 = vmatprep.subr.bf16.mxu0 0
  %5624 = vmatpush1.bf16.msra.mxu0 0
  %5625 = vmatprep.subr.bf16.mxu0 0
  %5626 = vmatpush1.bf16.msra.mxu0 0
  %5627 = vmatprep.subr.bf16.mxu0 0
  %5628 = vmatpush1.bf16.msra.mxu0 0
  %5629 = vmatprep.subr.bf16.mxu0 0
  %5630 = vmatpush1.bf16.msra.mxu0 0
  %5631 = vmatprep.mubr.bf16.mxu0 0
  %5632 = vmatmul.mubr.bf16.gmra.mrb[0].mxu0 %v5541
  %v5633 = vpop.f32.mrb[0].mxu0
  %v5634 = vadd.f32 0.0, %v5633
  %v5635 = vpop.f32.mrb[0].mxu0
  %v5636 = vadd.f32 0.0, %v5635
  %v5637 = vpop.f32.mrb[0].mxu0
  %v5638 = vadd.f32 0.0, %v5637
  %v5639 = vpop.f32.mrb[0].mxu0
  %v5640 = vadd.f32 0.0, %v5639
  %5641 = vmatprep.mubr.bf16.mxu0 0
  %5642 = vmatmul.mubr.bf16.gmra.mrb[0].mxu0 %v5544
  %v5643 = vpop.f32.mrb[0].mxu0
  %v5644 = vadd.f32 0.0, %v5643
  %v5645 = vpop.f32.mrb[0].mxu0
  %v5646 = vadd.f32 0.0, %v5645
  %v5647 = vpop.f32.mrb[0].mxu0
  %v5648 = vadd.f32 0.0, %v5647
  %v5649 = vpop.f32.mrb[0].mxu0
  %v5650 = vadd.f32 0.0, %v5649
  %5651 = vdwg.mxu0
  %v5652 = vadd.f32 %v5344, %v5581
  %v5653 = vadd.f32 %v5346, %v5583
  %v5654 = vadd.f32 %v5397, %v5634
  %v5655 = vadd.f32 %v5399, %v5636
  %v5656 = vadd.f32 %v5348, %v5585
  %v5657 = vadd.f32 %v5350, %v5587
  %v5658 = vadd.f32 %v5401, %v5638
  %v5659 = vadd.f32 %v5403, %v5640
  %v5660 = vadd.f32 %v5354, %v5591
  %v5661 = vadd.f32 %v5356, %v5593
  %v5662 = vadd.f32 %v5407, %v5644
  %v5663 = vadd.f32 %v5409, %v5646
  %v5664 = vadd.f32 %v5358, %v5595
  %v5665 = vadd.f32 %v5360, %v5597
  %v5666 = vadd.f32 %v5411, %v5648
  %v5667 = vadd.f32 %v5413, %v5650
  %v5668 = vld [vmem:[%s849] sm:$0xf]
  %v5670 = vlaneseq
  %v5671 = vshrl.u32 %v5670, 7
  %v5672 = vsub.s32 0, %v5671
  %v5673 = vrot.slane %v5668, %v5672
  %v5674 = vlaneseq
  %v5675 = vshrl.u32 %v5674, 7
  %v5676 = vsub.s32 1, %v5675
  %v5677 = vrot.slane %v5668, %v5676
  %v5678 = vlaneseq
  %v5679 = vshrl.u32 %v5678, 7
  %v5680 = vsub.s32 2, %v5679
  %v5681 = vrot.slane %v5668, %v5680
  %v5682 = vlaneseq
  %v5683 = vshrl.u32 %v5682, 7
  %v5684 = vsub.s32 3, %v5683
  %v5685 = vrot.slane %v5668, %v5684
  %5686 = vrot.lane.b32.xlu0 %v5673, 127
  %v5687 = vpop.permute.xlu0 %5686
  %5688 = vrot.lane.b32.xlu0 %v5677, 127
  %v5689 = vpop.permute.xlu0 %5688
  %5690 = vrot.lane.b32.xlu0 %v5681, 127
  %v5691 = vpop.permute.xlu0 %5690
  %5692 = vrot.lane.b32.xlu0 %v5685, 127
  %v5693 = vpop.permute.xlu0 %5692
  %v5694 = vsel %vm876, %v5687, %v5689
  %v5695 = vsel %vm876, %v5689, %v5691
  %v5696 = vsel %vm876, %v5691, %v5693
  %v5702 = vmul.f32 %v4922, %v5687
  %v5703 = vmul.f32 %v4923, %v5694
  %v5704 = vmul.f32 %v4924, %v5695
  %v5705 = vmul.f32 %v4925, %v5696
  %v5706 = vmul.f32 %v4926, %v5693
  %v5707 = vmul.f32 %v4927, %v5687
  %v5708 = vmul.f32 %v4928, %v5694
  %v5709 = vmul.f32 %v4929, %v5695
  %v5710 = vmul.f32 %v4930, %v5696
  %v5711 = vmul.f32 %v4931, %v5693
  %v5712 = vmul.f32 %v4932, %v5687
  %v5713 = vmul.f32 %v4933, %v5694
  %v5714 = vmul.f32 %v4934, %v5695
  %v5715 = vmul.f32 %v4935, %v5696
  %v5716 = vmul.f32 %v4936, %v5693
  %v5717 = vmul.f32 %v4937, %v5687
  %v5718 = vmul.f32 %v4938, %v5694
  %v5719 = vmul.f32 %v4939, %v5695
  %v5720 = vmul.f32 %v4940, %v5696
  %v5721 = vmul.f32 %v4941, %v5693
  %v5722 = vpack.c.bf16 %v5707, %v5702
  %v5723 = vpack.c.bf16 %v5708, %v5703
  %v5724 = vpack.c.bf16 %v5709, %v5704
  %v5725 = vpack.c.bf16 %v5710, %v5705
  %v5726 = vpack.c.bf16 %v5711, %v5706
  %v5727 = vpack.c.bf16 %v5717, %v5712
  %v5728 = vpack.c.bf16 %v5718, %v5713
  %v5729 = vpack.c.bf16 %v5719, %v5714
  %v5730 = vpack.c.bf16 %v5720, %v5715
  %v5731 = vpack.c.bf16 %v5721, %v5716
  %s5732 = scalar_lea.vmem %s8, 48
  %v5733 = vld [vmem:[%s5732] sm:$0xf]
  %v5734 = vld [vmem:[%s5732 + $0x4] sm:$0xf]
  %v5735 = vld [vmem:[%s5732 + $0x8] sm:$0xf]
  %v5736 = vld [vmem:[%s5732 + $0xc] sm:$0xf]
  %v5741 = vunpack.c.l.b16 %v5733
  %v5742 = vunpack.c.l.b16 %v5734
  %v5743 = vunpack.c.l.b16 %v5735
  %v5744 = vunpack.c.l.b16 %v5736
  %v5745 = vpack.c.b16 %v5742, %v5741
  %v5746 = vpack.c.b16 %v5744, %v5743
  %5757 = vrot.lane.b32.xlu0 %v5722, 1
  %v5758 = vpop.permute.xlu0 %5757
  %5759 = vrot.lane.b32.xlu0 %v5723, 1
  %v5760 = vpop.permute.xlu0 %5759
  %5761 = vrot.lane.b32.xlu0 %v5724, 1
  %v5762 = vpop.permute.xlu0 %5761
  %5763 = vrot.lane.b32.xlu0 %v5725, 1
  %v5764 = vpop.permute.xlu0 %5763
  %5765 = vrot.lane.b32.xlu0 %v5726, 1
  %v5766 = vpop.permute.xlu0 %5765
  %5767 = vrot.lane.b32.xlu0 %v5727, 1
  %v5768 = vpop.permute.xlu0 %5767
  %5769 = vrot.lane.b32.xlu0 %v5728, 1
  %v5770 = vpop.permute.xlu0 %5769
  %5771 = vrot.lane.b32.xlu0 %v5729, 1
  %v5772 = vpop.permute.xlu0 %5771
  %5773 = vrot.lane.b32.xlu0 %v5730, 1
  %v5774 = vpop.permute.xlu0 %5773
  %5775 = vrot.lane.b32.xlu0 %v5731, 1
  %v5776 = vpop.permute.xlu0 %5775
  %v5777 = vsel %vm960, %v5758, %v5760
  %v5778 = vsel %vm960, %v5760, %v5762
  %v5779 = vsel %vm960, %v5762, %v5764
  %v5780 = vsel %vm960, %v5764, %v5766
  %v5781 = vsel %vm960, %v5768, %v5770
  %v5782 = vsel %vm960, %v5770, %v5772
  %v5783 = vsel %vm960, %v5772, %v5774
  %v5784 = vsel %vm960, %v5774, %v5776
  %v5794 = vsel %vm311, %v5745, 0
  %v5797 = vsel %vm311, %v5746, 0
  %5799 = vmatprep.subr.bf16.mxu0 %v5778
  %5800 = vmatpush1.bf16.msra.mxu0 %v5777
  %5801 = vmatprep.subr.bf16.mxu0 %v5782
  %5802 = vmatpush1.bf16.msra.mxu0 %v5781
  %5803 = vmatprep.subr.bf16.mxu0 0
  %5804 = vmatpush1.bf16.msra.mxu0 0
  %5805 = vmatprep.subr.bf16.mxu0 0
  %5806 = vmatpush1.bf16.msra.mxu0 0
  %5807 = vmatprep.subr.bf16.mxu0 0
  %5808 = vmatpush1.bf16.msra.mxu0 0
  %5809 = vmatprep.subr.bf16.mxu0 0
  %5810 = vmatpush1.bf16.msra.mxu0 0
  %5811 = vmatprep.subr.bf16.mxu0 0
  %5812 = vmatpush1.bf16.msra.mxu0 0
  %5813 = vmatprep.subr.bf16.mxu0 0
  %5814 = vmatpush1.bf16.msra.mxu0 0
  %5815 = vmatprep.subr.bf16.mxu0 0
  %5816 = vmatpush1.bf16.msra.mxu0 0
  %5817 = vmatprep.subr.bf16.mxu0 0
  %5818 = vmatpush1.bf16.msra.mxu0 0
  %5819 = vmatprep.subr.bf16.mxu0 0
  %5820 = vmatpush1.bf16.msra.mxu0 0
  %5821 = vmatprep.subr.bf16.mxu0 0
  %5822 = vmatpush1.bf16.msra.mxu0 0
  %5823 = vmatprep.subr.bf16.mxu0 0
  %5824 = vmatpush1.bf16.msra.mxu0 0
  %5825 = vmatprep.subr.bf16.mxu0 0
  %5826 = vmatpush1.bf16.msra.mxu0 0
  %5827 = vmatprep.subr.bf16.mxu0 0
  %5828 = vmatpush1.bf16.msra.mxu0 0
  %5829 = vmatprep.subr.bf16.mxu0 0
  %5830 = vmatpush1.bf16.msra.mxu0 0
  %5831 = vmatprep.mubr.bf16.mxu0 0
  %5832 = vmatmul.mubr.bf16.gmra.mrb[0].mxu0 %v5794
  %v5833 = vpop.f32.mrb[0].mxu0
  %v5834 = vadd.f32 0.0, %v5833
  %v5835 = vpop.f32.mrb[0].mxu0
  %v5836 = vadd.f32 0.0, %v5835
  %v5837 = vpop.f32.mrb[0].mxu0
  %v5838 = vadd.f32 0.0, %v5837
  %v5839 = vpop.f32.mrb[0].mxu0
  %v5840 = vadd.f32 0.0, %v5839
  %5841 = vmatprep.mubr.bf16.mxu0 0
  %5842 = vmatmul.mubr.bf16.gmra.mrb[0].mxu0 %v5797
  %v5843 = vpop.f32.mrb[0].mxu0
  %v5844 = vadd.f32 0.0, %v5843
  %v5845 = vpop.f32.mrb[0].mxu0
  %v5846 = vadd.f32 0.0, %v5845
  %v5847 = vpop.f32.mrb[0].mxu0
  %v5848 = vadd.f32 0.0, %v5847
  %v5849 = vpop.f32.mrb[0].mxu0
  %v5850 = vadd.f32 0.0, %v5849
  %5851 = vdwg.mxu0
  %5852 = vmatprep.subr.bf16.mxu0 %v5780
  %5853 = vmatpush1.bf16.msra.mxu0 %v5779
  %5854 = vmatprep.subr.bf16.mxu0 %v5784
  %5855 = vmatpush1.bf16.msra.mxu0 %v5783
  %5856 = vmatprep.subr.bf16.mxu0 0
  %5857 = vmatpush1.bf16.msra.mxu0 0
  %5858 = vmatprep.subr.bf16.mxu0 0
  %5859 = vmatpush1.bf16.msra.mxu0 0
  %5860 = vmatprep.subr.bf16.mxu0 0
  %5861 = vmatpush1.bf16.msra.mxu0 0
  %5862 = vmatprep.subr.bf16.mxu0 0
  %5863 = vmatpush1.bf16.msra.mxu0 0
  %5864 = vmatprep.subr.bf16.mxu0 0
  %5865 = vmatpush1.bf16.msra.mxu0 0
  %5866 = vmatprep.subr.bf16.mxu0 0
  %5867 = vmatpush1.bf16.msra.mxu0 0
  %5868 = vmatprep.subr.bf16.mxu0 0
  %5869 = vmatpush1.bf16.msra.mxu0 0
  %5870 = vmatprep.subr.bf16.mxu0 0
  %5871 = vmatpush1.bf16.msra.mxu0 0
  %5872 = vmatprep.subr.bf16.mxu0 0
  %5873 = vmatpush1.bf16.msra.mxu0 0
  %5874 = vmatprep.subr.bf16.mxu0 0
  %5875 = vmatpush1.bf16.msra.mxu0 0
  %5876 = vmatprep.subr.bf16.mxu0 0
  %5877 = vmatpush1.bf16.msra.mxu0 0
  %5878 = vmatprep.subr.bf16.mxu0 0
  %5879 = vmatpush1.bf16.msra.mxu0 0
  %5880 = vmatprep.subr.bf16.mxu0 0
  %5881 = vmatpush1.bf16.msra.mxu0 0
  %5882 = vmatprep.subr.bf16.mxu0 0
  %5883 = vmatpush1.bf16.msra.mxu0 0
  %5884 = vmatprep.mubr.bf16.mxu0 0
  %5885 = vmatmul.mubr.bf16.gmra.mrb[0].mxu0 %v5794
  %v5886 = vpop.f32.mrb[0].mxu0
  %v5887 = vadd.f32 0.0, %v5886
  %v5888 = vpop.f32.mrb[0].mxu0
  %v5889 = vadd.f32 0.0, %v5888
  %v5890 = vpop.f32.mrb[0].mxu0
  %v5891 = vadd.f32 0.0, %v5890
  %v5892 = vpop.f32.mrb[0].mxu0
  %v5893 = vadd.f32 0.0, %v5892
  %5894 = vmatprep.mubr.bf16.mxu0 0
  %5895 = vmatmul.mubr.bf16.gmra.mrb[0].mxu0 %v5797
  %v5896 = vpop.f32.mrb[0].mxu0
  %v5897 = vadd.f32 0.0, %v5896
  %v5898 = vpop.f32.mrb[0].mxu0
  %v5899 = vadd.f32 0.0, %v5898
  %v5900 = vpop.f32.mrb[0].mxu0
  %v5901 = vadd.f32 0.0, %v5900
  %v5902 = vpop.f32.mrb[0].mxu0
  %v5903 = vadd.f32 0.0, %v5902
  %5904 = vdwg.mxu0
  %v5905 = vadd.f32 %v5652, %v5834
  %v5906 = vadd.f32 %v5653, %v5836
  %v5907 = vadd.f32 %v5654, %v5887
  %v5908 = vadd.f32 %v5655, %v5889
  %v5909 = vadd.f32 %v5656, %v5838
  %v5910 = vadd.f32 %v5657, %v5840
  %v5911 = vadd.f32 %v5658, %v5891
  %v5912 = vadd.f32 %v5659, %v5893
  %v5913 = vadd.f32 %v5660, %v5844
  %v5914 = vadd.f32 %v5661, %v5846
  %v5915 = vadd.f32 %v5662, %v5897
  %v5916 = vadd.f32 %v5663, %v5899
  %v5917 = vadd.f32 %v5664, %v5848
  %v5918 = vadd.f32 %v5665, %v5850
  %v5919 = vadd.f32 %v5666, %v5901
  %v5920 = vadd.f32 %v5667, %v5903
  %v5921 = vpack.c.bf16 %v4928, %v4923
  %v5922 = vpack.c.bf16 %v4929, %v4924
  %v5923 = vpack.c.bf16 %v4930, %v4925
  %v5924 = vpack.c.bf16 %v4931, %v4926
  %v5925 = vpack.c.bf16 %v4938, %v4933
  %v5926 = vpack.c.bf16 %v4939, %v4934
  %v5927 = vpack.c.bf16 %v4940, %v4935
  %v5928 = vpack.c.bf16 %v4941, %v4936
  %s5929 = scalar_lea.vmem %s8, 64
  %v5930 = vld [vmem:[%s5929] sm:$0xf]
  %v5931 = vld [vmem:[%s5929 + $0x4] sm:$0xf]
  %v5932 = vld [vmem:[%s5929 + $0x8] sm:$0xf]
  %v5933 = vld [vmem:[%s5929 + $0xc] sm:$0xf]
  %v5938 = vunpack.c.l.b16 %v5930
  %v5939 = vunpack.c.l.b16 %v5931
  %v5940 = vunpack.c.l.b16 %v5932
  %v5941 = vunpack.c.l.b16 %v5933
  %v5942 = vpack.c.b16 %v5939, %v5938
  %v5943 = vpack.c.b16 %v5941, %v5940
  %v5945 = vsel %vm311, %v5942, 0
  %v5948 = vsel %vm311, %v5943, 0
  %5950 = vmatprep.subr.bf16.mxu0 %v5922
  %5951 = vmatpush1.bf16.msra.mxu0 %v5921
  %5952 = vmatprep.subr.bf16.mxu0 %v5926
  %5953 = vmatpush1.bf16.msra.mxu0 %v5925
  %5954 = vmatprep.subr.bf16.mxu0 0
  %5955 = vmatpush1.bf16.msra.mxu0 0
  %5956 = vmatprep.subr.bf16.mxu0 0
  %5957 = vmatpush1.bf16.msra.mxu0 0
  %5958 = vmatprep.subr.bf16.mxu0 0
  %5959 = vmatpush1.bf16.msra.mxu0 0
  %5960 = vmatprep.subr.bf16.mxu0 0
  %5961 = vmatpush1.bf16.msra.mxu0 0
  %5962 = vmatprep.subr.bf16.mxu0 0
  %5963 = vmatpush1.bf16.msra.mxu0 0
  %5964 = vmatprep.subr.bf16.mxu0 0
  %5965 = vmatpush1.bf16.msra.mxu0 0
  %5966 = vmatprep.subr.bf16.mxu0 0
  %5967 = vmatpush1.bf16.msra.mxu0 0
  %5968 = vmatprep.subr.bf16.mxu0 0
  %5969 = vmatpush1.bf16.msra.mxu0 0
  %5970 = vmatprep.subr.bf16.mxu0 0
  %5971 = vmatpush1.bf16.msra.mxu0 0
  %5972 = vmatprep.subr.bf16.mxu0 0
  %5973 = vmatpush1.bf16.msra.mxu0 0
  %5974 = vmatprep.subr.bf16.mxu0 0
  %5975 = vmatpush1.bf16.msra.mxu0 0
  %5976 = vmatprep.subr.bf16.mxu0 0
  %5977 = vmatpush1.bf16.msra.mxu0 0
  %5978 = vmatprep.subr.bf16.mxu0 0
  %5979 = vmatpush1.bf16.msra.mxu0 0
  %5980 = vmatprep.subr.bf16.mxu0 0
  %5981 = vmatpush1.bf16.msra.mxu0 0
  %5982 = vmatprep.mubr.bf16.mxu0 0
  %5983 = vmatmul.mubr.bf16.gmra.mrb[0].mxu0 %v5945
  %v5984 = vpop.f32.mrb[0].mxu0
  %v5985 = vadd.f32 0.0, %v5984
  %v5986 = vpop.f32.mrb[0].mxu0
  %v5987 = vadd.f32 0.0, %v5986
  %v5988 = vpop.f32.mrb[0].mxu0
  %v5989 = vadd.f32 0.0, %v5988
  %v5990 = vpop.f32.mrb[0].mxu0
  %v5991 = vadd.f32 0.0, %v5990
  %5992 = vmatprep.mubr.bf16.mxu0 0
  %5993 = vmatmul.mubr.bf16.gmra.mrb[0].mxu0 %v5948
  %v5994 = vpop.f32.mrb[0].mxu0
  %v5995 = vadd.f32 0.0, %v5994
  %v5996 = vpop.f32.mrb[0].mxu0
  %v5997 = vadd.f32 0.0, %v5996
  %v5998 = vpop.f32.mrb[0].mxu0
  %v5999 = vadd.f32 0.0, %v5998
  %v6000 = vpop.f32.mrb[0].mxu0
  %v6001 = vadd.f32 0.0, %v6000
  %6002 = vdwg.mxu0
  %6003 = vmatprep.subr.bf16.mxu0 %v5924
  %6004 = vmatpush1.bf16.msra.mxu0 %v5923
  %6005 = vmatprep.subr.bf16.mxu0 %v5928
  %6006 = vmatpush1.bf16.msra.mxu0 %v5927
  %6007 = vmatprep.subr.bf16.mxu0 0
  %6008 = vmatpush1.bf16.msra.mxu0 0
  %6009 = vmatprep.subr.bf16.mxu0 0
  %6010 = vmatpush1.bf16.msra.mxu0 0
  %6011 = vmatprep.subr.bf16.mxu0 0
  %6012 = vmatpush1.bf16.msra.mxu0 0
  %6013 = vmatprep.subr.bf16.mxu0 0
  %6014 = vmatpush1.bf16.msra.mxu0 0
  %6015 = vmatprep.subr.bf16.mxu0 0
  %6016 = vmatpush1.bf16.msra.mxu0 0
  %6017 = vmatprep.subr.bf16.mxu0 0
  %6018 = vmatpush1.bf16.msra.mxu0 0
  %6019 = vmatprep.subr.bf16.mxu0 0
  %6020 = vmatpush1.bf16.msra.mxu0 0
  %6021 = vmatprep.subr.bf16.mxu0 0
  %6022 = vmatpush1.bf16.msra.mxu0 0
  %6023 = vmatprep.subr.bf16.mxu0 0
  %6024 = vmatpush1.bf16.msra.mxu0 0
  %6025 = vmatprep.subr.bf16.mxu0 0
  %6026 = vmatpush1.bf16.msra.mxu0 0
  %6027 = vmatprep.subr.bf16.mxu0 0
  %6028 = vmatpush1.bf16.msra.mxu0 0
  %6029 = vmatprep.subr.bf16.mxu0 0
  %6030 = vmatpush1.bf16.msra.mxu0 0
  %6031 = vmatprep.subr.bf16.mxu0 0
  %6032 = vmatpush1.bf16.msra.mxu0 0
  %6033 = vmatprep.subr.bf16.mxu0 0
  %6034 = vmatpush1.bf16.msra.mxu0 0
  %6035 = vmatprep.mubr.bf16.mxu0 0
  %6036 = vmatmul.mubr.bf16.gmra.mrb[0].mxu0 %v5945
  %v6037 = vpop.f32.mrb[0].mxu0
  %v6038 = vadd.f32 0.0, %v6037
  %v6039 = vpop.f32.mrb[0].mxu0
  %v6040 = vadd.f32 0.0, %v6039
  %v6041 = vpop.f32.mrb[0].mxu0
  %v6042 = vadd.f32 0.0, %v6041
  %v6043 = vpop.f32.mrb[0].mxu0
  %v6044 = vadd.f32 0.0, %v6043
  %6045 = vmatprep.mubr.bf16.mxu0 0
  %6046 = vmatmul.mubr.bf16.gmra.mrb[0].mxu0 %v5948
  %v6047 = vpop.f32.mrb[0].mxu0
  %v6048 = vadd.f32 0.0, %v6047
  %v6049 = vpop.f32.mrb[0].mxu0
  %v6050 = vadd.f32 0.0, %v6049
  %v6051 = vpop.f32.mrb[0].mxu0
  %v6052 = vadd.f32 0.0, %v6051
  %v6053 = vpop.f32.mrb[0].mxu0
  %v6054 = vadd.f32 0.0, %v6053
  %6055 = vdwg.mxu0
  %v6056 = vadd.f32 %v5905, %v5985
  %v6057 = vadd.f32 %v5906, %v5987
  %v6058 = vadd.f32 %v5907, %v6038
  %v6059 = vadd.f32 %v5908, %v6040
  %v6060 = vadd.f32 %v5909, %v5989
  %v6061 = vadd.f32 %v5910, %v5991
  %v6062 = vadd.f32 %v5911, %v6042
  %v6063 = vadd.f32 %v5912, %v6044
  %v6064 = vadd.f32 %v5913, %v5995
  %v6065 = vadd.f32 %v5914, %v5997
  %v6066 = vadd.f32 %v5915, %v6048
  %v6067 = vadd.f32 %v5916, %v6050
  %v6068 = vadd.f32 %v5917, %v5999
  %v6069 = vadd.f32 %v5918, %v6001
  %v6070 = vadd.f32 %v5919, %v6052
  %v6071 = vadd.f32 %v5920, %v6054
  %v6072 = vld [vmem:[#allocation2 + $0x8] sm:$0xff]
  %v6073 = vld [vmem:[#allocation2 + $0x10] sm:$0xff]
  %v6074 = vld [vmem:[#allocation2 + $0x18] sm:$0xff]
  %v6075 = vld [vmem:[#allocation2 + $0x20] sm:$0xff]
  %v6076 = vld [vmem:[#allocation2 + $0x28] sm:$0xff]
  %v6077 = vld [vmem:[#allocation2 + $0x38] sm:$0xff]
  %v6078 = vld [vmem:[#allocation2 + $0x40] sm:$0xff]
  %v6079 = vld [vmem:[#allocation2 + $0x48] sm:$0xff]
  %v6080 = vld [vmem:[#allocation2 + $0x50] sm:$0xff]
  %v6081 = vld [vmem:[#allocation2 + $0x58] sm:$0xff]
  %v6082 = vld [vmem:[#allocation2 + $0x68] sm:$0xff]
  %v6083 = vld [vmem:[#allocation2 + $0x70] sm:$0xff]
  %v6084 = vld [vmem:[#allocation2 + $0x78] sm:$0xff]
  %v6085 = vld [vmem:[#allocation2 + $0x80] sm:$0xff]
  %v6086 = vld [vmem:[#allocation2 + $0x88] sm:$0xff]
  %v6087 = vld [vmem:[#allocation2 + $0x98] sm:$0xff]
  %v6088 = vld [vmem:[#allocation2 + $0xa0] sm:$0xff]
  %v6089 = vld [vmem:[#allocation2 + $0xa8] sm:$0xff]
  %v6090 = vld [vmem:[#allocation2 + $0xb0] sm:$0xff]
  %v6091 = vld [vmem:[#allocation2 + $0xb8] sm:$0xff]
  %v6092 = vld [vmem:[%s1276] sm:$0xf]
  %v6094 = vlaneseq
  %v6095 = vshrl.u32 %v6094, 7
  %v6096 = vsub.s32 0, %v6095
  %v6097 = vrot.slane %v6092, %v6096
  %v6098 = vlaneseq
  %v6099 = vshrl.u32 %v6098, 7
  %v6100 = vsub.s32 1, %v6099
  %v6101 = vrot.slane %v6092, %v6100
  %v6102 = vlaneseq
  %v6103 = vshrl.u32 %v6102, 7
  %v6104 = vsub.s32 2, %v6103
  %v6105 = vrot.slane %v6092, %v6104
  %v6106 = vlaneseq
  %v6107 = vshrl.u32 %v6106, 7
  %v6108 = vsub.s32 3, %v6107
  %v6109 = vrot.slane %v6092, %v6108
  %6110 = vrot.lane.b32.xlu0 %v6097, 1
  %v6111 = vpop.permute.xlu0 %6110
  %6112 = vrot.lane.b32.xlu0 %v6101, 1
  %v6113 = vpop.permute.xlu0 %6112
  %6114 = vrot.lane.b32.xlu0 %v6105, 1
  %v6115 = vpop.permute.xlu0 %6114
  %6116 = vrot.lane.b32.xlu0 %v6109, 1
  %v6117 = vpop.permute.xlu0 %6116
  %v6118 = vsel %vm1303, %v6111, %v6113
  %v6119 = vsel %vm1303, %v6113, %v6115
  %v6120 = vsel %vm1303, %v6115, %v6117
  %v6126 = vmul.f32 %v6072, %v6111
  %v6127 = vmul.f32 %v6073, %v6118
  %v6128 = vmul.f32 %v6074, %v6119
  %v6129 = vmul.f32 %v6075, %v6120
  %v6130 = vmul.f32 %v6076, %v6117
  %v6131 = vmul.f32 %v6077, %v6111
  %v6132 = vmul.f32 %v6078, %v6118
  %v6133 = vmul.f32 %v6079, %v6119
  %v6134 = vmul.f32 %v6080, %v6120
  %v6135 = vmul.f32 %v6081, %v6117
  %v6136 = vmul.f32 %v6082, %v6111
  %v6137 = vmul.f32 %v6083, %v6118
  %v6138 = vmul.f32 %v6084, %v6119
  %v6139 = vmul.f32 %v6085, %v6120
  %v6140 = vmul.f32 %v6086, %v6117
  %v6141 = vmul.f32 %v6087, %v6111
  %v6142 = vmul.f32 %v6088, %v6118
  %v6143 = vmul.f32 %v6089, %v6119
  %v6144 = vmul.f32 %v6090, %v6120
  %v6145 = vmul.f32 %v6091, %v6117
  %v6146 = vpack.c.bf16 %v6131, %v6126
  %v6147 = vpack.c.bf16 %v6132, %v6127
  %v6148 = vpack.c.bf16 %v6133, %v6128
  %v6149 = vpack.c.bf16 %v6134, %v6129
  %v6150 = vpack.c.bf16 %v6135, %v6130
  %v6151 = vpack.c.bf16 %v6141, %v6136
  %v6152 = vpack.c.bf16 %v6142, %v6137
  %v6153 = vpack.c.bf16 %v6143, %v6138
  %v6154 = vpack.c.bf16 %v6144, %v6139
  %v6155 = vpack.c.bf16 %v6145, %v6140
  %s6156 = scalar_lea.vmem %s8, 80
  %v6157 = vld [vmem:[%s6156] sm:$0xf]
  %v6158 = vld [vmem:[%s6156 + $0x4] sm:$0xf]
  %v6159 = vld [vmem:[%s6156 + $0x8] sm:$0xf]
  %v6160 = vld [vmem:[%s6156 + $0xc] sm:$0xf]
  %v6165 = vunpack.c.l.b16 %v6157
  %v6166 = vunpack.c.l.b16 %v6158
  %v6167 = vunpack.c.l.b16 %v6159
  %v6168 = vunpack.c.l.b16 %v6160
  %v6169 = vpack.c.b16 %v6166, %v6165
  %v6170 = vpack.c.b16 %v6168, %v6167
  %6181 = vrot.lane.b32.xlu0 %v6146, 127
  %v6182 = vpop.permute.xlu0 %6181
  %6183 = vrot.lane.b32.xlu0 %v6147, 127
  %v6184 = vpop.permute.xlu0 %6183
  %6185 = vrot.lane.b32.xlu0 %v6148, 127
  %v6186 = vpop.permute.xlu0 %6185
  %6187 = vrot.lane.b32.xlu0 %v6149, 127
  %v6188 = vpop.permute.xlu0 %6187
  %6189 = vrot.lane.b32.xlu0 %v6150, 127
  %v6190 = vpop.permute.xlu0 %6189
  %6191 = vrot.lane.b32.xlu0 %v6151, 127
  %v6192 = vpop.permute.xlu0 %6191
  %6193 = vrot.lane.b32.xlu0 %v6152, 127
  %v6194 = vpop.permute.xlu0 %6193
  %6195 = vrot.lane.b32.xlu0 %v6153, 127
  %v6196 = vpop.permute.xlu0 %6195
  %6197 = vrot.lane.b32.xlu0 %v6154, 127
  %v6198 = vpop.permute.xlu0 %6197
  %6199 = vrot.lane.b32.xlu0 %v6155, 127
  %v6200 = vpop.permute.xlu0 %6199
  %v6201 = vsel %vm1387, %v6182, %v6184
  %v6202 = vsel %vm1387, %v6184, %v6186
  %v6203 = vsel %vm1387, %v6186, %v6188
  %v6204 = vsel %vm1387, %v6188, %v6190
  %v6205 = vsel %vm1387, %v6192, %v6194
  %v6206 = vsel %vm1387, %v6194, %v6196
  %v6207 = vsel %vm1387, %v6196, %v6198
  %v6208 = vsel %vm1387, %v6198, %v6200
  %v6218 = vsel %vm311, %v6169, 0
  %v6221 = vsel %vm311, %v6170, 0
  %6223 = vmatprep.subr.bf16.mxu0 %v6202
  %6224 = vmatpush1.bf16.msra.mxu0 %v6201
  %6225 = vmatprep.subr.bf16.mxu0 %v6206
  %6226 = vmatpush1.bf16.msra.mxu0 %v6205
  %6227 = vmatprep.subr.bf16.mxu0 0
  %6228 = vmatpush1.bf16.msra.mxu0 0
  %6229 = vmatprep.subr.bf16.mxu0 0
  %6230 = vmatpush1.bf16.msra.mxu0 0
  %6231 = vmatprep.subr.bf16.mxu0 0
  %6232 = vmatpush1.bf16.msra.mxu0 0
  %6233 = vmatprep.subr.bf16.mxu0 0
  %6234 = vmatpush1.bf16.msra.mxu0 0
  %6235 = vmatprep.subr.bf16.mxu0 0
  %6236 = vmatpush1.bf16.msra.mxu0 0
  %6237 = vmatprep.subr.bf16.mxu0 0
  %6238 = vmatpush1.bf16.msra.mxu0 0
  %6239 = vmatprep.subr.bf16.mxu0 0
  %6240 = vmatpush1.bf16.msra.mxu0 0
  %6241 = vmatprep.subr.bf16.mxu0 0
  %6242 = vmatpush1.bf16.msra.mxu0 0
  %6243 = vmatprep.subr.bf16.mxu0 0
  %6244 = vmatpush1.bf16.msra.mxu0 0
  %6245 = vmatprep.subr.bf16.mxu0 0
  %6246 = vmatpush1.bf16.msra.mxu0 0
  %6247 = vmatprep.subr.bf16.mxu0 0
  %6248 = vmatpush1.bf16.msra.mxu0 0
  %6249 = vmatprep.subr.bf16.mxu0 0
  %6250 = vmatpush1.bf16.msra.mxu0 0
  %6251 = vmatprep.subr.bf16.mxu0 0
  %6252 = vmatpush1.bf16.msra.mxu0 0
  %6253 = vmatprep.subr.bf16.mxu0 0
  %6254 = vmatpush1.bf16.msra.mxu0 0
  %6255 = vmatprep.mubr.bf16.mxu0 0
  %6256 = vmatmul.mubr.bf16.gmra.mrb[0].mxu0 %v6218
  %v6257 = vpop.f32.mrb[0].mxu0
  %v6258 = vadd.f32 0.0, %v6257
  %v6259 = vpop.f32.mrb[0].mxu0
  %v6260 = vadd.f32 0.0, %v6259
  %v6261 = vpop.f32.mrb[0].mxu0
  %v6262 = vadd.f32 0.0, %v6261
  %v6263 = vpop.f32.mrb[0].mxu0
  %v6264 = vadd.f32 0.0, %v6263
  %6265 = vmatprep.mubr.bf16.mxu0 0
  %6266 = vmatmul.mubr.bf16.gmra.mrb[0].mxu0 %v6221
  %v6267 = vpop.f32.mrb[0].mxu0
  %v6268 = vadd.f32 0.0, %v6267
  %v6269 = vpop.f32.mrb[0].mxu0
  %v6270 = vadd.f32 0.0, %v6269
  %v6271 = vpop.f32.mrb[0].mxu0
  %v6272 = vadd.f32 0.0, %v6271
  %v6273 = vpop.f32.mrb[0].mxu0
  %v6274 = vadd.f32 0.0, %v6273
  %6275 = vdwg.mxu0
  %6276 = vmatprep.subr.bf16.mxu0 %v6204
  %6277 = vmatpush1.bf16.msra.mxu0 %v6203
  %6278 = vmatprep.subr.bf16.mxu0 %v6208
  %6279 = vmatpush1.bf16.msra.mxu0 %v6207
  %6280 = vmatprep.subr.bf16.mxu0 0
  %6281 = vmatpush1.bf16.msra.mxu0 0
  %6282 = vmatprep.subr.bf16.mxu0 0
  %6283 = vmatpush1.bf16.msra.mxu0 0
  %6284 = vmatprep.subr.bf16.mxu0 0
  %6285 = vmatpush1.bf16.msra.mxu0 0
  %6286 = vmatprep.subr.bf16.mxu0 0
  %6287 = vmatpush1.bf16.msra.mxu0 0
  %6288 = vmatprep.subr.bf16.mxu0 0
  %6289 = vmatpush1.bf16.msra.mxu0 0
  %6290 = vmatprep.subr.bf16.mxu0 0
  %6291 = vmatpush1.bf16.msra.mxu0 0
  %6292 = vmatprep.subr.bf16.mxu0 0
  %6293 = vmatpush1.bf16.msra.mxu0 0
  %6294 = vmatprep.subr.bf16.mxu0 0
  %6295 = vmatpush1.bf16.msra.mxu0 0
  %6296 = vmatprep.subr.bf16.mxu0 0
  %6297 = vmatpush1.bf16.msra.mxu0 0
  %6298 = vmatprep.subr.bf16.mxu0 0
  %6299 = vmatpush1.bf16.msra.mxu0 0
  %6300 = vmatprep.subr.bf16.mxu0 0
  %6301 = vmatpush1.bf16.msra.mxu0 0
  %6302 = vmatprep.subr.bf16.mxu0 0
  %6303 = vmatpush1.bf16.msra.mxu0 0
  %6304 = vmatprep.subr.bf16.mxu0 0
  %6305 = vmatpush1.bf16.msra.mxu0 0
  %6306 = vmatprep.subr.bf16.mxu0 0
  %6307 = vmatpush1.bf16.msra.mxu0 0
  %6308 = vmatprep.mubr.bf16.mxu0 0
  %6309 = vmatmul.mubr.bf16.gmra.mrb[0].mxu0 %v6218
  %v6310 = vpop.f32.mrb[0].mxu0
  %v6311 = vadd.f32 0.0, %v6310
  %v6312 = vpop.f32.mrb[0].mxu0
  %v6313 = vadd.f32 0.0, %v6312
  %v6314 = vpop.f32.mrb[0].mxu0
  %v6315 = vadd.f32 0.0, %v6314
  %v6316 = vpop.f32.mrb[0].mxu0
  %v6317 = vadd.f32 0.0, %v6316
  %6318 = vmatprep.mubr.bf16.mxu0 0
  %6319 = vmatmul.mubr.bf16.gmra.mrb[0].mxu0 %v6221
  %v6320 = vpop.f32.mrb[0].mxu0
  %v6321 = vadd.f32 0.0, %v6320
  %v6322 = vpop.f32.mrb[0].mxu0
  %v6323 = vadd.f32 0.0, %v6322
  %v6324 = vpop.f32.mrb[0].mxu0
  %v6325 = vadd.f32 0.0, %v6324
  %v6326 = vpop.f32.mrb[0].mxu0
  %v6327 = vadd.f32 0.0, %v6326
  %6328 = vdwg.mxu0
  %v6329 = vadd.f32 %v6056, %v6258
  %v6330 = vadd.f32 %v6057, %v6260
  %v6331 = vadd.f32 %v6058, %v6311
  %v6332 = vadd.f32 %v6059, %v6313
  %v6333 = vadd.f32 %v6060, %v6262
  %v6334 = vadd.f32 %v6061, %v6264
  %v6335 = vadd.f32 %v6062, %v6315
  %v6336 = vadd.f32 %v6063, %v6317
  %v6337 = vadd.f32 %v6064, %v6268
  %v6338 = vadd.f32 %v6065, %v6270
  %v6339 = vadd.f32 %v6066, %v6321
  %v6340 = vadd.f32 %v6067, %v6323
  %v6341 = vadd.f32 %v6068, %v6272
  %v6342 = vadd.f32 %v6069, %v6274
  %v6343 = vadd.f32 %v6070, %v6325
  %v6344 = vadd.f32 %v6071, %v6327
  %v6345 = vld [vmem:[%s1532] sm:$0xf]
  %v6347 = vlaneseq
  %v6348 = vshrl.u32 %v6347, 7
  %v6349 = vsub.s32 0, %v6348
  %v6350 = vrot.slane %v6345, %v6349
  %v6351 = vlaneseq
  %v6352 = vshrl.u32 %v6351, 7
  %v6353 = vsub.s32 1, %v6352
  %v6354 = vrot.slane %v6345, %v6353
  %v6355 = vlaneseq
  %v6356 = vshrl.u32 %v6355, 7
  %v6357 = vsub.s32 2, %v6356
  %v6358 = vrot.slane %v6345, %v6357
  %v6359 = vlaneseq
  %v6360 = vshrl.u32 %v6359, 7
  %v6361 = vsub.s32 3, %v6360
  %v6362 = vrot.slane %v6345, %v6361
  %6363 = vrot.lane.b32.xlu0 %v6350, 15
  %v6364 = vpop.permute.xlu0 %6363
  %6365 = vrot.lane.b32.xlu0 %v6354, 15
  %v6366 = vpop.permute.xlu0 %6365
  %6367 = vrot.lane.b32.xlu0 %v6358, 15
  %v6368 = vpop.permute.xlu0 %6367
  %6369 = vrot.lane.b32.xlu0 %v6362, 15
  %v6370 = vpop.permute.xlu0 %6369
  %v6371 = vsel %vm1559, %v6364, %v6366
  %v6372 = vsel %vm1559, %v6366, %v6368
  %v6373 = vsel %vm1559, %v6368, %v6370
  %v6379 = vmul.f32 %v6072, %v6364
  %v6380 = vmul.f32 %v6073, %v6371
  %v6381 = vmul.f32 %v6074, %v6372
  %v6382 = vmul.f32 %v6075, %v6373
  %v6383 = vmul.f32 %v6076, %v6370
  %v6384 = vmul.f32 %v6077, %v6364
  %v6385 = vmul.f32 %v6078, %v6371
  %v6386 = vmul.f32 %v6079, %v6372
  %v6387 = vmul.f32 %v6080, %v6373
  %v6388 = vmul.f32 %v6081, %v6370
  %v6389 = vmul.f32 %v6082, %v6364
  %v6390 = vmul.f32 %v6083, %v6371
  %v6391 = vmul.f32 %v6084, %v6372
  %v6392 = vmul.f32 %v6085, %v6373
  %v6393 = vmul.f32 %v6086, %v6370
  %v6394 = vmul.f32 %v6087, %v6364
  %v6395 = vmul.f32 %v6088, %v6371
  %v6396 = vmul.f32 %v6089, %v6372
  %v6397 = vmul.f32 %v6090, %v6373
  %v6398 = vmul.f32 %v6091, %v6370
  %v6399 = vpack.c.bf16 %v6384, %v6379
  %v6400 = vpack.c.bf16 %v6385, %v6380
  %v6401 = vpack.c.bf16 %v6386, %v6381
  %v6402 = vpack.c.bf16 %v6387, %v6382
  %v6403 = vpack.c.bf16 %v6388, %v6383
  %v6404 = vpack.c.bf16 %v6394, %v6389
  %v6405 = vpack.c.bf16 %v6395, %v6390
  %v6406 = vpack.c.bf16 %v6396, %v6391
  %v6407 = vpack.c.bf16 %v6397, %v6392
  %v6408 = vpack.c.bf16 %v6398, %v6393
  %s6409 = scalar_lea.vmem %s8, 96
  %v6410 = vld [vmem:[%s6409] sm:$0xf]
  %v6411 = vld [vmem:[%s6409 + $0x4] sm:$0xf]
  %v6412 = vld [vmem:[%s6409 + $0x8] sm:$0xf]
  %v6413 = vld [vmem:[%s6409 + $0xc] sm:$0xf]
  %v6418 = vunpack.c.l.b16 %v6410
  %v6419 = vunpack.c.l.b16 %v6411
  %v6420 = vunpack.c.l.b16 %v6412
  %v6421 = vunpack.c.l.b16 %v6413
  %v6422 = vpack.c.b16 %v6419, %v6418
  %v6423 = vpack.c.b16 %v6421, %v6420
  %6434 = vrot.lane.b32.xlu0 %v6399, 113
  %v6435 = vpop.permute.xlu0 %6434
  %6436 = vrot.lane.b32.xlu0 %v6400, 113
  %v6437 = vpop.permute.xlu0 %6436
  %6438 = vrot.lane.b32.xlu0 %v6401, 113
  %v6439 = vpop.permute.xlu0 %6438
  %6440 = vrot.lane.b32.xlu0 %v6402, 113
  %v6441 = vpop.permute.xlu0 %6440
  %6442 = vrot.lane.b32.xlu0 %v6403, 113
  %v6443 = vpop.permute.xlu0 %6442
  %6444 = vrot.lane.b32.xlu0 %v6404, 113
  %v6445 = vpop.permute.xlu0 %6444
  %6446 = vrot.lane.b32.xlu0 %v6405, 113
  %v6447 = vpop.permute.xlu0 %6446
  %6448 = vrot.lane.b32.xlu0 %v6406, 113
  %v6449 = vpop.permute.xlu0 %6448
  %6450 = vrot.lane.b32.xlu0 %v6407, 113
  %v6451 = vpop.permute.xlu0 %6450
  %6452 = vrot.lane.b32.xlu0 %v6408, 113
  %v6453 = vpop.permute.xlu0 %6452
  %v6454 = vsel %vm1643, %v6435, %v6437
  %v6455 = vsel %vm1643, %v6437, %v6439
  %v6456 = vsel %vm1643, %v6439, %v6441
  %v6457 = vsel %vm1643, %v6441, %v6443
  %v6458 = vsel %vm1643, %v6445, %v6447
  %v6459 = vsel %vm1643, %v6447, %v6449
  %v6460 = vsel %vm1643, %v6449, %v6451
  %v6461 = vsel %vm1643, %v6451, %v6453
  %v6471 = vsel %vm311, %v6422, 0
  %v6474 = vsel %vm311, %v6423, 0
  %6476 = vmatprep.subr.bf16.mxu0 %v6455
  %6477 = vmatpush1.bf16.msra.mxu0 %v6454
  %6478 = vmatprep.subr.bf16.mxu0 %v6459
  %6479 = vmatpush1.bf16.msra.mxu0 %v6458
  %6480 = vmatprep.subr.bf16.mxu0 0
  %6481 = vmatpush1.bf16.msra.mxu0 0
  %6482 = vmatprep.subr.bf16.mxu0 0
  %6483 = vmatpush1.bf16.msra.mxu0 0
  %6484 = vmatprep.subr.bf16.mxu0 0
  %6485 = vmatpush1.bf16.msra.mxu0 0
  %6486 = vmatprep.subr.bf16.mxu0 0
  %6487 = vmatpush1.bf16.msra.mxu0 0
  %6488 = vmatprep.subr.bf16.mxu0 0
  %6489 = vmatpush1.bf16.msra.mxu0 0
  %6490 = vmatprep.subr.bf16.mxu0 0
  %6491 = vmatpush1.bf16.msra.mxu0 0
  %6492 = vmatprep.subr.bf16.mxu0 0
  %6493 = vmatpush1.bf16.msra.mxu0 0
  %6494 = vmatprep.subr.bf16.mxu0 0
  %6495 = vmatpush1.bf16.msra.mxu0 0
  %6496 = vmatprep.subr.bf16.mxu0 0
  %6497 = vmatpush1.bf16.msra.mxu0 0
  %6498 = vmatprep.subr.bf16.mxu0 0
  %6499 = vmatpush1.bf16.msra.mxu0 0
  %6500 = vmatprep.subr.bf16.mxu0 0
  %6501 = vmatpush1.bf16.msra.mxu0 0
  %6502 = vmatprep.subr.bf16.mxu0 0
  %6503 = vmatpush1.bf16.msra.mxu0 0
  %6504 = vmatprep.subr.bf16.mxu0 0
  %6505 = vmatpush1.bf16.msra.mxu0 0
  %6506 = vmatprep.subr.bf16.mxu0 0
  %6507 = vmatpush1.bf16.msra.mxu0 0
  %6508 = vmatprep.mubr.bf16.mxu0 0
  %6509 = vmatmul.mubr.bf16.gmra.mrb[0].mxu0 %v6471
  %v6510 = vpop.f32.mrb[0].mxu0
  %v6511 = vadd.f32 0.0, %v6510
  %v6512 = vpop.f32.mrb[0].mxu0
  %v6513 = vadd.f32 0.0, %v6512
  %v6514 = vpop.f32.mrb[0].mxu0
  %v6515 = vadd.f32 0.0, %v6514
  %v6516 = vpop.f32.mrb[0].mxu0
  %v6517 = vadd.f32 0.0, %v6516
  %6518 = vmatprep.mubr.bf16.mxu0 0
  %6519 = vmatmul.mubr.bf16.gmra.mrb[0].mxu0 %v6474
  %v6520 = vpop.f32.mrb[0].mxu0
  %v6521 = vadd.f32 0.0, %v6520
  %v6522 = vpop.f32.mrb[0].mxu0
  %v6523 = vadd.f32 0.0, %v6522
  %v6524 = vpop.f32.mrb[0].mxu0
  %v6525 = vadd.f32 0.0, %v6524
  %v6526 = vpop.f32.mrb[0].mxu0
  %v6527 = vadd.f32 0.0, %v6526
  %6528 = vdwg.mxu0
  %6529 = vmatprep.subr.bf16.mxu0 %v6457
  %6530 = vmatpush1.bf16.msra.mxu0 %v6456
  %6531 = vmatprep.subr.bf16.mxu0 %v6461
  %6532 = vmatpush1.bf16.msra.mxu0 %v6460
  %6533 = vmatprep.subr.bf16.mxu0 0
  %6534 = vmatpush1.bf16.msra.mxu0 0
  %6535 = vmatprep.subr.bf16.mxu0 0
  %6536 = vmatpush1.bf16.msra.mxu0 0
  %6537 = vmatprep.subr.bf16.mxu0 0
  %6538 = vmatpush1.bf16.msra.mxu0 0
  %6539 = vmatprep.subr.bf16.mxu0 0
  %6540 = vmatpush1.bf16.msra.mxu0 0
  %6541 = vmatprep.subr.bf16.mxu0 0
  %6542 = vmatpush1.bf16.msra.mxu0 0
  %6543 = vmatprep.subr.bf16.mxu0 0
  %6544 = vmatpush1.bf16.msra.mxu0 0
  %6545 = vmatprep.subr.bf16.mxu0 0
  %6546 = vmatpush1.bf16.msra.mxu0 0
  %6547 = vmatprep.subr.bf16.mxu0 0
  %6548 = vmatpush1.bf16.msra.mxu0 0
  %6549 = vmatprep.subr.bf16.mxu0 0
  %6550 = vmatpush1.bf16.msra.mxu0 0
  %6551 = vmatprep.subr.bf16.mxu0 0
  %6552 = vmatpush1.bf16.msra.mxu0 0
  %6553 = vmatprep.subr.bf16.mxu0 0
  %6554 = vmatpush1.bf16.msra.mxu0 0
  %6555 = vmatprep.subr.bf16.mxu0 0
  %6556 = vmatpush1.bf16.msra.mxu0 0
  %6557 = vmatprep.subr.bf16.mxu0 0
  %6558 = vmatpush1.bf16.msra.mxu0 0
  %6559 = vmatprep.subr.bf16.mxu0 0
  %6560 = vmatpush1.bf16.msra.mxu0 0
  %6561 = vmatprep.mubr.bf16.mxu0 0
  %6562 = vmatmul.mubr.bf16.gmra.mrb[0].mxu0 %v6471
  %v6563 = vpop.f32.mrb[0].mxu0
  %v6564 = vadd.f32 0.0, %v6563
  %v6565 = vpop.f32.mrb[0].mxu0
  %v6566 = vadd.f32 0.0, %v6565
  %v6567 = vpop.f32.mrb[0].mxu0
  %v6568 = vadd.f32 0.0, %v6567
  %v6569 = vpop.f32.mrb[0].mxu0
  %v6570 = vadd.f32 0.0, %v6569
  %6571 = vmatprep.mubr.bf16.mxu0 0
  %6572 = vmatmul.mubr.bf16.gmra.mrb[0].mxu0 %v6474
  %v6573 = vpop.f32.mrb[0].mxu0
  %v6574 = vadd.f32 0.0, %v6573
  %v6575 = vpop.f32.mrb[0].mxu0
  %v6576 = vadd.f32 0.0, %v6575
  %v6577 = vpop.f32.mrb[0].mxu0
  %v6578 = vadd.f32 0.0, %v6577
  %v6579 = vpop.f32.mrb[0].mxu0
  %v6580 = vadd.f32 0.0, %v6579
  %6581 = vdwg.mxu0
  %v6582 = vadd.f32 %v6329, %v6511
  %v6583 = vadd.f32 %v6330, %v6513
  %v6584 = vadd.f32 %v6331, %v6564
  %v6585 = vadd.f32 %v6332, %v6566
  %v6586 = vadd.f32 %v6333, %v6515
  %v6587 = vadd.f32 %v6334, %v6517
  %v6588 = vadd.f32 %v6335, %v6568
  %v6589 = vadd.f32 %v6336, %v6570
  %v6590 = vadd.f32 %v6337, %v6521
  %v6591 = vadd.f32 %v6338, %v6523
  %v6592 = vadd.f32 %v6339, %v6574
  %v6593 = vadd.f32 %v6340, %v6576
  %v6594 = vadd.f32 %v6341, %v6525
  %v6595 = vadd.f32 %v6342, %v6527
  %v6596 = vadd.f32 %v6343, %v6578
  %v6597 = vadd.f32 %v6344, %v6580
  %v6598 = vld [vmem:[%s1788] sm:$0xf]
  %v6600 = vlaneseq
  %v6601 = vshrl.u32 %v6600, 7
  %v6602 = vsub.s32 0, %v6601
  %v6603 = vrot.slane %v6598, %v6602
  %v6604 = vlaneseq
  %v6605 = vshrl.u32 %v6604, 7
  %v6606 = vsub.s32 1, %v6605
  %v6607 = vrot.slane %v6598, %v6606
  %v6608 = vlaneseq
  %v6609 = vshrl.u32 %v6608, 7
  %v6610 = vsub.s32 2, %v6609
  %v6611 = vrot.slane %v6598, %v6610
  %v6612 = vlaneseq
  %v6613 = vshrl.u32 %v6612, 7
  %v6614 = vsub.s32 3, %v6613
  %v6615 = vrot.slane %v6598, %v6614
  %6616 = vrot.lane.b32.xlu0 %v6603, 16
  %v6617 = vpop.permute.xlu0 %6616
  %6618 = vrot.lane.b32.xlu0 %v6607, 16
  %v6619 = vpop.permute.xlu0 %6618
  %6620 = vrot.lane.b32.xlu0 %v6611, 16
  %v6621 = vpop.permute.xlu0 %6620
  %6622 = vrot.lane.b32.xlu0 %v6615, 16
  %v6623 = vpop.permute.xlu0 %6622
  %v6624 = vsel %vm1815, %v6617, %v6619
  %v6625 = vsel %vm1815, %v6619, %v6621
  %v6626 = vsel %vm1815, %v6621, %v6623
  %v6632 = vmul.f32 %v6072, %v6617
  %v6633 = vmul.f32 %v6073, %v6624
  %v6634 = vmul.f32 %v6074, %v6625
  %v6635 = vmul.f32 %v6075, %v6626
  %v6636 = vmul.f32 %v6076, %v6623
  %v6637 = vmul.f32 %v6077, %v6617
  %v6638 = vmul.f32 %v6078, %v6624
  %v6639 = vmul.f32 %v6079, %v6625
  %v6640 = vmul.f32 %v6080, %v6626
  %v6641 = vmul.f32 %v6081, %v6623
  %v6642 = vmul.f32 %v6082, %v6617
  %v6643 = vmul.f32 %v6083, %v6624
  %v6644 = vmul.f32 %v6084, %v6625
  %v6645 = vmul.f32 %v6085, %v6626
  %v6646 = vmul.f32 %v6086, %v6623
  %v6647 = vmul.f32 %v6087, %v6617
  %v6648 = vmul.f32 %v6088, %v6624
  %v6649 = vmul.f32 %v6089, %v6625
  %v6650 = vmul.f32 %v6090, %v6626
  %v6651 = vmul.f32 %v6091, %v6623
  %v6652 = vpack.c.bf16 %v6637, %v6632
  %v6653 = vpack.c.bf16 %v6638, %v6633
  %v6654 = vpack.c.bf16 %v6639, %v6634
  %v6655 = vpack.c.bf16 %v6640, %v6635
  %v6656 = vpack.c.bf16 %v6641, %v6636
  %v6657 = vpack.c.bf16 %v6647, %v6642
  %v6658 = vpack.c.bf16 %v6648, %v6643
  %v6659 = vpack.c.bf16 %v6649, %v6644
  %v6660 = vpack.c.bf16 %v6650, %v6645
  %v6661 = vpack.c.bf16 %v6651, %v6646
  %s6662 = scalar_lea.vmem %s8, 112
  %v6663 = vld [vmem:[%s6662] sm:$0xf]
  %v6664 = vld [vmem:[%s6662 + $0x4] sm:$0xf]
  %v6665 = vld [vmem:[%s6662 + $0x8] sm:$0xf]
  %v6666 = vld [vmem:[%s6662 + $0xc] sm:$0xf]
  %v6671 = vunpack.c.l.b16 %v6663
  %v6672 = vunpack.c.l.b16 %v6664
  %v6673 = vunpack.c.l.b16 %v6665
  %v6674 = vunpack.c.l.b16 %v6666
  %v6675 = vpack.c.b16 %v6672, %v6671
  %v6676 = vpack.c.b16 %v6674, %v6673
  %6687 = vrot.lane.b32.xlu0 %v6652, 112
  %v6688 = vpop.permute.xlu0 %6687
  %6689 = vrot.lane.b32.xlu0 %v6653, 112
  %v6690 = vpop.permute.xlu0 %6689
  %6691 = vrot.lane.b32.xlu0 %v6654, 112
  %v6692 = vpop.permute.xlu0 %6691
  %6693 = vrot.lane.b32.xlu0 %v6655, 112
  %v6694 = vpop.permute.xlu0 %6693
  %6695 = vrot.lane.b32.xlu0 %v6656, 112
  %v6696 = vpop.permute.xlu0 %6695
  %6697 = vrot.lane.b32.xlu0 %v6657, 112
  %v6698 = vpop.permute.xlu0 %6697
  %6699 = vrot.lane.b32.xlu0 %v6658, 112
  %v6700 = vpop.permute.xlu0 %6699
  %6701 = vrot.lane.b32.xlu0 %v6659, 112
  %v6702 = vpop.permute.xlu0 %6701
  %6703 = vrot.lane.b32.xlu0 %v6660, 112
  %v6704 = vpop.permute.xlu0 %6703
  %6705 = vrot.lane.b32.xlu0 %v6661, 112
  %v6706 = vpop.permute.xlu0 %6705
  %v6707 = vsel %vm1899, %v6688, %v6690
  %v6708 = vsel %vm1899, %v6690, %v6692
  %v6709 = vsel %vm1899, %v6692, %v6694
  %v6710 = vsel %vm1899, %v6694, %v6696
  %v6711 = vsel %vm1899, %v6698, %v6700
  %v6712 = vsel %vm1899, %v6700, %v6702
  %v6713 = vsel %vm1899, %v6702, %v6704
  %v6714 = vsel %vm1899, %v6704, %v6706
  %v6724 = vsel %vm311, %v6675, 0
  %v6727 = vsel %vm311, %v6676, 0
  %6729 = vmatprep.subr.bf16.mxu0 %v6708
  %6730 = vmatpush1.bf16.msra.mxu0 %v6707
  %6731 = vmatprep.subr.bf16.mxu0 %v6712
  %6732 = vmatpush1.bf16.msra.mxu0 %v6711
  %6733 = vmatprep.subr.bf16.mxu0 0
  %6734 = vmatpush1.bf16.msra.mxu0 0
  %6735 = vmatprep.subr.bf16.mxu0 0
  %6736 = vmatpush1.bf16.msra.mxu0 0
  %6737 = vmatprep.subr.bf16.mxu0 0
  %6738 = vmatpush1.bf16.msra.mxu0 0
  %6739 = vmatprep.subr.bf16.mxu0 0
  %6740 = vmatpush1.bf16.msra.mxu0 0
  %6741 = vmatprep.subr.bf16.mxu0 0
  %6742 = vmatpush1.bf16.msra.mxu0 0
  %6743 = vmatprep.subr.bf16.mxu0 0
  %6744 = vmatpush1.bf16.msra.mxu0 0
  %6745 = vmatprep.subr.bf16.mxu0 0
  %6746 = vmatpush1.bf16.msra.mxu0 0
  %6747 = vmatprep.subr.bf16.mxu0 0
  %6748 = vmatpush1.bf16.msra.mxu0 0
  %6749 = vmatprep.subr.bf16.mxu0 0
  %6750 = vmatpush1.bf16.msra.mxu0 0
  %6751 = vmatprep.subr.bf16.mxu0 0
  %6752 = vmatpush1.bf16.msra.mxu0 0
  %6753 = vmatprep.subr.bf16.mxu0 0
  %6754 = vmatpush1.bf16.msra.mxu0 0
  %6755 = vmatprep.subr.bf16.mxu0 0
  %6756 = vmatpush1.bf16.msra.mxu0 0
  %6757 = vmatprep.subr.bf16.mxu0 0
  %6758 = vmatpush1.bf16.msra.mxu0 0
  %6759 = vmatprep.subr.bf16.mxu0 0
  %6760 = vmatpush1.bf16.msra.mxu0 0
  %6761 = vmatprep.mubr.bf16.mxu0 0
  %6762 = vmatmul.mubr.bf16.gmra.mrb[0].mxu0 %v6724
  %v6763 = vpop.f32.mrb[0].mxu0
  %v6764 = vadd.f32 0.0, %v6763
  %v6765 = vpop.f32.mrb[0].mxu0
  %v6766 = vadd.f32 0.0, %v6765
  %v6767 = vpop.f32.mrb[0].mxu0
  %v6768 = vadd.f32 0.0, %v6767
  %v6769 = vpop.f32.mrb[0].mxu0
  %v6770 = vadd.f32 0.0, %v6769
  %6771 = vmatprep.mubr.bf16.mxu0 0
  %6772 = vmatmul.mubr.bf16.gmra.mrb[0].mxu0 %v6727
  %v6773 = vpop.f32.mrb[0].mxu0
  %v6774 = vadd.f32 0.0, %v6773
  %v6775 = vpop.f32.mrb[0].mxu0
  %v6776 = vadd.f32 0.0, %v6775
  %v6777 = vpop.f32.mrb[0].mxu0
  %v6778 = vadd.f32 0.0, %v6777
  %v6779 = vpop.f32.mrb[0].mxu0
  %v6780 = vadd.f32 0.0, %v6779
  %6781 = vdwg.mxu0
  %6782 = vmatprep.subr.bf16.mxu0 %v6710
  %6783 = vmatpush1.bf16.msra.mxu0 %v6709
  %6784 = vmatprep.subr.bf16.mxu0 %v6714
  %6785 = vmatpush1.bf16.msra.mxu0 %v6713
  %6786 = vmatprep.subr.bf16.mxu0 0
  %6787 = vmatpush1.bf16.msra.mxu0 0
  %6788 = vmatprep.subr.bf16.mxu0 0
  %6789 = vmatpush1.bf16.msra.mxu0 0
  %6790 = vmatprep.subr.bf16.mxu0 0
  %6791 = vmatpush1.bf16.msra.mxu0 0
  %6792 = vmatprep.subr.bf16.mxu0 0
  %6793 = vmatpush1.bf16.msra.mxu0 0
  %6794 = vmatprep.subr.bf16.mxu0 0
  %6795 = vmatpush1.bf16.msra.mxu0 0
  %6796 = vmatprep.subr.bf16.mxu0 0
  %6797 = vmatpush1.bf16.msra.mxu0 0
  %6798 = vmatprep.subr.bf16.mxu0 0
  %6799 = vmatpush1.bf16.msra.mxu0 0
  %6800 = vmatprep.subr.bf16.mxu0 0
  %6801 = vmatpush1.bf16.msra.mxu0 0
  %6802 = vmatprep.subr.bf16.mxu0 0
  %6803 = vmatpush1.bf16.msra.mxu0 0
  %6804 = vmatprep.subr.bf16.mxu0 0
  %6805 = vmatpush1.bf16.msra.mxu0 0
  %6806 = vmatprep.subr.bf16.mxu0 0
  %6807 = vmatpush1.bf16.msra.mxu0 0
  %6808 = vmatprep.subr.bf16.mxu0 0
  %6809 = vmatpush1.bf16.msra.mxu0 0
  %6810 = vmatprep.subr.bf16.mxu0 0
  %6811 = vmatpush1.bf16.msra.mxu0 0
  %6812 = vmatprep.subr.bf16.mxu0 0
  %6813 = vmatpush1.bf16.msra.mxu0 0
  %6814 = vmatprep.mubr.bf16.mxu0 0
  %6815 = vmatmul.mubr.bf16.gmra.mrb[0].mxu0 %v6724
  %v6816 = vpop.f32.mrb[0].mxu0
  %v6817 = vadd.f32 0.0, %v6816
  %v6818 = vpop.f32.mrb[0].mxu0
  %v6819 = vadd.f32 0.0, %v6818
  %v6820 = vpop.f32.mrb[0].mxu0
  %v6821 = vadd.f32 0.0, %v6820
  %v6822 = vpop.f32.mrb[0].mxu0
  %v6823 = vadd.f32 0.0, %v6822
  %6824 = vmatprep.mubr.bf16.mxu0 0
  %6825 = vmatmul.mubr.bf16.gmra.mrb[0].mxu0 %v6727
  %v6826 = vpop.f32.mrb[0].mxu0
  %v6827 = vadd.f32 0.0, %v6826
  %v6828 = vpop.f32.mrb[0].mxu0
  %v6829 = vadd.f32 0.0, %v6828
  %v6830 = vpop.f32.mrb[0].mxu0
  %v6831 = vadd.f32 0.0, %v6830
  %v6832 = vpop.f32.mrb[0].mxu0
  %v6833 = vadd.f32 0.0, %v6832
  %6834 = vdwg.mxu0
  %v6835 = vadd.f32 %v6582, %v6764
  %v6836 = vadd.f32 %v6583, %v6766
  %v6837 = vadd.f32 %v6584, %v6817
  %v6838 = vadd.f32 %v6585, %v6819
  %v6839 = vadd.f32 %v6586, %v6768
  %v6840 = vadd.f32 %v6587, %v6770
  %v6841 = vadd.f32 %v6588, %v6821
  %v6842 = vadd.f32 %v6589, %v6823
  %v6843 = vadd.f32 %v6590, %v6774
  %v6844 = vadd.f32 %v6591, %v6776
  %v6845 = vadd.f32 %v6592, %v6827
  %v6846 = vadd.f32 %v6593, %v6829
  %v6847 = vadd.f32 %v6594, %v6778
  %v6848 = vadd.f32 %v6595, %v6780
  %v6849 = vadd.f32 %v6596, %v6831
  %v6850 = vadd.f32 %v6597, %v6833
  %v6851 = vld [vmem:[%s2044] sm:$0xf]
  %v6853 = vlaneseq
  %v6854 = vshrl.u32 %v6853, 7
  %v6855 = vsub.s32 0, %v6854
  %v6856 = vrot.slane %v6851, %v6855
  %v6857 = vlaneseq
  %v6858 = vshrl.u32 %v6857, 7
  %v6859 = vsub.s32 1, %v6858
  %v6860 = vrot.slane %v6851, %v6859
  %v6861 = vlaneseq
  %v6862 = vshrl.u32 %v6861, 7
  %v6863 = vsub.s32 2, %v6862
  %v6864 = vrot.slane %v6851, %v6863
  %v6865 = vlaneseq
  %v6866 = vshrl.u32 %v6865, 7
  %v6867 = vsub.s32 3, %v6866
  %v6868 = vrot.slane %v6851, %v6867
  %6869 = vrot.lane.b32.xlu0 %v6856, 17
  %v6870 = vpop.permute.xlu0 %6869
  %6871 = vrot.lane.b32.xlu0 %v6860, 17
  %v6872 = vpop.permute.xlu0 %6871
  %6873 = vrot.lane.b32.xlu0 %v6864, 17
  %v6874 = vpop.permute.xlu0 %6873
  %6875 = vrot.lane.b32.xlu0 %v6868, 17
  %v6876 = vpop.permute.xlu0 %6875
  %v6877 = vsel %vm2071, %v6870, %v6872
  %v6878 = vsel %vm2071, %v6872, %v6874
  %v6879 = vsel %vm2071, %v6874, %v6876
  %v6885 = vmul.f32 %v6072, %v6870
  %v6886 = vmul.f32 %v6073, %v6877
  %v6887 = vmul.f32 %v6074, %v6878
  %v6888 = vmul.f32 %v6075, %v6879
  %v6889 = vmul.f32 %v6076, %v6876
  %v6890 = vmul.f32 %v6077, %v6870
  %v6891 = vmul.f32 %v6078, %v6877
  %v6892 = vmul.f32 %v6079, %v6878
  %v6893 = vmul.f32 %v6080, %v6879
  %v6894 = vmul.f32 %v6081, %v6876
  %v6895 = vmul.f32 %v6082, %v6870
  %v6896 = vmul.f32 %v6083, %v6877
  %v6897 = vmul.f32 %v6084, %v6878
  %v6898 = vmul.f32 %v6085, %v6879
  %v6899 = vmul.f32 %v6086, %v6876
  %v6900 = vmul.f32 %v6087, %v6870
  %v6901 = vmul.f32 %v6088, %v6877
  %v6902 = vmul.f32 %v6089, %v6878
  %v6903 = vmul.f32 %v6090, %v6879
  %v6904 = vmul.f32 %v6091, %v6876
  %v6905 = vpack.c.bf16 %v6890, %v6885
  %v6906 = vpack.c.bf16 %v6891, %v6886
  %v6907 = vpack.c.bf16 %v6892, %v6887
  %v6908 = vpack.c.bf16 %v6893, %v6888
  %v6909 = vpack.c.bf16 %v6894, %v6889
  %v6910 = vpack.c.bf16 %v6900, %v6895
  %v6911 = vpack.c.bf16 %v6901, %v6896
  %v6912 = vpack.c.bf16 %v6902, %v6897
  %v6913 = vpack.c.bf16 %v6903, %v6898
  %v6914 = vpack.c.bf16 %v6904, %v6899
  %s6915 = scalar_lea.vmem %s8, 128
  %v6916 = vld [vmem:[%s6915] sm:$0xf]
  %v6917 = vld [vmem:[%s6915 + $0x4] sm:$0xf]
  %v6918 = vld [vmem:[%s6915 + $0x8] sm:$0xf]
  %v6919 = vld [vmem:[%s6915 + $0xc] sm:$0xf]
  %v6924 = vunpack.c.l.b16 %v6916
  %v6925 = vunpack.c.l.b16 %v6917
  %v6926 = vunpack.c.l.b16 %v6918
  %v6927 = vunpack.c.l.b16 %v6919
  %v6928 = vpack.c.b16 %v6925, %v6924
  %v6929 = vpack.c.b16 %v6927, %v6926
  %6940 = vrot.lane.b32.xlu0 %v6905, 111
  %v6941 = vpop.permute.xlu0 %6940
  %6942 = vrot.lane.b32.xlu0 %v6906, 111
  %v6943 = vpop.permute.xlu0 %6942
  %6944 = vrot.lane.b32.xlu0 %v6907, 111
  %v6945 = vpop.permute.xlu0 %6944
  %6946 = vrot.lane.b32.xlu0 %v6908, 111
  %v6947 = vpop.permute.xlu0 %6946
  %6948 = vrot.lane.b32.xlu0 %v6909, 111
  %v6949 = vpop.permute.xlu0 %6948
  %6950 = vrot.lane.b32.xlu0 %v6910, 111
  %v6951 = vpop.permute.xlu0 %6950
  %6952 = vrot.lane.b32.xlu0 %v6911, 111
  %v6953 = vpop.permute.xlu0 %6952
  %6954 = vrot.lane.b32.xlu0 %v6912, 111
  %v6955 = vpop.permute.xlu0 %6954
  %6956 = vrot.lane.b32.xlu0 %v6913, 111
  %v6957 = vpop.permute.xlu0 %6956
  %6958 = vrot.lane.b32.xlu0 %v6914, 111
  %v6959 = vpop.permute.xlu0 %6958
  %v6960 = vsel %vm2155, %v6941, %v6943
  %v6961 = vsel %vm2155, %v6943, %v6945
  %v6962 = vsel %vm2155, %v6945, %v6947
  %v6963 = vsel %vm2155, %v6947, %v6949
  %v6964 = vsel %vm2155, %v6951, %v6953
  %v6965 = vsel %vm2155, %v6953, %v6955
  %v6966 = vsel %vm2155, %v6955, %v6957
  %v6967 = vsel %vm2155, %v6957, %v6959
  %v6977 = vsel %vm311, %v6928, 0
  %v6980 = vsel %vm311, %v6929, 0
  %6982 = vmatprep.subr.bf16.mxu0 %v6961
  %6983 = vmatpush1.bf16.msra.mxu0 %v6960
  %6984 = vmatprep.subr.bf16.mxu0 %v6965
  %6985 = vmatpush1.bf16.msra.mxu0 %v6964
  %6986 = vmatprep.subr.bf16.mxu0 0
  %6987 = vmatpush1.bf16.msra.mxu0 0
  %6988 = vmatprep.subr.bf16.mxu0 0
  %6989 = vmatpush1.bf16.msra.mxu0 0
  %6990 = vmatprep.subr.bf16.mxu0 0
  %6991 = vmatpush1.bf16.msra.mxu0 0
  %6992 = vmatprep.subr.bf16.mxu0 0
  %6993 = vmatpush1.bf16.msra.mxu0 0
  %6994 = vmatprep.subr.bf16.mxu0 0
  %6995 = vmatpush1.bf16.msra.mxu0 0
  %6996 = vmatprep.subr.bf16.mxu0 0
  %6997 = vmatpush1.bf16.msra.mxu0 0
  %6998 = vmatprep.subr.bf16.mxu0 0
  %6999 = vmatpush1.bf16.msra.mxu0 0
  %7000 = vmatprep.subr.bf16.mxu0 0
  %7001 = vmatpush1.bf16.msra.mxu0 0
  %7002 = vmatprep.subr.bf16.mxu0 0
  %7003 = vmatpush1.bf16.msra.mxu0 0
  %7004 = vmatprep.subr.bf16.mxu0 0
  %7005 = vmatpush1.bf16.msra.mxu0 0
  %7006 = vmatprep.subr.bf16.mxu0 0
  %7007 = vmatpush1.bf16.msra.mxu0 0
  %7008 = vmatprep.subr.bf16.mxu0 0
  %7009 = vmatpush1.bf16.msra.mxu0 0
  %7010 = vmatprep.subr.bf16.mxu0 0
  %7011 = vmatpush1.bf16.msra.mxu0 0
  %7012 = vmatprep.subr.bf16.mxu0 0
  %7013 = vmatpush1.bf16.msra.mxu0 0
  %7014 = vmatprep.mubr.bf16.mxu0 0
  %7015 = vmatmul.mubr.bf16.gmra.mrb[0].mxu0 %v6977
  %v7016 = vpop.f32.mrb[0].mxu0
  %v7017 = vadd.f32 0.0, %v7016
  %v7018 = vpop.f32.mrb[0].mxu0
  %v7019 = vadd.f32 0.0, %v7018
  %v7020 = vpop.f32.mrb[0].mxu0
  %v7021 = vadd.f32 0.0, %v7020
  %v7022 = vpop.f32.mrb[0].mxu0
  %v7023 = vadd.f32 0.0, %v7022
  %7024 = vmatprep.mubr.bf16.mxu0 0
  %7025 = vmatmul.mubr.bf16.gmra.mrb[0].mxu0 %v6980
  %v7026 = vpop.f32.mrb[0].mxu0
  %v7027 = vadd.f32 0.0, %v7026
  %v7028 = vpop.f32.mrb[0].mxu0
  %v7029 = vadd.f32 0.0, %v7028
  %v7030 = vpop.f32.mrb[0].mxu0
  %v7031 = vadd.f32 0.0, %v7030
  %v7032 = vpop.f32.mrb[0].mxu0
  %v7033 = vadd.f32 0.0, %v7032
  %7034 = vdwg.mxu0
  %7035 = vmatprep.subr.bf16.mxu0 %v6963
  %7036 = vmatpush1.bf16.msra.mxu0 %v6962
  %7037 = vmatprep.subr.bf16.mxu0 %v6967
  %7038 = vmatpush1.bf16.msra.mxu0 %v6966
  %7039 = vmatprep.subr.bf16.mxu0 0
  %7040 = vmatpush1.bf16.msra.mxu0 0
  %7041 = vmatprep.subr.bf16.mxu0 0
  %7042 = vmatpush1.bf16.msra.mxu0 0
  %7043 = vmatprep.subr.bf16.mxu0 0
  %7044 = vmatpush1.bf16.msra.mxu0 0
  %7045 = vmatprep.subr.bf16.mxu0 0
  %7046 = vmatpush1.bf16.msra.mxu0 0
  %7047 = vmatprep.subr.bf16.mxu0 0
  %7048 = vmatpush1.bf16.msra.mxu0 0
  %7049 = vmatprep.subr.bf16.mxu0 0
  %7050 = vmatpush1.bf16.msra.mxu0 0
  %7051 = vmatprep.subr.bf16.mxu0 0
  %7052 = vmatpush1.bf16.msra.mxu0 0
  %7053 = vmatprep.subr.bf16.mxu0 0
  %7054 = vmatpush1.bf16.msra.mxu0 0
  %7055 = vmatprep.subr.bf16.mxu0 0
  %7056 = vmatpush1.bf16.msra.mxu0 0
  %7057 = vmatprep.subr.bf16.mxu0 0
  %7058 = vmatpush1.bf16.msra.mxu0 0
  %7059 = vmatprep.subr.bf16.mxu0 0
  %7060 = vmatpush1.bf16.msra.mxu0 0
  %7061 = vmatprep.subr.bf16.mxu0 0
  %7062 = vmatpush1.bf16.msra.mxu0 0
  %7063 = vmatprep.subr.bf16.mxu0 0
  %7064 = vmatpush1.bf16.msra.mxu0 0
  %7065 = vmatprep.subr.bf16.mxu0 0
  %7066 = vmatpush1.bf16.msra.mxu0 0
  %7067 = vmatprep.mubr.bf16.mxu0 0
  %7068 = vmatmul.mubr.bf16.gmra.mrb[0].mxu0 %v6977
  %v7069 = vpop.f32.mrb[0].mxu0
  %v7070 = vadd.f32 0.0, %v7069
  %v7071 = vpop.f32.mrb[0].mxu0
  %v7072 = vadd.f32 0.0, %v7071
  %v7073 = vpop.f32.mrb[0].mxu0
  %v7074 = vadd.f32 0.0, %v7073
  %v7075 = vpop.f32.mrb[0].mxu0
  %v7076 = vadd.f32 0.0, %v7075
  %7077 = vmatprep.mubr.bf16.mxu0 0
  %7078 = vmatmul.mubr.bf16.gmra.mrb[0].mxu0 %v6980
  %v7079 = vpop.f32.mrb[0].mxu0
  %v7080 = vadd.f32 0.0, %v7079
  %v7081 = vpop.f32.mrb[0].mxu0
  %v7082 = vadd.f32 0.0, %v7081
  %v7083 = vpop.f32.mrb[0].mxu0
  %v7084 = vadd.f32 0.0, %v7083
  %v7085 = vpop.f32.mrb[0].mxu0
  %v7086 = vadd.f32 0.0, %v7085
  %7087 = vdwg.mxu0
  %v7088 = vadd.f32 %v6835, %v7017
  %v7089 = vadd.f32 %v6836, %v7019
  %v7090 = vadd.f32 %v6837, %v7070
  %v7091 = vadd.f32 %v6838, %v7072
  %v7092 = vadd.f32 %v6839, %v7021
  %v7093 = vadd.f32 %v6840, %v7023
  %v7094 = vadd.f32 %v6841, %v7074
  %v7095 = vadd.f32 %v6842, %v7076
  %v7096 = vadd.f32 %v6843, %v7027
  %v7097 = vadd.f32 %v6844, %v7029
  %v7098 = vadd.f32 %v6845, %v7080
  %v7099 = vadd.f32 %v6846, %v7082
  %v7100 = vadd.f32 %v6847, %v7031
  %v7101 = vadd.f32 %v6848, %v7033
  %v7102 = vadd.f32 %v6849, %v7084
  %v7103 = vadd.f32 %v6850, %v7086
  %v7104 = vadd.f32 %v7088, %v7089
  %v7105 = vadd.f32 %v7104, %v7090
  %v7106 = vadd.f32 %v7105, %v7091
  %7107 = vadd.xlane.f32.xlu0 %v7106
  %v7108 = vpop.xlane.xlu0 %7107
  %v7109 = vadd.f32 %v7092, %v7093
  %v7110 = vadd.f32 %v7109, %v7094
  %v7111 = vadd.f32 %v7110, %v7095
  %7112 = vadd.xlane.f32.xlu0 %v7111
  %v7113 = vpop.xlane.xlu0 %7112
  %v7114 = vadd.f32 %v7096, %v7097
  %v7115 = vadd.f32 %v7114, %v7098
  %v7116 = vadd.f32 %v7115, %v7099
  %7117 = vadd.xlane.f32.xlu0 %v7116
  %v7118 = vpop.xlane.xlu0 %7117
  %v7119 = vadd.f32 %v7100, %v7101
  %v7120 = vadd.f32 %v7119, %v7102
  %v7121 = vadd.f32 %v7120, %v7103
  %7122 = vadd.xlane.f32.xlu0 %v7121
  %v7123 = vpop.xlane.xlu0 %7122
  %v7124 = vmul.f32 %v7108, 0.001953125
  %v7125 = vmul.f32 %v7113, 0.001953125
  %v7126 = vmul.f32 %v7118, 0.001953125
  %v7127 = vmul.f32 %v7123, 0.001953125
  %v7128 = vsub.f32 %v7088, %v7124
  %v7129 = vsub.f32 %v7089, %v7124
  %v7130 = vsub.f32 %v7090, %v7124
  %v7131 = vsub.f32 %v7091, %v7124
  %v7132 = vsub.f32 %v7092, %v7125
  %v7133 = vsub.f32 %v7093, %v7125
  %v7134 = vsub.f32 %v7094, %v7125
  %v7135 = vsub.f32 %v7095, %v7125
  %v7136 = vsub.f32 %v7096, %v7126
  %v7137 = vsub.f32 %v7097, %v7126
  %v7138 = vsub.f32 %v7098, %v7126
  %v7139 = vsub.f32 %v7099, %v7126
  %v7140 = vsub.f32 %v7100, %v7127
  %v7141 = vsub.f32 %v7101, %v7127
  %v7142 = vsub.f32 %v7102, %v7127
  %v7143 = vsub.f32 %v7103, %v7127
  %v7144 = vmul.f32 %v7128, %v7128
  %v7145 = vmul.f32 %v7129, %v7129
  %v7146 = vmul.f32 %v7130, %v7130
  %v7147 = vmul.f32 %v7131, %v7131
  %v7148 = vmul.f32 %v7132, %v7132
  %v7149 = vmul.f32 %v7133, %v7133
  %v7150 = vmul.f32 %v7134, %v7134
  %v7151 = vmul.f32 %v7135, %v7135
  %v7152 = vmul.f32 %v7136, %v7136
  %v7153 = vmul.f32 %v7137, %v7137
  %v7154 = vmul.f32 %v7138, %v7138
  %v7155 = vmul.f32 %v7139, %v7139
  %v7156 = vmul.f32 %v7140, %v7140
  %v7157 = vmul.f32 %v7141, %v7141
  %v7158 = vmul.f32 %v7142, %v7142
  %v7159 = vmul.f32 %v7143, %v7143
  %v7160 = vadd.f32 %v7144, %v7145
  %v7161 = vadd.f32 %v7160, %v7146
  %v7162 = vadd.f32 %v7161, %v7147
  %7163 = vadd.xlane.f32.xlu0 %v7162
  %v7164 = vpop.xlane.xlu0 %7163
  %v7165 = vadd.f32 %v7148, %v7149
  %v7166 = vadd.f32 %v7165, %v7150
  %v7167 = vadd.f32 %v7166, %v7151
  %7168 = vadd.xlane.f32.xlu0 %v7167
  %v7169 = vpop.xlane.xlu0 %7168
  %v7170 = vadd.f32 %v7152, %v7153
  %v7171 = vadd.f32 %v7170, %v7154
  %v7172 = vadd.f32 %v7171, %v7155
  %7173 = vadd.xlane.f32.xlu0 %v7172
  %v7174 = vpop.xlane.xlu0 %7173
  %v7175 = vadd.f32 %v7156, %v7157
  %v7176 = vadd.f32 %v7175, %v7158
  %v7177 = vadd.f32 %v7176, %v7159
  %7178 = vadd.xlane.f32.xlu0 %v7177
  %v7179 = vpop.xlane.xlu0 %7178
  %v7180 = vmul.f32 %v7164, 0.001953125
  %v7181 = vmul.f32 %v7169, 0.001953125
  %v7182 = vmul.f32 %v7174, 0.001953125
  %v7183 = vmul.f32 %v7179, 0.001953125
  %v7184 = vld [vmem:[%s9] sm:$0xff]
  %v7185 = vld [vmem:[%s9 + $0x8] sm:$0xff]
  %v7186 = vld [vmem:[%s9 + $0x10] sm:$0xff]
  %v7187 = vld [vmem:[%s9 + $0x18] sm:$0xff]
  %v7188 = vadd.f32 %v7180, 1e-05
  %v7189 = vadd.f32 %v7181, 1e-05
  %v7190 = vadd.f32 %v7182, 1e-05
  %v7191 = vadd.f32 %v7183, 1e-05
  %v7192 = vrsqrt.pop %v7188
  %v7193 = vrsqrt.pop %v7189
  %v7194 = vrsqrt.pop %v7190
  %v7195 = vrsqrt.pop %v7191
  %v7196 = vmul.f32 %v7184, %v7192
  %v7197 = vmul.f32 %v7185, %v7193
  %v7198 = vmul.f32 %v7186, %v7194
  %v7199 = vmul.f32 %v7187, %v7195
  %7201 = vset.pattern.permute.xlu0 0
  %7202 = vperm.xlu0 %7201, %v7196
  %v7203 = vpop.permute.xlu0 %7202
  %7206 = vset.pattern.permute.xlu0 0
  %7207 = vperm.xlu0 %7206, %v7197
  %v7208 = vpop.permute.xlu0 %7207
  %7211 = vset.pattern.permute.xlu0 0
  %7212 = vperm.xlu0 %7211, %v7198
  %v7213 = vpop.permute.xlu0 %7212
  %7216 = vset.pattern.permute.xlu0 0
  %7217 = vperm.xlu0 %7216, %v7199
  %v7218 = vpop.permute.xlu0 %7217
  %v7220 = vmul.f32 %v7128, %v7203
  %v7221 = vmul.f32 %v7129, %v7203
  %v7222 = vmul.f32 %v7130, %v7203
  %v7223 = vmul.f32 %v7131, %v7203
  %v7224 = vmul.f32 %v7132, %v7208
  %v7225 = vmul.f32 %v7133, %v7208
  %v7226 = vmul.f32 %v7134, %v7208
  %v7227 = vmul.f32 %v7135, %v7208
  %v7228 = vmul.f32 %v7136, %v7213
  %v7229 = vmul.f32 %v7137, %v7213
  %v7230 = vmul.f32 %v7138, %v7213
  %v7231 = vmul.f32 %v7139, %v7213
  %v7232 = vmul.f32 %v7140, %v7218
  %v7233 = vmul.f32 %v7141, %v7218
  %v7234 = vmul.f32 %v7142, %v7218
  %v7235 = vmul.f32 %v7143, %v7218
  %v7236 = vld [vmem:[%s10] sm:$0xff]
  %v7237 = vld [vmem:[%s10 + $0x8] sm:$0xff]
  %v7238 = vld [vmem:[%s10 + $0x10] sm:$0xff]
  %v7239 = vld [vmem:[%s10 + $0x18] sm:$0xff]
  %7241 = vset.pattern.permute.xlu0 0
  %7242 = vperm.xlu0 %7241, %v7236
  %v7243 = vpop.permute.xlu0 %7242
  %7246 = vset.pattern.permute.xlu0 0
  %7247 = vperm.xlu0 %7246, %v7237
  %v7248 = vpop.permute.xlu0 %7247
  %7251 = vset.pattern.permute.xlu0 0
  %7252 = vperm.xlu0 %7251, %v7238
  %v7253 = vpop.permute.xlu0 %7252
  %7256 = vset.pattern.permute.xlu0 0
  %7257 = vperm.xlu0 %7256, %v7239
  %v7258 = vpop.permute.xlu0 %7257
  %v7260 = vadd.f32 %v7220, %v7243
  %v7261 = vadd.f32 %v7221, %v7243
  %v7262 = vadd.f32 %v7222, %v7243
  %v7263 = vadd.f32 %v7223, %v7243
  %v7264 = vadd.f32 %v7224, %v7248
  %v7265 = vadd.f32 %v7225, %v7248
  %v7266 = vadd.f32 %v7226, %v7248
  %v7267 = vadd.f32 %v7227, %v7248
  %v7268 = vadd.f32 %v7228, %v7253
  %v7269 = vadd.f32 %v7229, %v7253
  %v7270 = vadd.f32 %v7230, %v7253
  %v7271 = vadd.f32 %v7231, %v7253
  %v7272 = vadd.f32 %v7232, %v7258
  %v7273 = vadd.f32 %v7233, %v7258
  %v7274 = vadd.f32 %v7234, %v7258
  %v7275 = vadd.f32 %v7235, %v7258
  %v7276 = vmul.f32 %v7260, 0.2
  %v7277 = vmul.f32 %v7261, 0.2
  %v7278 = vmul.f32 %v7262, 0.2
  %v7279 = vmul.f32 %v7263, 0.2
  %v7280 = vmul.f32 %v7264, 0.2
  %v7281 = vmul.f32 %v7265, 0.2
  %v7282 = vmul.f32 %v7266, 0.2
  %v7283 = vmul.f32 %v7267, 0.2
  %v7284 = vmul.f32 %v7268, 0.2
  %v7285 = vmul.f32 %v7269, 0.2
  %v7286 = vmul.f32 %v7270, 0.2
  %v7287 = vmul.f32 %v7271, 0.2
  %v7288 = vmul.f32 %v7272, 0.2
  %v7289 = vmul.f32 %v7273, 0.2
  %v7290 = vmul.f32 %v7274, 0.2
  %v7291 = vmul.f32 %v7275, 0.2
  %v7292 = vmax.f32 %v7260, %v7276
  %v7293 = vmax.f32 %v7261, %v7277
  %v7294 = vmax.f32 %v7262, %v7278
  %v7295 = vmax.f32 %v7263, %v7279
  %v7296 = vmax.f32 %v7264, %v7280
  %v7297 = vmax.f32 %v7265, %v7281
  %v7298 = vmax.f32 %v7266, %v7282
  %v7299 = vmax.f32 %v7267, %v7283
  %v7300 = vmax.f32 %v7268, %v7284
  %v7301 = vmax.f32 %v7269, %v7285
  %v7302 = vmax.f32 %v7270, %v7286
  %v7303 = vmax.f32 %v7271, %v7287
  %v7304 = vmax.f32 %v7272, %v7288
  %v7305 = vmax.f32 %v7273, %v7289
  %v7306 = vmax.f32 %v7274, %v7290
  %v7307 = vmax.f32 %v7275, %v7291
  %7308 = vst [vmem:[#allocation2 + $0x8] sm:$0xff] %v7292
  %7309 = vst [vmem:[#allocation2 + $0x10] sm:$0xff] %v7293
  %7310 = vst [vmem:[#allocation2 + $0x18] sm:$0xff] %v7294
  %7311 = vst [vmem:[#allocation2 + $0x20] sm:$0xff] %v7295
  %7312 = vst [vmem:[#allocation2 + $0x38] sm:$0xff] %v7296
  %7313 = vst [vmem:[#allocation2 + $0x40] sm:$0xff] %v7297
  %7314 = vst [vmem:[#allocation2 + $0x48] sm:$0xff] %v7298
  %7315 = vst [vmem:[#allocation2 + $0x50] sm:$0xff] %v7299
  %7316 = vst [vmem:[#allocation2 + $0x68] sm:$0xff] %v7300
  %7317 = vst [vmem:[#allocation2 + $0x70] sm:$0xff] %v7301
  %7318 = vst [vmem:[#allocation2 + $0x78] sm:$0xff] %v7302
  %7319 = vst [vmem:[#allocation2 + $0x80] sm:$0xff] %v7303
  %7320 = vst [vmem:[#allocation2 + $0x98] sm:$0xff] %v7304
  %7321 = vst [vmem:[#allocation2 + $0xa0] sm:$0xff] %v7305
  %7322 = vst [vmem:[#allocation2 + $0xa8] sm:$0xff] %v7306
  %7323 = vst [vmem:[#allocation2 + $0xb0] sm:$0xff] %v7307
  %v7324 = vld [vmem:[#allocation2] sm:$0xff]
  %v7325 = vld [vmem:[#allocation2 + $0x8] sm:$0xff]
  %v7326 = vld [vmem:[#allocation2 + $0x10] sm:$0xff]
  %v7327 = vld [vmem:[#allocation2 + $0x18] sm:$0xff]
  %v7328 = vld [vmem:[#allocation2 + $0x20] sm:$0xff]
  %v7329 = vld [vmem:[#allocation2 + $0x30] sm:$0xff]
  %v7330 = vld [vmem:[#allocation2 + $0x38] sm:$0xff]
  %v7331 = vld [vmem:[#allocation2 + $0x40] sm:$0xff]
  %v7332 = vld [vmem:[#allocation2 + $0x48] sm:$0xff]
  %v7333 = vld [vmem:[#allocation2 + $0x50] sm:$0xff]
  %v7334 = vld [vmem:[#allocation2 + $0x60] sm:$0xff]
  %v7335 = vld [vmem:[#allocation2 + $0x68] sm:$0xff]
  %v7336 = vld [vmem:[#allocation2 + $0x70] sm:$0xff]
  %v7337 = vld [vmem:[#allocation2 + $0x78] sm:$0xff]
  %v7338 = vld [vmem:[#allocation2 + $0x80] sm:$0xff]
  %v7339 = vld [vmem:[#allocation2 + $0x90] sm:$0xff]
  %v7340 = vld [vmem:[#allocation2 + $0x98] sm:$0xff]
  %v7341 = vld [vmem:[#allocation2 + $0xa0] sm:$0xff]
  %v7342 = vld [vmem:[#allocation2 + $0xa8] sm:$0xff]
  %v7343 = vld [vmem:[#allocation2 + $0xb0] sm:$0xff]
  %v7344 = vld [vmem:[%s0] sm:$0xf]
  %v7346 = vlaneseq
  %v7347 = vshrl.u32 %v7346, 7
  %v7348 = vsub.s32 0, %v7347
  %v7349 = vrot.slane %v7344, %v7348
  %v7350 = vlaneseq
  %v7351 = vshrl.u32 %v7350, 7
  %v7352 = vsub.s32 1, %v7351
  %v7353 = vrot.slane %v7344, %v7352
  %v7354 = vlaneseq
  %v7355 = vshrl.u32 %v7354, 7
  %v7356 = vsub.s32 2, %v7355
  %v7357 = vrot.slane %v7344, %v7356
  %v7358 = vlaneseq
  %v7359 = vshrl.u32 %v7358, 7
  %v7360 = vsub.s32 3, %v7359
  %v7361 = vrot.slane %v7344, %v7360
  %7362 = vrot.lane.b32.xlu0 %v7349, 111
  %v7363 = vpop.permute.xlu0 %7362
  %7364 = vrot.lane.b32.xlu0 %v7353, 111
  %v7365 = vpop.permute.xlu0 %7364
  %7366 = vrot.lane.b32.xlu0 %v7357, 111
  %v7367 = vpop.permute.xlu0 %7366
  %7368 = vrot.lane.b32.xlu0 %v7361, 111
  %v7369 = vpop.permute.xlu0 %7368
  %v7370 = vsel %vm140, %v7363, %v7365
  %v7371 = vsel %vm140, %v7365, %v7367
  %v7372 = vsel %vm140, %v7367, %v7369
  %v7378 = vmul.f32 %v7324, %v7363
  %v7379 = vmul.f32 %v7325, %v7370
  %v7380 = vmul.f32 %v7326, %v7371
  %v7381 = vmul.f32 %v7327, %v7372
  %v7382 = vmul.f32 %v7328, %v7369
  %v7383 = vmul.f32 %v7329, %v7363
  %v7384 = vmul.f32 %v7330, %v7370
  %v7385 = vmul.f32 %v7331, %v7371
  %v7386 = vmul.f32 %v7332, %v7372
  %v7387 = vmul.f32 %v7333, %v7369
  %v7388 = vmul.f32 %v7334, %v7363
  %v7389 = vmul.f32 %v7335, %v7370
  %v7390 = vmul.f32 %v7336, %v7371
  %v7391 = vmul.f32 %v7337, %v7372
  %v7392 = vmul.f32 %v7338, %v7369
  %v7393 = vmul.f32 %v7339, %v7363
  %v7394 = vmul.f32 %v7340, %v7370
  %v7395 = vmul.f32 %v7341, %v7371
  %v7396 = vmul.f32 %v7342, %v7372
  %v7397 = vmul.f32 %v7343, %v7369
  %v7398 = vpack.c.bf16 %v7383, %v7378
  %v7399 = vpack.c.bf16 %v7384, %v7379
  %v7400 = vpack.c.bf16 %v7385, %v7380
  %v7401 = vpack.c.bf16 %v7386, %v7381
  %v7402 = vpack.c.bf16 %v7387, %v7382
  %v7403 = vpack.c.bf16 %v7393, %v7388
  %v7404 = vpack.c.bf16 %v7394, %v7389
  %v7405 = vpack.c.bf16 %v7395, %v7390
  %v7406 = vpack.c.bf16 %v7396, %v7391
  %v7407 = vpack.c.bf16 %v7397, %v7392
  %v7408 = vld [vmem:[%s11] sm:$0xf]
  %v7409 = vld [vmem:[%s11 + $0x4] sm:$0xf]
  %v7410 = vld [vmem:[%s11 + $0x8] sm:$0xf]
  %v7411 = vld [vmem:[%s11 + $0xc] sm:$0xf]
  %v7412 = vld [vmem:[%s183] sm:$0xf]
  %v7414 = vlaneseq
  %v7415 = vshrl.u32 %v7414, 7
  %v7416 = vsub.s32 0, %v7415
  %v7417 = vrot.slane %v7412, %v7416
  %v7418 = vlaneseq
  %v7419 = vshrl.u32 %v7418, 7
  %v7420 = vsub.s32 1, %v7419
  %v7421 = vrot.slane %v7412, %v7420
  %v7422 = vlaneseq
  %v7423 = vshrl.u32 %v7422, 7
  %v7424 = vsub.s32 2, %v7423
  %v7425 = vrot.slane %v7412, %v7424
  %v7426 = vlaneseq
  %v7427 = vshrl.u32 %v7426, 7
  %v7428 = vsub.s32 3, %v7427
  %v7429 = vrot.slane %v7412, %v7428
  %7430 = vrot.lane.b32.xlu0 %v7417, 112
  %v7431 = vpop.permute.xlu0 %7430
  %7432 = vrot.lane.b32.xlu0 %v7421, 112
  %v7433 = vpop.permute.xlu0 %7432
  %7434 = vrot.lane.b32.xlu0 %v7425, 112
  %v7435 = vpop.permute.xlu0 %7434
  %7436 = vrot.lane.b32.xlu0 %v7429, 112
  %v7437 = vpop.permute.xlu0 %7436
  %v7438 = vsel %vm210, %v7431, %v7433
  %v7439 = vsel %vm210, %v7433, %v7435
  %v7440 = vsel %vm210, %v7435, %v7437
  %v7446 = vmul.f32 %v7324, %v7431
  %v7447 = vmul.f32 %v7325, %v7438
  %v7448 = vmul.f32 %v7326, %v7439
  %v7449 = vmul.f32 %v7327, %v7440
  %v7450 = vmul.f32 %v7328, %v7437
  %v7451 = vmul.f32 %v7329, %v7431
  %v7452 = vmul.f32 %v7330, %v7438
  %v7453 = vmul.f32 %v7331, %v7439
  %v7454 = vmul.f32 %v7332, %v7440
  %v7455 = vmul.f32 %v7333, %v7437
  %v7456 = vmul.f32 %v7334, %v7431
  %v7457 = vmul.f32 %v7335, %v7438
  %v7458 = vmul.f32 %v7336, %v7439
  %v7459 = vmul.f32 %v7337, %v7440
  %v7460 = vmul.f32 %v7338, %v7437
  %v7461 = vmul.f32 %v7339, %v7431
  %v7462 = vmul.f32 %v7340, %v7438
  %v7463 = vmul.f32 %v7341, %v7439
  %v7464 = vmul.f32 %v7342, %v7440
  %v7465 = vmul.f32 %v7343, %v7437
  %v7466 = vpack.c.bf16 %v7451, %v7446
  %v7467 = vpack.c.bf16 %v7452, %v7447
  %v7468 = vpack.c.bf16 %v7453, %v7448
  %v7469 = vpack.c.bf16 %v7454, %v7449
  %v7470 = vpack.c.bf16 %v7455, %v7450
  %v7471 = vpack.c.bf16 %v7461, %v7456
  %v7472 = vpack.c.bf16 %v7462, %v7457
  %v7473 = vpack.c.bf16 %v7463, %v7458
  %v7474 = vpack.c.bf16 %v7464, %v7459
  %v7475 = vpack.c.bf16 %v7465, %v7460
  %s7476 = scalar_lea.vmem %s11, 16
  %v7477 = vld [vmem:[%s7476] sm:$0xf]
  %v7478 = vld [vmem:[%s7476 + $0x4] sm:$0xf]
  %v7479 = vld [vmem:[%s7476 + $0x8] sm:$0xf]
  %v7480 = vld [vmem:[%s7476 + $0xc] sm:$0xf]
  %v7485 = vunpack.c.l.b16 %v7477
  %v7486 = vunpack.c.l.b16 %v7478
  %v7487 = vunpack.c.l.b16 %v7479
  %v7488 = vunpack.c.l.b16 %v7480
  %v7489 = vpack.c.b16 %v7486, %v7485
  %v7490 = vpack.c.b16 %v7488, %v7487
  %7501 = vrot.lane.b32.xlu0 %v7466, 16
  %v7502 = vpop.permute.xlu0 %7501
  %7503 = vrot.lane.b32.xlu0 %v7467, 16
  %v7504 = vpop.permute.xlu0 %7503
  %7505 = vrot.lane.b32.xlu0 %v7468, 16
  %v7506 = vpop.permute.xlu0 %7505
  %7507 = vrot.lane.b32.xlu0 %v7469, 16
  %v7508 = vpop.permute.xlu0 %7507
  %7509 = vrot.lane.b32.xlu0 %v7470, 16
  %v7510 = vpop.permute.xlu0 %7509
  %7511 = vrot.lane.b32.xlu0 %v7471, 16
  %v7512 = vpop.permute.xlu0 %7511
  %7513 = vrot.lane.b32.xlu0 %v7472, 16
  %v7514 = vpop.permute.xlu0 %7513
  %7515 = vrot.lane.b32.xlu0 %v7473, 16
  %v7516 = vpop.permute.xlu0 %7515
  %7517 = vrot.lane.b32.xlu0 %v7474, 16
  %v7518 = vpop.permute.xlu0 %7517
  %7519 = vrot.lane.b32.xlu0 %v7475, 16
  %v7520 = vpop.permute.xlu0 %7519
  %v7521 = vsel %vm294, %v7502, %v7504
  %v7522 = vsel %vm294, %v7504, %v7506
  %v7523 = vsel %vm294, %v7506, %v7508
  %v7524 = vsel %vm294, %v7508, %v7510
  %v7525 = vsel %vm294, %v7512, %v7514
  %v7526 = vsel %vm294, %v7514, %v7516
  %v7527 = vsel %vm294, %v7516, %v7518
  %v7528 = vsel %vm294, %v7518, %v7520
  %v7538 = vsel %vm311, %v7489, 0
  %v7541 = vsel %vm311, %v7490, 0
  %7543 = vmatprep.subr.bf16.mxu0 %v7522
  %7544 = vmatpush1.bf16.msra.mxu0 %v7521
  %7545 = vmatprep.subr.bf16.mxu0 %v7526
  %7546 = vmatpush1.bf16.msra.mxu0 %v7525
  %7547 = vmatprep.subr.bf16.mxu0 0
  %7548 = vmatpush1.bf16.msra.mxu0 0
  %7549 = vmatprep.subr.bf16.mxu0 0
  %7550 = vmatpush1.bf16.msra.mxu0 0
  %7551 = vmatprep.subr.bf16.mxu0 0
  %7552 = vmatpush1.bf16.msra.mxu0 0
  %7553 = vmatprep.subr.bf16.mxu0 0
  %7554 = vmatpush1.bf16.msra.mxu0 0
  %7555 = vmatprep.subr.bf16.mxu0 0
  %7556 = vmatpush1.bf16.msra.mxu0 0
  %7557 = vmatprep.subr.bf16.mxu0 0
  %7558 = vmatpush1.bf16.msra.mxu0 0
  %7559 = vmatprep.subr.bf16.mxu0 0
  %7560 = vmatpush1.bf16.msra.mxu0 0
  %7561 = vmatprep.subr.bf16.mxu0 0
  %7562 = vmatpush1.bf16.msra.mxu0 0
  %7563 = vmatprep.subr.bf16.mxu0 0
  %7564 = vmatpush1.bf16.msra.mxu0 0
  %7565 = vmatprep.subr.bf16.mxu0 0
  %7566 = vmatpush1.bf16.msra.mxu0 0
  %7567 = vmatprep.subr.bf16.mxu0 0
  %7568 = vmatpush1.bf16.msra.mxu0 0
  %7569 = vmatprep.subr.bf16.mxu0 0
  %7570 = vmatpush1.bf16.msra.mxu0 0
  %7571 = vmatprep.subr.bf16.mxu0 0
  %7572 = vmatpush1.bf16.msra.mxu0 0
  %7573 = vmatprep.subr.bf16.mxu0 0
  %7574 = vmatpush1.bf16.msra.mxu0 0
  %7575 = vmatprep.mubr.bf16.mxu0 0
  %7576 = vmatmul.mubr.bf16.gmra.mrb[0].mxu0 %v7538
  %v7577 = vpop.f32.mrb[0].mxu0
  %v7578 = vadd.f32 0.0, %v7577
  %v7579 = vpop.f32.mrb[0].mxu0
  %v7580 = vadd.f32 0.0, %v7579
  %v7581 = vpop.f32.mrb[0].mxu0
  %v7582 = vadd.f32 0.0, %v7581
  %v7583 = vpop.f32.mrb[0].mxu0
  %v7584 = vadd.f32 0.0, %v7583
  %7585 = vmatprep.mubr.bf16.mxu0 0
  %7586 = vmatmul.mubr.bf16.gmra.mrb[0].mxu0 %v7541
  %v7587 = vpop.f32.mrb[0].mxu0
  %v7588 = vadd.f32 0.0, %v7587
  %v7589 = vpop.f32.mrb[0].mxu0
  %v7590 = vadd.f32 0.0, %v7589
  %v7591 = vpop.f32.mrb[0].mxu0
  %v7592 = vadd.f32 0.0, %v7591
  %v7593 = vpop.f32.mrb[0].mxu0
  %v7594 = vadd.f32 0.0, %v7593
  %7595 = vdwg.mxu0
  %7596 = vmatprep.subr.bf16.mxu0 %v7524
  %7597 = vmatpush1.bf16.msra.mxu0 %v7523
  %7598 = vmatprep.subr.bf16.mxu0 %v7528
  %7599 = vmatpush1.bf16.msra.mxu0 %v7527
  %7600 = vmatprep.subr.bf16.mxu0 0
  %7601 = vmatpush1.bf16.msra.mxu0 0
  %7602 = vmatprep.subr.bf16.mxu0 0
  %7603 = vmatpush1.bf16.msra.mxu0 0
  %7604 = vmatprep.subr.bf16.mxu0 0
  %7605 = vmatpush1.bf16.msra.mxu0 0
  %7606 = vmatprep.subr.bf16.mxu0 0
  %7607 = vmatpush1.bf16.msra.mxu0 0
  %7608 = vmatprep.subr.bf16.mxu0 0
  %7609 = vmatpush1.bf16.msra.mxu0 0
  %7610 = vmatprep.subr.bf16.mxu0 0
  %7611 = vmatpush1.bf16.msra.mxu0 0
  %7612 = vmatprep.subr.bf16.mxu0 0
  %7613 = vmatpush1.bf16.msra.mxu0 0
  %7614 = vmatprep.subr.bf16.mxu0 0
  %7615 = vmatpush1.bf16.msra.mxu0 0
  %7616 = vmatprep.subr.bf16.mxu0 0
  %7617 = vmatpush1.bf16.msra.mxu0 0
  %7618 = vmatprep.subr.bf16.mxu0 0
  %7619 = vmatpush1.bf16.msra.mxu0 0
  %7620 = vmatprep.subr.bf16.mxu0 0
  %7621 = vmatpush1.bf16.msra.mxu0 0
  %7622 = vmatprep.subr.bf16.mxu0 0
  %7623 = vmatpush1.bf16.msra.mxu0 0
  %7624 = vmatprep.subr.bf16.mxu0 0
  %7625 = vmatpush1.bf16.msra.mxu0 0
  %7626 = vmatprep.subr.bf16.mxu0 0
  %7627 = vmatpush1.bf16.msra.mxu0 0
  %7628 = vmatprep.mubr.bf16.mxu0 0
  %7629 = vmatmul.mubr.bf16.gmra.mrb[0].mxu0 %v7538
  %v7630 = vpop.f32.mrb[0].mxu0
  %v7631 = vadd.f32 0.0, %v7630
  %v7632 = vpop.f32.mrb[0].mxu0
  %v7633 = vadd.f32 0.0, %v7632
  %v7634 = vpop.f32.mrb[0].mxu0
  %v7635 = vadd.f32 0.0, %v7634
  %v7636 = vpop.f32.mrb[0].mxu0
  %v7637 = vadd.f32 0.0, %v7636
  %7638 = vmatprep.mubr.bf16.mxu0 0
  %7639 = vmatmul.mubr.bf16.gmra.mrb[0].mxu0 %v7541
  %v7640 = vpop.f32.mrb[0].mxu0
  %v7641 = vadd.f32 0.0, %v7640
  %v7642 = vpop.f32.mrb[0].mxu0
  %v7643 = vadd.f32 0.0, %v7642
  %v7644 = vpop.f32.mrb[0].mxu0
  %v7645 = vadd.f32 0.0, %v7644
  %v7646 = vpop.f32.mrb[0].mxu0
  %v7647 = vadd.f32 0.0, %v7646
  %7648 = vdwg.mxu0
  %v7653 = vunpack.c.l.b16 %v7408
  %v7654 = vunpack.c.l.b16 %v7409
  %v7655 = vunpack.c.l.b16 %v7410
  %v7656 = vunpack.c.l.b16 %v7411
  %v7657 = vpack.c.b16 %v7654, %v7653
  %v7658 = vpack.c.b16 %v7656, %v7655
  %7669 = vrot.lane.b32.xlu0 %v7398, 17
  %v7670 = vpop.permute.xlu0 %7669
  %7671 = vrot.lane.b32.xlu0 %v7399, 17
  %v7672 = vpop.permute.xlu0 %7671
  %7673 = vrot.lane.b32.xlu0 %v7400, 17
  %v7674 = vpop.permute.xlu0 %7673
  %7675 = vrot.lane.b32.xlu0 %v7401, 17
  %v7676 = vpop.permute.xlu0 %7675
  %7677 = vrot.lane.b32.xlu0 %v7402, 17
  %v7678 = vpop.permute.xlu0 %7677
  %7679 = vrot.lane.b32.xlu0 %v7403, 17
  %v7680 = vpop.permute.xlu0 %7679
  %7681 = vrot.lane.b32.xlu0 %v7404, 17
  %v7682 = vpop.permute.xlu0 %7681
  %7683 = vrot.lane.b32.xlu0 %v7405, 17
  %v7684 = vpop.permute.xlu0 %7683
  %7685 = vrot.lane.b32.xlu0 %v7406, 17
  %v7686 = vpop.permute.xlu0 %7685
  %7687 = vrot.lane.b32.xlu0 %v7407, 17
  %v7688 = vpop.permute.xlu0 %7687
  %v7689 = vsel %vm464, %v7670, %v7672
  %v7690 = vsel %vm464, %v7672, %v7674
  %v7691 = vsel %vm464, %v7674, %v7676
  %v7692 = vsel %vm464, %v7676, %v7678
  %v7693 = vsel %vm464, %v7680, %v7682
  %v7694 = vsel %vm464, %v7682, %v7684
  %v7695 = vsel %vm464, %v7684, %v7686
  %v7696 = vsel %vm464, %v7686, %v7688
  %v7706 = vsel %vm311, %v7657, 0
  %v7709 = vsel %vm311, %v7658, 0
  %7711 = vmatprep.subr.bf16.mxu0 %v7690
  %7712 = vmatpush1.bf16.msra.mxu0 %v7689
  %7713 = vmatprep.subr.bf16.mxu0 %v7694
  %7714 = vmatpush1.bf16.msra.mxu0 %v7693
  %7715 = vmatprep.subr.bf16.mxu0 0
  %7716 = vmatpush1.bf16.msra.mxu0 0
  %7717 = vmatprep.subr.bf16.mxu0 0
  %7718 = vmatpush1.bf16.msra.mxu0 0
  %7719 = vmatprep.subr.bf16.mxu0 0
  %7720 = vmatpush1.bf16.msra.mxu0 0
  %7721 = vmatprep.subr.bf16.mxu0 0
  %7722 = vmatpush1.bf16.msra.mxu0 0
  %7723 = vmatprep.subr.bf16.mxu0 0
  %7724 = vmatpush1.bf16.msra.mxu0 0
  %7725 = vmatprep.subr.bf16.mxu0 0
  %7726 = vmatpush1.bf16.msra.mxu0 0
  %7727 = vmatprep.subr.bf16.mxu0 0
  %7728 = vmatpush1.bf16.msra.mxu0 0
  %7729 = vmatprep.subr.bf16.mxu0 0
  %7730 = vmatpush1.bf16.msra.mxu0 0
  %7731 = vmatprep.subr.bf16.mxu0 0
  %7732 = vmatpush1.bf16.msra.mxu0 0
  %7733 = vmatprep.subr.bf16.mxu0 0
  %7734 = vmatpush1.bf16.msra.mxu0 0
  %7735 = vmatprep.subr.bf16.mxu0 0
  %7736 = vmatpush1.bf16.msra.mxu0 0
  %7737 = vmatprep.subr.bf16.mxu0 0
  %7738 = vmatpush1.bf16.msra.mxu0 0
  %7739 = vmatprep.subr.bf16.mxu0 0
  %7740 = vmatpush1.bf16.msra.mxu0 0
  %7741 = vmatprep.subr.bf16.mxu0 0
  %7742 = vmatpush1.bf16.msra.mxu0 0
  %7743 = vmatprep.mubr.bf16.mxu0 0
  %7744 = vmatmul.mubr.bf16.gmra.mrb[0].mxu0 %v7706
  %v7745 = vpop.f32.mrb[0].mxu0
  %v7746 = vadd.f32 %v7578, %v7745
  %v7747 = vpop.f32.mrb[0].mxu0
  %v7748 = vadd.f32 %v7580, %v7747
  %v7749 = vpop.f32.mrb[0].mxu0
  %v7750 = vadd.f32 %v7582, %v7749
  %v7751 = vpop.f32.mrb[0].mxu0
  %v7752 = vadd.f32 %v7584, %v7751
  %7753 = vmatprep.mubr.bf16.mxu0 0
  %7754 = vmatmul.mubr.bf16.gmra.mrb[0].mxu0 %v7709
  %v7755 = vpop.f32.mrb[0].mxu0
  %v7756 = vadd.f32 %v7588, %v7755
  %v7757 = vpop.f32.mrb[0].mxu0
  %v7758 = vadd.f32 %v7590, %v7757
  %v7759 = vpop.f32.mrb[0].mxu0
  %v7760 = vadd.f32 %v7592, %v7759
  %v7761 = vpop.f32.mrb[0].mxu0
  %v7762 = vadd.f32 %v7594, %v7761
  %7763 = vdwg.mxu0
  %7764 = vmatprep.subr.bf16.mxu0 %v7692
  %7765 = vmatpush1.bf16.msra.mxu0 %v7691
  %7766 = vmatprep.subr.bf16.mxu0 %v7696
  %7767 = vmatpush1.bf16.msra.mxu0 %v7695
  %7768 = vmatprep.subr.bf16.mxu0 0
  %7769 = vmatpush1.bf16.msra.mxu0 0
  %7770 = vmatprep.subr.bf16.mxu0 0
  %7771 = vmatpush1.bf16.msra.mxu0 0
  %7772 = vmatprep.subr.bf16.mxu0 0
  %7773 = vmatpush1.bf16.msra.mxu0 0
  %7774 = vmatprep.subr.bf16.mxu0 0
  %7775 = vmatpush1.bf16.msra.mxu0 0
  %7776 = vmatprep.subr.bf16.mxu0 0
  %7777 = vmatpush1.bf16.msra.mxu0 0
  %7778 = vmatprep.subr.bf16.mxu0 0
  %7779 = vmatpush1.bf16.msra.mxu0 0
  %7780 = vmatprep.subr.bf16.mxu0 0
  %7781 = vmatpush1.bf16.msra.mxu0 0
  %7782 = vmatprep.subr.bf16.mxu0 0
  %7783 = vmatpush1.bf16.msra.mxu0 0
  %7784 = vmatprep.subr.bf16.mxu0 0
  %7785 = vmatpush1.bf16.msra.mxu0 0
  %7786 = vmatprep.subr.bf16.mxu0 0
  %7787 = vmatpush1.bf16.msra.mxu0 0
  %7788 = vmatprep.subr.bf16.mxu0 0
  %7789 = vmatpush1.bf16.msra.mxu0 0
  %7790 = vmatprep.subr.bf16.mxu0 0
  %7791 = vmatpush1.bf16.msra.mxu0 0
  %7792 = vmatprep.subr.bf16.mxu0 0
  %7793 = vmatpush1.bf16.msra.mxu0 0
  %7794 = vmatprep.subr.bf16.mxu0 0
  %7795 = vmatpush1.bf16.msra.mxu0 0
  %7796 = vmatprep.mubr.bf16.mxu0 0
  %7797 = vmatmul.mubr.bf16.gmra.mrb[0].mxu0 %v7706
  %v7798 = vpop.f32.mrb[0].mxu0
  %v7799 = vadd.f32 %v7631, %v7798
  %v7800 = vpop.f32.mrb[0].mxu0
  %v7801 = vadd.f32 %v7633, %v7800
  %v7802 = vpop.f32.mrb[0].mxu0
  %v7803 = vadd.f32 %v7635, %v7802
  %v7804 = vpop.f32.mrb[0].mxu0
  %v7805 = vadd.f32 %v7637, %v7804
  %7806 = vmatprep.mubr.bf16.mxu0 0
  %7807 = vmatmul.mubr.bf16.gmra.mrb[0].mxu0 %v7709
  %v7808 = vpop.f32.mrb[0].mxu0
  %v7809 = vadd.f32 %v7641, %v7808
  %v7810 = vpop.f32.mrb[0].mxu0
  %v7811 = vadd.f32 %v7643, %v7810
  %v7812 = vpop.f32.mrb[0].mxu0
  %v7813 = vadd.f32 %v7645, %v7812
  %v7814 = vpop.f32.mrb[0].mxu0
  %v7815 = vadd.f32 %v7647, %v7814
  %7816 = vdwg.mxu0
  %v7817 = vld [vmem:[%s593] sm:$0xf]
  %v7819 = vlaneseq
  %v7820 = vshrl.u32 %v7819, 7
  %v7821 = vsub.s32 0, %v7820
  %v7822 = vrot.slane %v7817, %v7821
  %v7823 = vlaneseq
  %v7824 = vshrl.u32 %v7823, 7
  %v7825 = vsub.s32 1, %v7824
  %v7826 = vrot.slane %v7817, %v7825
  %v7827 = vlaneseq
  %v7828 = vshrl.u32 %v7827, 7
  %v7829 = vsub.s32 2, %v7828
  %v7830 = vrot.slane %v7817, %v7829
  %v7831 = vlaneseq
  %v7832 = vshrl.u32 %v7831, 7
  %v7833 = vsub.s32 3, %v7832
  %v7834 = vrot.slane %v7817, %v7833
  %7835 = vrot.lane.b32.xlu0 %v7822, 113
  %v7836 = vpop.permute.xlu0 %7835
  %7837 = vrot.lane.b32.xlu0 %v7826, 113
  %v7838 = vpop.permute.xlu0 %7837
  %7839 = vrot.lane.b32.xlu0 %v7830, 113
  %v7840 = vpop.permute.xlu0 %7839
  %7841 = vrot.lane.b32.xlu0 %v7834, 113
  %v7842 = vpop.permute.xlu0 %7841
  %v7843 = vsel %vm620, %v7836, %v7838
  %v7844 = vsel %vm620, %v7838, %v7840
  %v7845 = vsel %vm620, %v7840, %v7842
  %v7851 = vmul.f32 %v7324, %v7836
  %v7852 = vmul.f32 %v7325, %v7843
  %v7853 = vmul.f32 %v7326, %v7844
  %v7854 = vmul.f32 %v7327, %v7845
  %v7855 = vmul.f32 %v7328, %v7842
  %v7856 = vmul.f32 %v7329, %v7836
  %v7857 = vmul.f32 %v7330, %v7843
  %v7858 = vmul.f32 %v7331, %v7844
  %v7859 = vmul.f32 %v7332, %v7845
  %v7860 = vmul.f32 %v7333, %v7842
  %v7861 = vmul.f32 %v7334, %v7836
  %v7862 = vmul.f32 %v7335, %v7843
  %v7863 = vmul.f32 %v7336, %v7844
  %v7864 = vmul.f32 %v7337, %v7845
  %v7865 = vmul.f32 %v7338, %v7842
  %v7866 = vmul.f32 %v7339, %v7836
  %v7867 = vmul.f32 %v7340, %v7843
  %v7868 = vmul.f32 %v7341, %v7844
  %v7869 = vmul.f32 %v7342, %v7845
  %v7870 = vmul.f32 %v7343, %v7842
  %v7871 = vpack.c.bf16 %v7856, %v7851
  %v7872 = vpack.c.bf16 %v7857, %v7852
  %v7873 = vpack.c.bf16 %v7858, %v7853
  %v7874 = vpack.c.bf16 %v7859, %v7854
  %v7875 = vpack.c.bf16 %v7860, %v7855
  %v7876 = vpack.c.bf16 %v7866, %v7861
  %v7877 = vpack.c.bf16 %v7867, %v7862
  %v7878 = vpack.c.bf16 %v7868, %v7863
  %v7879 = vpack.c.bf16 %v7869, %v7864
  %v7880 = vpack.c.bf16 %v7870, %v7865
  %s7881 = scalar_lea.vmem %s11, 32
  %v7882 = vld [vmem:[%s7881] sm:$0xf]
  %v7883 = vld [vmem:[%s7881 + $0x4] sm:$0xf]
  %v7884 = vld [vmem:[%s7881 + $0x8] sm:$0xf]
  %v7885 = vld [vmem:[%s7881 + $0xc] sm:$0xf]
  %v7890 = vunpack.c.l.b16 %v7882
  %v7891 = vunpack.c.l.b16 %v7883
  %v7892 = vunpack.c.l.b16 %v7884
  %v7893 = vunpack.c.l.b16 %v7885
  %v7894 = vpack.c.b16 %v7891, %v7890
  %v7895 = vpack.c.b16 %v7893, %v7892
  %7906 = vrot.lane.b32.xlu0 %v7871, 15
  %v7907 = vpop.permute.xlu0 %7906
  %7908 = vrot.lane.b32.xlu0 %v7872, 15
  %v7909 = vpop.permute.xlu0 %7908
  %7910 = vrot.lane.b32.xlu0 %v7873, 15
  %v7911 = vpop.permute.xlu0 %7910
  %7912 = vrot.lane.b32.xlu0 %v7874, 15
  %v7913 = vpop.permute.xlu0 %7912
  %7914 = vrot.lane.b32.xlu0 %v7875, 15
  %v7915 = vpop.permute.xlu0 %7914
  %7916 = vrot.lane.b32.xlu0 %v7876, 15
  %v7917 = vpop.permute.xlu0 %7916
  %7918 = vrot.lane.b32.xlu0 %v7877, 15
  %v7919 = vpop.permute.xlu0 %7918
  %7920 = vrot.lane.b32.xlu0 %v7878, 15
  %v7921 = vpop.permute.xlu0 %7920
  %7922 = vrot.lane.b32.xlu0 %v7879, 15
  %v7923 = vpop.permute.xlu0 %7922
  %7924 = vrot.lane.b32.xlu0 %v7880, 15
  %v7925 = vpop.permute.xlu0 %7924
  %v7926 = vsel %vm704, %v7907, %v7909
  %v7927 = vsel %vm704, %v7909, %v7911
  %v7928 = vsel %vm704, %v7911, %v7913
  %v7929 = vsel %vm704, %v7913, %v7915
  %v7930 = vsel %vm704, %v7917, %v7919
  %v7931 = vsel %vm704, %v7919, %v7921
  %v7932 = vsel %vm704, %v7921, %v7923
  %v7933 = vsel %vm704, %v7923, %v7925
  %v7943 = vsel %vm311, %v7894, 0
  %v7946 = vsel %vm311, %v7895, 0
  %7948 = vmatprep.subr.bf16.mxu0 %v7927
  %7949 = vmatpush1.bf16.msra.mxu0 %v7926
  %7950 = vmatprep.subr.bf16.mxu0 %v7931
  %7951 = vmatpush1.bf16.msra.mxu0 %v7930
  %7952 = vmatprep.subr.bf16.mxu0 0
  %7953 = vmatpush1.bf16.msra.mxu0 0
  %7954 = vmatprep.subr.bf16.mxu0 0
  %7955 = vmatpush1.bf16.msra.mxu0 0
  %7956 = vmatprep.subr.bf16.mxu0 0
  %7957 = vmatpush1.bf16.msra.mxu0 0
  %7958 = vmatprep.subr.bf16.mxu0 0
  %7959 = vmatpush1.bf16.msra.mxu0 0
  %7960 = vmatprep.subr.bf16.mxu0 0
  %7961 = vmatpush1.bf16.msra.mxu0 0
  %7962 = vmatprep.subr.bf16.mxu0 0
  %7963 = vmatpush1.bf16.msra.mxu0 0
  %7964 = vmatprep.subr.bf16.mxu0 0
  %7965 = vmatpush1.bf16.msra.mxu0 0
  %7966 = vmatprep.subr.bf16.mxu0 0
  %7967 = vmatpush1.bf16.msra.mxu0 0
  %7968 = vmatprep.subr.bf16.mxu0 0
  %7969 = vmatpush1.bf16.msra.mxu0 0
  %7970 = vmatprep.subr.bf16.mxu0 0
  %7971 = vmatpush1.bf16.msra.mxu0 0
  %7972 = vmatprep.subr.bf16.mxu0 0
  %7973 = vmatpush1.bf16.msra.mxu0 0
  %7974 = vmatprep.subr.bf16.mxu0 0
  %7975 = vmatpush1.bf16.msra.mxu0 0
  %7976 = vmatprep.subr.bf16.mxu0 0
  %7977 = vmatpush1.bf16.msra.mxu0 0
  %7978 = vmatprep.subr.bf16.mxu0 0
  %7979 = vmatpush1.bf16.msra.mxu0 0
  %7980 = vmatprep.mubr.bf16.mxu0 0
  %7981 = vmatmul.mubr.bf16.gmra.mrb[0].mxu0 %v7943
  %v7982 = vpop.f32.mrb[0].mxu0
  %v7983 = vadd.f32 0.0, %v7982
  %v7984 = vpop.f32.mrb[0].mxu0
  %v7985 = vadd.f32 0.0, %v7984
  %v7986 = vpop.f32.mrb[0].mxu0
  %v7987 = vadd.f32 0.0, %v7986
  %v7988 = vpop.f32.mrb[0].mxu0
  %v7989 = vadd.f32 0.0, %v7988
  %7990 = vmatprep.mubr.bf16.mxu0 0
  %7991 = vmatmul.mubr.bf16.gmra.mrb[0].mxu0 %v7946
  %v7992 = vpop.f32.mrb[0].mxu0
  %v7993 = vadd.f32 0.0, %v7992
  %v7994 = vpop.f32.mrb[0].mxu0
  %v7995 = vadd.f32 0.0, %v7994
  %v7996 = vpop.f32.mrb[0].mxu0
  %v7997 = vadd.f32 0.0, %v7996
  %v7998 = vpop.f32.mrb[0].mxu0
  %v7999 = vadd.f32 0.0, %v7998
  %8000 = vdwg.mxu0
  %8001 = vmatprep.subr.bf16.mxu0 %v7929
  %8002 = vmatpush1.bf16.msra.mxu0 %v7928
  %8003 = vmatprep.subr.bf16.mxu0 %v7933
  %8004 = vmatpush1.bf16.msra.mxu0 %v7932
  %8005 = vmatprep.subr.bf16.mxu0 0
  %8006 = vmatpush1.bf16.msra.mxu0 0
  %8007 = vmatprep.subr.bf16.mxu0 0
  %8008 = vmatpush1.bf16.msra.mxu0 0
  %8009 = vmatprep.subr.bf16.mxu0 0
  %8010 = vmatpush1.bf16.msra.mxu0 0
  %8011 = vmatprep.subr.bf16.mxu0 0
  %8012 = vmatpush1.bf16.msra.mxu0 0
  %8013 = vmatprep.subr.bf16.mxu0 0
  %8014 = vmatpush1.bf16.msra.mxu0 0
  %8015 = vmatprep.subr.bf16.mxu0 0
  %8016 = vmatpush1.bf16.msra.mxu0 0
  %8017 = vmatprep.subr.bf16.mxu0 0
  %8018 = vmatpush1.bf16.msra.mxu0 0
  %8019 = vmatprep.subr.bf16.mxu0 0
  %8020 = vmatpush1.bf16.msra.mxu0 0
  %8021 = vmatprep.subr.bf16.mxu0 0
  %8022 = vmatpush1.bf16.msra.mxu0 0
  %8023 = vmatprep.subr.bf16.mxu0 0
  %8024 = vmatpush1.bf16.msra.mxu0 0
  %8025 = vmatprep.subr.bf16.mxu0 0
  %8026 = vmatpush1.bf16.msra.mxu0 0
  %8027 = vmatprep.subr.bf16.mxu0 0
  %8028 = vmatpush1.bf16.msra.mxu0 0
  %8029 = vmatprep.subr.bf16.mxu0 0
  %8030 = vmatpush1.bf16.msra.mxu0 0
  %8031 = vmatprep.subr.bf16.mxu0 0
  %8032 = vmatpush1.bf16.msra.mxu0 0
  %8033 = vmatprep.mubr.bf16.mxu0 0
  %8034 = vmatmul.mubr.bf16.gmra.mrb[0].mxu0 %v7943
  %v8035 = vpop.f32.mrb[0].mxu0
  %v8036 = vadd.f32 0.0, %v8035
  %v8037 = vpop.f32.mrb[0].mxu0
  %v8038 = vadd.f32 0.0, %v8037
  %v8039 = vpop.f32.mrb[0].mxu0
  %v8040 = vadd.f32 0.0, %v8039
  %v8041 = vpop.f32.mrb[0].mxu0
  %v8042 = vadd.f32 0.0, %v8041
  %8043 = vmatprep.mubr.bf16.mxu0 0
  %8044 = vmatmul.mubr.bf16.gmra.mrb[0].mxu0 %v7946
  %v8045 = vpop.f32.mrb[0].mxu0
  %v8046 = vadd.f32 0.0, %v8045
  %v8047 = vpop.f32.mrb[0].mxu0
  %v8048 = vadd.f32 0.0, %v8047
  %v8049 = vpop.f32.mrb[0].mxu0
  %v8050 = vadd.f32 0.0, %v8049
  %v8051 = vpop.f32.mrb[0].mxu0
  %v8052 = vadd.f32 0.0, %v8051
  %8053 = vdwg.mxu0
  %v8054 = vadd.f32 %v7746, %v7983
  %v8055 = vadd.f32 %v7748, %v7985
  %v8056 = vadd.f32 %v7799, %v8036
  %v8057 = vadd.f32 %v7801, %v8038
  %v8058 = vadd.f32 %v7750, %v7987
  %v8059 = vadd.f32 %v7752, %v7989
  %v8060 = vadd.f32 %v7803, %v8040
  %v8061 = vadd.f32 %v7805, %v8042
  %v8062 = vadd.f32 %v7756, %v7993
  %v8063 = vadd.f32 %v7758, %v7995
  %v8064 = vadd.f32 %v7809, %v8046
  %v8065 = vadd.f32 %v7811, %v8048
  %v8066 = vadd.f32 %v7760, %v7997
  %v8067 = vadd.f32 %v7762, %v7999
  %v8068 = vadd.f32 %v7813, %v8050
  %v8069 = vadd.f32 %v7815, %v8052
  %v8070 = vld [vmem:[%s849] sm:$0xf]
  %v8072 = vlaneseq
  %v8073 = vshrl.u32 %v8072, 7
  %v8074 = vsub.s32 0, %v8073
  %v8075 = vrot.slane %v8070, %v8074
  %v8076 = vlaneseq
  %v8077 = vshrl.u32 %v8076, 7
  %v8078 = vsub.s32 1, %v8077
  %v8079 = vrot.slane %v8070, %v8078
  %v8080 = vlaneseq
  %v8081 = vshrl.u32 %v8080, 7
  %v8082 = vsub.s32 2, %v8081
  %v8083 = vrot.slane %v8070, %v8082
  %v8084 = vlaneseq
  %v8085 = vshrl.u32 %v8084, 7
  %v8086 = vsub.s32 3, %v8085
  %v8087 = vrot.slane %v8070, %v8086
  %8088 = vrot.lane.b32.xlu0 %v8075, 127
  %v8089 = vpop.permute.xlu0 %8088
  %8090 = vrot.lane.b32.xlu0 %v8079, 127
  %v8091 = vpop.permute.xlu0 %8090
  %8092 = vrot.lane.b32.xlu0 %v8083, 127
  %v8093 = vpop.permute.xlu0 %8092
  %8094 = vrot.lane.b32.xlu0 %v8087, 127
  %v8095 = vpop.permute.xlu0 %8094
  %v8096 = vsel %vm876, %v8089, %v8091
  %v8097 = vsel %vm876, %v8091, %v8093
  %v8098 = vsel %vm876, %v8093, %v8095
  %v8104 = vmul.f32 %v7324, %v8089
  %v8105 = vmul.f32 %v7325, %v8096
  %v8106 = vmul.f32 %v7326, %v8097
  %v8107 = vmul.f32 %v7327, %v8098
  %v8108 = vmul.f32 %v7328, %v8095
  %v8109 = vmul.f32 %v7329, %v8089
  %v8110 = vmul.f32 %v7330, %v8096
  %v8111 = vmul.f32 %v7331, %v8097
  %v8112 = vmul.f32 %v7332, %v8098
  %v8113 = vmul.f32 %v7333, %v8095
  %v8114 = vmul.f32 %v7334, %v8089
  %v8115 = vmul.f32 %v7335, %v8096
  %v8116 = vmul.f32 %v7336, %v8097
  %v8117 = vmul.f32 %v7337, %v8098
  %v8118 = vmul.f32 %v7338, %v8095
  %v8119 = vmul.f32 %v7339, %v8089
  %v8120 = vmul.f32 %v7340, %v8096
  %v8121 = vmul.f32 %v7341, %v8097
  %v8122 = vmul.f32 %v7342, %v8098
  %v8123 = vmul.f32 %v7343, %v8095
  %v8124 = vpack.c.bf16 %v8109, %v8104
  %v8125 = vpack.c.bf16 %v8110, %v8105
  %v8126 = vpack.c.bf16 %v8111, %v8106
  %v8127 = vpack.c.bf16 %v8112, %v8107
  %v8128 = vpack.c.bf16 %v8113, %v8108
  %v8129 = vpack.c.bf16 %v8119, %v8114
  %v8130 = vpack.c.bf16 %v8120, %v8115
  %v8131 = vpack.c.bf16 %v8121, %v8116
  %v8132 = vpack.c.bf16 %v8122, %v8117
  %v8133 = vpack.c.bf16 %v8123, %v8118
  %s8134 = scalar_lea.vmem %s11, 48
  %v8135 = vld [vmem:[%s8134] sm:$0xf]
  %v8136 = vld [vmem:[%s8134 + $0x4] sm:$0xf]
  %v8137 = vld [vmem:[%s8134 + $0x8] sm:$0xf]
  %v8138 = vld [vmem:[%s8134 + $0xc] sm:$0xf]
  %v8143 = vunpack.c.l.b16 %v8135
  %v8144 = vunpack.c.l.b16 %v8136
  %v8145 = vunpack.c.l.b16 %v8137
  %v8146 = vunpack.c.l.b16 %v8138
  %v8147 = vpack.c.b16 %v8144, %v8143
  %v8148 = vpack.c.b16 %v8146, %v8145
  %8159 = vrot.lane.b32.xlu0 %v8124, 1
  %v8160 = vpop.permute.xlu0 %8159
  %8161 = vrot.lane.b32.xlu0 %v8125, 1
  %v8162 = vpop.permute.xlu0 %8161
  %8163 = vrot.lane.b32.xlu0 %v8126, 1
  %v8164 = vpop.permute.xlu0 %8163
  %8165 = vrot.lane.b32.xlu0 %v8127, 1
  %v8166 = vpop.permute.xlu0 %8165
  %8167 = vrot.lane.b32.xlu0 %v8128, 1
  %v8168 = vpop.permute.xlu0 %8167
  %8169 = vrot.lane.b32.xlu0 %v8129, 1
  %v8170 = vpop.permute.xlu0 %8169
  %8171 = vrot.lane.b32.xlu0 %v8130, 1
  %v8172 = vpop.permute.xlu0 %8171
  %8173 = vrot.lane.b32.xlu0 %v8131, 1
  %v8174 = vpop.permute.xlu0 %8173
  %8175 = vrot.lane.b32.xlu0 %v8132, 1
  %v8176 = vpop.permute.xlu0 %8175
  %8177 = vrot.lane.b32.xlu0 %v8133, 1
  %v8178 = vpop.permute.xlu0 %8177
  %v8179 = vsel %vm960, %v8160, %v8162
  %v8180 = vsel %vm960, %v8162, %v8164
  %v8181 = vsel %vm960, %v8164, %v8166
  %v8182 = vsel %vm960, %v8166, %v8168
  %v8183 = vsel %vm960, %v8170, %v8172
  %v8184 = vsel %vm960, %v8172, %v8174
  %v8185 = vsel %vm960, %v8174, %v8176
  %v8186 = vsel %vm960, %v8176, %v8178
  %v8196 = vsel %vm311, %v8147, 0
  %v8199 = vsel %vm311, %v8148, 0
  %8201 = vmatprep.subr.bf16.mxu0 %v8180
  %8202 = vmatpush1.bf16.msra.mxu0 %v8179
  %8203 = vmatprep.subr.bf16.mxu0 %v8184
  %8204 = vmatpush1.bf16.msra.mxu0 %v8183
  %8205 = vmatprep.subr.bf16.mxu0 0
  %8206 = vmatpush1.bf16.msra.mxu0 0
  %8207 = vmatprep.subr.bf16.mxu0 0
  %8208 = vmatpush1.bf16.msra.mxu0 0
  %8209 = vmatprep.subr.bf16.mxu0 0
  %8210 = vmatpush1.bf16.msra.mxu0 0
  %8211 = vmatprep.subr.bf16.mxu0 0
  %8212 = vmatpush1.bf16.msra.mxu0 0
  %8213 = vmatprep.subr.bf16.mxu0 0
  %8214 = vmatpush1.bf16.msra.mxu0 0
  %8215 = vmatprep.subr.bf16.mxu0 0
  %8216 = vmatpush1.bf16.msra.mxu0 0
  %8217 = vmatprep.subr.bf16.mxu0 0
  %8218 = vmatpush1.bf16.msra.mxu0 0
  %8219 = vmatprep.subr.bf16.mxu0 0
  %8220 = vmatpush1.bf16.msra.mxu0 0
  %8221 = vmatprep.subr.bf16.mxu0 0
  %8222 = vmatpush1.bf16.msra.mxu0 0
  %8223 = vmatprep.subr.bf16.mxu0 0
  %8224 = vmatpush1.bf16.msra.mxu0 0
  %8225 = vmatprep.subr.bf16.mxu0 0
  %8226 = vmatpush1.bf16.msra.mxu0 0
  %8227 = vmatprep.subr.bf16.mxu0 0
  %8228 = vmatpush1.bf16.msra.mxu0 0
  %8229 = vmatprep.subr.bf16.mxu0 0
  %8230 = vmatpush1.bf16.msra.mxu0 0
  %8231 = vmatprep.subr.bf16.mxu0 0
  %8232 = vmatpush1.bf16.msra.mxu0 0
  %8233 = vmatprep.mubr.bf16.mxu0 0
  %8234 = vmatmul.mubr.bf16.gmra.mrb[0].mxu0 %v8196
  %v8235 = vpop.f32.mrb[0].mxu0
  %v8236 = vadd.f32 0.0, %v8235
  %v8237 = vpop.f32.mrb[0].mxu0
  %v8238 = vadd.f32 0.0, %v8237
  %v8239 = vpop.f32.mrb[0].mxu0
  %v8240 = vadd.f32 0.0, %v8239
  %v8241 = vpop.f32.mrb[0].mxu0
  %v8242 = vadd.f32 0.0, %v8241
  %8243 = vmatprep.mubr.bf16.mxu0 0
  %8244 = vmatmul.mubr.bf16.gmra.mrb[0].mxu0 %v8199
  %v8245 = vpop.f32.mrb[0].mxu0
  %v8246 = vadd.f32 0.0, %v8245
  %v8247 = vpop.f32.mrb[0].mxu0
  %v8248 = vadd.f32 0.0, %v8247
  %v8249 = vpop.f32.mrb[0].mxu0
  %v8250 = vadd.f32 0.0, %v8249
  %v8251 = vpop.f32.mrb[0].mxu0
  %v8252 = vadd.f32 0.0, %v8251
  %8253 = vdwg.mxu0
  %8254 = vmatprep.subr.bf16.mxu0 %v8182
  %8255 = vmatpush1.bf16.msra.mxu0 %v8181
  %8256 = vmatprep.subr.bf16.mxu0 %v8186
  %8257 = vmatpush1.bf16.msra.mxu0 %v8185
  %8258 = vmatprep.subr.bf16.mxu0 0
  %8259 = vmatpush1.bf16.msra.mxu0 0
  %8260 = vmatprep.subr.bf16.mxu0 0
  %8261 = vmatpush1.bf16.msra.mxu0 0
  %8262 = vmatprep.subr.bf16.mxu0 0
  %8263 = vmatpush1.bf16.msra.mxu0 0
  %8264 = vmatprep.subr.bf16.mxu0 0
  %8265 = vmatpush1.bf16.msra.mxu0 0
  %8266 = vmatprep.subr.bf16.mxu0 0
  %8267 = vmatpush1.bf16.msra.mxu0 0
  %8268 = vmatprep.subr.bf16.mxu0 0
  %8269 = vmatpush1.bf16.msra.mxu0 0
  %8270 = vmatprep.subr.bf16.mxu0 0
  %8271 = vmatpush1.bf16.msra.mxu0 0
  %8272 = vmatprep.subr.bf16.mxu0 0
  %8273 = vmatpush1.bf16.msra.mxu0 0
  %8274 = vmatprep.subr.bf16.mxu0 0
  %8275 = vmatpush1.bf16.msra.mxu0 0
  %8276 = vmatprep.subr.bf16.mxu0 0
  %8277 = vmatpush1.bf16.msra.mxu0 0
  %8278 = vmatprep.subr.bf16.mxu0 0
  %8279 = vmatpush1.bf16.msra.mxu0 0
  %8280 = vmatprep.subr.bf16.mxu0 0
  %8281 = vmatpush1.bf16.msra.mxu0 0
  %8282 = vmatprep.subr.bf16.mxu0 0
  %8283 = vmatpush1.bf16.msra.mxu0 0
  %8284 = vmatprep.subr.bf16.mxu0 0
  %8285 = vmatpush1.bf16.msra.mxu0 0
  %8286 = vmatprep.mubr.bf16.mxu0 0
  %8287 = vmatmul.mubr.bf16.gmra.mrb[0].mxu0 %v8196
  %v8288 = vpop.f32.mrb[0].mxu0
  %v8289 = vadd.f32 0.0, %v8288
  %v8290 = vpop.f32.mrb[0].mxu0
  %v8291 = vadd.f32 0.0, %v8290
  %v8292 = vpop.f32.mrb[0].mxu0
  %v8293 = vadd.f32 0.0, %v8292
  %v8294 = vpop.f32.mrb[0].mxu0
  %v8295 = vadd.f32 0.0, %v8294
  %8296 = vmatprep.mubr.bf16.mxu0 0
  %8297 = vmatmul.mubr.bf16.gmra.mrb[0].mxu0 %v8199
  %v8298 = vpop.f32.mrb[0].mxu0
  %v8299 = vadd.f32 0.0, %v8298
  %v8300 = vpop.f32.mrb[0].mxu0
  %v8301 = vadd.f32 0.0, %v8300
  %v8302 = vpop.f32.mrb[0].mxu0
  %v8303 = vadd.f32 0.0, %v8302
  %v8304 = vpop.f32.mrb[0].mxu0
  %v8305 = vadd.f32 0.0, %v8304
  %8306 = vdwg.mxu0
  %v8307 = vadd.f32 %v8054, %v8236
  %v8308 = vadd.f32 %v8055, %v8238
  %v8309 = vadd.f32 %v8056, %v8289
  %v8310 = vadd.f32 %v8057, %v8291
  %v8311 = vadd.f32 %v8058, %v8240
  %v8312 = vadd.f32 %v8059, %v8242
  %v8313 = vadd.f32 %v8060, %v8293
  %v8314 = vadd.f32 %v8061, %v8295
  %v8315 = vadd.f32 %v8062, %v8246
  %v8316 = vadd.f32 %v8063, %v8248
  %v8317 = vadd.f32 %v8064, %v8299
  %v8318 = vadd.f32 %v8065, %v8301
  %v8319 = vadd.f32 %v8066, %v8250
  %v8320 = vadd.f32 %v8067, %v8252
  %v8321 = vadd.f32 %v8068, %v8303
  %v8322 = vadd.f32 %v8069, %v8305
  %v8323 = vpack.c.bf16 %v7330, %v7325
  %v8324 = vpack.c.bf16 %v7331, %v7326
  %v8325 = vpack.c.bf16 %v7332, %v7327
  %v8326 = vpack.c.bf16 %v7333, %v7328
  %v8327 = vpack.c.bf16 %v7340, %v7335
  %v8328 = vpack.c.bf16 %v7341, %v7336
  %v8329 = vpack.c.bf16 %v7342, %v7337
  %v8330 = vpack.c.bf16 %v7343, %v7338
  %s8331 = scalar_lea.vmem %s11, 64
  %v8332 = vld [vmem:[%s8331] sm:$0xf]
  %v8333 = vld [vmem:[%s8331 + $0x4] sm:$0xf]
  %v8334 = vld [vmem:[%s8331 + $0x8] sm:$0xf]
  %v8335 = vld [vmem:[%s8331 + $0xc] sm:$0xf]
  %v8340 = vunpack.c.l.b16 %v8332
  %v8341 = vunpack.c.l.b16 %v8333
  %v8342 = vunpack.c.l.b16 %v8334
  %v8343 = vunpack.c.l.b16 %v8335
  %v8344 = vpack.c.b16 %v8341, %v8340
  %v8345 = vpack.c.b16 %v8343, %v8342
  %v8347 = vsel %vm311, %v8344, 0
  %v8350 = vsel %vm311, %v8345, 0
  %8352 = vmatprep.subr.bf16.mxu0 %v8324
  %8353 = vmatpush1.bf16.msra.mxu0 %v8323
  %8354 = vmatprep.subr.bf16.mxu0 %v8328
  %8355 = vmatpush1.bf16.msra.mxu0 %v8327
  %8356 = vmatprep.subr.bf16.mxu0 0
  %8357 = vmatpush1.bf16.msra.mxu0 0
  %8358 = vmatprep.subr.bf16.mxu0 0
  %8359 = vmatpush1.bf16.msra.mxu0 0
  %8360 = vmatprep.subr.bf16.mxu0 0
  %8361 = vmatpush1.bf16.msra.mxu0 0
  %8362 = vmatprep.subr.bf16.mxu0 0
  %8363 = vmatpush1.bf16.msra.mxu0 0
  %8364 = vmatprep.subr.bf16.mxu0 0
  %8365 = vmatpush1.bf16.msra.mxu0 0
  %8366 = vmatprep.subr.bf16.mxu0 0
  %8367 = vmatpush1.bf16.msra.mxu0 0
  %8368 = vmatprep.subr.bf16.mxu0 0
  %8369 = vmatpush1.bf16.msra.mxu0 0
  %8370 = vmatprep.subr.bf16.mxu0 0
  %8371 = vmatpush1.bf16.msra.mxu0 0
  %8372 = vmatprep.subr.bf16.mxu0 0
  %8373 = vmatpush1.bf16.msra.mxu0 0
  %8374 = vmatprep.subr.bf16.mxu0 0
  %8375 = vmatpush1.bf16.msra.mxu0 0
  %8376 = vmatprep.subr.bf16.mxu0 0
  %8377 = vmatpush1.bf16.msra.mxu0 0
  %8378 = vmatprep.subr.bf16.mxu0 0
  %8379 = vmatpush1.bf16.msra.mxu0 0
  %8380 = vmatprep.subr.bf16.mxu0 0
  %8381 = vmatpush1.bf16.msra.mxu0 0
  %8382 = vmatprep.subr.bf16.mxu0 0
  %8383 = vmatpush1.bf16.msra.mxu0 0
  %8384 = vmatprep.mubr.bf16.mxu0 0
  %8385 = vmatmul.mubr.bf16.gmra.mrb[0].mxu0 %v8347
  %v8386 = vpop.f32.mrb[0].mxu0
  %v8387 = vadd.f32 0.0, %v8386
  %v8388 = vpop.f32.mrb[0].mxu0
  %v8389 = vadd.f32 0.0, %v8388
  %v8390 = vpop.f32.mrb[0].mxu0
  %v8391 = vadd.f32 0.0, %v8390
  %v8392 = vpop.f32.mrb[0].mxu0
  %v8393 = vadd.f32 0.0, %v8392
  %8394 = vmatprep.mubr.bf16.mxu0 0
  %8395 = vmatmul.mubr.bf16.gmra.mrb[0].mxu0 %v8350
  %v8396 = vpop.f32.mrb[0].mxu0
  %v8397 = vadd.f32 0.0, %v8396
  %v8398 = vpop.f32.mrb[0].mxu0
  %v8399 = vadd.f32 0.0, %v8398
  %v8400 = vpop.f32.mrb[0].mxu0
  %v8401 = vadd.f32 0.0, %v8400
  %v8402 = vpop.f32.mrb[0].mxu0
  %v8403 = vadd.f32 0.0, %v8402
  %8404 = vdwg.mxu0
  %8405 = vmatprep.subr.bf16.mxu0 %v8326
  %8406 = vmatpush1.bf16.msra.mxu0 %v8325
  %8407 = vmatprep.subr.bf16.mxu0 %v8330
  %8408 = vmatpush1.bf16.msra.mxu0 %v8329
  %8409 = vmatprep.subr.bf16.mxu0 0
  %8410 = vmatpush1.bf16.msra.mxu0 0
  %8411 = vmatprep.subr.bf16.mxu0 0
  %8412 = vmatpush1.bf16.msra.mxu0 0
  %8413 = vmatprep.subr.bf16.mxu0 0
  %8414 = vmatpush1.bf16.msra.mxu0 0
  %8415 = vmatprep.subr.bf16.mxu0 0
  %8416 = vmatpush1.bf16.msra.mxu0 0
  %8417 = vmatprep.subr.bf16.mxu0 0
  %8418 = vmatpush1.bf16.msra.mxu0 0
  %8419 = vmatprep.subr.bf16.mxu0 0
  %8420 = vmatpush1.bf16.msra.mxu0 0
  %8421 = vmatprep.subr.bf16.mxu0 0
  %8422 = vmatpush1.bf16.msra.mxu0 0
  %8423 = vmatprep.subr.bf16.mxu0 0
  %8424 = vmatpush1.bf16.msra.mxu0 0
  %8425 = vmatprep.subr.bf16.mxu0 0
  %8426 = vmatpush1.bf16.msra.mxu0 0
  %8427 = vmatprep.subr.bf16.mxu0 0
  %8428 = vmatpush1.bf16.msra.mxu0 0
  %8429 = vmatprep.subr.bf16.mxu0 0
  %8430 = vmatpush1.bf16.msra.mxu0 0
  %8431 = vmatprep.subr.bf16.mxu0 0
  %8432 = vmatpush1.bf16.msra.mxu0 0
  %8433 = vmatprep.subr.bf16.mxu0 0
  %8434 = vmatpush1.bf16.msra.mxu0 0
  %8435 = vmatprep.subr.bf16.mxu0 0
  %8436 = vmatpush1.bf16.msra.mxu0 0
  %8437 = vmatprep.mubr.bf16.mxu0 0
  %8438 = vmatmul.mubr.bf16.gmra.mrb[0].mxu0 %v8347
  %v8439 = vpop.f32.mrb[0].mxu0
  %v8440 = vadd.f32 0.0, %v8439
  %v8441 = vpop.f32.mrb[0].mxu0
  %v8442 = vadd.f32 0.0, %v8441
  %v8443 = vpop.f32.mrb[0].mxu0
  %v8444 = vadd.f32 0.0, %v8443
  %v8445 = vpop.f32.mrb[0].mxu0
  %v8446 = vadd.f32 0.0, %v8445
  %8447 = vmatprep.mubr.bf16.mxu0 0
  %8448 = vmatmul.mubr.bf16.gmra.mrb[0].mxu0 %v8350
  %v8449 = vpop.f32.mrb[0].mxu0
  %v8450 = vadd.f32 0.0, %v8449
  %v8451 = vpop.f32.mrb[0].mxu0
  %v8452 = vadd.f32 0.0, %v8451
  %v8453 = vpop.f32.mrb[0].mxu0
  %v8454 = vadd.f32 0.0, %v8453
  %v8455 = vpop.f32.mrb[0].mxu0
  %v8456 = vadd.f32 0.0, %v8455
  %8457 = vdwg.mxu0
  %v8458 = vadd.f32 %v8307, %v8387
  %v8459 = vadd.f32 %v8308, %v8389
  %v8460 = vadd.f32 %v8309, %v8440
  %v8461 = vadd.f32 %v8310, %v8442
  %v8462 = vadd.f32 %v8311, %v8391
  %v8463 = vadd.f32 %v8312, %v8393
  %v8464 = vadd.f32 %v8313, %v8444
  %v8465 = vadd.f32 %v8314, %v8446
  %v8466 = vadd.f32 %v8315, %v8397
  %v8467 = vadd.f32 %v8316, %v8399
  %v8468 = vadd.f32 %v8317, %v8450
  %v8469 = vadd.f32 %v8318, %v8452
  %v8470 = vadd.f32 %v8319, %v8401
  %v8471 = vadd.f32 %v8320, %v8403
  %v8472 = vadd.f32 %v8321, %v8454
  %v8473 = vadd.f32 %v8322, %v8456
  %v8474 = vld [vmem:[#allocation2 + $0x8] sm:$0xff]
  %v8475 = vld [vmem:[#allocation2 + $0x10] sm:$0xff]
  %v8476 = vld [vmem:[#allocation2 + $0x18] sm:$0xff]
  %v8477 = vld [vmem:[#allocation2 + $0x20] sm:$0xff]
  %v8478 = vld [vmem:[#allocation2 + $0x28] sm:$0xff]
  %v8479 = vld [vmem:[#allocation2 + $0x38] sm:$0xff]
  %v8480 = vld [vmem:[#allocation2 + $0x40] sm:$0xff]
  %v8481 = vld [vmem:[#allocation2 + $0x48] sm:$0xff]
  %v8482 = vld [vmem:[#allocation2 + $0x50] sm:$0xff]
  %v8483 = vld [vmem:[#allocation2 + $0x58] sm:$0xff]
  %v8484 = vld [vmem:[#allocation2 + $0x68] sm:$0xff]
  %v8485 = vld [vmem:[#allocation2 + $0x70] sm:$0xff]
  %v8486 = vld [vmem:[#allocation2 + $0x78] sm:$0xff]
  %v8487 = vld [vmem:[#allocation2 + $0x80] sm:$0xff]
  %v8488 = vld [vmem:[#allocation2 + $0x88] sm:$0xff]
  %v8489 = vld [vmem:[#allocation2 + $0x98] sm:$0xff]
  %v8490 = vld [vmem:[#allocation2 + $0xa0] sm:$0xff]
  %v8491 = vld [vmem:[#allocation2 + $0xa8] sm:$0xff]
  %v8492 = vld [vmem:[#allocation2 + $0xb0] sm:$0xff]
  %v8493 = vld [vmem:[#allocation2 + $0xb8] sm:$0xff]
  %v8494 = vld [vmem:[%s1276] sm:$0xf]
  %v8496 = vlaneseq
  %v8497 = vshrl.u32 %v8496, 7
  %v8498 = vsub.s32 0, %v8497
  %v8499 = vrot.slane %v8494, %v8498
  %v8500 = vlaneseq
  %v8501 = vshrl.u32 %v8500, 7
  %v8502 = vsub.s32 1, %v8501
  %v8503 = vrot.slane %v8494, %v8502
  %v8504 = vlaneseq
  %v8505 = vshrl.u32 %v8504, 7
  %v8506 = vsub.s32 2, %v8505
  %v8507 = vrot.slane %v8494, %v8506
  %v8508 = vlaneseq
  %v8509 = vshrl.u32 %v8508, 7
  %v8510 = vsub.s32 3, %v8509
  %v8511 = vrot.slane %v8494, %v8510
  %8512 = vrot.lane.b32.xlu0 %v8499, 1
  %v8513 = vpop.permute.xlu0 %8512
  %8514 = vrot.lane.b32.xlu0 %v8503, 1
  %v8515 = vpop.permute.xlu0 %8514
  %8516 = vrot.lane.b32.xlu0 %v8507, 1
  %v8517 = vpop.permute.xlu0 %8516
  %8518 = vrot.lane.b32.xlu0 %v8511, 1
  %v8519 = vpop.permute.xlu0 %8518
  %v8520 = vsel %vm1303, %v8513, %v8515
  %v8521 = vsel %vm1303, %v8515, %v8517
  %v8522 = vsel %vm1303, %v8517, %v8519
  %v8528 = vmul.f32 %v8474, %v8513
  %v8529 = vmul.f32 %v8475, %v8520
  %v8530 = vmul.f32 %v8476, %v8521
  %v8531 = vmul.f32 %v8477, %v8522
  %v8532 = vmul.f32 %v8478, %v8519
  %v8533 = vmul.f32 %v8479, %v8513
  %v8534 = vmul.f32 %v8480, %v8520
  %v8535 = vmul.f32 %v8481, %v8521
  %v8536 = vmul.f32 %v8482, %v8522
  %v8537 = vmul.f32 %v8483, %v8519
  %v8538 = vmul.f32 %v8484, %v8513
  %v8539 = vmul.f32 %v8485, %v8520
  %v8540 = vmul.f32 %v8486, %v8521
  %v8541 = vmul.f32 %v8487, %v8522
  %v8542 = vmul.f32 %v8488, %v8519
  %v8543 = vmul.f32 %v8489, %v8513
  %v8544 = vmul.f32 %v8490, %v8520
  %v8545 = vmul.f32 %v8491, %v8521
  %v8546 = vmul.f32 %v8492, %v8522
  %v8547 = vmul.f32 %v8493, %v8519
  %v8548 = vpack.c.bf16 %v8533, %v8528
  %v8549 = vpack.c.bf16 %v8534, %v8529
  %v8550 = vpack.c.bf16 %v8535, %v8530
  %v8551 = vpack.c.bf16 %v8536, %v8531
  %v8552 = vpack.c.bf16 %v8537, %v8532
  %v8553 = vpack.c.bf16 %v8543, %v8538
  %v8554 = vpack.c.bf16 %v8544, %v8539
  %v8555 = vpack.c.bf16 %v8545, %v8540
  %v8556 = vpack.c.bf16 %v8546, %v8541
  %v8557 = vpack.c.bf16 %v8547, %v8542
  %s8558 = scalar_lea.vmem %s11, 80
  %v8559 = vld [vmem:[%s8558] sm:$0xf]
  %v8560 = vld [vmem:[%s8558 + $0x4] sm:$0xf]
  %v8561 = vld [vmem:[%s8558 + $0x8] sm:$0xf]
  %v8562 = vld [vmem:[%s8558 + $0xc] sm:$0xf]
  %v8567 = vunpack.c.l.b16 %v8559
  %v8568 = vunpack.c.l.b16 %v8560
  %v8569 = vunpack.c.l.b16 %v8561
  %v8570 = vunpack.c.l.b16 %v8562
  %v8571 = vpack.c.b16 %v8568, %v8567
  %v8572 = vpack.c.b16 %v8570, %v8569
  %8583 = vrot.lane.b32.xlu0 %v8548, 127
  %v8584 = vpop.permute.xlu0 %8583
  %8585 = vrot.lane.b32.xlu0 %v8549, 127
  %v8586 = vpop.permute.xlu0 %8585
  %8587 = vrot.lane.b32.xlu0 %v8550, 127
  %v8588 = vpop.permute.xlu0 %8587
  %8589 = vrot.lane.b32.xlu0 %v8551, 127
  %v8590 = vpop.permute.xlu0 %8589
  %8591 = vrot.lane.b32.xlu0 %v8552, 127
  %v8592 = vpop.permute.xlu0 %8591
  %8593 = vrot.lane.b32.xlu0 %v8553, 127
  %v8594 = vpop.permute.xlu0 %8593
  %8595 = vrot.lane.b32.xlu0 %v8554, 127
  %v8596 = vpop.permute.xlu0 %8595
  %8597 = vrot.lane.b32.xlu0 %v8555, 127
  %v8598 = vpop.permute.xlu0 %8597
  %8599 = vrot.lane.b32.xlu0 %v8556, 127
  %v8600 = vpop.permute.xlu0 %8599
  %8601 = vrot.lane.b32.xlu0 %v8557, 127
  %v8602 = vpop.permute.xlu0 %8601
  %v8603 = vsel %vm1387, %v8584, %v8586
  %v8604 = vsel %vm1387, %v8586, %v8588
  %v8605 = vsel %vm1387, %v8588, %v8590
  %v8606 = vsel %vm1387, %v8590, %v8592
  %v8607 = vsel %vm1387, %v8594, %v8596
  %v8608 = vsel %vm1387, %v8596, %v8598
  %v8609 = vsel %vm1387, %v8598, %v8600
  %v8610 = vsel %vm1387, %v8600, %v8602
  %v8620 = vsel %vm311, %v8571, 0
  %v8623 = vsel %vm311, %v8572, 0
  %8625 = vmatprep.subr.bf16.mxu0 %v8604
  %8626 = vmatpush1.bf16.msra.mxu0 %v8603
  %8627 = vmatprep.subr.bf16.mxu0 %v8608
  %8628 = vmatpush1.bf16.msra.mxu0 %v8607
  %8629 = vmatprep.subr.bf16.mxu0 0
  %8630 = vmatpush1.bf16.msra.mxu0 0
  %8631 = vmatprep.subr.bf16.mxu0 0
  %8632 = vmatpush1.bf16.msra.mxu0 0
  %8633 = vmatprep.subr.bf16.mxu0 0
  %8634 = vmatpush1.bf16.msra.mxu0 0
  %8635 = vmatprep.subr.bf16.mxu0 0
  %8636 = vmatpush1.bf16.msra.mxu0 0
  %8637 = vmatprep.subr.bf16.mxu0 0
  %8638 = vmatpush1.bf16.msra.mxu0 0
  %8639 = vmatprep.subr.bf16.mxu0 0
  %8640 = vmatpush1.bf16.msra.mxu0 0
  %8641 = vmatprep.subr.bf16.mxu0 0
  %8642 = vmatpush1.bf16.msra.mxu0 0
  %8643 = vmatprep.subr.bf16.mxu0 0
  %8644 = vmatpush1.bf16.msra.mxu0 0
  %8645 = vmatprep.subr.bf16.mxu0 0
  %8646 = vmatpush1.bf16.msra.mxu0 0
  %8647 = vmatprep.subr.bf16.mxu0 0
  %8648 = vmatpush1.bf16.msra.mxu0 0
  %8649 = vmatprep.subr.bf16.mxu0 0
  %8650 = vmatpush1.bf16.msra.mxu0 0
  %8651 = vmatprep.subr.bf16.mxu0 0
  %8652 = vmatpush1.bf16.msra.mxu0 0
  %8653 = vmatprep.subr.bf16.mxu0 0
  %8654 = vmatpush1.bf16.msra.mxu0 0
  %8655 = vmatprep.subr.bf16.mxu0 0
  %8656 = vmatpush1.bf16.msra.mxu0 0
  %8657 = vmatprep.mubr.bf16.mxu0 0
  %8658 = vmatmul.mubr.bf16.gmra.mrb[0].mxu0 %v8620
  %v8659 = vpop.f32.mrb[0].mxu0
  %v8660 = vadd.f32 0.0, %v8659
  %v8661 = vpop.f32.mrb[0].mxu0
  %v8662 = vadd.f32 0.0, %v8661
  %v8663 = vpop.f32.mrb[0].mxu0
  %v8664 = vadd.f32 0.0, %v8663
  %v8665 = vpop.f32.mrb[0].mxu0
  %v8666 = vadd.f32 0.0, %v8665
  %8667 = vmatprep.mubr.bf16.mxu0 0
  %8668 = vmatmul.mubr.bf16.gmra.mrb[0].mxu0 %v8623
  %v8669 = vpop.f32.mrb[0].mxu0
  %v8670 = vadd.f32 0.0, %v8669
  %v8671 = vpop.f32.mrb[0].mxu0
  %v8672 = vadd.f32 0.0, %v8671
  %v8673 = vpop.f32.mrb[0].mxu0
  %v8674 = vadd.f32 0.0, %v8673
  %v8675 = vpop.f32.mrb[0].mxu0
  %v8676 = vadd.f32 0.0, %v8675
  %8677 = vdwg.mxu0
  %8678 = vmatprep.subr.bf16.mxu0 %v8606
  %8679 = vmatpush1.bf16.msra.mxu0 %v8605
  %8680 = vmatprep.subr.bf16.mxu0 %v8610
  %8681 = vmatpush1.bf16.msra.mxu0 %v8609
  %8682 = vmatprep.subr.bf16.mxu0 0
  %8683 = vmatpush1.bf16.msra.mxu0 0
  %8684 = vmatprep.subr.bf16.mxu0 0
  %8685 = vmatpush1.bf16.msra.mxu0 0
  %8686 = vmatprep.subr.bf16.mxu0 0
  %8687 = vmatpush1.bf16.msra.mxu0 0
  %8688 = vmatprep.subr.bf16.mxu0 0
  %8689 = vmatpush1.bf16.msra.mxu0 0
  %8690 = vmatprep.subr.bf16.mxu0 0
  %8691 = vmatpush1.bf16.msra.mxu0 0
  %8692 = vmatprep.subr.bf16.mxu0 0
  %8693 = vmatpush1.bf16.msra.mxu0 0
  %8694 = vmatprep.subr.bf16.mxu0 0
  %8695 = vmatpush1.bf16.msra.mxu0 0
  %8696 = vmatprep.subr.bf16.mxu0 0
  %8697 = vmatpush1.bf16.msra.mxu0 0
  %8698 = vmatprep.subr.bf16.mxu0 0
  %8699 = vmatpush1.bf16.msra.mxu0 0
  %8700 = vmatprep.subr.bf16.mxu0 0
  %8701 = vmatpush1.bf16.msra.mxu0 0
  %8702 = vmatprep.subr.bf16.mxu0 0
  %8703 = vmatpush1.bf16.msra.mxu0 0
  %8704 = vmatprep.subr.bf16.mxu0 0
  %8705 = vmatpush1.bf16.msra.mxu0 0
  %8706 = vmatprep.subr.bf16.mxu0 0
  %8707 = vmatpush1.bf16.msra.mxu0 0
  %8708 = vmatprep.subr.bf16.mxu0 0
  %8709 = vmatpush1.bf16.msra.mxu0 0
  %8710 = vmatprep.mubr.bf16.mxu0 0
  %8711 = vmatmul.mubr.bf16.gmra.mrb[0].mxu0 %v8620
  %v8712 = vpop.f32.mrb[0].mxu0
  %v8713 = vadd.f32 0.0, %v8712
  %v8714 = vpop.f32.mrb[0].mxu0
  %v8715 = vadd.f32 0.0, %v8714
  %v8716 = vpop.f32.mrb[0].mxu0
  %v8717 = vadd.f32 0.0, %v8716
  %v8718 = vpop.f32.mrb[0].mxu0
  %v8719 = vadd.f32 0.0, %v8718
  %8720 = vmatprep.mubr.bf16.mxu0 0
  %8721 = vmatmul.mubr.bf16.gmra.mrb[0].mxu0 %v8623
  %v8722 = vpop.f32.mrb[0].mxu0
  %v8723 = vadd.f32 0.0, %v8722
  %v8724 = vpop.f32.mrb[0].mxu0
  %v8725 = vadd.f32 0.0, %v8724
  %v8726 = vpop.f32.mrb[0].mxu0
  %v8727 = vadd.f32 0.0, %v8726
  %v8728 = vpop.f32.mrb[0].mxu0
  %v8729 = vadd.f32 0.0, %v8728
  %8730 = vdwg.mxu0
  %v8731 = vadd.f32 %v8458, %v8660
  %v8732 = vadd.f32 %v8459, %v8662
  %v8733 = vadd.f32 %v8460, %v8713
  %v8734 = vadd.f32 %v8461, %v8715
  %v8735 = vadd.f32 %v8462, %v8664
  %v8736 = vadd.f32 %v8463, %v8666
  %v8737 = vadd.f32 %v8464, %v8717
  %v8738 = vadd.f32 %v8465, %v8719
  %v8739 = vadd.f32 %v8466, %v8670
  %v8740 = vadd.f32 %v8467, %v8672
  %v8741 = vadd.f32 %v8468, %v8723
  %v8742 = vadd.f32 %v8469, %v8725
  %v8743 = vadd.f32 %v8470, %v8674
  %v8744 = vadd.f32 %v8471, %v8676
  %v8745 = vadd.f32 %v8472, %v8727
  %v8746 = vadd.f32 %v8473, %v8729
  %v8747 = vld [vmem:[%s1532] sm:$0xf]
  %v8749 = vlaneseq
  %v8750 = vshrl.u32 %v8749, 7
  %v8751 = vsub.s32 0, %v8750
  %v8752 = vrot.slane %v8747, %v8751
  %v8753 = vlaneseq
  %v8754 = vshrl.u32 %v8753, 7
  %v8755 = vsub.s32 1, %v8754
  %v8756 = vrot.slane %v8747, %v8755
  %v8757 = vlaneseq
  %v8758 = vshrl.u32 %v8757, 7
  %v8759 = vsub.s32 2, %v8758
  %v8760 = vrot.slane %v8747, %v8759
  %v8761 = vlaneseq
  %v8762 = vshrl.u32 %v8761, 7
  %v8763 = vsub.s32 3, %v8762
  %v8764 = vrot.slane %v8747, %v8763
  %8765 = vrot.lane.b32.xlu0 %v8752, 15
  %v8766 = vpop.permute.xlu0 %8765
  %8767 = vrot.lane.b32.xlu0 %v8756, 15
  %v8768 = vpop.permute.xlu0 %8767
  %8769 = vrot.lane.b32.xlu0 %v8760, 15
  %v8770 = vpop.permute.xlu0 %8769
  %8771 = vrot.lane.b32.xlu0 %v8764, 15
  %v8772 = vpop.permute.xlu0 %8771
  %v8773 = vsel %vm1559, %v8766, %v8768
  %v8774 = vsel %vm1559, %v8768, %v8770
  %v8775 = vsel %vm1559, %v8770, %v8772
  %v8781 = vmul.f32 %v8474, %v8766
  %v8782 = vmul.f32 %v8475, %v8773
  %v8783 = vmul.f32 %v8476, %v8774
  %v8784 = vmul.f32 %v8477, %v8775
  %v8785 = vmul.f32 %v8478, %v8772
  %v8786 = vmul.f32 %v8479, %v8766
  %v8787 = vmul.f32 %v8480, %v8773
  %v8788 = vmul.f32 %v8481, %v8774
  %v8789 = vmul.f32 %v8482, %v8775
  %v8790 = vmul.f32 %v8483, %v8772
  %v8791 = vmul.f32 %v8484, %v8766
  %v8792 = vmul.f32 %v8485, %v8773
  %v8793 = vmul.f32 %v8486, %v8774
  %v8794 = vmul.f32 %v8487, %v8775
  %v8795 = vmul.f32 %v8488, %v8772
  %v8796 = vmul.f32 %v8489, %v8766
  %v8797 = vmul.f32 %v8490, %v8773
  %v8798 = vmul.f32 %v8491, %v8774
  %v8799 = vmul.f32 %v8492, %v8775
  %v8800 = vmul.f32 %v8493, %v8772
  %v8801 = vpack.c.bf16 %v8786, %v8781
  %v8802 = vpack.c.bf16 %v8787, %v8782
  %v8803 = vpack.c.bf16 %v8788, %v8783
  %v8804 = vpack.c.bf16 %v8789, %v8784
  %v8805 = vpack.c.bf16 %v8790, %v8785
  %v8806 = vpack.c.bf16 %v8796, %v8791
  %v8807 = vpack.c.bf16 %v8797, %v8792
  %v8808 = vpack.c.bf16 %v8798, %v8793
  %v8809 = vpack.c.bf16 %v8799, %v8794
  %v8810 = vpack.c.bf16 %v8800, %v8795
  %s8811 = scalar_lea.vmem %s11, 96
  %v8812 = vld [vmem:[%s8811] sm:$0xf]
  %v8813 = vld [vmem:[%s8811 + $0x4] sm:$0xf]
  %v8814 = vld [vmem:[%s8811 + $0x8] sm:$0xf]
  %v8815 = vld [vmem:[%s8811 + $0xc] sm:$0xf]
  %v8820 = vunpack.c.l.b16 %v8812
  %v8821 = vunpack.c.l.b16 %v8813
  %v8822 = vunpack.c.l.b16 %v8814
  %v8823 = vunpack.c.l.b16 %v8815
  %v8824 = vpack.c.b16 %v8821, %v8820
  %v8825 = vpack.c.b16 %v8823, %v8822
  %8836 = vrot.lane.b32.xlu0 %v8801, 113
  %v8837 = vpop.permute.xlu0 %8836
  %8838 = vrot.lane.b32.xlu0 %v8802, 113
  %v8839 = vpop.permute.xlu0 %8838
  %8840 = vrot.lane.b32.xlu0 %v8803, 113
  %v8841 = vpop.permute.xlu0 %8840
  %8842 = vrot.lane.b32.xlu0 %v8804, 113
  %v8843 = vpop.permute.xlu0 %8842
  %8844 = vrot.lane.b32.xlu0 %v8805, 113
  %v8845 = vpop.permute.xlu0 %8844
  %8846 = vrot.lane.b32.xlu0 %v8806, 113
  %v8847 = vpop.permute.xlu0 %8846
  %8848 = vrot.lane.b32.xlu0 %v8807, 113
  %v8849 = vpop.permute.xlu0 %8848
  %8850 = vrot.lane.b32.xlu0 %v8808, 113
  %v8851 = vpop.permute.xlu0 %8850
  %8852 = vrot.lane.b32.xlu0 %v8809, 113
  %v8853 = vpop.permute.xlu0 %8852
  %8854 = vrot.lane.b32.xlu0 %v8810, 113
  %v8855 = vpop.permute.xlu0 %8854
  %v8856 = vsel %vm1643, %v8837, %v8839
  %v8857 = vsel %vm1643, %v8839, %v8841
  %v8858 = vsel %vm1643, %v8841, %v8843
  %v8859 = vsel %vm1643, %v8843, %v8845
  %v8860 = vsel %vm1643, %v8847, %v8849
  %v8861 = vsel %vm1643, %v8849, %v8851
  %v8862 = vsel %vm1643, %v8851, %v8853
  %v8863 = vsel %vm1643, %v8853, %v8855
  %v8873 = vsel %vm311, %v8824, 0
  %v8876 = vsel %vm311, %v8825, 0
  %8878 = vmatprep.subr.bf16.mxu0 %v8857
  %8879 = vmatpush1.bf16.msra.mxu0 %v8856
  %8880 = vmatprep.subr.bf16.mxu0 %v8861
  %8881 = vmatpush1.bf16.msra.mxu0 %v8860
  %8882 = vmatprep.subr.bf16.mxu0 0
  %8883 = vmatpush1.bf16.msra.mxu0 0
  %8884 = vmatprep.subr.bf16.mxu0 0
  %8885 = vmatpush1.bf16.msra.mxu0 0
  %8886 = vmatprep.subr.bf16.mxu0 0
  %8887 = vmatpush1.bf16.msra.mxu0 0
  %8888 = vmatprep.subr.bf16.mxu0 0
  %8889 = vmatpush1.bf16.msra.mxu0 0
  %8890 = vmatprep.subr.bf16.mxu0 0
  %8891 = vmatpush1.bf16.msra.mxu0 0
  %8892 = vmatprep.subr.bf16.mxu0 0
  %8893 = vmatpush1.bf16.msra.mxu0 0
  %8894 = vmatprep.subr.bf16.mxu0 0
  %8895 = vmatpush1.bf16.msra.mxu0 0
  %8896 = vmatprep.subr.bf16.mxu0 0
  %8897 = vmatpush1.bf16.msra.mxu0 0
  %8898 = vmatprep.subr.bf16.mxu0 0
  %8899 = vmatpush1.bf16.msra.mxu0 0
  %8900 = vmatprep.subr.bf16.mxu0 0
  %8901 = vmatpush1.bf16.msra.mxu0 0
  %8902 = vmatprep.subr.bf16.mxu0 0
  %8903 = vmatpush1.bf16.msra.mxu0 0
  %8904 = vmatprep.subr.bf16.mxu0 0
  %8905 = vmatpush1.bf16.msra.mxu0 0
  %8906 = vmatprep.subr.bf16.mxu0 0
  %8907 = vmatpush1.bf16.msra.mxu0 0
  %8908 = vmatprep.subr.bf16.mxu0 0
  %8909 = vmatpush1.bf16.msra.mxu0 0
  %8910 = vmatprep.mubr.bf16.mxu0 0
  %8911 = vmatmul.mubr.bf16.gmra.mrb[0].mxu0 %v8873
  %v8912 = vpop.f32.mrb[0].mxu0
  %v8913 = vadd.f32 0.0, %v8912
  %v8914 = vpop.f32.mrb[0].mxu0
  %v8915 = vadd.f32 0.0, %v8914
  %v8916 = vpop.f32.mrb[0].mxu0
  %v8917 = vadd.f32 0.0, %v8916
  %v8918 = vpop.f32.mrb[0].mxu0
  %v8919 = vadd.f32 0.0, %v8918
  %8920 = vmatprep.mubr.bf16.mxu0 0
  %8921 = vmatmul.mubr.bf16.gmra.mrb[0].mxu0 %v8876
  %v8922 = vpop.f32.mrb[0].mxu0
  %v8923 = vadd.f32 0.0, %v8922
  %v8924 = vpop.f32.mrb[0].mxu0
  %v8925 = vadd.f32 0.0, %v8924
  %v8926 = vpop.f32.mrb[0].mxu0
  %v8927 = vadd.f32 0.0, %v8926
  %v8928 = vpop.f32.mrb[0].mxu0
  %v8929 = vadd.f32 0.0, %v8928
  %8930 = vdwg.mxu0
  %8931 = vmatprep.subr.bf16.mxu0 %v8859
  %8932 = vmatpush1.bf16.msra.mxu0 %v8858
  %8933 = vmatprep.subr.bf16.mxu0 %v8863
  %8934 = vmatpush1.bf16.msra.mxu0 %v8862
  %8935 = vmatprep.subr.bf16.mxu0 0
  %8936 = vmatpush1.bf16.msra.mxu0 0
  %8937 = vmatprep.subr.bf16.mxu0 0
  %8938 = vmatpush1.bf16.msra.mxu0 0
  %8939 = vmatprep.subr.bf16.mxu0 0
  %8940 = vmatpush1.bf16.msra.mxu0 0
  %8941 = vmatprep.subr.bf16.mxu0 0
  %8942 = vmatpush1.bf16.msra.mxu0 0
  %8943 = vmatprep.subr.bf16.mxu0 0
  %8944 = vmatpush1.bf16.msra.mxu0 0
  %8945 = vmatprep.subr.bf16.mxu0 0
  %8946 = vmatpush1.bf16.msra.mxu0 0
  %8947 = vmatprep.subr.bf16.mxu0 0
  %8948 = vmatpush1.bf16.msra.mxu0 0
  %8949 = vmatprep.subr.bf16.mxu0 0
  %8950 = vmatpush1.bf16.msra.mxu0 0
  %8951 = vmatprep.subr.bf16.mxu0 0
  %8952 = vmatpush1.bf16.msra.mxu0 0
  %8953 = vmatprep.subr.bf16.mxu0 0
  %8954 = vmatpush1.bf16.msra.mxu0 0
  %8955 = vmatprep.subr.bf16.mxu0 0
  %8956 = vmatpush1.bf16.msra.mxu0 0
  %8957 = vmatprep.subr.bf16.mxu0 0
  %8958 = vmatpush1.bf16.msra.mxu0 0
  %8959 = vmatprep.subr.bf16.mxu0 0
  %8960 = vmatpush1.bf16.msra.mxu0 0
  %8961 = vmatprep.subr.bf16.mxu0 0
  %8962 = vmatpush1.bf16.msra.mxu0 0
  %8963 = vmatprep.mubr.bf16.mxu0 0
  %8964 = vmatmul.mubr.bf16.gmra.mrb[0].mxu0 %v8873
  %v8965 = vpop.f32.mrb[0].mxu0
  %v8966 = vadd.f32 0.0, %v8965
  %v8967 = vpop.f32.mrb[0].mxu0
  %v8968 = vadd.f32 0.0, %v8967
  %v8969 = vpop.f32.mrb[0].mxu0
  %v8970 = vadd.f32 0.0, %v8969
  %v8971 = vpop.f32.mrb[0].mxu0
  %v8972 = vadd.f32 0.0, %v8971
  %8973 = vmatprep.mubr.bf16.mxu0 0
  %8974 = vmatmul.mubr.bf16.gmra.mrb[0].mxu0 %v8876
  %v8975 = vpop.f32.mrb[0].mxu0
  %v8976 = vadd.f32 0.0, %v8975
  %v8977 = vpop.f32.mrb[0].mxu0
  %v8978 = vadd.f32 0.0, %v8977
  %v8979 = vpop.f32.mrb[0].mxu0
  %v8980 = vadd.f32 0.0, %v8979
  %v8981 = vpop.f32.mrb[0].mxu0
  %v8982 = vadd.f32 0.0, %v8981
  %8983 = vdwg.mxu0
  %v8984 = vadd.f32 %v8731, %v8913
  %v8985 = vadd.f32 %v8732, %v8915
  %v8986 = vadd.f32 %v8733, %v8966
  %v8987 = vadd.f32 %v8734, %v8968
  %v8988 = vadd.f32 %v8735, %v8917
  %v8989 = vadd.f32 %v8736, %v8919
  %v8990 = vadd.f32 %v8737, %v8970
  %v8991 = vadd.f32 %v8738, %v8972
  %v8992 = vadd.f32 %v8739, %v8923
  %v8993 = vadd.f32 %v8740, %v8925
  %v8994 = vadd.f32 %v8741, %v8976
  %v8995 = vadd.f32 %v8742, %v8978
  %v8996 = vadd.f32 %v8743, %v8927
  %v8997 = vadd.f32 %v8744, %v8929
  %v8998 = vadd.f32 %v8745, %v8980
  %v8999 = vadd.f32 %v8746, %v8982
  %v9000 = vld [vmem:[%s1788] sm:$0xf]
  %v9002 = vlaneseq
  %v9003 = vshrl.u32 %v9002, 7
  %v9004 = vsub.s32 0, %v9003
  %v9005 = vrot.slane %v9000, %v9004
  %v9006 = vlaneseq
  %v9007 = vshrl.u32 %v9006, 7
  %v9008 = vsub.s32 1, %v9007
  %v9009 = vrot.slane %v9000, %v9008
  %v9010 = vlaneseq
  %v9011 = vshrl.u32 %v9010, 7
  %v9012 = vsub.s32 2, %v9011
  %v9013 = vrot.slane %v9000, %v9012
  %v9014 = vlaneseq
  %v9015 = vshrl.u32 %v9014, 7
  %v9016 = vsub.s32 3, %v9015
  %v9017 = vrot.slane %v9000, %v9016
  %9018 = vrot.lane.b32.xlu0 %v9005, 16
  %v9019 = vpop.permute.xlu0 %9018
  %9020 = vrot.lane.b32.xlu0 %v9009, 16
  %v9021 = vpop.permute.xlu0 %9020
  %9022 = vrot.lane.b32.xlu0 %v9013, 16
  %v9023 = vpop.permute.xlu0 %9022
  %9024 = vrot.lane.b32.xlu0 %v9017, 16
  %v9025 = vpop.permute.xlu0 %9024
  %v9026 = vsel %vm1815, %v9019, %v9021
  %v9027 = vsel %vm1815, %v9021, %v9023
  %v9028 = vsel %vm1815, %v9023, %v9025
  %v9034 = vmul.f32 %v8474, %v9019
  %v9035 = vmul.f32 %v8475, %v9026
  %v9036 = vmul.f32 %v8476, %v9027
  %v9037 = vmul.f32 %v8477, %v9028
  %v9038 = vmul.f32 %v8478, %v9025
  %v9039 = vmul.f32 %v8479, %v9019
  %v9040 = vmul.f32 %v8480, %v9026
  %v9041 = vmul.f32 %v8481, %v9027
  %v9042 = vmul.f32 %v8482, %v9028
  %v9043 = vmul.f32 %v8483, %v9025
  %v9044 = vmul.f32 %v8484, %v9019
  %v9045 = vmul.f32 %v8485, %v9026
  %v9046 = vmul.f32 %v8486, %v9027
  %v9047 = vmul.f32 %v8487, %v9028
  %v9048 = vmul.f32 %v8488, %v9025
  %v9049 = vmul.f32 %v8489, %v9019
  %v9050 = vmul.f32 %v8490, %v9026
  %v9051 = vmul.f32 %v8491, %v9027
  %v9052 = vmul.f32 %v8492, %v9028
  %v9053 = vmul.f32 %v8493, %v9025
  %v9054 = vpack.c.bf16 %v9039, %v9034
  %v9055 = vpack.c.bf16 %v9040, %v9035
  %v9056 = vpack.c.bf16 %v9041, %v9036
  %v9057 = vpack.c.bf16 %v9042, %v9037
  %v9058 = vpack.c.bf16 %v9043, %v9038
  %v9059 = vpack.c.bf16 %v9049, %v9044
  %v9060 = vpack.c.bf16 %v9050, %v9045
  %v9061 = vpack.c.bf16 %v9051, %v9046
  %v9062 = vpack.c.bf16 %v9052, %v9047
  %v9063 = vpack.c.bf16 %v9053, %v9048
  %s9064 = scalar_lea.vmem %s11, 112
  %v9065 = vld [vmem:[%s9064] sm:$0xf]
  %v9066 = vld [vmem:[%s9064 + $0x4] sm:$0xf]
  %v9067 = vld [vmem:[%s9064 + $0x8] sm:$0xf]
  %v9068 = vld [vmem:[%s9064 + $0xc] sm:$0xf]
  %v9073 = vunpack.c.l.b16 %v9065
  %v9074 = vunpack.c.l.b16 %v9066
  %v9075 = vunpack.c.l.b16 %v9067
  %v9076 = vunpack.c.l.b16 %v9068
  %v9077 = vpack.c.b16 %v9074, %v9073
  %v9078 = vpack.c.b16 %v9076, %v9075
  %9089 = vrot.lane.b32.xlu0 %v9054, 112
  %v9090 = vpop.permute.xlu0 %9089
  %9091 = vrot.lane.b32.xlu0 %v9055, 112
  %v9092 = vpop.permute.xlu0 %9091
  %9093 = vrot.lane.b32.xlu0 %v9056, 112
  %v9094 = vpop.permute.xlu0 %9093
  %9095 = vrot.lane.b32.xlu0 %v9057, 112
  %v9096 = vpop.permute.xlu0 %9095
  %9097 = vrot.lane.b32.xlu0 %v9058, 112
  %v9098 = vpop.permute.xlu0 %9097
  %9099 = vrot.lane.b32.xlu0 %v9059, 112
  %v9100 = vpop.permute.xlu0 %9099
  %9101 = vrot.lane.b32.xlu0 %v9060, 112
  %v9102 = vpop.permute.xlu0 %9101
  %9103 = vrot.lane.b32.xlu0 %v9061, 112
  %v9104 = vpop.permute.xlu0 %9103
  %9105 = vrot.lane.b32.xlu0 %v9062, 112
  %v9106 = vpop.permute.xlu0 %9105
  %9107 = vrot.lane.b32.xlu0 %v9063, 112
  %v9108 = vpop.permute.xlu0 %9107
  %v9109 = vsel %vm1899, %v9090, %v9092
  %v9110 = vsel %vm1899, %v9092, %v9094
  %v9111 = vsel %vm1899, %v9094, %v9096
  %v9112 = vsel %vm1899, %v9096, %v9098
  %v9113 = vsel %vm1899, %v9100, %v9102
  %v9114 = vsel %vm1899, %v9102, %v9104
  %v9115 = vsel %vm1899, %v9104, %v9106
  %v9116 = vsel %vm1899, %v9106, %v9108
  %v9126 = vsel %vm311, %v9077, 0
  %v9129 = vsel %vm311, %v9078, 0
  %9131 = vmatprep.subr.bf16.mxu0 %v9110
  %9132 = vmatpush1.bf16.msra.mxu0 %v9109
  %9133 = vmatprep.subr.bf16.mxu0 %v9114
  %9134 = vmatpush1.bf16.msra.mxu0 %v9113
  %9135 = vmatprep.subr.bf16.mxu0 0
  %9136 = vmatpush1.bf16.msra.mxu0 0
  %9137 = vmatprep.subr.bf16.mxu0 0
  %9138 = vmatpush1.bf16.msra.mxu0 0
  %9139 = vmatprep.subr.bf16.mxu0 0
  %9140 = vmatpush1.bf16.msra.mxu0 0
  %9141 = vmatprep.subr.bf16.mxu0 0
  %9142 = vmatpush1.bf16.msra.mxu0 0
  %9143 = vmatprep.subr.bf16.mxu0 0
  %9144 = vmatpush1.bf16.msra.mxu0 0
  %9145 = vmatprep.subr.bf16.mxu0 0
  %9146 = vmatpush1.bf16.msra.mxu0 0
  %9147 = vmatprep.subr.bf16.mxu0 0
  %9148 = vmatpush1.bf16.msra.mxu0 0
  %9149 = vmatprep.subr.bf16.mxu0 0
  %9150 = vmatpush1.bf16.msra.mxu0 0
  %9151 = vmatprep.subr.bf16.mxu0 0
  %9152 = vmatpush1.bf16.msra.mxu0 0
  %9153 = vmatprep.subr.bf16.mxu0 0
  %9154 = vmatpush1.bf16.msra.mxu0 0
  %9155 = vmatprep.subr.bf16.mxu0 0
  %9156 = vmatpush1.bf16.msra.mxu0 0
  %9157 = vmatprep.subr.bf16.mxu0 0
  %9158 = vmatpush1.bf16.msra.mxu0 0
  %9159 = vmatprep.subr.bf16.mxu0 0
  %9160 = vmatpush1.bf16.msra.mxu0 0
  %9161 = vmatprep.subr.bf16.mxu0 0
  %9162 = vmatpush1.bf16.msra.mxu0 0
  %9163 = vmatprep.mubr.bf16.mxu0 0
  %9164 = vmatmul.mubr.bf16.gmra.mrb[0].mxu0 %v9126
  %v9165 = vpop.f32.mrb[0].mxu0
  %v9166 = vadd.f32 0.0, %v9165
  %v9167 = vpop.f32.mrb[0].mxu0
  %v9168 = vadd.f32 0.0, %v9167
  %v9169 = vpop.f32.mrb[0].mxu0
  %v9170 = vadd.f32 0.0, %v9169
  %v9171 = vpop.f32.mrb[0].mxu0
  %v9172 = vadd.f32 0.0, %v9171
  %9173 = vmatprep.mubr.bf16.mxu0 0
  %9174 = vmatmul.mubr.bf16.gmra.mrb[0].mxu0 %v9129
  %v9175 = vpop.f32.mrb[0].mxu0
  %v9176 = vadd.f32 0.0, %v9175
  %v9177 = vpop.f32.mrb[0].mxu0
  %v9178 = vadd.f32 0.0, %v9177
  %v9179 = vpop.f32.mrb[0].mxu0
  %v9180 = vadd.f32 0.0, %v9179
  %v9181 = vpop.f32.mrb[0].mxu0
  %v9182 = vadd.f32 0.0, %v9181
  %9183 = vdwg.mxu0
  %9184 = vmatprep.subr.bf16.mxu0 %v9112
  %9185 = vmatpush1.bf16.msra.mxu0 %v9111
  %9186 = vmatprep.subr.bf16.mxu0 %v9116
  %9187 = vmatpush1.bf16.msra.mxu0 %v9115
  %9188 = vmatprep.subr.bf16.mxu0 0
  %9189 = vmatpush1.bf16.msra.mxu0 0
  %9190 = vmatprep.subr.bf16.mxu0 0
  %9191 = vmatpush1.bf16.msra.mxu0 0
  %9192 = vmatprep.subr.bf16.mxu0 0
  %9193 = vmatpush1.bf16.msra.mxu0 0
  %9194 = vmatprep.subr.bf16.mxu0 0
  %9195 = vmatpush1.bf16.msra.mxu0 0
  %9196 = vmatprep.subr.bf16.mxu0 0
  %9197 = vmatpush1.bf16.msra.mxu0 0
  %9198 = vmatprep.subr.bf16.mxu0 0
  %9199 = vmatpush1.bf16.msra.mxu0 0
  %9200 = vmatprep.subr.bf16.mxu0 0
  %9201 = vmatpush1.bf16.msra.mxu0 0
  %9202 = vmatprep.subr.bf16.mxu0 0
  %9203 = vmatpush1.bf16.msra.mxu0 0
  %9204 = vmatprep.subr.bf16.mxu0 0
  %9205 = vmatpush1.bf16.msra.mxu0 0
  %9206 = vmatprep.subr.bf16.mxu0 0
  %9207 = vmatpush1.bf16.msra.mxu0 0
  %9208 = vmatprep.subr.bf16.mxu0 0
  %9209 = vmatpush1.bf16.msra.mxu0 0
  %9210 = vmatprep.subr.bf16.mxu0 0
  %9211 = vmatpush1.bf16.msra.mxu0 0
  %9212 = vmatprep.subr.bf16.mxu0 0
  %9213 = vmatpush1.bf16.msra.mxu0 0
  %9214 = vmatprep.subr.bf16.mxu0 0
  %9215 = vmatpush1.bf16.msra.mxu0 0
  %9216 = vmatprep.mubr.bf16.mxu0 0
  %9217 = vmatmul.mubr.bf16.gmra.mrb[0].mxu0 %v9126
  %v9218 = vpop.f32.mrb[0].mxu0
  %v9219 = vadd.f32 0.0, %v9218
  %v9220 = vpop.f32.mrb[0].mxu0
  %v9221 = vadd.f32 0.0, %v9220
  %v9222 = vpop.f32.mrb[0].mxu0
  %v9223 = vadd.f32 0.0, %v9222
  %v9224 = vpop.f32.mrb[0].mxu0
  %v9225 = vadd.f32 0.0, %v9224
  %9226 = vmatprep.mubr.bf16.mxu0 0
  %9227 = vmatmul.mubr.bf16.gmra.mrb[0].mxu0 %v9129
  %v9228 = vpop.f32.mrb[0].mxu0
  %v9229 = vadd.f32 0.0, %v9228
  %v9230 = vpop.f32.mrb[0].mxu0
  %v9231 = vadd.f32 0.0, %v9230
  %v9232 = vpop.f32.mrb[0].mxu0
  %v9233 = vadd.f32 0.0, %v9232
  %v9234 = vpop.f32.mrb[0].mxu0
  %v9235 = vadd.f32 0.0, %v9234
  %9236 = vdwg.mxu0
  %v9237 = vadd.f32 %v8984, %v9166
  %v9238 = vadd.f32 %v8985, %v9168
  %v9239 = vadd.f32 %v8986, %v9219
  %v9240 = vadd.f32 %v8987, %v9221
  %v9241 = vadd.f32 %v8988, %v9170
  %v9242 = vadd.f32 %v8989, %v9172
  %v9243 = vadd.f32 %v8990, %v9223
  %v9244 = vadd.f32 %v8991, %v9225
  %v9245 = vadd.f32 %v8992, %v9176
  %v9246 = vadd.f32 %v8993, %v9178
  %v9247 = vadd.f32 %v8994, %v9229
  %v9248 = vadd.f32 %v8995, %v9231
  %v9249 = vadd.f32 %v8996, %v9180
  %v9250 = vadd.f32 %v8997, %v9182
  %v9251 = vadd.f32 %v8998, %v9233
  %v9252 = vadd.f32 %v8999, %v9235
  %v9253 = vld [vmem:[%s2044] sm:$0xf]
  %v9255 = vlaneseq
  %v9256 = vshrl.u32 %v9255, 7
  %v9257 = vsub.s32 0, %v9256
  %v9258 = vrot.slane %v9253, %v9257
  %v9259 = vlaneseq
  %v9260 = vshrl.u32 %v9259, 7
  %v9261 = vsub.s32 1, %v9260
  %v9262 = vrot.slane %v9253, %v9261
  %v9263 = vlaneseq
  %v9264 = vshrl.u32 %v9263, 7
  %v9265 = vsub.s32 2, %v9264
  %v9266 = vrot.slane %v9253, %v9265
  %v9267 = vlaneseq
  %v9268 = vshrl.u32 %v9267, 7
  %v9269 = vsub.s32 3, %v9268
  %v9270 = vrot.slane %v9253, %v9269
  %9271 = vrot.lane.b32.xlu0 %v9258, 17
  %v9272 = vpop.permute.xlu0 %9271
  %9273 = vrot.lane.b32.xlu0 %v9262, 17
  %v9274 = vpop.permute.xlu0 %9273
  %9275 = vrot.lane.b32.xlu0 %v9266, 17
  %v9276 = vpop.permute.xlu0 %9275
  %9277 = vrot.lane.b32.xlu0 %v9270, 17
  %v9278 = vpop.permute.xlu0 %9277
  %v9279 = vsel %vm2071, %v9272, %v9274
  %v9280 = vsel %vm2071, %v9274, %v9276
  %v9281 = vsel %vm2071, %v9276, %v9278
  %v9287 = vmul.f32 %v8474, %v9272
  %v9288 = vmul.f32 %v8475, %v9279
  %v9289 = vmul.f32 %v8476, %v9280
  %v9290 = vmul.f32 %v8477, %v9281
  %v9291 = vmul.f32 %v8478, %v9278
  %v9292 = vmul.f32 %v8479, %v9272
  %v9293 = vmul.f32 %v8480, %v9279
  %v9294 = vmul.f32 %v8481, %v9280
  %v9295 = vmul.f32 %v8482, %v9281
  %v9296 = vmul.f32 %v8483, %v9278
  %v9297 = vmul.f32 %v8484, %v9272
  %v9298 = vmul.f32 %v8485, %v9279
  %v9299 = vmul.f32 %v8486, %v9280
  %v9300 = vmul.f32 %v8487, %v9281
  %v9301 = vmul.f32 %v8488, %v9278
  %v9302 = vmul.f32 %v8489, %v9272
  %v9303 = vmul.f32 %v8490, %v9279
  %v9304 = vmul.f32 %v8491, %v9280
  %v9305 = vmul.f32 %v8492, %v9281
  %v9306 = vmul.f32 %v8493, %v9278
  %v9307 = vpack.c.bf16 %v9292, %v9287
  %v9308 = vpack.c.bf16 %v9293, %v9288
  %v9309 = vpack.c.bf16 %v9294, %v9289
  %v9310 = vpack.c.bf16 %v9295, %v9290
  %v9311 = vpack.c.bf16 %v9296, %v9291
  %v9312 = vpack.c.bf16 %v9302, %v9297
  %v9313 = vpack.c.bf16 %v9303, %v9298
  %v9314 = vpack.c.bf16 %v9304, %v9299
  %v9315 = vpack.c.bf16 %v9305, %v9300
  %v9316 = vpack.c.bf16 %v9306, %v9301
  %s9317 = scalar_lea.vmem %s11, 128
  %v9318 = vld [vmem:[%s9317] sm:$0xf]
  %v9319 = vld [vmem:[%s9317 + $0x4] sm:$0xf]
  %v9320 = vld [vmem:[%s9317 + $0x8] sm:$0xf]
  %v9321 = vld [vmem:[%s9317 + $0xc] sm:$0xf]
  %v9326 = vunpack.c.l.b16 %v9318
  %v9327 = vunpack.c.l.b16 %v9319
  %v9328 = vunpack.c.l.b16 %v9320
  %v9329 = vunpack.c.l.b16 %v9321
  %v9330 = vpack.c.b16 %v9327, %v9326
  %v9331 = vpack.c.b16 %v9329, %v9328
  %9342 = vrot.lane.b32.xlu0 %v9307, 111
  %v9343 = vpop.permute.xlu0 %9342
  %9344 = vrot.lane.b32.xlu0 %v9308, 111
  %v9345 = vpop.permute.xlu0 %9344
  %9346 = vrot.lane.b32.xlu0 %v9309, 111
  %v9347 = vpop.permute.xlu0 %9346
  %9348 = vrot.lane.b32.xlu0 %v9310, 111
  %v9349 = vpop.permute.xlu0 %9348
  %9350 = vrot.lane.b32.xlu0 %v9311, 111
  %v9351 = vpop.permute.xlu0 %9350
  %9352 = vrot.lane.b32.xlu0 %v9312, 111
  %v9353 = vpop.permute.xlu0 %9352
  %9354 = vrot.lane.b32.xlu0 %v9313, 111
  %v9355 = vpop.permute.xlu0 %9354
  %9356 = vrot.lane.b32.xlu0 %v9314, 111
  %v9357 = vpop.permute.xlu0 %9356
  %9358 = vrot.lane.b32.xlu0 %v9315, 111
  %v9359 = vpop.permute.xlu0 %9358
  %9360 = vrot.lane.b32.xlu0 %v9316, 111
  %v9361 = vpop.permute.xlu0 %9360
  %v9362 = vsel %vm2155, %v9343, %v9345
  %v9363 = vsel %vm2155, %v9345, %v9347
  %v9364 = vsel %vm2155, %v9347, %v9349
  %v9365 = vsel %vm2155, %v9349, %v9351
  %v9366 = vsel %vm2155, %v9353, %v9355
  %v9367 = vsel %vm2155, %v9355, %v9357
  %v9368 = vsel %vm2155, %v9357, %v9359
  %v9369 = vsel %vm2155, %v9359, %v9361
  %v9379 = vsel %vm311, %v9330, 0
  %v9382 = vsel %vm311, %v9331, 0
  %9384 = vmatprep.subr.bf16.mxu0 %v9363
  %9385 = vmatpush1.bf16.msra.mxu0 %v9362
  %9386 = vmatprep.subr.bf16.mxu0 %v9367
  %9387 = vmatpush1.bf16.msra.mxu0 %v9366
  %9388 = vmatprep.subr.bf16.mxu0 0
  %9389 = vmatpush1.bf16.msra.mxu0 0
  %9390 = vmatprep.subr.bf16.mxu0 0
  %9391 = vmatpush1.bf16.msra.mxu0 0
  %9392 = vmatprep.subr.bf16.mxu0 0
  %9393 = vmatpush1.bf16.msra.mxu0 0
  %9394 = vmatprep.subr.bf16.mxu0 0
  %9395 = vmatpush1.bf16.msra.mxu0 0
  %9396 = vmatprep.subr.bf16.mxu0 0
  %9397 = vmatpush1.bf16.msra.mxu0 0
  %9398 = vmatprep.subr.bf16.mxu0 0
  %9399 = vmatpush1.bf16.msra.mxu0 0
  %9400 = vmatprep.subr.bf16.mxu0 0
  %9401 = vmatpush1.bf16.msra.mxu0 0
  %9402 = vmatprep.subr.bf16.mxu0 0
  %9403 = vmatpush1.bf16.msra.mxu0 0
  %9404 = vmatprep.subr.bf16.mxu0 0
  %9405 = vmatpush1.bf16.msra.mxu0 0
  %9406 = vmatprep.subr.bf16.mxu0 0
  %9407 = vmatpush1.bf16.msra.mxu0 0
  %9408 = vmatprep.subr.bf16.mxu0 0
  %9409 = vmatpush1.bf16.msra.mxu0 0
  %9410 = vmatprep.subr.bf16.mxu0 0
  %9411 = vmatpush1.bf16.msra.mxu0 0
  %9412 = vmatprep.subr.bf16.mxu0 0
  %9413 = vmatpush1.bf16.msra.mxu0 0
  %9414 = vmatprep.subr.bf16.mxu0 0
  %9415 = vmatpush1.bf16.msra.mxu0 0
  %9416 = vmatprep.mubr.bf16.mxu0 0
  %9417 = vmatmul.mubr.bf16.gmra.mrb[0].mxu0 %v9379
  %v9418 = vpop.f32.mrb[0].mxu0
  %v9419 = vadd.f32 0.0, %v9418
  %v9420 = vpop.f32.mrb[0].mxu0
  %v9421 = vadd.f32 0.0, %v9420
  %v9422 = vpop.f32.mrb[0].mxu0
  %v9423 = vadd.f32 0.0, %v9422
  %v9424 = vpop.f32.mrb[0].mxu0
  %v9425 = vadd.f32 0.0, %v9424
  %9426 = vmatprep.mubr.bf16.mxu0 0
  %9427 = vmatmul.mubr.bf16.gmra.mrb[0].mxu0 %v9382
  %v9428 = vpop.f32.mrb[0].mxu0
  %v9429 = vadd.f32 0.0, %v9428
  %v9430 = vpop.f32.mrb[0].mxu0
  %v9431 = vadd.f32 0.0, %v9430
  %v9432 = vpop.f32.mrb[0].mxu0
  %v9433 = vadd.f32 0.0, %v9432
  %v9434 = vpop.f32.mrb[0].mxu0
  %v9435 = vadd.f32 0.0, %v9434
  %9436 = vdwg.mxu0
  %9437 = vmatprep.subr.bf16.mxu0 %v9365
  %9438 = vmatpush1.bf16.msra.mxu0 %v9364
  %9439 = vmatprep.subr.bf16.mxu0 %v9369
  %9440 = vmatpush1.bf16.msra.mxu0 %v9368
  %9441 = vmatprep.subr.bf16.mxu0 0
  %9442 = vmatpush1.bf16.msra.mxu0 0
  %9443 = vmatprep.subr.bf16.mxu0 0
  %9444 = vmatpush1.bf16.msra.mxu0 0
  %9445 = vmatprep.subr.bf16.mxu0 0
  %9446 = vmatpush1.bf16.msra.mxu0 0
  %9447 = vmatprep.subr.bf16.mxu0 0
  %9448 = vmatpush1.bf16.msra.mxu0 0
  %9449 = vmatprep.subr.bf16.mxu0 0
  %9450 = vmatpush1.bf16.msra.mxu0 0
  %9451 = vmatprep.subr.bf16.mxu0 0
  %9452 = vmatpush1.bf16.msra.mxu0 0
  %9453 = vmatprep.subr.bf16.mxu0 0
  %9454 = vmatpush1.bf16.msra.mxu0 0
  %9455 = vmatprep.subr.bf16.mxu0 0
  %9456 = vmatpush1.bf16.msra.mxu0 0
  %9457 = vmatprep.subr.bf16.mxu0 0
  %9458 = vmatpush1.bf16.msra.mxu0 0
  %9459 = vmatprep.subr.bf16.mxu0 0
  %9460 = vmatpush1.bf16.msra.mxu0 0
  %9461 = vmatprep.subr.bf16.mxu0 0
  %9462 = vmatpush1.bf16.msra.mxu0 0
  %9463 = vmatprep.subr.bf16.mxu0 0
  %9464 = vmatpush1.bf16.msra.mxu0 0
  %9465 = vmatprep.subr.bf16.mxu0 0
  %9466 = vmatpush1.bf16.msra.mxu0 0
  %9467 = vmatprep.subr.bf16.mxu0 0
  %9468 = vmatpush1.bf16.msra.mxu0 0
  %9469 = vmatprep.mubr.bf16.mxu0 0
  %9470 = vmatmul.mubr.bf16.gmra.mrb[0].mxu0 %v9379
  %v9471 = vpop.f32.mrb[0].mxu0
  %v9472 = vadd.f32 0.0, %v9471
  %v9473 = vpop.f32.mrb[0].mxu0
  %v9474 = vadd.f32 0.0, %v9473
  %v9475 = vpop.f32.mrb[0].mxu0
  %v9476 = vadd.f32 0.0, %v9475
  %v9477 = vpop.f32.mrb[0].mxu0
  %v9478 = vadd.f32 0.0, %v9477
  %9479 = vmatprep.mubr.bf16.mxu0 0
  %9480 = vmatmul.mubr.bf16.gmra.mrb[0].mxu0 %v9382
  %v9481 = vpop.f32.mrb[0].mxu0
  %v9482 = vadd.f32 0.0, %v9481
  %v9483 = vpop.f32.mrb[0].mxu0
  %v9484 = vadd.f32 0.0, %v9483
  %v9485 = vpop.f32.mrb[0].mxu0
  %v9486 = vadd.f32 0.0, %v9485
  %v9487 = vpop.f32.mrb[0].mxu0
  %v9488 = vadd.f32 0.0, %v9487
  %9489 = vdwg.mxu0
  %v9490 = vadd.f32 %v9237, %v9419
  %v9491 = vadd.f32 %v9238, %v9421
  %v9492 = vadd.f32 %v9239, %v9472
  %v9493 = vadd.f32 %v9240, %v9474
  %v9494 = vadd.f32 %v9241, %v9423
  %v9495 = vadd.f32 %v9242, %v9425
  %v9496 = vadd.f32 %v9243, %v9476
  %v9497 = vadd.f32 %v9244, %v9478
  %v9498 = vadd.f32 %v9245, %v9429
  %v9499 = vadd.f32 %v9246, %v9431
  %v9500 = vadd.f32 %v9247, %v9482
  %v9501 = vadd.f32 %v9248, %v9484
  %v9502 = vadd.f32 %v9249, %v9433
  %v9503 = vadd.f32 %v9250, %v9435
  %v9504 = vadd.f32 %v9251, %v9486
  %v9505 = vadd.f32 %v9252, %v9488
  %v9506 = vadd.f32 %v9490, %v9491
  %v9507 = vadd.f32 %v9506, %v9492
  %v9508 = vadd.f32 %v9507, %v9493
  %9509 = vadd.xlane.f32.xlu0 %v9508
  %v9510 = vpop.xlane.xlu0 %9509
  %v9511 = vadd.f32 %v9494, %v9495
  %v9512 = vadd.f32 %v9511, %v9496
  %v9513 = vadd.f32 %v9512, %v9497
  %9514 = vadd.xlane.f32.xlu0 %v9513
  %v9515 = vpop.xlane.xlu0 %9514
  %v9516 = vadd.f32 %v9498, %v9499
  %v9517 = vadd.f32 %v9516, %v9500
  %v9518 = vadd.f32 %v9517, %v9501
  %9519 = vadd.xlane.f32.xlu0 %v9518
  %v9520 = vpop.xlane.xlu0 %9519
  %v9521 = vadd.f32 %v9502, %v9503
  %v9522 = vadd.f32 %v9521, %v9504
  %v9523 = vadd.f32 %v9522, %v9505
  %9524 = vadd.xlane.f32.xlu0 %v9523
  %v9525 = vpop.xlane.xlu0 %9524
  %v9526 = vmul.f32 %v9510, 0.001953125
  %v9527 = vmul.f32 %v9515, 0.001953125
  %v9528 = vmul.f32 %v9520, 0.001953125
  %v9529 = vmul.f32 %v9525, 0.001953125
  %v9530 = vsub.f32 %v9490, %v9526
  %v9531 = vsub.f32 %v9491, %v9526
  %v9532 = vsub.f32 %v9492, %v9526
  %v9533 = vsub.f32 %v9493, %v9526
  %v9534 = vsub.f32 %v9494, %v9527
  %v9535 = vsub.f32 %v9495, %v9527
  %v9536 = vsub.f32 %v9496, %v9527
  %v9537 = vsub.f32 %v9497, %v9527
  %v9538 = vsub.f32 %v9498, %v9528
  %v9539 = vsub.f32 %v9499, %v9528
  %v9540 = vsub.f32 %v9500, %v9528
  %v9541 = vsub.f32 %v9501, %v9528
  %v9542 = vsub.f32 %v9502, %v9529
  %v9543 = vsub.f32 %v9503, %v9529
  %v9544 = vsub.f32 %v9504, %v9529
  %v9545 = vsub.f32 %v9505, %v9529
  %v9546 = vmul.f32 %v9530, %v9530
  %v9547 = vmul.f32 %v9531, %v9531
  %v9548 = vmul.f32 %v9532, %v9532
  %v9549 = vmul.f32 %v9533, %v9533
  %v9550 = vmul.f32 %v9534, %v9534
  %v9551 = vmul.f32 %v9535, %v9535
  %v9552 = vmul.f32 %v9536, %v9536
  %v9553 = vmul.f32 %v9537, %v9537
  %v9554 = vmul.f32 %v9538, %v9538
  %v9555 = vmul.f32 %v9539, %v9539
  %v9556 = vmul.f32 %v9540, %v9540
  %v9557 = vmul.f32 %v9541, %v9541
  %v9558 = vmul.f32 %v9542, %v9542
  %v9559 = vmul.f32 %v9543, %v9543
  %v9560 = vmul.f32 %v9544, %v9544
  %v9561 = vmul.f32 %v9545, %v9545
  %v9562 = vadd.f32 %v9546, %v9547
  %v9563 = vadd.f32 %v9562, %v9548
  %v9564 = vadd.f32 %v9563, %v9549
  %9565 = vadd.xlane.f32.xlu0 %v9564
  %v9566 = vpop.xlane.xlu0 %9565
  %v9567 = vadd.f32 %v9550, %v9551
  %v9568 = vadd.f32 %v9567, %v9552
  %v9569 = vadd.f32 %v9568, %v9553
  %9570 = vadd.xlane.f32.xlu0 %v9569
  %v9571 = vpop.xlane.xlu0 %9570
  %v9572 = vadd.f32 %v9554, %v9555
  %v9573 = vadd.f32 %v9572, %v9556
  %v9574 = vadd.f32 %v9573, %v9557
  %9575 = vadd.xlane.f32.xlu0 %v9574
  %v9576 = vpop.xlane.xlu0 %9575
  %v9577 = vadd.f32 %v9558, %v9559
  %v9578 = vadd.f32 %v9577, %v9560
  %v9579 = vadd.f32 %v9578, %v9561
  %9580 = vadd.xlane.f32.xlu0 %v9579
  %v9581 = vpop.xlane.xlu0 %9580
  %v9582 = vmul.f32 %v9566, 0.001953125
  %v9583 = vmul.f32 %v9571, 0.001953125
  %v9584 = vmul.f32 %v9576, 0.001953125
  %v9585 = vmul.f32 %v9581, 0.001953125
  %v9586 = vld [vmem:[%s12] sm:$0xff]
  %v9587 = vld [vmem:[%s12 + $0x8] sm:$0xff]
  %v9588 = vld [vmem:[%s12 + $0x10] sm:$0xff]
  %v9589 = vld [vmem:[%s12 + $0x18] sm:$0xff]
  %v9590 = vadd.f32 %v9582, 1e-05
  %v9591 = vadd.f32 %v9583, 1e-05
  %v9592 = vadd.f32 %v9584, 1e-05
  %v9593 = vadd.f32 %v9585, 1e-05
  %v9594 = vrsqrt.pop %v9590
  %v9595 = vrsqrt.pop %v9591
  %v9596 = vrsqrt.pop %v9592
  %v9597 = vrsqrt.pop %v9593
  %v9598 = vmul.f32 %v9586, %v9594
  %v9599 = vmul.f32 %v9587, %v9595
  %v9600 = vmul.f32 %v9588, %v9596
  %v9601 = vmul.f32 %v9589, %v9597
  %9603 = vset.pattern.permute.xlu0 0
  %9604 = vperm.xlu0 %9603, %v9598
  %v9605 = vpop.permute.xlu0 %9604
  %9608 = vset.pattern.permute.xlu0 0
  %9609 = vperm.xlu0 %9608, %v9599
  %v9610 = vpop.permute.xlu0 %9609
  %9613 = vset.pattern.permute.xlu0 0
  %9614 = vperm.xlu0 %9613, %v9600
  %v9615 = vpop.permute.xlu0 %9614
  %9618 = vset.pattern.permute.xlu0 0
  %9619 = vperm.xlu0 %9618, %v9601
  %v9620 = vpop.permute.xlu0 %9619
  %v9622 = vmul.f32 %v9530, %v9605
  %v9623 = vmul.f32 %v9531, %v9605
  %v9624 = vmul.f32 %v9532, %v9605
  %v9625 = vmul.f32 %v9533, %v9605
  %v9626 = vmul.f32 %v9534, %v9610
  %v9627 = vmul.f32 %v9535, %v9610
  %v9628 = vmul.f32 %v9536, %v9610
  %v9629 = vmul.f32 %v9537, %v9610
  %v9630 = vmul.f32 %v9538, %v9615
  %v9631 = vmul.f32 %v9539, %v9615
  %v9632 = vmul.f32 %v9540, %v9615
  %v9633 = vmul.f32 %v9541, %v9615
  %v9634 = vmul.f32 %v9542, %v9620
  %v9635 = vmul.f32 %v9543, %v9620
  %v9636 = vmul.f32 %v9544, %v9620
  %v9637 = vmul.f32 %v9545, %v9620
  %v9638 = vld [vmem:[%s13] sm:$0xff]
  %v9639 = vld [vmem:[%s13 + $0x8] sm:$0xff]
  %v9640 = vld [vmem:[%s13 + $0x10] sm:$0xff]
  %v9641 = vld [vmem:[%s13 + $0x18] sm:$0xff]
  %9643 = vset.pattern.permute.xlu0 0
  %9644 = vperm.xlu0 %9643, %v9638
  %v9645 = vpop.permute.xlu0 %9644
  %9648 = vset.pattern.permute.xlu0 0
  %9649 = vperm.xlu0 %9648, %v9639
  %v9650 = vpop.permute.xlu0 %9649
  %9653 = vset.pattern.permute.xlu0 0
  %9654 = vperm.xlu0 %9653, %v9640
  %v9655 = vpop.permute.xlu0 %9654
  %9658 = vset.pattern.permute.xlu0 0
  %9659 = vperm.xlu0 %9658, %v9641
  %v9660 = vpop.permute.xlu0 %9659
  %v9662 = vadd.f32 %v9622, %v9645
  %v9663 = vadd.f32 %v9623, %v9645
  %v9664 = vadd.f32 %v9624, %v9645
  %v9665 = vadd.f32 %v9625, %v9645
  %v9666 = vadd.f32 %v9626, %v9650
  %v9667 = vadd.f32 %v9627, %v9650
  %v9668 = vadd.f32 %v9628, %v9650
  %v9669 = vadd.f32 %v9629, %v9650
  %v9670 = vadd.f32 %v9630, %v9655
  %v9671 = vadd.f32 %v9631, %v9655
  %v9672 = vadd.f32 %v9632, %v9655
  %v9673 = vadd.f32 %v9633, %v9655
  %v9674 = vadd.f32 %v9634, %v9660
  %v9675 = vadd.f32 %v9635, %v9660
  %v9676 = vadd.f32 %v9636, %v9660
  %v9677 = vadd.f32 %v9637, %v9660
  %v9678 = vmul.f32 %v9662, 0.2
  %v9679 = vmul.f32 %v9663, 0.2
  %v9680 = vmul.f32 %v9664, 0.2
  %v9681 = vmul.f32 %v9665, 0.2
  %v9682 = vmul.f32 %v9666, 0.2
  %v9683 = vmul.f32 %v9667, 0.2
  %v9684 = vmul.f32 %v9668, 0.2
  %v9685 = vmul.f32 %v9669, 0.2
  %v9686 = vmul.f32 %v9670, 0.2
  %v9687 = vmul.f32 %v9671, 0.2
  %v9688 = vmul.f32 %v9672, 0.2
  %v9689 = vmul.f32 %v9673, 0.2
  %v9690 = vmul.f32 %v9674, 0.2
  %v9691 = vmul.f32 %v9675, 0.2
  %v9692 = vmul.f32 %v9676, 0.2
  %v9693 = vmul.f32 %v9677, 0.2
  %v9694 = vmax.f32 %v9662, %v9678
  %v9695 = vmax.f32 %v9663, %v9679
  %v9696 = vmax.f32 %v9664, %v9680
  %v9697 = vmax.f32 %v9665, %v9681
  %v9698 = vmax.f32 %v9666, %v9682
  %v9699 = vmax.f32 %v9667, %v9683
  %v9700 = vmax.f32 %v9668, %v9684
  %v9701 = vmax.f32 %v9669, %v9685
  %v9702 = vmax.f32 %v9670, %v9686
  %v9703 = vmax.f32 %v9671, %v9687
  %v9704 = vmax.f32 %v9672, %v9688
  %v9705 = vmax.f32 %v9673, %v9689
  %v9706 = vmax.f32 %v9674, %v9690
  %v9707 = vmax.f32 %v9675, %v9691
  %v9708 = vmax.f32 %v9676, %v9692
  %v9709 = vmax.f32 %v9677, %v9693
  %9710 = vst [vmem:[#allocation2 + $0x8] sm:$0xff] %v9694
  %9711 = vst [vmem:[#allocation2 + $0x10] sm:$0xff] %v9695
  %9712 = vst [vmem:[#allocation2 + $0x18] sm:$0xff] %v9696
  %9713 = vst [vmem:[#allocation2 + $0x20] sm:$0xff] %v9697
  %9714 = vst [vmem:[#allocation2 + $0x38] sm:$0xff] %v9698
  %9715 = vst [vmem:[#allocation2 + $0x40] sm:$0xff] %v9699
  %9716 = vst [vmem:[#allocation2 + $0x48] sm:$0xff] %v9700
  %9717 = vst [vmem:[#allocation2 + $0x50] sm:$0xff] %v9701
  %9718 = vst [vmem:[#allocation2 + $0x68] sm:$0xff] %v9702
  %9719 = vst [vmem:[#allocation2 + $0x70] sm:$0xff] %v9703
  %9720 = vst [vmem:[#allocation2 + $0x78] sm:$0xff] %v9704
  %9721 = vst [vmem:[#allocation2 + $0x80] sm:$0xff] %v9705
  %9722 = vst [vmem:[#allocation2 + $0x98] sm:$0xff] %v9706
  %9723 = vst [vmem:[#allocation2 + $0xa0] sm:$0xff] %v9707
  %9724 = vst [vmem:[#allocation2 + $0xa8] sm:$0xff] %v9708
  %9725 = vst [vmem:[#allocation2 + $0xb0] sm:$0xff] %v9709
  %v9726 = vld [vmem:[#allocation2] sm:$0xff]
  %v9727 = vld [vmem:[#allocation2 + $0x8] sm:$0xff]
  %v9728 = vld [vmem:[#allocation2 + $0x10] sm:$0xff]
  %v9729 = vld [vmem:[#allocation2 + $0x18] sm:$0xff]
  %v9730 = vld [vmem:[#allocation2 + $0x20] sm:$0xff]
  %v9731 = vld [vmem:[#allocation2 + $0x30] sm:$0xff]
  %v9732 = vld [vmem:[#allocation2 + $0x38] sm:$0xff]
  %v9733 = vld [vmem:[#allocation2 + $0x40] sm:$0xff]
  %v9734 = vld [vmem:[#allocation2 + $0x48] sm:$0xff]
  %v9735 = vld [vmem:[#allocation2 + $0x50] sm:$0xff]
  %v9736 = vld [vmem:[#allocation2 + $0x60] sm:$0xff]
  %v9737 = vld [vmem:[#allocation2 + $0x68] sm:$0xff]
  %v9738 = vld [vmem:[#allocation2 + $0x70] sm:$0xff]
  %v9739 = vld [vmem:[#allocation2 + $0x78] sm:$0xff]
  %v9740 = vld [vmem:[#allocation2 + $0x80] sm:$0xff]
  %v9741 = vld [vmem:[#allocation2 + $0x90] sm:$0xff]
  %v9742 = vld [vmem:[#allocation2 + $0x98] sm:$0xff]
  %v9743 = vld [vmem:[#allocation2 + $0xa0] sm:$0xff]
  %v9744 = vld [vmem:[#allocation2 + $0xa8] sm:$0xff]
  %v9745 = vld [vmem:[#allocation2 + $0xb0] sm:$0xff]
  %v9746 = vld [vmem:[%s0] sm:$0xf]
  %v9748 = vlaneseq
  %v9749 = vshrl.u32 %v9748, 7
  %v9750 = vsub.s32 0, %v9749
  %v9751 = vrot.slane %v9746, %v9750
  %v9752 = vlaneseq
  %v9753 = vshrl.u32 %v9752, 7
  %v9754 = vsub.s32 1, %v9753
  %v9755 = vrot.slane %v9746, %v9754
  %v9756 = vlaneseq
  %v9757 = vshrl.u32 %v9756, 7
  %v9758 = vsub.s32 2, %v9757
  %v9759 = vrot.slane %v9746, %v9758
  %v9760 = vlaneseq
  %v9761 = vshrl.u32 %v9760, 7
  %v9762 = vsub.s32 3, %v9761
  %v9763 = vrot.slane %v9746, %v9762
  %9764 = vrot.lane.b32.xlu0 %v9751, 111
  %v9765 = vpop.permute.xlu0 %9764
  %9766 = vrot.lane.b32.xlu0 %v9755, 111
  %v9767 = vpop.permute.xlu0 %9766
  %9768 = vrot.lane.b32.xlu0 %v9759, 111
  %v9769 = vpop.permute.xlu0 %9768
  %9770 = vrot.lane.b32.xlu0 %v9763, 111
  %v9771 = vpop.permute.xlu0 %9770
  %v9772 = vsel %vm140, %v9765, %v9767
  %v9773 = vsel %vm140, %v9767, %v9769
  %v9774 = vsel %vm140, %v9769, %v9771
  %v9780 = vmul.f32 %v9726, %v9765
  %v9781 = vmul.f32 %v9727, %v9772
  %v9782 = vmul.f32 %v9728, %v9773
  %v9783 = vmul.f32 %v9729, %v9774
  %v9784 = vmul.f32 %v9730, %v9771
  %v9785 = vmul.f32 %v9731, %v9765
  %v9786 = vmul.f32 %v9732, %v9772
  %v9787 = vmul.f32 %v9733, %v9773
  %v9788 = vmul.f32 %v9734, %v9774
  %v9789 = vmul.f32 %v9735, %v9771
  %v9790 = vmul.f32 %v9736, %v9765
  %v9791 = vmul.f32 %v9737, %v9772
  %v9792 = vmul.f32 %v9738, %v9773
  %v9793 = vmul.f32 %v9739, %v9774
  %v9794 = vmul.f32 %v9740, %v9771
  %v9795 = vmul.f32 %v9741, %v9765
  %v9796 = vmul.f32 %v9742, %v9772
  %v9797 = vmul.f32 %v9743, %v9773
  %v9798 = vmul.f32 %v9744, %v9774
  %v9799 = vmul.f32 %v9745, %v9771
  %v9800 = vpack.c.bf16 %v9785, %v9780
  %v9801 = vpack.c.bf16 %v9786, %v9781
  %v9802 = vpack.c.bf16 %v9787, %v9782
  %v9803 = vpack.c.bf16 %v9788, %v9783
  %v9804 = vpack.c.bf16 %v9789, %v9784
  %v9805 = vpack.c.bf16 %v9795, %v9790
  %v9806 = vpack.c.bf16 %v9796, %v9791
  %v9807 = vpack.c.bf16 %v9797, %v9792
  %v9808 = vpack.c.bf16 %v9798, %v9793
  %v9809 = vpack.c.bf16 %v9799, %v9794
  %v9810 = vld [vmem:[%s14] sm:$0xf]
  %v9811 = vld [vmem:[%s183] sm:$0xf]
  %v9813 = vlaneseq
  %v9814 = vshrl.u32 %v9813, 7
  %v9815 = vsub.s32 0, %v9814
  %v9816 = vrot.slane %v9811, %v9815
  %v9817 = vlaneseq
  %v9818 = vshrl.u32 %v9817, 7
  %v9819 = vsub.s32 1, %v9818
  %v9820 = vrot.slane %v9811, %v9819
  %v9821 = vlaneseq
  %v9822 = vshrl.u32 %v9821, 7
  %v9823 = vsub.s32 2, %v9822
  %v9824 = vrot.slane %v9811, %v9823
  %v9825 = vlaneseq
  %v9826 = vshrl.u32 %v9825, 7
  %v9827 = vsub.s32 3, %v9826
  %v9828 = vrot.slane %v9811, %v9827
  %9829 = vrot.lane.b32.xlu0 %v9816, 112
  %v9830 = vpop.permute.xlu0 %9829
  %9831 = vrot.lane.b32.xlu0 %v9820, 112
  %v9832 = vpop.permute.xlu0 %9831
  %9833 = vrot.lane.b32.xlu0 %v9824, 112
  %v9834 = vpop.permute.xlu0 %9833
  %9835 = vrot.lane.b32.xlu0 %v9828, 112
  %v9836 = vpop.permute.xlu0 %9835
  %v9837 = vsel %vm210, %v9830, %v9832
  %v9838 = vsel %vm210, %v9832, %v9834
  %v9839 = vsel %vm210, %v9834, %v9836
  %v9845 = vmul.f32 %v9726, %v9830
  %v9846 = vmul.f32 %v9727, %v9837
  %v9847 = vmul.f32 %v9728, %v9838
  %v9848 = vmul.f32 %v9729, %v9839
  %v9849 = vmul.f32 %v9730, %v9836
  %v9850 = vmul.f32 %v9731, %v9830
  %v9851 = vmul.f32 %v9732, %v9837
  %v9852 = vmul.f32 %v9733, %v9838
  %v9853 = vmul.f32 %v9734, %v9839
  %v9854 = vmul.f32 %v9735, %v9836
  %v9855 = vmul.f32 %v9736, %v9830
  %v9856 = vmul.f32 %v9737, %v9837
  %v9857 = vmul.f32 %v9738, %v9838
  %v9858 = vmul.f32 %v9739, %v9839
  %v9859 = vmul.f32 %v9740, %v9836
  %v9860 = vmul.f32 %v9741, %v9830
  %v9861 = vmul.f32 %v9742, %v9837
  %v9862 = vmul.f32 %v9743, %v9838
  %v9863 = vmul.f32 %v9744, %v9839
  %v9864 = vmul.f32 %v9745, %v9836
  %v9865 = vpack.c.bf16 %v9850, %v9845
  %v9866 = vpack.c.bf16 %v9851, %v9846
  %v9867 = vpack.c.bf16 %v9852, %v9847
  %v9868 = vpack.c.bf16 %v9853, %v9848
  %v9869 = vpack.c.bf16 %v9854, %v9849
  %v9870 = vpack.c.bf16 %v9860, %v9855
  %v9871 = vpack.c.bf16 %v9861, %v9856
  %v9872 = vpack.c.bf16 %v9862, %v9857
  %v9873 = vpack.c.bf16 %v9863, %v9858
  %v9874 = vpack.c.bf16 %v9864, %v9859
  %s9875 = scalar_lea.vmem %s14, 4
  %v9876 = vld [vmem:[%s9875] sm:$0xf]
  %9887 = vrot.lane.b32.xlu0 %v9865, 16
  %v9888 = vpop.permute.xlu0 %9887
  %9889 = vrot.lane.b32.xlu0 %v9866, 16
  %v9890 = vpop.permute.xlu0 %9889
  %9891 = vrot.lane.b32.xlu0 %v9867, 16
  %v9892 = vpop.permute.xlu0 %9891
  %9893 = vrot.lane.b32.xlu0 %v9868, 16
  %v9894 = vpop.permute.xlu0 %9893
  %9895 = vrot.lane.b32.xlu0 %v9869, 16
  %v9896 = vpop.permute.xlu0 %9895
  %9897 = vrot.lane.b32.xlu0 %v9870, 16
  %v9898 = vpop.permute.xlu0 %9897
  %9899 = vrot.lane.b32.xlu0 %v9871, 16
  %v9900 = vpop.permute.xlu0 %9899
  %9901 = vrot.lane.b32.xlu0 %v9872, 16
  %v9902 = vpop.permute.xlu0 %9901
  %9903 = vrot.lane.b32.xlu0 %v9873, 16
  %v9904 = vpop.permute.xlu0 %9903
  %9905 = vrot.lane.b32.xlu0 %v9874, 16
  %v9906 = vpop.permute.xlu0 %9905
  %v9907 = vsel %vm294, %v9888, %v9890
  %v9908 = vsel %vm294, %v9890, %v9892
  %v9909 = vsel %vm294, %v9892, %v9894
  %v9910 = vsel %vm294, %v9894, %v9896
  %v9911 = vsel %vm294, %v9898, %v9900
  %v9912 = vsel %vm294, %v9900, %v9902
  %v9913 = vsel %vm294, %v9902, %v9904
  %v9914 = vsel %vm294, %v9904, %v9906
  %v9924 = vsel %vm311, %v9876, 0
  %9926 = vmatprep.subr.bf16.mxu0 %v9908
  %9927 = vmatpush1.bf16.msra.mxu0 %v9907
  %9928 = vmatprep.subr.bf16.mxu0 %v9912
  %9929 = vmatpush1.bf16.msra.mxu0 %v9911
  %9930 = vmatprep.subr.bf16.mxu0 0
  %9931 = vmatpush1.bf16.msra.mxu0 0
  %9932 = vmatprep.subr.bf16.mxu0 0
  %9933 = vmatpush1.bf16.msra.mxu0 0
  %9934 = vmatprep.subr.bf16.mxu0 0
  %9935 = vmatpush1.bf16.msra.mxu0 0
  %9936 = vmatprep.subr.bf16.mxu0 0
  %9937 = vmatpush1.bf16.msra.mxu0 0
  %9938 = vmatprep.subr.bf16.mxu0 0
  %9939 = vmatpush1.bf16.msra.mxu0 0
  %9940 = vmatprep.subr.bf16.mxu0 0
  %9941 = vmatpush1.bf16.msra.mxu0 0
  %9942 = vmatprep.subr.bf16.mxu0 0
  %9943 = vmatpush1.bf16.msra.mxu0 0
  %9944 = vmatprep.subr.bf16.mxu0 0
  %9945 = vmatpush1.bf16.msra.mxu0 0
  %9946 = vmatprep.subr.bf16.mxu0 0
  %9947 = vmatpush1.bf16.msra.mxu0 0
  %9948 = vmatprep.subr.bf16.mxu0 0
  %9949 = vmatpush1.bf16.msra.mxu0 0
  %9950 = vmatprep.subr.bf16.mxu0 0
  %9951 = vmatpush1.bf16.msra.mxu0 0
  %9952 = vmatprep.subr.bf16.mxu0 0
  %9953 = vmatpush1.bf16.msra.mxu0 0
  %9954 = vmatprep.subr.bf16.mxu0 0
  %9955 = vmatpush1.bf16.msra.mxu0 0
  %9956 = vmatprep.subr.bf16.mxu0 0
  %9957 = vmatpush1.bf16.msra.mxu0 0
  %9958 = vmatprep.mubr.bf16.mxu0 0
  %9959 = vmatmul.mubr.bf16.gmra.mrb[0].mxu0 %v9924
  %v9960 = vpop.f32.mrb[0].mxu0
  %v9961 = vadd.f32 0.0, %v9960
  %v9962 = vpop.f32.mrb[0].mxu0
  %v9963 = vadd.f32 0.0, %v9962
  %v9964 = vpop.f32.mrb[0].mxu0
  %v9965 = vpop.f32.mrb[0].mxu0
  %9966 = vdwg.mxu0
  %9967 = vmatprep.subr.bf16.mxu0 %v9910
  %9968 = vmatpush1.bf16.msra.mxu0 %v9909
  %9969 = vmatprep.subr.bf16.mxu0 %v9914
  %9970 = vmatpush1.bf16.msra.mxu0 %v9913
  %9971 = vmatprep.subr.bf16.mxu0 0
  %9972 = vmatpush1.bf16.msra.mxu0 0
  %9973 = vmatprep.subr.bf16.mxu0 0
  %9974 = vmatpush1.bf16.msra.mxu0 0
  %9975 = vmatprep.subr.bf16.mxu0 0
  %9976 = vmatpush1.bf16.msra.mxu0 0
  %9977 = vmatprep.subr.bf16.mxu0 0
  %9978 = vmatpush1.bf16.msra.mxu0 0
  %9979 = vmatprep.subr.bf16.mxu0 0
  %9980 = vmatpush1.bf16.msra.mxu0 0
  %9981 = vmatprep.subr.bf16.mxu0 0
  %9982 = vmatpush1.bf16.msra.mxu0 0
  %9983 = vmatprep.subr.bf16.mxu0 0
  %9984 = vmatpush1.bf16.msra.mxu0 0
  %9985 = vmatprep.subr.bf16.mxu0 0
  %9986 = vmatpush1.bf16.msra.mxu0 0
  %9987 = vmatprep.subr.bf16.mxu0 0
  %9988 = vmatpush1.bf16.msra.mxu0 0
  %9989 = vmatprep.subr.bf16.mxu0 0
  %9990 = vmatpush1.bf16.msra.mxu0 0
  %9991 = vmatprep.subr.bf16.mxu0 0
  %9992 = vmatpush1.bf16.msra.mxu0 0
  %9993 = vmatprep.subr.bf16.mxu0 0
  %9994 = vmatpush1.bf16.msra.mxu0 0
  %9995 = vmatprep.subr.bf16.mxu0 0
  %9996 = vmatpush1.bf16.msra.mxu0 0
  %9997 = vmatprep.subr.bf16.mxu0 0
  %9998 = vmatpush1.bf16.msra.mxu0 0
  %9999 = vmatprep.mubr.bf16.mxu0 0
  %10000 = vmatmul.mubr.bf16.gmra.mrb[0].mxu0 %v9924
  %v10001 = vpop.f32.mrb[0].mxu0
  %v10002 = vadd.f32 0.0, %v10001
  %v10003 = vpop.f32.mrb[0].mxu0
  %v10004 = vadd.f32 0.0, %v10003
  %v10005 = vpop.f32.mrb[0].mxu0
  %v10006 = vpop.f32.mrb[0].mxu0
  %10007 = vdwg.mxu0
  %10018 = vrot.lane.b32.xlu0 %v9800, 17
  %v10019 = vpop.permute.xlu0 %10018
  %10020 = vrot.lane.b32.xlu0 %v9801, 17
  %v10021 = vpop.permute.xlu0 %10020
  %10022 = vrot.lane.b32.xlu0 %v9802, 17
  %v10023 = vpop.permute.xlu0 %10022
  %10024 = vrot.lane.b32.xlu0 %v9803, 17
  %v10025 = vpop.permute.xlu0 %10024
  %10026 = vrot.lane.b32.xlu0 %v9804, 17
  %v10027 = vpop.permute.xlu0 %10026
  %10028 = vrot.lane.b32.xlu0 %v9805, 17
  %v10029 = vpop.permute.xlu0 %10028
  %10030 = vrot.lane.b32.xlu0 %v9806, 17
  %v10031 = vpop.permute.xlu0 %10030
  %10032 = vrot.lane.b32.xlu0 %v9807, 17
  %v10033 = vpop.permute.xlu0 %10032
  %10034 = vrot.lane.b32.xlu0 %v9808, 17
  %v10035 = vpop.permute.xlu0 %10034
  %10036 = vrot.lane.b32.xlu0 %v9809, 17
  %v10037 = vpop.permute.xlu0 %10036
  %v10038 = vsel %vm464, %v10019, %v10021
  %v10039 = vsel %vm464, %v10021, %v10023
  %v10040 = vsel %vm464, %v10023, %v10025
  %v10041 = vsel %vm464, %v10025, %v10027
  %v10042 = vsel %vm464, %v10029, %v10031
  %v10043 = vsel %vm464, %v10031, %v10033
  %v10044 = vsel %vm464, %v10033, %v10035
  %v10045 = vsel %vm464, %v10035, %v10037
  %v10055 = vsel %vm311, %v9810, 0
  %10057 = vmatprep.subr.bf16.mxu0 %v10039
  %10058 = vmatpush1.bf16.msra.mxu0 %v10038
  %10059 = vmatprep.subr.bf16.mxu0 %v10043
  %10060 = vmatpush1.bf16.msra.mxu0 %v10042
  %10061 = vmatprep.subr.bf16.mxu0 0
  %10062 = vmatpush1.bf16.msra.mxu0 0
  %10063 = vmatprep.subr.bf16.mxu0 0
  %10064 = vmatpush1.bf16.msra.mxu0 0
  %10065 = vmatprep.subr.bf16.mxu0 0
  %10066 = vmatpush1.bf16.msra.mxu0 0
  %10067 = vmatprep.subr.bf16.mxu0 0
  %10068 = vmatpush1.bf16.msra.mxu0 0
  %10069 = vmatprep.subr.bf16.mxu0 0
  %10070 = vmatpush1.bf16.msra.mxu0 0
  %10071 = vmatprep.subr.bf16.mxu0 0
  %10072 = vmatpush1.bf16.msra.mxu0 0
  %10073 = vmatprep.subr.bf16.mxu0 0
  %10074 = vmatpush1.bf16.msra.mxu0 0
  %10075 = vmatprep.subr.bf16.mxu0 0
  %10076 = vmatpush1.bf16.msra.mxu0 0
  %10077 = vmatprep.subr.bf16.mxu0 0
  %10078 = vmatpush1.bf16.msra.mxu0 0
  %10079 = vmatprep.subr.bf16.mxu0 0
  %10080 = vmatpush1.bf16.msra.mxu0 0
  %10081 = vmatprep.subr.bf16.mxu0 0
  %10082 = vmatpush1.bf16.msra.mxu0 0
  %10083 = vmatprep.subr.bf16.mxu0 0
  %10084 = vmatpush1.bf16.msra.mxu0 0
  %10085 = vmatprep.subr.bf16.mxu0 0
  %10086 = vmatpush1.bf16.msra.mxu0 0
  %10087 = vmatprep.subr.bf16.mxu0 0
  %10088 = vmatpush1.bf16.msra.mxu0 0
  %10089 = vmatprep.mubr.bf16.mxu0 0
  %10090 = vmatmul.mubr.bf16.gmra.mrb[0].mxu0 %v10055
  %v10091 = vpop.f32.mrb[0].mxu0
  %v10092 = vadd.f32 %v9961, %v10091
  %v10093 = vpop.f32.mrb[0].mxu0
  %v10094 = vadd.f32 %v9963, %v10093
  %v10095 = vpop.f32.mrb[0].mxu0
  %v10096 = vpop.f32.mrb[0].mxu0
  %10097 = vdwg.mxu0
  %10098 = vmatprep.subr.bf16.mxu0 %v10041
  %10099 = vmatpush1.bf16.msra.mxu0 %v10040
  %10100 = vmatprep.subr.bf16.mxu0 %v10045
  %10101 = vmatpush1.bf16.msra.mxu0 %v10044
  %10102 = vmatprep.subr.bf16.mxu0 0
  %10103 = vmatpush1.bf16.msra.mxu0 0
  %10104 = vmatprep.subr.bf16.mxu0 0
  %10105 = vmatpush1.bf16.msra.mxu0 0
  %10106 = vmatprep.subr.bf16.mxu0 0
  %10107 = vmatpush1.bf16.msra.mxu0 0
  %10108 = vmatprep.subr.bf16.mxu0 0
  %10109 = vmatpush1.bf16.msra.mxu0 0
  %10110 = vmatprep.subr.bf16.mxu0 0
  %10111 = vmatpush1.bf16.msra.mxu0 0
  %10112 = vmatprep.subr.bf16.mxu0 0
  %10113 = vmatpush1.bf16.msra.mxu0 0
  %10114 = vmatprep.subr.bf16.mxu0 0
  %10115 = vmatpush1.bf16.msra.mxu0 0
  %10116 = vmatprep.subr.bf16.mxu0 0
  %10117 = vmatpush1.bf16.msra.mxu0 0
  %10118 = vmatprep.subr.bf16.mxu0 0
  %10119 = vmatpush1.bf16.msra.mxu0 0
  %10120 = vmatprep.subr.bf16.mxu0 0
  %10121 = vmatpush1.bf16.msra.mxu0 0
  %10122 = vmatprep.subr.bf16.mxu0 0
  %10123 = vmatpush1.bf16.msra.mxu0 0
  %10124 = vmatprep.subr.bf16.mxu0 0
  %10125 = vmatpush1.bf16.msra.mxu0 0
  %10126 = vmatprep.subr.bf16.mxu0 0
  %10127 = vmatpush1.bf16.msra.mxu0 0
  %10128 = vmatprep.subr.bf16.mxu0 0
  %10129 = vmatpush1.bf16.msra.mxu0 0
  %10130 = vmatprep.mubr.bf16.mxu0 0
  %10131 = vmatmul.mubr.bf16.gmra.mrb[0].mxu0 %v10055
  %v10132 = vpop.f32.mrb[0].mxu0
  %v10133 = vadd.f32 %v10002, %v10132
  %v10134 = vpop.f32.mrb[0].mxu0
  %v10135 = vadd.f32 %v10004, %v10134
  %v10136 = vpop.f32.mrb[0].mxu0
  %v10137 = vpop.f32.mrb[0].mxu0
  %10138 = vdwg.mxu0
  %v10139 = vld [vmem:[%s593] sm:$0xf]
  %v10141 = vlaneseq
  %v10142 = vshrl.u32 %v10141, 7
  %v10143 = vsub.s32 0, %v10142
  %v10144 = vrot.slane %v10139, %v10143
  %v10145 = vlaneseq
  %v10146 = vshrl.u32 %v10145, 7
  %v10147 = vsub.s32 1, %v10146
  %v10148 = vrot.slane %v10139, %v10147
  %v10149 = vlaneseq
  %v10150 = vshrl.u32 %v10149, 7
  %v10151 = vsub.s32 2, %v10150
  %v10152 = vrot.slane %v10139, %v10151
  %v10153 = vlaneseq
  %v10154 = vshrl.u32 %v10153, 7
  %v10155 = vsub.s32 3, %v10154
  %v10156 = vrot.slane %v10139, %v10155
  %10157 = vrot.lane.b32.xlu0 %v10144, 113
  %v10158 = vpop.permute.xlu0 %10157
  %10159 = vrot.lane.b32.xlu0 %v10148, 113
  %v10160 = vpop.permute.xlu0 %10159
  %10161 = vrot.lane.b32.xlu0 %v10152, 113
  %v10162 = vpop.permute.xlu0 %10161
  %10163 = vrot.lane.b32.xlu0 %v10156, 113
  %v10164 = vpop.permute.xlu0 %10163
  %v10165 = vsel %vm620, %v10158, %v10160
  %v10166 = vsel %vm620, %v10160, %v10162
  %v10167 = vsel %vm620, %v10162, %v10164
  %v10173 = vmul.f32 %v9726, %v10158
  %v10174 = vmul.f32 %v9727, %v10165
  %v10175 = vmul.f32 %v9728, %v10166
  %v10176 = vmul.f32 %v9729, %v10167
  %v10177 = vmul.f32 %v9730, %v10164
  %v10178 = vmul.f32 %v9731, %v10158
  %v10179 = vmul.f32 %v9732, %v10165
  %v10180 = vmul.f32 %v9733, %v10166
  %v10181 = vmul.f32 %v9734, %v10167
  %v10182 = vmul.f32 %v9735, %v10164
  %v10183 = vmul.f32 %v9736, %v10158
  %v10184 = vmul.f32 %v9737, %v10165
  %v10185 = vmul.f32 %v9738, %v10166
  %v10186 = vmul.f32 %v9739, %v10167
  %v10187 = vmul.f32 %v9740, %v10164
  %v10188 = vmul.f32 %v9741, %v10158
  %v10189 = vmul.f32 %v9742, %v10165
  %v10190 = vmul.f32 %v9743, %v10166
  %v10191 = vmul.f32 %v9744, %v10167
  %v10192 = vmul.f32 %v9745, %v10164
  %v10193 = vpack.c.bf16 %v10178, %v10173
  %v10194 = vpack.c.bf16 %v10179, %v10174
  %v10195 = vpack.c.bf16 %v10180, %v10175
  %v10196 = vpack.c.bf16 %v10181, %v10176
  %v10197 = vpack.c.bf16 %v10182, %v10177
  %v10198 = vpack.c.bf16 %v10188, %v10183
  %v10199 = vpack.c.bf16 %v10189, %v10184
  %v10200 = vpack.c.bf16 %v10190, %v10185
  %v10201 = vpack.c.bf16 %v10191, %v10186
  %v10202 = vpack.c.bf16 %v10192, %v10187
  %s10203 = scalar_lea.vmem %s14, 8
  %v10204 = vld [vmem:[%s10203] sm:$0xf]
  %10215 = vrot.lane.b32.xlu0 %v10193, 15
  %v10216 = vpop.permute.xlu0 %10215
  %10217 = vrot.lane.b32.xlu0 %v10194, 15
  %v10218 = vpop.permute.xlu0 %10217
  %10219 = vrot.lane.b32.xlu0 %v10195, 15
  %v10220 = vpop.permute.xlu0 %10219
  %10221 = vrot.lane.b32.xlu0 %v10196, 15
  %v10222 = vpop.permute.xlu0 %10221
  %10223 = vrot.lane.b32.xlu0 %v10197, 15
  %v10224 = vpop.permute.xlu0 %10223
  %10225 = vrot.lane.b32.xlu0 %v10198, 15
  %v10226 = vpop.permute.xlu0 %10225
  %10227 = vrot.lane.b32.xlu0 %v10199, 15
  %v10228 = vpop.permute.xlu0 %10227
  %10229 = vrot.lane.b32.xlu0 %v10200, 15
  %v10230 = vpop.permute.xlu0 %10229
  %10231 = vrot.lane.b32.xlu0 %v10201, 15
  %v10232 = vpop.permute.xlu0 %10231
  %10233 = vrot.lane.b32.xlu0 %v10202, 15
  %v10234 = vpop.permute.xlu0 %10233
  %v10235 = vsel %vm704, %v10216, %v10218
  %v10236 = vsel %vm704, %v10218, %v10220
  %v10237 = vsel %vm704, %v10220, %v10222
  %v10238 = vsel %vm704, %v10222, %v10224
  %v10239 = vsel %vm704, %v10226, %v10228
  %v10240 = vsel %vm704, %v10228, %v10230
  %v10241 = vsel %vm704, %v10230, %v10232
  %v10242 = vsel %vm704, %v10232, %v10234
  %v10252 = vsel %vm311, %v10204, 0
  %10254 = vmatprep.subr.bf16.mxu0 %v10236
  %10255 = vmatpush1.bf16.msra.mxu0 %v10235
  %10256 = vmatprep.subr.bf16.mxu0 %v10240
  %10257 = vmatpush1.bf16.msra.mxu0 %v10239
  %10258 = vmatprep.subr.bf16.mxu0 0
  %10259 = vmatpush1.bf16.msra.mxu0 0
  %10260 = vmatprep.subr.bf16.mxu0 0
  %10261 = vmatpush1.bf16.msra.mxu0 0
  %10262 = vmatprep.subr.bf16.mxu0 0
  %10263 = vmatpush1.bf16.msra.mxu0 0
  %10264 = vmatprep.subr.bf16.mxu0 0
  %10265 = vmatpush1.bf16.msra.mxu0 0
  %10266 = vmatprep.subr.bf16.mxu0 0
  %10267 = vmatpush1.bf16.msra.mxu0 0
  %10268 = vmatprep.subr.bf16.mxu0 0
  %10269 = vmatpush1.bf16.msra.mxu0 0
  %10270 = vmatprep.subr.bf16.mxu0 0
  %10271 = vmatpush1.bf16.msra.mxu0 0
  %10272 = vmatprep.subr.bf16.mxu0 0
  %10273 = vmatpush1.bf16.msra.mxu0 0
  %10274 = vmatprep.subr.bf16.mxu0 0
  %10275 = vmatpush1.bf16.msra.mxu0 0
  %10276 = vmatprep.subr.bf16.mxu0 0
  %10277 = vmatpush1.bf16.msra.mxu0 0
  %10278 = vmatprep.subr.bf16.mxu0 0
  %10279 = vmatpush1.bf16.msra.mxu0 0
  %10280 = vmatprep.subr.bf16.mxu0 0
  %10281 = vmatpush1.bf16.msra.mxu0 0
  %10282 = vmatprep.subr.bf16.mxu0 0
  %10283 = vmatpush1.bf16.msra.mxu0 0
  %10284 = vmatprep.subr.bf16.mxu0 0
  %10285 = vmatpush1.bf16.msra.mxu0 0
  %10286 = vmatprep.mubr.bf16.mxu0 0
  %10287 = vmatmul.mubr.bf16.gmra.mrb[0].mxu0 %v10252
  %v10288 = vpop.f32.mrb[0].mxu0
  %v10289 = vadd.f32 0.0, %v10288
  %v10290 = vpop.f32.mrb[0].mxu0
  %v10291 = vadd.f32 0.0, %v10290
  %v10292 = vpop.f32.mrb[0].mxu0
  %v10293 = vpop.f32.mrb[0].mxu0
  %10294 = vdwg.mxu0
  %10295 = vmatprep.subr.bf16.mxu0 %v10238
  %10296 = vmatpush1.bf16.msra.mxu0 %v10237
  %10297 = vmatprep.subr.bf16.mxu0 %v10242
  %10298 = vmatpush1.bf16.msra.mxu0 %v10241
  %10299 = vmatprep.subr.bf16.mxu0 0
  %10300 = vmatpush1.bf16.msra.mxu0 0
  %10301 = vmatprep.subr.bf16.mxu0 0
  %10302 = vmatpush1.bf16.msra.mxu0 0
  %10303 = vmatprep.subr.bf16.mxu0 0
  %10304 = vmatpush1.bf16.msra.mxu0 0
  %10305 = vmatprep.subr.bf16.mxu0 0
  %10306 = vmatpush1.bf16.msra.mxu0 0
  %10307 = vmatprep.subr.bf16.mxu0 0
  %10308 = vmatpush1.bf16.msra.mxu0 0
  %10309 = vmatprep.subr.bf16.mxu0 0
  %10310 = vmatpush1.bf16.msra.mxu0 0
  %10311 = vmatprep.subr.bf16.mxu0 0
  %10312 = vmatpush1.bf16.msra.mxu0 0
  %10313 = vmatprep.subr.bf16.mxu0 0
  %10314 = vmatpush1.bf16.msra.mxu0 0
  %10315 = vmatprep.subr.bf16.mxu0 0
  %10316 = vmatpush1.bf16.msra.mxu0 0
  %10317 = vmatprep.subr.bf16.mxu0 0
  %10318 = vmatpush1.bf16.msra.mxu0 0
  %10319 = vmatprep.subr.bf16.mxu0 0
  %10320 = vmatpush1.bf16.msra.mxu0 0
  %10321 = vmatprep.subr.bf16.mxu0 0
  %10322 = vmatpush1.bf16.msra.mxu0 0
  %10323 = vmatprep.subr.bf16.mxu0 0
  %10324 = vmatpush1.bf16.msra.mxu0 0
  %10325 = vmatprep.subr.bf16.mxu0 0
  %10326 = vmatpush1.bf16.msra.mxu0 0
  %10327 = vmatprep.mubr.bf16.mxu0 0
  %10328 = vmatmul.mubr.bf16.gmra.mrb[0].mxu0 %v10252
  %v10329 = vpop.f32.mrb[0].mxu0
  %v10330 = vadd.f32 0.0, %v10329
  %v10331 = vpop.f32.mrb[0].mxu0
  %v10332 = vadd.f32 0.0, %v10331
  %v10333 = vpop.f32.mrb[0].mxu0
  %v10334 = vpop.f32.mrb[0].mxu0
  %10335 = vdwg.mxu0
  %v10336 = vadd.f32 %v10092, %v10289
  %v10337 = vadd.f32 %v10094, %v10291
  %v10338 = vadd.f32 %v10133, %v10330
  %v10339 = vadd.f32 %v10135, %v10332
  %v10340 = vld [vmem:[%s849] sm:$0xf]
  %v10342 = vlaneseq
  %v10343 = vshrl.u32 %v10342, 7
  %v10344 = vsub.s32 0, %v10343
  %v10345 = vrot.slane %v10340, %v10344
  %v10346 = vlaneseq
  %v10347 = vshrl.u32 %v10346, 7
  %v10348 = vsub.s32 1, %v10347
  %v10349 = vrot.slane %v10340, %v10348
  %v10350 = vlaneseq
  %v10351 = vshrl.u32 %v10350, 7
  %v10352 = vsub.s32 2, %v10351
  %v10353 = vrot.slane %v10340, %v10352
  %v10354 = vlaneseq
  %v10355 = vshrl.u32 %v10354, 7
  %v10356 = vsub.s32 3, %v10355
  %v10357 = vrot.slane %v10340, %v10356
  %10358 = vrot.lane.b32.xlu0 %v10345, 127
  %v10359 = vpop.permute.xlu0 %10358
  %10360 = vrot.lane.b32.xlu0 %v10349, 127
  %v10361 = vpop.permute.xlu0 %10360
  %10362 = vrot.lane.b32.xlu0 %v10353, 127
  %v10363 = vpop.permute.xlu0 %10362
  %10364 = vrot.lane.b32.xlu0 %v10357, 127
  %v10365 = vpop.permute.xlu0 %10364
  %v10366 = vsel %vm876, %v10359, %v10361
  %v10367 = vsel %vm876, %v10361, %v10363
  %v10368 = vsel %vm876, %v10363, %v10365
  %v10374 = vmul.f32 %v9726, %v10359
  %v10375 = vmul.f32 %v9727, %v10366
  %v10376 = vmul.f32 %v9728, %v10367
  %v10377 = vmul.f32 %v9729, %v10368
  %v10378 = vmul.f32 %v9730, %v10365
  %v10379 = vmul.f32 %v9731, %v10359
  %v10380 = vmul.f32 %v9732, %v10366
  %v10381 = vmul.f32 %v9733, %v10367
  %v10382 = vmul.f32 %v9734, %v10368
  %v10383 = vmul.f32 %v9735, %v10365
  %v10384 = vmul.f32 %v9736, %v10359
  %v10385 = vmul.f32 %v9737, %v10366
  %v10386 = vmul.f32 %v9738, %v10367
  %v10387 = vmul.f32 %v9739, %v10368
  %v10388 = vmul.f32 %v9740, %v10365
  %v10389 = vmul.f32 %v9741, %v10359
  %v10390 = vmul.f32 %v9742, %v10366
  %v10391 = vmul.f32 %v9743, %v10367
  %v10392 = vmul.f32 %v9744, %v10368
  %v10393 = vmul.f32 %v9745, %v10365
  %v10394 = vpack.c.bf16 %v10379, %v10374
  %v10395 = vpack.c.bf16 %v10380, %v10375
  %v10396 = vpack.c.bf16 %v10381, %v10376
  %v10397 = vpack.c.bf16 %v10382, %v10377
  %v10398 = vpack.c.bf16 %v10383, %v10378
  %v10399 = vpack.c.bf16 %v10389, %v10384
  %v10400 = vpack.c.bf16 %v10390, %v10385
  %v10401 = vpack.c.bf16 %v10391, %v10386
  %v10402 = vpack.c.bf16 %v10392, %v10387
  %v10403 = vpack.c.bf16 %v10393, %v10388
  %s10404 = scalar_lea.vmem %s14, 12
  %v10405 = vld [vmem:[%s10404] sm:$0xf]
  %10416 = vrot.lane.b32.xlu0 %v10394, 1
  %v10417 = vpop.permute.xlu0 %10416
  %10418 = vrot.lane.b32.xlu0 %v10395, 1
  %v10419 = vpop.permute.xlu0 %10418
  %10420 = vrot.lane.b32.xlu0 %v10396, 1
  %v10421 = vpop.permute.xlu0 %10420
  %10422 = vrot.lane.b32.xlu0 %v10397, 1
  %v10423 = vpop.permute.xlu0 %10422
  %10424 = vrot.lane.b32.xlu0 %v10398, 1
  %v10425 = vpop.permute.xlu0 %10424
  %10426 = vrot.lane.b32.xlu0 %v10399, 1
  %v10427 = vpop.permute.xlu0 %10426
  %10428 = vrot.lane.b32.xlu0 %v10400, 1
  %v10429 = vpop.permute.xlu0 %10428
  %10430 = vrot.lane.b32.xlu0 %v10401, 1
  %v10431 = vpop.permute.xlu0 %10430
  %10432 = vrot.lane.b32.xlu0 %v10402, 1
  %v10433 = vpop.permute.xlu0 %10432
  %10434 = vrot.lane.b32.xlu0 %v10403, 1
  %v10435 = vpop.permute.xlu0 %10434
  %v10436 = vsel %vm960, %v10417, %v10419
  %v10437 = vsel %vm960, %v10419, %v10421
  %v10438 = vsel %vm960, %v10421, %v10423
  %v10439 = vsel %vm960, %v10423, %v10425
  %v10440 = vsel %vm960, %v10427, %v10429
  %v10441 = vsel %vm960, %v10429, %v10431
  %v10442 = vsel %vm960, %v10431, %v10433
  %v10443 = vsel %vm960, %v10433, %v10435
  %v10453 = vsel %vm311, %v10405, 0
  %10455 = vmatprep.subr.bf16.mxu0 %v10437
  %10456 = vmatpush1.bf16.msra.mxu0 %v10436
  %10457 = vmatprep.subr.bf16.mxu0 %v10441
  %10458 = vmatpush1.bf16.msra.mxu0 %v10440
  %10459 = vmatprep.subr.bf16.mxu0 0
  %10460 = vmatpush1.bf16.msra.mxu0 0
  %10461 = vmatprep.subr.bf16.mxu0 0
  %10462 = vmatpush1.bf16.msra.mxu0 0
  %10463 = vmatprep.subr.bf16.mxu0 0
  %10464 = vmatpush1.bf16.msra.mxu0 0
  %10465 = vmatprep.subr.bf16.mxu0 0
  %10466 = vmatpush1.bf16.msra.mxu0 0
  %10467 = vmatprep.subr.bf16.mxu0 0
  %10468 = vmatpush1.bf16.msra.mxu0 0
  %10469 = vmatprep.subr.bf16.mxu0 0
  %10470 = vmatpush1.bf16.msra.mxu0 0
  %10471 = vmatprep.subr.bf16.mxu0 0
  %10472 = vmatpush1.bf16.msra.mxu0 0
  %10473 = vmatprep.subr.bf16.mxu0 0
  %10474 = vmatpush1.bf16.msra.mxu0 0
  %10475 = vmatprep.subr.bf16.mxu0 0
  %10476 = vmatpush1.bf16.msra.mxu0 0
  %10477 = vmatprep.subr.bf16.mxu0 0
  %10478 = vmatpush1.bf16.msra.mxu0 0
  %10479 = vmatprep.subr.bf16.mxu0 0
  %10480 = vmatpush1.bf16.msra.mxu0 0
  %10481 = vmatprep.subr.bf16.mxu0 0
  %10482 = vmatpush1.bf16.msra.mxu0 0
  %10483 = vmatprep.subr.bf16.mxu0 0
  %10484 = vmatpush1.bf16.msra.mxu0 0
  %10485 = vmatprep.subr.bf16.mxu0 0
  %10486 = vmatpush1.bf16.msra.mxu0 0
  %10487 = vmatprep.mubr.bf16.mxu0 0
  %10488 = vmatmul.mubr.bf16.gmra.mrb[0].mxu0 %v10453
  %v10489 = vpop.f32.mrb[0].mxu0
  %v10490 = vadd.f32 0.0, %v10489
  %v10491 = vpop.f32.mrb[0].mxu0
  %v10492 = vadd.f32 0.0, %v10491
  %v10493 = vpop.f32.mrb[0].mxu0
  %v10494 = vpop.f32.mrb[0].mxu0
  %10495 = vdwg.mxu0
  %10496 = vmatprep.subr.bf16.mxu0 %v10439
  %10497 = vmatpush1.bf16.msra.mxu0 %v10438
  %10498 = vmatprep.subr.bf16.mxu0 %v10443
  %10499 = vmatpush1.bf16.msra.mxu0 %v10442
  %10500 = vmatprep.subr.bf16.mxu0 0
  %10501 = vmatpush1.bf16.msra.mxu0 0
  %10502 = vmatprep.subr.bf16.mxu0 0
  %10503 = vmatpush1.bf16.msra.mxu0 0
  %10504 = vmatprep.subr.bf16.mxu0 0
  %10505 = vmatpush1.bf16.msra.mxu0 0
  %10506 = vmatprep.subr.bf16.mxu0 0
  %10507 = vmatpush1.bf16.msra.mxu0 0
  %10508 = vmatprep.subr.bf16.mxu0 0
  %10509 = vmatpush1.bf16.msra.mxu0 0
  %10510 = vmatprep.subr.bf16.mxu0 0
  %10511 = vmatpush1.bf16.msra.mxu0 0
  %10512 = vmatprep.subr.bf16.mxu0 0
  %10513 = vmatpush1.bf16.msra.mxu0 0
  %10514 = vmatprep.subr.bf16.mxu0 0
  %10515 = vmatpush1.bf16.msra.mxu0 0
  %10516 = vmatprep.subr.bf16.mxu0 0
  %10517 = vmatpush1.bf16.msra.mxu0 0
  %10518 = vmatprep.subr.bf16.mxu0 0
  %10519 = vmatpush1.bf16.msra.mxu0 0
  %10520 = vmatprep.subr.bf16.mxu0 0
  %10521 = vmatpush1.bf16.msra.mxu0 0
  %10522 = vmatprep.subr.bf16.mxu0 0
  %10523 = vmatpush1.bf16.msra.mxu0 0
  %10524 = vmatprep.subr.bf16.mxu0 0
  %10525 = vmatpush1.bf16.msra.mxu0 0
  %10526 = vmatprep.subr.bf16.mxu0 0
  %10527 = vmatpush1.bf16.msra.mxu0 0
  %10528 = vmatprep.mubr.bf16.mxu0 0
  %10529 = vmatmul.mubr.bf16.gmra.mrb[0].mxu0 %v10453
  %v10530 = vpop.f32.mrb[0].mxu0
  %v10531 = vadd.f32 0.0, %v10530
  %v10532 = vpop.f32.mrb[0].mxu0
  %v10533 = vadd.f32 0.0, %v10532
  %v10534 = vpop.f32.mrb[0].mxu0
  %v10535 = vpop.f32.mrb[0].mxu0
  %10536 = vdwg.mxu0
  %v10537 = vadd.f32 %v10336, %v10490
  %v10538 = vadd.f32 %v10337, %v10492
  %v10539 = vadd.f32 %v10338, %v10531
  %v10540 = vadd.f32 %v10339, %v10533
  %v10541 = vpack.c.bf16 %v9732, %v9727
  %v10542 = vpack.c.bf16 %v9733, %v9728
  %v10543 = vpack.c.bf16 %v9734, %v9729
  %v10544 = vpack.c.bf16 %v9735, %v9730
  %v10545 = vpack.c.bf16 %v9742, %v9737
  %v10546 = vpack.c.bf16 %v9743, %v9738
  %v10547 = vpack.c.bf16 %v9744, %v9739
  %v10548 = vpack.c.bf16 %v9745, %v9740
  %s10549 = scalar_lea.vmem %s14, 16
  %v10550 = vld [vmem:[%s10549] sm:$0xf]
  %v10552 = vsel %vm311, %v10550, 0
  %10554 = vmatprep.subr.bf16.mxu0 %v10542
  %10555 = vmatpush1.bf16.msra.mxu0 %v10541
  %10556 = vmatprep.subr.bf16.mxu0 %v10546
  %10557 = vmatpush1.bf16.msra.mxu0 %v10545
  %10558 = vmatprep.subr.bf16.mxu0 0
  %10559 = vmatpush1.bf16.msra.mxu0 0
  %10560 = vmatprep.subr.bf16.mxu0 0
  %10561 = vmatpush1.bf16.msra.mxu0 0
  %10562 = vmatprep.subr.bf16.mxu0 0
  %10563 = vmatpush1.bf16.msra.mxu0 0
  %10564 = vmatprep.subr.bf16.mxu0 0
  %10565 = vmatpush1.bf16.msra.mxu0 0
  %10566 = vmatprep.subr.bf16.mxu0 0
  %10567 = vmatpush1.bf16.msra.mxu0 0
  %10568 = vmatprep.subr.bf16.mxu0 0
  %10569 = vmatpush1.bf16.msra.mxu0 0
  %10570 = vmatprep.subr.bf16.mxu0 0
  %10571 = vmatpush1.bf16.msra.mxu0 0
  %10572 = vmatprep.subr.bf16.mxu0 0
  %10573 = vmatpush1.bf16.msra.mxu0 0
  %10574 = vmatprep.subr.bf16.mxu0 0
  %10575 = vmatpush1.bf16.msra.mxu0 0
  %10576 = vmatprep.subr.bf16.mxu0 0
  %10577 = vmatpush1.bf16.msra.mxu0 0
  %10578 = vmatprep.subr.bf16.mxu0 0
  %10579 = vmatpush1.bf16.msra.mxu0 0
  %10580 = vmatprep.subr.bf16.mxu0 0
  %10581 = vmatpush1.bf16.msra.mxu0 0
  %10582 = vmatprep.subr.bf16.mxu0 0
  %10583 = vmatpush1.bf16.msra.mxu0 0
  %10584 = vmatprep.subr.bf16.mxu0 0
  %10585 = vmatpush1.bf16.msra.mxu0 0
  %10586 = vmatprep.mubr.bf16.mxu0 0
  %10587 = vmatmul.mubr.bf16.gmra.mrb[0].mxu0 %v10552
  %v10588 = vpop.f32.mrb[0].mxu0
  %v10589 = vadd.f32 0.0, %v10588
  %v10590 = vpop.f32.mrb[0].mxu0
  %v10591 = vadd.f32 0.0, %v10590
  %v10592 = vpop.f32.mrb[0].mxu0
  %v10593 = vpop.f32.mrb[0].mxu0
  %10594 = vdwg.mxu0
  %10595 = vmatprep.subr.bf16.mxu0 %v10544
  %10596 = vmatpush1.bf16.msra.mxu0 %v10543
  %10597 = vmatprep.subr.bf16.mxu0 %v10548
  %10598 = vmatpush1.bf16.msra.mxu0 %v10547
  %10599 = vmatprep.subr.bf16.mxu0 0
  %10600 = vmatpush1.bf16.msra.mxu0 0
  %10601 = vmatprep.subr.bf16.mxu0 0
  %10602 = vmatpush1.bf16.msra.mxu0 0
  %10603 = vmatprep.subr.bf16.mxu0 0
  %10604 = vmatpush1.bf16.msra.mxu0 0
  %10605 = vmatprep.subr.bf16.mxu0 0
  %10606 = vmatpush1.bf16.msra.mxu0 0
  %10607 = vmatprep.subr.bf16.mxu0 0
  %10608 = vmatpush1.bf16.msra.mxu0 0
  %10609 = vmatprep.subr.bf16.mxu0 0
  %10610 = vmatpush1.bf16.msra.mxu0 0
  %10611 = vmatprep.subr.bf16.mxu0 0
  %10612 = vmatpush1.bf16.msra.mxu0 0
  %10613 = vmatprep.subr.bf16.mxu0 0
  %10614 = vmatpush1.bf16.msra.mxu0 0
  %10615 = vmatprep.subr.bf16.mxu0 0
  %10616 = vmatpush1.bf16.msra.mxu0 0
  %10617 = vmatprep.subr.bf16.mxu0 0
  %10618 = vmatpush1.bf16.msra.mxu0 0
  %10619 = vmatprep.subr.bf16.mxu0 0
  %10620 = vmatpush1.bf16.msra.mxu0 0
  %10621 = vmatprep.subr.bf16.mxu0 0
  %10622 = vmatpush1.bf16.msra.mxu0 0
  %10623 = vmatprep.subr.bf16.mxu0 0
  %10624 = vmatpush1.bf16.msra.mxu0 0
  %10625 = vmatprep.subr.bf16.mxu0 0
  %10626 = vmatpush1.bf16.msra.mxu0 0
  %10627 = vmatprep.mubr.bf16.mxu0 0
  %10628 = vmatmul.mubr.bf16.gmra.mrb[0].mxu0 %v10552
  %v10629 = vpop.f32.mrb[0].mxu0
  %v10630 = vadd.f32 0.0, %v10629
  %v10631 = vpop.f32.mrb[0].mxu0
  %v10632 = vadd.f32 0.0, %v10631
  %v10633 = vpop.f32.mrb[0].mxu0
  %v10634 = vpop.f32.mrb[0].mxu0
  %10635 = vdwg.mxu0
  %v10636 = vadd.f32 %v10537, %v10589
  %v10637 = vadd.f32 %v10538, %v10591
  %v10638 = vadd.f32 %v10539, %v10630
  %v10639 = vadd.f32 %v10540, %v10632
  %v10640 = vld [vmem:[#allocation2 + $0x8] sm:$0xff]
  %v10641 = vld [vmem:[#allocation2 + $0x10] sm:$0xff]
  %v10642 = vld [vmem:[#allocation2 + $0x18] sm:$0xff]
  %v10643 = vld [vmem:[#allocation2 + $0x20] sm:$0xff]
  %v10644 = vld [vmem:[#allocation2 + $0x28] sm:$0xff]
  %v10645 = vld [vmem:[#allocation2 + $0x38] sm:$0xff]
  %v10646 = vld [vmem:[#allocation2 + $0x40] sm:$0xff]
  %v10647 = vld [vmem:[#allocation2 + $0x48] sm:$0xff]
  %v10648 = vld [vmem:[#allocation2 + $0x50] sm:$0xff]
  %v10649 = vld [vmem:[#allocation2 + $0x58] sm:$0xff]
  %v10650 = vld [vmem:[#allocation2 + $0x68] sm:$0xff]
  %v10651 = vld [vmem:[#allocation2 + $0x70] sm:$0xff]
  %v10652 = vld [vmem:[#allocation2 + $0x78] sm:$0xff]
  %v10653 = vld [vmem:[#allocation2 + $0x80] sm:$0xff]
  %v10654 = vld [vmem:[#allocation2 + $0x88] sm:$0xff]
  %v10655 = vld [vmem:[#allocation2 + $0x98] sm:$0xff]
  %v10656 = vld [vmem:[#allocation2 + $0xa0] sm:$0xff]
  %v10657 = vld [vmem:[#allocation2 + $0xa8] sm:$0xff]
  %v10658 = vld [vmem:[#allocation2 + $0xb0] sm:$0xff]
  %v10659 = vld [vmem:[#allocation2 + $0xb8] sm:$0xff]
  %v10660 = vld [vmem:[%s1276] sm:$0xf]
  %v10662 = vlaneseq
  %v10663 = vshrl.u32 %v10662, 7
  %v10664 = vsub.s32 0, %v10663
  %v10665 = vrot.slane %v10660, %v10664
  %v10666 = vlaneseq
  %v10667 = vshrl.u32 %v10666, 7
  %v10668 = vsub.s32 1, %v10667
  %v10669 = vrot.slane %v10660, %v10668
  %v10670 = vlaneseq
  %v10671 = vshrl.u32 %v10670, 7
  %v10672 = vsub.s32 2, %v10671
  %v10673 = vrot.slane %v10660, %v10672
  %v10674 = vlaneseq
  %v10675 = vshrl.u32 %v10674, 7
  %v10676 = vsub.s32 3, %v10675
  %v10677 = vrot.slane %v10660, %v10676
  %10678 = vrot.lane.b32.xlu0 %v10665, 1
  %v10679 = vpop.permute.xlu0 %10678
  %10680 = vrot.lane.b32.xlu0 %v10669, 1
  %v10681 = vpop.permute.xlu0 %10680
  %10682 = vrot.lane.b32.xlu0 %v10673, 1
  %v10683 = vpop.permute.xlu0 %10682
  %10684 = vrot.lane.b32.xlu0 %v10677, 1
  %v10685 = vpop.permute.xlu0 %10684
  %v10686 = vsel %vm1303, %v10679, %v10681
  %v10687 = vsel %vm1303, %v10681, %v10683
  %v10688 = vsel %vm1303, %v10683, %v10685
  %v10694 = vmul.f32 %v10640, %v10679
  %v10695 = vmul.f32 %v10641, %v10686
  %v10696 = vmul.f32 %v10642, %v10687
  %v10697 = vmul.f32 %v10643, %v10688
  %v10698 = vmul.f32 %v10644, %v10685
  %v10699 = vmul.f32 %v10645, %v10679
  %v10700 = vmul.f32 %v10646, %v10686
  %v10701 = vmul.f32 %v10647, %v10687
  %v10702 = vmul.f32 %v10648, %v10688
  %v10703 = vmul.f32 %v10649, %v10685
  %v10704 = vmul.f32 %v10650, %v10679
  %v10705 = vmul.f32 %v10651, %v10686
  %v10706 = vmul.f32 %v10652, %v10687
  %v10707 = vmul.f32 %v10653, %v10688
  %v10708 = vmul.f32 %v10654, %v10685
  %v10709 = vmul.f32 %v10655, %v10679
  %v10710 = vmul.f32 %v10656, %v10686
  %v10711 = vmul.f32 %v10657, %v10687
  %v10712 = vmul.f32 %v10658, %v10688
  %v10713 = vmul.f32 %v10659, %v10685
  %v10714 = vpack.c.bf16 %v10699, %v10694
  %v10715 = vpack.c.bf16 %v10700, %v10695
  %v10716 = vpack.c.bf16 %v10701, %v10696
  %v10717 = vpack.c.bf16 %v10702, %v10697
  %v10718 = vpack.c.bf16 %v10703, %v10698
  %v10719 = vpack.c.bf16 %v10709, %v10704
  %v10720 = vpack.c.bf16 %v10710, %v10705
  %v10721 = vpack.c.bf16 %v10711, %v10706
  %v10722 = vpack.c.bf16 %v10712, %v10707
  %v10723 = vpack.c.bf16 %v10713, %v10708
  %s10724 = scalar_lea.vmem %s14, 20
  %v10725 = vld [vmem:[%s10724] sm:$0xf]
  %10736 = vrot.lane.b32.xlu0 %v10714, 127
  %v10737 = vpop.permute.xlu0 %10736
  %10738 = vrot.lane.b32.xlu0 %v10715, 127
  %v10739 = vpop.permute.xlu0 %10738
  %10740 = vrot.lane.b32.xlu0 %v10716, 127
  %v10741 = vpop.permute.xlu0 %10740
  %10742 = vrot.lane.b32.xlu0 %v10717, 127
  %v10743 = vpop.permute.xlu0 %10742
  %10744 = vrot.lane.b32.xlu0 %v10718, 127
  %v10745 = vpop.permute.xlu0 %10744
  %10746 = vrot.lane.b32.xlu0 %v10719, 127
  %v10747 = vpop.permute.xlu0 %10746
  %10748 = vrot.lane.b32.xlu0 %v10720, 127
  %v10749 = vpop.permute.xlu0 %10748
  %10750 = vrot.lane.b32.xlu0 %v10721, 127
  %v10751 = vpop.permute.xlu0 %10750
  %10752 = vrot.lane.b32.xlu0 %v10722, 127
  %v10753 = vpop.permute.xlu0 %10752
  %10754 = vrot.lane.b32.xlu0 %v10723, 127
  %v10755 = vpop.permute.xlu0 %10754
  %v10756 = vsel %vm1387, %v10737, %v10739
  %v10757 = vsel %vm1387, %v10739, %v10741
  %v10758 = vsel %vm1387, %v10741, %v10743
  %v10759 = vsel %vm1387, %v10743, %v10745
  %v10760 = vsel %vm1387, %v10747, %v10749
  %v10761 = vsel %vm1387, %v10749, %v10751
  %v10762 = vsel %vm1387, %v10751, %v10753
  %v10763 = vsel %vm1387, %v10753, %v10755
  %v10773 = vsel %vm311, %v10725, 0
  %10775 = vmatprep.subr.bf16.mxu0 %v10757
  %10776 = vmatpush1.bf16.msra.mxu0 %v10756
  %10777 = vmatprep.subr.bf16.mxu0 %v10761
  %10778 = vmatpush1.bf16.msra.mxu0 %v10760
  %10779 = vmatprep.subr.bf16.mxu0 0
  %10780 = vmatpush1.bf16.msra.mxu0 0
  %10781 = vmatprep.subr.bf16.mxu0 0
  %10782 = vmatpush1.bf16.msra.mxu0 0
  %10783 = vmatprep.subr.bf16.mxu0 0
  %10784 = vmatpush1.bf16.msra.mxu0 0
  %10785 = vmatprep.subr.bf16.mxu0 0
  %10786 = vmatpush1.bf16.msra.mxu0 0
  %10787 = vmatprep.subr.bf16.mxu0 0
  %10788 = vmatpush1.bf16.msra.mxu0 0
  %10789 = vmatprep.subr.bf16.mxu0 0
  %10790 = vmatpush1.bf16.msra.mxu0 0
  %10791 = vmatprep.subr.bf16.mxu0 0
  %10792 = vmatpush1.bf16.msra.mxu0 0
  %10793 = vmatprep.subr.bf16.mxu0 0
  %10794 = vmatpush1.bf16.msra.mxu0 0
  %10795 = vmatprep.subr.bf16.mxu0 0
  %10796 = vmatpush1.bf16.msra.mxu0 0
  %10797 = vmatprep.subr.bf16.mxu0 0
  %10798 = vmatpush1.bf16.msra.mxu0 0
  %10799 = vmatprep.subr.bf16.mxu0 0
  %10800 = vmatpush1.bf16.msra.mxu0 0
  %10801 = vmatprep.subr.bf16.mxu0 0
  %10802 = vmatpush1.bf16.msra.mxu0 0
  %10803 = vmatprep.subr.bf16.mxu0 0
  %10804 = vmatpush1.bf16.msra.mxu0 0
  %10805 = vmatprep.subr.bf16.mxu0 0
  %10806 = vmatpush1.bf16.msra.mxu0 0
  %10807 = vmatprep.mubr.bf16.mxu0 0
  %10808 = vmatmul.mubr.bf16.gmra.mrb[0].mxu0 %v10773
  %v10809 = vpop.f32.mrb[0].mxu0
  %v10810 = vadd.f32 0.0, %v10809
  %v10811 = vpop.f32.mrb[0].mxu0
  %v10812 = vadd.f32 0.0, %v10811
  %v10813 = vpop.f32.mrb[0].mxu0
  %v10814 = vpop.f32.mrb[0].mxu0
  %10815 = vdwg.mxu0
  %10816 = vmatprep.subr.bf16.mxu0 %v10759
  %10817 = vmatpush1.bf16.msra.mxu0 %v10758
  %10818 = vmatprep.subr.bf16.mxu0 %v10763
  %10819 = vmatpush1.bf16.msra.mxu0 %v10762
  %10820 = vmatprep.subr.bf16.mxu0 0
  %10821 = vmatpush1.bf16.msra.mxu0 0
  %10822 = vmatprep.subr.bf16.mxu0 0
  %10823 = vmatpush1.bf16.msra.mxu0 0
  %10824 = vmatprep.subr.bf16.mxu0 0
  %10825 = vmatpush1.bf16.msra.mxu0 0
  %10826 = vmatprep.subr.bf16.mxu0 0
  %10827 = vmatpush1.bf16.msra.mxu0 0
  %10828 = vmatprep.subr.bf16.mxu0 0
  %10829 = vmatpush1.bf16.msra.mxu0 0
  %10830 = vmatprep.subr.bf16.mxu0 0
  %10831 = vmatpush1.bf16.msra.mxu0 0
  %10832 = vmatprep.subr.bf16.mxu0 0
  %10833 = vmatpush1.bf16.msra.mxu0 0
  %10834 = vmatprep.subr.bf16.mxu0 0
  %10835 = vmatpush1.bf16.msra.mxu0 0
  %10836 = vmatprep.subr.bf16.mxu0 0
  %10837 = vmatpush1.bf16.msra.mxu0 0
  %10838 = vmatprep.subr.bf16.mxu0 0
  %10839 = vmatpush1.bf16.msra.mxu0 0
  %10840 = vmatprep.subr.bf16.mxu0 0
  %10841 = vmatpush1.bf16.msra.mxu0 0
  %10842 = vmatprep.subr.bf16.mxu0 0
  %10843 = vmatpush1.bf16.msra.mxu0 0
  %10844 = vmatprep.subr.bf16.mxu0 0
  %10845 = vmatpush1.bf16.msra.mxu0 0
  %10846 = vmatprep.subr.bf16.mxu0 0
  %10847 = vmatpush1.bf16.msra.mxu0 0
  %10848 = vmatprep.mubr.bf16.mxu0 0
  %10849 = vmatmul.mubr.bf16.gmra.mrb[0].mxu0 %v10773
  %v10850 = vpop.f32.mrb[0].mxu0
  %v10851 = vadd.f32 0.0, %v10850
  %v10852 = vpop.f32.mrb[0].mxu0
  %v10853 = vadd.f32 0.0, %v10852
  %v10854 = vpop.f32.mrb[0].mxu0
  %v10855 = vpop.f32.mrb[0].mxu0
  %10856 = vdwg.mxu0
  %v10857 = vadd.f32 %v10636, %v10810
  %v10858 = vadd.f32 %v10637, %v10812
  %v10859 = vadd.f32 %v10638, %v10851
  %v10860 = vadd.f32 %v10639, %v10853
  %v10861 = vld [vmem:[%s1532] sm:$0xf]
  %v10863 = vlaneseq
  %v10864 = vshrl.u32 %v10863, 7
  %v10865 = vsub.s32 0, %v10864
  %v10866 = vrot.slane %v10861, %v10865
  %v10867 = vlaneseq
  %v10868 = vshrl.u32 %v10867, 7
  %v10869 = vsub.s32 1, %v10868
  %v10870 = vrot.slane %v10861, %v10869
  %v10871 = vlaneseq
  %v10872 = vshrl.u32 %v10871, 7
  %v10873 = vsub.s32 2, %v10872
  %v10874 = vrot.slane %v10861, %v10873
  %v10875 = vlaneseq
  %v10876 = vshrl.u32 %v10875, 7
  %v10877 = vsub.s32 3, %v10876
  %v10878 = vrot.slane %v10861, %v10877
  %10879 = vrot.lane.b32.xlu0 %v10866, 15
  %v10880 = vpop.permute.xlu0 %10879
  %10881 = vrot.lane.b32.xlu0 %v10870, 15
  %v10882 = vpop.permute.xlu0 %10881
  %10883 = vrot.lane.b32.xlu0 %v10874, 15
  %v10884 = vpop.permute.xlu0 %10883
  %10885 = vrot.lane.b32.xlu0 %v10878, 15
  %v10886 = vpop.permute.xlu0 %10885
  %v10887 = vsel %vm1559, %v10880, %v10882
  %v10888 = vsel %vm1559, %v10882, %v10884
  %v10889 = vsel %vm1559, %v10884, %v10886
  %v10895 = vmul.f32 %v10640, %v10880
  %v10896 = vmul.f32 %v10641, %v10887
  %v10897 = vmul.f32 %v10642, %v10888
  %v10898 = vmul.f32 %v10643, %v10889
  %v10899 = vmul.f32 %v10644, %v10886
  %v10900 = vmul.f32 %v10645, %v10880
  %v10901 = vmul.f32 %v10646, %v10887
  %v10902 = vmul.f32 %v10647, %v10888
  %v10903 = vmul.f32 %v10648, %v10889
  %v10904 = vmul.f32 %v10649, %v10886
  %v10905 = vmul.f32 %v10650, %v10880
  %v10906 = vmul.f32 %v10651, %v10887
  %v10907 = vmul.f32 %v10652, %v10888
  %v10908 = vmul.f32 %v10653, %v10889
  %v10909 = vmul.f32 %v10654, %v10886
  %v10910 = vmul.f32 %v10655, %v10880
  %v10911 = vmul.f32 %v10656, %v10887
  %v10912 = vmul.f32 %v10657, %v10888
  %v10913 = vmul.f32 %v10658, %v10889
  %v10914 = vmul.f32 %v10659, %v10886
  %v10915 = vpack.c.bf16 %v10900, %v10895
  %v10916 = vpack.c.bf16 %v10901, %v10896
  %v10917 = vpack.c.bf16 %v10902, %v10897
  %v10918 = vpack.c.bf16 %v10903, %v10898
  %v10919 = vpack.c.bf16 %v10904, %v10899
  %v10920 = vpack.c.bf16 %v10910, %v10905
  %v10921 = vpack.c.bf16 %v10911, %v10906
  %v10922 = vpack.c.bf16 %v10912, %v10907
  %v10923 = vpack.c.bf16 %v10913, %v10908
  %v10924 = vpack.c.bf16 %v10914, %v10909
  %s10925 = scalar_lea.vmem %s14, 24
  %v10926 = vld [vmem:[%s10925] sm:$0xf]
  %10937 = vrot.lane.b32.xlu0 %v10915, 113
  %v10938 = vpop.permute.xlu0 %10937
  %10939 = vrot.lane.b32.xlu0 %v10916, 113
  %v10940 = vpop.permute.xlu0 %10939
  %10941 = vrot.lane.b32.xlu0 %v10917, 113
  %v10942 = vpop.permute.xlu0 %10941
  %10943 = vrot.lane.b32.xlu0 %v10918, 113
  %v10944 = vpop.permute.xlu0 %10943
  %10945 = vrot.lane.b32.xlu0 %v10919, 113
  %v10946 = vpop.permute.xlu0 %10945
  %10947 = vrot.lane.b32.xlu0 %v10920, 113
  %v10948 = vpop.permute.xlu0 %10947
  %10949 = vrot.lane.b32.xlu0 %v10921, 113
  %v10950 = vpop.permute.xlu0 %10949
  %10951 = vrot.lane.b32.xlu0 %v10922, 113
  %v10952 = vpop.permute.xlu0 %10951
  %10953 = vrot.lane.b32.xlu0 %v10923, 113
  %v10954 = vpop.permute.xlu0 %10953
  %10955 = vrot.lane.b32.xlu0 %v10924, 113
  %v10956 = vpop.permute.xlu0 %10955
  %v10957 = vsel %vm1643, %v10938, %v10940
  %v10958 = vsel %vm1643, %v10940, %v10942
  %v10959 = vsel %vm1643, %v10942, %v10944
  %v10960 = vsel %vm1643, %v10944, %v10946
  %v10961 = vsel %vm1643, %v10948, %v10950
  %v10962 = vsel %vm1643, %v10950, %v10952
  %v10963 = vsel %vm1643, %v10952, %v10954
  %v10964 = vsel %vm1643, %v10954, %v10956
  %v10974 = vsel %vm311, %v10926, 0
  %10976 = vmatprep.subr.bf16.mxu0 %v10958
  %10977 = vmatpush1.bf16.msra.mxu0 %v10957
  %10978 = vmatprep.subr.bf16.mxu0 %v10962
  %10979 = vmatpush1.bf16.msra.mxu0 %v10961
  %10980 = vmatprep.subr.bf16.mxu0 0
  %10981 = vmatpush1.bf16.msra.mxu0 0
  %10982 = vmatprep.subr.bf16.mxu0 0
  %10983 = vmatpush1.bf16.msra.mxu0 0
  %10984 = vmatprep.subr.bf16.mxu0 0
  %10985 = vmatpush1.bf16.msra.mxu0 0
  %10986 = vmatprep.subr.bf16.mxu0 0
  %10987 = vmatpush1.bf16.msra.mxu0 0
  %10988 = vmatprep.subr.bf16.mxu0 0
  %10989 = vmatpush1.bf16.msra.mxu0 0
  %10990 = vmatprep.subr.bf16.mxu0 0
  %10991 = vmatpush1.bf16.msra.mxu0 0
  %10992 = vmatprep.subr.bf16.mxu0 0
  %10993 = vmatpush1.bf16.msra.mxu0 0
  %10994 = vmatprep.subr.bf16.mxu0 0
  %10995 = vmatpush1.bf16.msra.mxu0 0
  %10996 = vmatprep.subr.bf16.mxu0 0
  %10997 = vmatpush1.bf16.msra.mxu0 0
  %10998 = vmatprep.subr.bf16.mxu0 0
  %10999 = vmatpush1.bf16.msra.mxu0 0
  %11000 = vmatprep.subr.bf16.mxu0 0
  %11001 = vmatpush1.bf16.msra.mxu0 0
  %11002 = vmatprep.subr.bf16.mxu0 0
  %11003 = vmatpush1.bf16.msra.mxu0 0
  %11004 = vmatprep.subr.bf16.mxu0 0
  %11005 = vmatpush1.bf16.msra.mxu0 0
  %11006 = vmatprep.subr.bf16.mxu0 0
  %11007 = vmatpush1.bf16.msra.mxu0 0
  %11008 = vmatprep.mubr.bf16.mxu0 0
  %11009 = vmatmul.mubr.bf16.gmra.mrb[0].mxu0 %v10974
  %v11010 = vpop.f32.mrb[0].mxu0
  %v11011 = vadd.f32 0.0, %v11010
  %v11012 = vpop.f32.mrb[0].mxu0
  %v11013 = vadd.f32 0.0, %v11012
  %v11014 = vpop.f32.mrb[0].mxu0
  %v11015 = vpop.f32.mrb[0].mxu0
  %11016 = vdwg.mxu0
  %11017 = vmatprep.subr.bf16.mxu0 %v10960
  %11018 = vmatpush1.bf16.msra.mxu0 %v10959
  %11019 = vmatprep.subr.bf16.mxu0 %v10964
  %11020 = vmatpush1.bf16.msra.mxu0 %v10963
  %11021 = vmatprep.subr.bf16.mxu0 0
  %11022 = vmatpush1.bf16.msra.mxu0 0
  %11023 = vmatprep.subr.bf16.mxu0 0
  %11024 = vmatpush1.bf16.msra.mxu0 0
  %11025 = vmatprep.subr.bf16.mxu0 0
  %11026 = vmatpush1.bf16.msra.mxu0 0
  %11027 = vmatprep.subr.bf16.mxu0 0
  %11028 = vmatpush1.bf16.msra.mxu0 0
  %11029 = vmatprep.subr.bf16.mxu0 0
  %11030 = vmatpush1.bf16.msra.mxu0 0
  %11031 = vmatprep.subr.bf16.mxu0 0
  %11032 = vmatpush1.bf16.msra.mxu0 0
  %11033 = vmatprep.subr.bf16.mxu0 0
  %11034 = vmatpush1.bf16.msra.mxu0 0
  %11035 = vmatprep.subr.bf16.mxu0 0
  %11036 = vmatpush1.bf16.msra.mxu0 0
  %11037 = vmatprep.subr.bf16.mxu0 0
  %11038 = vmatpush1.bf16.msra.mxu0 0
  %11039 = vmatprep.subr.bf16.mxu0 0
  %11040 = vmatpush1.bf16.msra.mxu0 0
  %11041 = vmatprep.subr.bf16.mxu0 0
  %11042 = vmatpush1.bf16.msra.mxu0 0
  %11043 = vmatprep.subr.bf16.mxu0 0
  %11044 = vmatpush1.bf16.msra.mxu0 0
  %11045 = vmatprep.subr.bf16.mxu0 0
  %11046 = vmatpush1.bf16.msra.mxu0 0
  %11047 = vmatprep.subr.bf16.mxu0 0
  %11048 = vmatpush1.bf16.msra.mxu0 0
  %11049 = vmatprep.mubr.bf16.mxu0 0
  %11050 = vmatmul.mubr.bf16.gmra.mrb[0].mxu0 %v10974
  %v11051 = vpop.f32.mrb[0].mxu0
  %v11052 = vadd.f32 0.0, %v11051
  %v11053 = vpop.f32.mrb[0].mxu0
  %v11054 = vadd.f32 0.0, %v11053
  %v11055 = vpop.f32.mrb[0].mxu0
  %v11056 = vpop.f32.mrb[0].mxu0
  %11057 = vdwg.mxu0
  %v11058 = vadd.f32 %v10857, %v11011
  %v11059 = vadd.f32 %v10858, %v11013
  %v11060 = vadd.f32 %v10859, %v11052
  %v11061 = vadd.f32 %v10860, %v11054
  %v11062 = vld [vmem:[%s1788] sm:$0xf]
  %v11064 = vlaneseq
  %v11065 = vshrl.u32 %v11064, 7
  %v11066 = vsub.s32 0, %v11065
  %v11067 = vrot.slane %v11062, %v11066
  %v11068 = vlaneseq
  %v11069 = vshrl.u32 %v11068, 7
  %v11070 = vsub.s32 1, %v11069
  %v11071 = vrot.slane %v11062, %v11070
  %v11072 = vlaneseq
  %v11073 = vshrl.u32 %v11072, 7
  %v11074 = vsub.s32 2, %v11073
  %v11075 = vrot.slane %v11062, %v11074
  %v11076 = vlaneseq
  %v11077 = vshrl.u32 %v11076, 7
  %v11078 = vsub.s32 3, %v11077
  %v11079 = vrot.slane %v11062, %v11078
  %11080 = vrot.lane.b32.xlu0 %v11067, 16
  %v11081 = vpop.permute.xlu0 %11080
  %11082 = vrot.lane.b32.xlu0 %v11071, 16
  %v11083 = vpop.permute.xlu0 %11082
  %11084 = vrot.lane.b32.xlu0 %v11075, 16
  %v11085 = vpop.permute.xlu0 %11084
  %11086 = vrot.lane.b32.xlu0 %v11079, 16
  %v11087 = vpop.permute.xlu0 %11086
  %v11088 = vsel %vm1815, %v11081, %v11083
  %v11089 = vsel %vm1815, %v11083, %v11085
  %v11090 = vsel %vm1815, %v11085, %v11087
  %v11096 = vmul.f32 %v10640, %v11081
  %v11097 = vmul.f32 %v10641, %v11088
  %v11098 = vmul.f32 %v10642, %v11089
  %v11099 = vmul.f32 %v10643, %v11090
  %v11100 = vmul.f32 %v10644, %v11087
  %v11101 = vmul.f32 %v10645, %v11081
  %v11102 = vmul.f32 %v10646, %v11088
  %v11103 = vmul.f32 %v10647, %v11089
  %v11104 = vmul.f32 %v10648, %v11090
  %v11105 = vmul.f32 %v10649, %v11087
  %v11106 = vmul.f32 %v10650, %v11081
  %v11107 = vmul.f32 %v10651, %v11088
  %v11108 = vmul.f32 %v10652, %v11089
  %v11109 = vmul.f32 %v10653, %v11090
  %v11110 = vmul.f32 %v10654, %v11087
  %v11111 = vmul.f32 %v10655, %v11081
  %v11112 = vmul.f32 %v10656, %v11088
  %v11113 = vmul.f32 %v10657, %v11089
  %v11114 = vmul.f32 %v10658, %v11090
  %v11115 = vmul.f32 %v10659, %v11087
  %v11116 = vpack.c.bf16 %v11101, %v11096
  %v11117 = vpack.c.bf16 %v11102, %v11097
  %v11118 = vpack.c.bf16 %v11103, %v11098
  %v11119 = vpack.c.bf16 %v11104, %v11099
  %v11120 = vpack.c.bf16 %v11105, %v11100
  %v11121 = vpack.c.bf16 %v11111, %v11106
  %v11122 = vpack.c.bf16 %v11112, %v11107
  %v11123 = vpack.c.bf16 %v11113, %v11108
  %v11124 = vpack.c.bf16 %v11114, %v11109
  %v11125 = vpack.c.bf16 %v11115, %v11110
  %s11126 = scalar_lea.vmem %s14, 28
  %v11127 = vld [vmem:[%s11126] sm:$0xf]
  %11138 = vrot.lane.b32.xlu0 %v11116, 112
  %v11139 = vpop.permute.xlu0 %11138
  %11140 = vrot.lane.b32.xlu0 %v11117, 112
  %v11141 = vpop.permute.xlu0 %11140
  %11142 = vrot.lane.b32.xlu0 %v11118, 112
  %v11143 = vpop.permute.xlu0 %11142
  %11144 = vrot.lane.b32.xlu0 %v11119, 112
  %v11145 = vpop.permute.xlu0 %11144
  %11146 = vrot.lane.b32.xlu0 %v11120, 112
  %v11147 = vpop.permute.xlu0 %11146
  %11148 = vrot.lane.b32.xlu0 %v11121, 112
  %v11149 = vpop.permute.xlu0 %11148
  %11150 = vrot.lane.b32.xlu0 %v11122, 112
  %v11151 = vpop.permute.xlu0 %11150
  %11152 = vrot.lane.b32.xlu0 %v11123, 112
  %v11153 = vpop.permute.xlu0 %11152
  %11154 = vrot.lane.b32.xlu0 %v11124, 112
  %v11155 = vpop.permute.xlu0 %11154
  %11156 = vrot.lane.b32.xlu0 %v11125, 112
  %v11157 = vpop.permute.xlu0 %11156
  %v11158 = vsel %vm1899, %v11139, %v11141
  %v11159 = vsel %vm1899, %v11141, %v11143
  %v11160 = vsel %vm1899, %v11143, %v11145
  %v11161 = vsel %vm1899, %v11145, %v11147
  %v11162 = vsel %vm1899, %v11149, %v11151
  %v11163 = vsel %vm1899, %v11151, %v11153
  %v11164 = vsel %vm1899, %v11153, %v11155
  %v11165 = vsel %vm1899, %v11155, %v11157
  %v11175 = vsel %vm311, %v11127, 0
  %11177 = vmatprep.subr.bf16.mxu0 %v11159
  %11178 = vmatpush1.bf16.msra.mxu0 %v11158
  %11179 = vmatprep.subr.bf16.mxu0 %v11163
  %11180 = vmatpush1.bf16.msra.mxu0 %v11162
  %11181 = vmatprep.subr.bf16.mxu0 0
  %11182 = vmatpush1.bf16.msra.mxu0 0
  %11183 = vmatprep.subr.bf16.mxu0 0
  %11184 = vmatpush1.bf16.msra.mxu0 0
  %11185 = vmatprep.subr.bf16.mxu0 0
  %11186 = vmatpush1.bf16.msra.mxu0 0
  %11187 = vmatprep.subr.bf16.mxu0 0
  %11188 = vmatpush1.bf16.msra.mxu0 0
  %11189 = vmatprep.subr.bf16.mxu0 0
  %11190 = vmatpush1.bf16.msra.mxu0 0
  %11191 = vmatprep.subr.bf16.mxu0 0
  %11192 = vmatpush1.bf16.msra.mxu0 0
  %11193 = vmatprep.subr.bf16.mxu0 0
  %11194 = vmatpush1.bf16.msra.mxu0 0
  %11195 = vmatprep.subr.bf16.mxu0 0
  %11196 = vmatpush1.bf16.msra.mxu0 0
  %11197 = vmatprep.subr.bf16.mxu0 0
  %11198 = vmatpush1.bf16.msra.mxu0 0
  %11199 = vmatprep.subr.bf16.mxu0 0
  %11200 = vmatpush1.bf16.msra.mxu0 0
  %11201 = vmatprep.subr.bf16.mxu0 0
  %11202 = vmatpush1.bf16.msra.mxu0 0
  %11203 = vmatprep.subr.bf16.mxu0 0
  %11204 = vmatpush1.bf16.msra.mxu0 0
  %11205 = vmatprep.subr.bf16.mxu0 0
  %11206 = vmatpush1.bf16.msra.mxu0 0
  %11207 = vmatprep.subr.bf16.mxu0 0
  %11208 = vmatpush1.bf16.msra.mxu0 0
  %11209 = vmatprep.mubr.bf16.mxu0 0
  %11210 = vmatmul.mubr.bf16.gmra.mrb[0].mxu0 %v11175
  %v11211 = vpop.f32.mrb[0].mxu0
  %v11212 = vadd.f32 0.0, %v11211
  %v11213 = vpop.f32.mrb[0].mxu0
  %v11214 = vadd.f32 0.0, %v11213
  %v11215 = vpop.f32.mrb[0].mxu0
  %v11216 = vpop.f32.mrb[0].mxu0
  %11217 = vdwg.mxu0
  %11218 = vmatprep.subr.bf16.mxu0 %v11161
  %11219 = vmatpush1.bf16.msra.mxu0 %v11160
  %11220 = vmatprep.subr.bf16.mxu0 %v11165
  %11221 = vmatpush1.bf16.msra.mxu0 %v11164
  %11222 = vmatprep.subr.bf16.mxu0 0
  %11223 = vmatpush1.bf16.msra.mxu0 0
  %11224 = vmatprep.subr.bf16.mxu0 0
  %11225 = vmatpush1.bf16.msra.mxu0 0
  %11226 = vmatprep.subr.bf16.mxu0 0
  %11227 = vmatpush1.bf16.msra.mxu0 0
  %11228 = vmatprep.subr.bf16.mxu0 0
  %11229 = vmatpush1.bf16.msra.mxu0 0
  %11230 = vmatprep.subr.bf16.mxu0 0
  %11231 = vmatpush1.bf16.msra.mxu0 0
  %11232 = vmatprep.subr.bf16.mxu0 0
  %11233 = vmatpush1.bf16.msra.mxu0 0
  %11234 = vmatprep.subr.bf16.mxu0 0
  %11235 = vmatpush1.bf16.msra.mxu0 0
  %11236 = vmatprep.subr.bf16.mxu0 0
  %11237 = vmatpush1.bf16.msra.mxu0 0
  %11238 = vmatprep.subr.bf16.mxu0 0
  %11239 = vmatpush1.bf16.msra.mxu0 0
  %11240 = vmatprep.subr.bf16.mxu0 0
  %11241 = vmatpush1.bf16.msra.mxu0 0
  %11242 = vmatprep.subr.bf16.mxu0 0
  %11243 = vmatpush1.bf16.msra.mxu0 0
  %11244 = vmatprep.subr.bf16.mxu0 0
  %11245 = vmatpush1.bf16.msra.mxu0 0
  %11246 = vmatprep.subr.bf16.mxu0 0
  %11247 = vmatpush1.bf16.msra.mxu0 0
  %11248 = vmatprep.subr.bf16.mxu0 0
  %11249 = vmatpush1.bf16.msra.mxu0 0
  %11250 = vmatprep.mubr.bf16.mxu0 0
  %11251 = vmatmul.mubr.bf16.gmra.mrb[0].mxu0 %v11175
  %v11252 = vpop.f32.mrb[0].mxu0
  %v11253 = vadd.f32 0.0, %v11252
  %v11254 = vpop.f32.mrb[0].mxu0
  %v11255 = vadd.f32 0.0, %v11254
  %v11256 = vpop.f32.mrb[0].mxu0
  %v11257 = vpop.f32.mrb[0].mxu0
  %11258 = vdwg.mxu0
  %v11259 = vadd.f32 %v11058, %v11212
  %v11260 = vadd.f32 %v11059, %v11214
  %v11261 = vadd.f32 %v11060, %v11253
  %v11262 = vadd.f32 %v11061, %v11255
  %v11263 = vld [vmem:[%s2044] sm:$0xf]
  %v11265 = vlaneseq
  %v11266 = vshrl.u32 %v11265, 7
  %v11267 = vsub.s32 0, %v11266
  %v11268 = vrot.slane %v11263, %v11267
  %v11269 = vlaneseq
  %v11270 = vshrl.u32 %v11269, 7
  %v11271 = vsub.s32 1, %v11270
  %v11272 = vrot.slane %v11263, %v11271
  %v11273 = vlaneseq
  %v11274 = vshrl.u32 %v11273, 7
  %v11275 = vsub.s32 2, %v11274
  %v11276 = vrot.slane %v11263, %v11275
  %v11277 = vlaneseq
  %v11278 = vshrl.u32 %v11277, 7
  %v11279 = vsub.s32 3, %v11278
  %v11280 = vrot.slane %v11263, %v11279
  %11281 = vrot.lane.b32.xlu0 %v11268, 17
  %v11282 = vpop.permute.xlu0 %11281
  %11283 = vrot.lane.b32.xlu0 %v11272, 17
  %v11284 = vpop.permute.xlu0 %11283
  %11285 = vrot.lane.b32.xlu0 %v11276, 17
  %v11286 = vpop.permute.xlu0 %11285
  %11287 = vrot.lane.b32.xlu0 %v11280, 17
  %v11288 = vpop.permute.xlu0 %11287
  %v11289 = vsel %vm2071, %v11282, %v11284
  %v11290 = vsel %vm2071, %v11284, %v11286
  %v11291 = vsel %vm2071, %v11286, %v11288
  %v11297 = vmul.f32 %v10640, %v11282
  %v11298 = vmul.f32 %v10641, %v11289
  %v11299 = vmul.f32 %v10642, %v11290
  %v11300 = vmul.f32 %v10643, %v11291
  %v11301 = vmul.f32 %v10644, %v11288
  %v11302 = vmul.f32 %v10645, %v11282
  %v11303 = vmul.f32 %v10646, %v11289
  %v11304 = vmul.f32 %v10647, %v11290
  %v11305 = vmul.f32 %v10648, %v11291
  %v11306 = vmul.f32 %v10649, %v11288
  %v11307 = vmul.f32 %v10650, %v11282
  %v11308 = vmul.f32 %v10651, %v11289
  %v11309 = vmul.f32 %v10652, %v11290
  %v11310 = vmul.f32 %v10653, %v11291
  %v11311 = vmul.f32 %v10654, %v11288
  %v11312 = vmul.f32 %v10655, %v11282
  %v11313 = vmul.f32 %v10656, %v11289
  %v11314 = vmul.f32 %v10657, %v11290
  %v11315 = vmul.f32 %v10658, %v11291
  %v11316 = vmul.f32 %v10659, %v11288
  %v11317 = vpack.c.bf16 %v11302, %v11297
  %v11318 = vpack.c.bf16 %v11303, %v11298
  %v11319 = vpack.c.bf16 %v11304, %v11299
  %v11320 = vpack.c.bf16 %v11305, %v11300
  %v11321 = vpack.c.bf16 %v11306, %v11301
  %v11322 = vpack.c.bf16 %v11312, %v11307
  %v11323 = vpack.c.bf16 %v11313, %v11308
  %v11324 = vpack.c.bf16 %v11314, %v11309
  %v11325 = vpack.c.bf16 %v11315, %v11310
  %v11326 = vpack.c.bf16 %v11316, %v11311
  %s11327 = scalar_lea.vmem %s14, 32
  %v11328 = vld [vmem:[%s11327] sm:$0xf]
  %11339 = vrot.lane.b32.xlu0 %v11317, 111
  %v11340 = vpop.permute.xlu0 %11339
  %11341 = vrot.lane.b32.xlu0 %v11318, 111
  %v11342 = vpop.permute.xlu0 %11341
  %11343 = vrot.lane.b32.xlu0 %v11319, 111
  %v11344 = vpop.permute.xlu0 %11343
  %11345 = vrot.lane.b32.xlu0 %v11320, 111
  %v11346 = vpop.permute.xlu0 %11345
  %11347 = vrot.lane.b32.xlu0 %v11321, 111
  %v11348 = vpop.permute.xlu0 %11347
  %11349 = vrot.lane.b32.xlu0 %v11322, 111
  %v11350 = vpop.permute.xlu0 %11349
  %11351 = vrot.lane.b32.xlu0 %v11323, 111
  %v11352 = vpop.permute.xlu0 %11351
  %11353 = vrot.lane.b32.xlu0 %v11324, 111
  %v11354 = vpop.permute.xlu0 %11353
  %11355 = vrot.lane.b32.xlu0 %v11325, 111
  %v11356 = vpop.permute.xlu0 %11355
  %11357 = vrot.lane.b32.xlu0 %v11326, 111
  %v11358 = vpop.permute.xlu0 %11357
  %v11359 = vsel %vm2155, %v11340, %v11342
  %v11360 = vsel %vm2155, %v11342, %v11344
  %v11361 = vsel %vm2155, %v11344, %v11346
  %v11362 = vsel %vm2155, %v11346, %v11348
  %v11363 = vsel %vm2155, %v11350, %v11352
  %v11364 = vsel %vm2155, %v11352, %v11354
  %v11365 = vsel %vm2155, %v11354, %v11356
  %v11366 = vsel %vm2155, %v11356, %v11358
  %v11376 = vsel %vm311, %v11328, 0
  %11378 = vmatprep.subr.bf16.mxu0 %v11360
  %11379 = vmatpush1.bf16.msra.mxu0 %v11359
  %11380 = vmatprep.subr.bf16.mxu0 %v11364
  %11381 = vmatpush1.bf16.msra.mxu0 %v11363
  %11382 = vmatprep.subr.bf16.mxu0 0
  %11383 = vmatpush1.bf16.msra.mxu0 0
  %11384 = vmatprep.subr.bf16.mxu0 0
  %11385 = vmatpush1.bf16.msra.mxu0 0
  %11386 = vmatprep.subr.bf16.mxu0 0
  %11387 = vmatpush1.bf16.msra.mxu0 0
  %11388 = vmatprep.subr.bf16.mxu0 0
  %11389 = vmatpush1.bf16.msra.mxu0 0
  %11390 = vmatprep.subr.bf16.mxu0 0
  %11391 = vmatpush1.bf16.msra.mxu0 0
  %11392 = vmatprep.subr.bf16.mxu0 0
  %11393 = vmatpush1.bf16.msra.mxu0 0
  %11394 = vmatprep.subr.bf16.mxu0 0
  %11395 = vmatpush1.bf16.msra.mxu0 0
  %11396 = vmatprep.subr.bf16.mxu0 0
  %11397 = vmatpush1.bf16.msra.mxu0 0
  %11398 = vmatprep.subr.bf16.mxu0 0
  %11399 = vmatpush1.bf16.msra.mxu0 0
  %11400 = vmatprep.subr.bf16.mxu0 0
  %11401 = vmatpush1.bf16.msra.mxu0 0
  %11402 = vmatprep.subr.bf16.mxu0 0
  %11403 = vmatpush1.bf16.msra.mxu0 0
  %11404 = vmatprep.subr.bf16.mxu0 0
  %11405 = vmatpush1.bf16.msra.mxu0 0
  %11406 = vmatprep.subr.bf16.mxu0 0
  %11407 = vmatpush1.bf16.msra.mxu0 0
  %11408 = vmatprep.subr.bf16.mxu0 0
  %11409 = vmatpush1.bf16.msra.mxu0 0
  %11410 = vmatprep.mubr.bf16.mxu0 0
  %11411 = vmatmul.mubr.bf16.gmra.mrb[0].mxu0 %v11376
  %v11412 = vpop.f32.mrb[0].mxu0
  %v11413 = vadd.f32 0.0, %v11412
  %v11414 = vpop.f32.mrb[0].mxu0
  %v11415 = vadd.f32 0.0, %v11414
  %v11416 = vpop.f32.mrb[0].mxu0
  %v11417 = vpop.f32.mrb[0].mxu0
  %11418 = vdwg.mxu0
  %11419 = vmatprep.subr.bf16.mxu0 %v11362
  %11420 = vmatpush1.bf16.msra.mxu0 %v11361
  %11421 = vmatprep.subr.bf16.mxu0 %v11366
  %11422 = vmatpush1.bf16.msra.mxu0 %v11365
  %11423 = vmatprep.subr.bf16.mxu0 0
  %11424 = vmatpush1.bf16.msra.mxu0 0
  %11425 = vmatprep.subr.bf16.mxu0 0
  %11426 = vmatpush1.bf16.msra.mxu0 0
  %11427 = vmatprep.subr.bf16.mxu0 0
  %11428 = vmatpush1.bf16.msra.mxu0 0
  %11429 = vmatprep.subr.bf16.mxu0 0
  %11430 = vmatpush1.bf16.msra.mxu0 0
  %11431 = vmatprep.subr.bf16.mxu0 0
  %11432 = vmatpush1.bf16.msra.mxu0 0
  %11433 = vmatprep.subr.bf16.mxu0 0
  %11434 = vmatpush1.bf16.msra.mxu0 0
  %11435 = vmatprep.subr.bf16.mxu0 0
  %11436 = vmatpush1.bf16.msra.mxu0 0
  %11437 = vmatprep.subr.bf16.mxu0 0
  %11438 = vmatpush1.bf16.msra.mxu0 0
  %11439 = vmatprep.subr.bf16.mxu0 0
  %11440 = vmatpush1.bf16.msra.mxu0 0
  %11441 = vmatprep.subr.bf16.mxu0 0
  %11442 = vmatpush1.bf16.msra.mxu0 0
  %11443 = vmatprep.subr.bf16.mxu0 0
  %11444 = vmatpush1.bf16.msra.mxu0 0
  %11445 = vmatprep.subr.bf16.mxu0 0
  %11446 = vmatpush1.bf16.msra.mxu0 0
  %11447 = vmatprep.subr.bf16.mxu0 0
  %11448 = vmatpush1.bf16.msra.mxu0 0
  %11449 = vmatprep.subr.bf16.mxu0 0
  %11450 = vmatpush1.bf16.msra.mxu0 0
  %11451 = vmatprep.mubr.bf16.mxu0 0
  %11452 = vmatmul.mubr.bf16.gmra.mrb[0].mxu0 %v11376
  %v11453 = vpop.f32.mrb[0].mxu0
  %v11454 = vadd.f32 0.0, %v11453
  %v11455 = vpop.f32.mrb[0].mxu0
  %v11456 = vadd.f32 0.0, %v11455
  %v11457 = vpop.f32.mrb[0].mxu0
  %v11458 = vpop.f32.mrb[0].mxu0
  %11459 = vdwg.mxu0
  %v11460 = vadd.f32 %v11259, %v11413
  %v11461 = vadd.f32 %v11260, %v11415
  %v11462 = vadd.f32 %v11261, %v11454
  %v11463 = vadd.f32 %v11262, %v11456
  %v11464 = vld [vmem:[%s15] sm:$0xff]
  %11466 = vset.pattern.permute.xlu0 0
  %11467 = vperm.xlu0 %11466, %v11464
  %v11468 = vpop.permute.xlu0 %11467
  %v11470 = vadd.f32 %v11460, %v11468
  %v11471 = vadd.f32 %v11461, %v11468
  %v11472 = vadd.f32 %v11462, %v11468
  %v11473 = vadd.f32 %v11463, %v11468
  %v11478 = vcombine.low %v11470, %v11471
  %v11479 = vcombine.low %v11472, %v11473
  %v11481 = vunpack.c.l.s4 1966171168
  %v11482 = vunpack.c.0.s8 %v11481
  %v11483 = vlaneseq
  %v11484 = vshrl.u32 %v11483, 7
  %v11485 = vsub.s32 %v11482, %v11484
  %v11486 = vrot.slane %v11478, %v11485
  %v11488 = vunpack.c.l.s4 1966171168
  %v11489 = vunpack.c.0.s8 %v11488
  %v11490 = vlaneseq
  %v11491 = vshrl.u32 %v11490, 7
  %v11492 = vsub.s32 %v11489, %v11491
  %v11493 = vrot.slane %v11479, %v11492
  %v11494 = vcombine.low %v11486, %v11493
  %v11496 = vunpack.c.l.s4 1966171168
  %v11497 = vunpack.c.0.s8 %v11496
  %v11498 = vlaneseq
  %v11499 = vshrl.u32 %v11498, 7
  %v11500 = vsub.s32 %v11497, %v11499
  %v11501 = vrot.slane %v11494, %v11500
  %v11503 = vlaneseq
  %vm11504 = vcmp.ge.s32.totalorder %v11503, 0
  %vm11505 = vcmp.lt.s32.totalorder %v11503, 512
  %vm11506 = vmand %vm11504, %vm11505
  %11507 = vst.msk [vmem:[%s16] sm:$0xf] %vm11506, %v11501
  // Predicated region
  $region66: #{wdiscriminator_forward.1} parent=0 // pred_check
    _
  $region67: #{wdiscriminator_forward.1} parent=0 // pred_check_branch
    %11509 = sbr.rel (0) target = $region69
  $region68: #{wdiscriminator_forward.1} parent=0 // pred_region
    _
  $region69: #{wdiscriminator_forward.1} parent=0 // pred_fallthru
    _
  // Predicated region
  $region70: #{wdiscriminator_forward.1} parent=0 // pred_check
    _
  $region71: #{wdiscriminator_forward.1} parent=0 // pred_check_branch
    %11511 = sbr.rel (0) target = $region73
  $region72: #{wdiscriminator_forward.1} parent=0 // pred_region
    _
  $region73: #{wdiscriminator_forward.1} parent=0 // pred_fallthru
    _

</llo_original>
